<compile_context>
chip_gen: v7x
topology: tpu7x:2x2x1
jax: 0.10.0
libtpu: 0.0.40
codegen_flags: <defaults>
</compile_context>

<pallas_src>
import functools

import jax
import jax.numpy as jnp
from jax.experimental import pallas as pl
from jax.experimental.pallas import tpu as pltpu

IN_CHANNELS_LIST = [8, 16, 32]
OUT_CHANNELS = 16
BACKBONE_CHANNELS = [(4, 8), (8, 16), (16, 32)]


# ----------------------------------------------------------------------------
# Pallas kernels
# ----------------------------------------------------------------------------
def _conv3x3_s2_relu_kernel(x_ref, w_ref, b_ref, o_ref, *, ho, wo, cin):
    """Backbone stage: 3x3 / stride-2 / pad-1 conv + ReLU for one batch element.

    x_ref : (4, 1, ho+1, (wo+1)*cin) f32  space-to-depth parity planes of the padded
                                          input, column layout col = x*cin + c
    w_ref : (9, wo*cin, wo*cout)     bf16 block-diagonal (kron) expanded taps
    b_ref : (1, wo*cout)             f32  bias tiled along W
    o_ref : (1, ho, wo*cout)         f32
    """
    acc = jnp.zeros(o_ref.shape[1:], jnp.float32)
    t = 0
    for di in range(3):
        for dj in range(3):
            p = (di % 2) * 2 + (dj % 2)          # parity plane index
            r0 = di // 2
            c0 = (dj // 2) * cin
            xs = x_ref[p, 0, r0:r0 + ho, c0:c0 + wo * cin].astype(jnp.bfloat16)
            acc = acc + jnp.dot(xs, w_ref[t], preferred_element_type=jnp.float32)
            t += 1
    acc = acc + b_ref[...]
    o_ref[0] = jnp.maximum(acc, 0.0).astype(o_ref.dtype)


def _make_fpn_level_kernel(h, w, oc, has_td):
    """Fused FPN level (one batch element): inner 1x1 conv (+ nearest-2x top-down
    upsample + lateral add) followed by the 3x3 layer conv, all in one kernel."""
    taps = [(di, dj) for di in range(3) for dj in range(3)]

    def kernel(*refs):
        if has_td:
            (feat_ref, td_ref, rexp_ref, cexp_ref,
             wi_ref, bi_ref, wl_ref, bl_ref,
             res_ref, inner_ref, pad_ref) = refs
        else:
            (feat_ref, wi_ref, bi_ref, wl_ref, bl_ref,
             res_ref, inner_ref, pad_ref) = refs

        # --- inner 1x1 conv as a block-diagonal matmul over the column layout ---
        featb = feat_ref[0].astype(jnp.bfloat16)                 # (h, w*cin)
        inner = jnp.dot(featb, wi_ref[...], preferred_element_type=jnp.float32)
        inner = inner + bi_ref[...]

        # --- fused nearest-2x upsample of the top-down path + lateral add ---
        if has_td:
            tdb = td_ref[0].astype(jnp.bfloat16)                 # (h//2, (w//2)*oc)
            up = jnp.dot(rexp_ref[...], tdb,
                         preferred_element_type=jnp.float32)     # duplicate rows
            up = jnp.dot(up.astype(jnp.bfloat16), cexp_ref[...],
                         preferred_element_type=jnp.float32)     # duplicate cols
            inner = inner + up
        inner_ref[0] = inner.astype(inner_ref.dtype)             # feeds next level

        # --- 3x3 / pad-1 layer conv over the merged map (padded in VMEM scratch) ---
        pad_ref[...] = jnp.zeros_like(pad_ref)
        pad_ref[1:h + 1, oc:(w + 1) * oc] = inner.astype(pad_ref.dtype)
        padv = pad_ref[...]                                      # (h+2, (w+2)*oc) bf16
        acc = jnp.zeros((h, w * oc), jnp.float32)
        for t, (di, dj) in enumerate(taps):
            acc = acc + jnp.dot(padv[di:di + h, dj * oc:(dj + w) * oc], wl_ref[t],
                                preferred_element_type=jnp.float32)
        acc = acc + bl_ref[...]
        res_ref[0] = acc.astype(res_ref.dtype)

    return kernel


# ----------------------------------------------------------------------------
# Wrappers (thin glue: layout only, no padded copies / no 9x im2col in HBM)
# ----------------------------------------------------------------------------
def conv3x3_s2_relu(x_nhwc, w_exp, b_tile):
    n, h, w, cin = x_nhwc.shape
    ho, wo = h // 2, w // 2
    cout = w_exp.shape[2] // wo
    hs, ws = ho + 1, wo + 1
    xp = jnp.pad(x_nhwc, ((0, 0), (1, 1), (1, 1), (0, 0)))
    # Stride-2 via a parity (space-to-depth) split so the kernel only ever reads
    # contiguous slices (~1x data instead of the old 9x im2col expansion).
    xs2d = jnp.stack(
        [xp[:, p::2, q::2, :].reshape(n, hs, ws * cin)
         for p in (0, 1) for q in (0, 1)],
        axis=0)                                                  # (4, n, hs, ws*cin)
    out = pl.pallas_call(
        functools.partial(_conv3x3_s2_relu_kernel, ho=ho, wo=wo, cin=cin),
        out_shape=jax.ShapeDtypeStruct((n, ho, wo * cout), jnp.float32),
        grid=(n,),
        in_specs=[
            pl.BlockSpec((4, 1, hs, ws * cin), lambda i: (0, i, 0, 0)),
            pl.BlockSpec(w_exp.shape, lambda i: (0, 0, 0)),
            pl.BlockSpec(b_tile.shape, lambda i: (0, 0)),
        ],
        out_specs=pl.BlockSpec((1, ho, wo * cout), lambda i: (i, 0, 0)),
        compiler_params=pltpu.CompilerParams(
            dimension_semantics=("parallel",)),
    )(xs2d, w_exp, b_tile)
    return out.reshape(n, ho, wo, cout)


def fpn_level(feat_nhwc, td_col, wi, bi, wl, bl, rexp=None, cexp=None):
    """One fused FPN level. Returns (result NHWC, merged 'last_inner' in column
    layout (n, h, w*OC) for the next level's top-down path)."""
    n, h, w, cin = feat_nhwc.shape
    oc = OUT_CHANNELS
    feat_col = feat_nhwc.reshape(n, h, w * cin)
    has_td = td_col is not None
    kernel = _make_fpn_level_kernel(h, w, oc, has_td)

    args = [feat_col]
    in_specs = [pl.BlockSpec((1, h, w * cin), lambda i: (i, 0, 0))]
    if has_td:
        args += [td_col, rexp, cexp]
        in_specs += [
            pl.BlockSpec((1, h // 2, (w // 2) * oc), lambda i: (i, 0, 0)),
            pl.BlockSpec(rexp.shape, lambda i: (0, 0)),
            pl.BlockSpec(cexp.shape, lambda i: (0, 0)),
        ]
    args += [wi, bi, wl, bl]
    in_specs += [
        pl.BlockSpec(wi.shape, lambda i: (0, 0)),
        pl.BlockSpec(bi.shape, lambda i: (0, 0)),
        pl.BlockSpec(wl.shape, lambda i: (0, 0, 0)),
        pl.BlockSpec(bl.shape, lambda i: (0, 0)),
    ]
    res_col, inner_col = pl.pallas_call(
        kernel,
        out_shape=(jax.ShapeDtypeStruct((n, h, w * oc), jnp.float32),
                   jax.ShapeDtypeStruct((n, h, w * oc), jnp.float32)),
        grid=(n,),
        in_specs=in_specs,
        out_specs=(pl.BlockSpec((1, h, w * oc), lambda i: (i, 0, 0)),
                   pl.BlockSpec((1, h, w * oc), lambda i: (i, 0, 0))),
        scratch_shapes=[pltpu.VMEM((h + 2, (w + 2) * oc), jnp.bfloat16)],
        compiler_params=pltpu.CompilerParams(
            dimension_semantics=("parallel",)),
    )(*args)
    return res_col.reshape(n, h, w, oc), inner_col


# ----------------------------------------------------------------------------
# Parameters (deterministic synthetic init, same as rev 1) + one-time prepare
# ----------------------------------------------------------------------------
def init_params(key):
    params = {}
    keys = jax.random.split(key, 32)
    k = 0
    for i, (ci, co) in enumerate(BACKBONE_CHANNELS):
        params[f"backbone_w{i}"] = 0.05 * jax.random.normal(
            keys[k], (3, 3, ci, co), jnp.float32); k += 1
        params[f"backbone_b{i}"] = 0.01 * jax.random.normal(
            keys[k], (co,), jnp.float32); k += 1
    for i, ci in enumerate(IN_CHANNELS_LIST):
        params[f"fpn_inner_w{i}"] = 0.05 * jax.random.normal(
            keys[k], (1, 1, ci, OUT_CHANNELS), jnp.float32); k += 1
        params[f"fpn_inner_b{i}"] = 0.01 * jax.random.normal(
            keys[k], (OUT_CHANNELS,), jnp.float32); k += 1
        params[f"fpn_layer_w{i}"] = 0.05 * jax.random.normal(
            keys[k], (3, 3, OUT_CHANNELS, OUT_CHANNELS), jnp.float32); k += 1
        params[f"fpn_layer_b{i}"] = 0.01 * jax.random.normal(
            keys[k], (OUT_CHANNELS,), jnp.float32); k += 1
    return params


def _row_expand(h):
    """(h, h//2) 0/1 matrix implementing nearest-2x upsampling along rows."""
    return (jnp.arange(h)[:, None] // 2 == jnp.arange(h // 2)[None, :]
            ).astype(jnp.float32)


def prepare_kernel_params(params, input_hw):
    """One-time weight preprocessing: expand each conv tap W[di,dj] (Cin,Cout) to the
    block-diagonal kron(I_W, W_tap) form used by the kernels, tile biases along W,
    and build the 0/1 upsample matrices.  Weights are stored bf16 (MXU operands),
    biases stay f32 (f32 epilogue)."""
    H, W = input_hw
    sizes = [(H // 2, W // 2), (H // 4, W // 4), (H // 8, W // 8)]
    oc = OUT_CHANNELS
    kp = {}
    for i, ((ho, wo), (ci, co)) in enumerate(zip(sizes, BACKBONE_CHANNELS)):
        wt = params[f"backbone_w{i}"]
        eye = jnp.eye(wo, dtype=jnp.float32)
        kp[f"bb_w{i}"] = jnp.stack(
            [jnp.kron(eye, wt[di, dj]) for di in range(3) for dj in range(3)],
            axis=0).astype(jnp.bfloat16)
        kp[f"bb_b{i}"] = jnp.tile(params[f"backbone_b{i}"], wo)[None, :]
    for i, ((hd, wd), ci) in enumerate(zip(sizes, IN_CHANNELS_LIST)):
        eye = jnp.eye(wd, dtype=jnp.float32)
        kp[f"in_w{i}"] = jnp.kron(
            eye, params[f"fpn_inner_w{i}"][0, 0]).astype(jnp.bfloat16)
        kp[f"in_b{i}"] = jnp.tile(params[f"fpn_inner_b{i}"], wd)[None, :]
        wl = params[f"fpn_layer_w{i}"]
        kp[f"ly_w{i}"] = jnp.stack(
            [jnp.kron(eye, wl[di, dj]) for di in range(3) for dj in range(3)],
            axis=0).astype(jnp.bfloat16)
        kp[f"ly_b{i}"] = jnp.tile(params[f"fpn_layer_b{i}"], wd)[None, :]
        if i < len(sizes) - 1:   # this level receives a top-down path
            kp[f"rexp{i}"] = _row_expand(hd).astype(jnp.bfloat16)
            kp[f"cexp{i}"] = jnp.kron(
                _row_expand(wd).T,
                jnp.eye(oc, dtype=jnp.float32)).astype(jnp.bfloat16)
    return kp


# ----------------------------------------------------------------------------
# Forward pass  ==  BackboneWithFPN.forward   (6 pallas_calls total)
# ----------------------------------------------------------------------------
def backbone_with_fpn_forward(kp, x_nchw):
    x = jnp.transpose(x_nchw, (0, 2, 3, 1))                     # NCHW -> NHWC

    # --- body: IntermediateLayerGetter over the 3-stage backbone ---
    feats = []
    h = x
    for i in range(3):
        h = conv3x3_s2_relu(h, kp[f"bb_w{i}"], kp[f"bb_b{i}"])
        feats.append(h)                                          # '0', '1', '2'

    # --- FeaturePyramidNetwork: one fused kernel per level (top-down) ---
    res2, inner2 = fpn_level(feats[2], None,
                             kp["in_w2"], kp["in_b2"], kp["ly_w2"], kp["ly_b2"])
    res1, inner1 = fpn_level(feats[1], inner2,
                             kp["in_w1"], kp["in_b1"], kp["ly_w1"], kp["ly_b1"],
                             kp["rexp1"], kp["cexp1"])
    res0, _ = fpn_level(feats[0], inner1,
                        kp["in_w0"], kp["in_b0"], kp["ly_w0"], kp["ly_b0"],
                        kp["rexp0"], kp["cexp0"])

    # extra_blocks = LastLevelMaxPool: max_pool2d(k=1, s=2) == strided subsample
    pool = res2[:, ::2, ::2, :]

    outs = {"0": res0, "1": res1, "2": res2, "pool": pool}
    return {k: jnp.transpose(v, (0, 3, 1, 2)) for k, v in outs.items()}


# ----------------------------------------------------------------------------
# Pure-JAX f32 reference (mirrors the PyTorch module) for a sanity check
# ----------------------------------------------------------------------------
def _ref_conv2d(x, w, b, stride=1, pad=0, relu=False):
    n, h, ww, cin = x.shape
    kh, kw, _, cout = w.shape
    xp = jnp.pad(x, ((0, 0), (pad, pad), (pad, pad), (0, 0)))
    ho = (h + 2 * pad - kh) // stride + 1
    wo = (ww + 2 * pad - kw) // stride + 1
    cols = []
    for i in range(kh):
        for j in range(kw):
            cols.append(xp[:, i:i + (ho - 1) * stride + 1:stride,
                           j:j + (wo - 1) * stride + 1:stride, :])
    patches = jnp.concatenate(cols, -1).reshape(n * ho * wo, kh * kw * cin)
    y = patches @ w.reshape(kh * kw * cin, cout) + b
    if relu:
        y = jnp.maximum(y, 0.0)
    return y.reshape(n, ho, wo, cout)


def _reference_forward(params, x_nchw):
    x = jnp.transpose(x_nchw, (0, 2, 3, 1))
    feats = []
    h = x
    for i in range(3):
        h = _ref_conv2d(h, params[f"backbone_w{i}"], params[f"backbone_b{i}"],
                        stride=2, pad=1, relu=True)
        feats.append(h)
    inner = [_ref_conv2d(f, params[f"fpn_inner_w{i}"], params[f"fpn_inner_b{i}"])
             for i, f in enumerate(feats)]
    last_inner = inner[-1]
    results = [_ref_conv2d(last_inner, params["fpn_layer_w2"],
                           params["fpn_layer_b2"], pad=1)]
    for idx in range(len(feats) - 2, -1, -1):
        rh = inner[idx].shape[1] // last_inner.shape[1]
        rw = inner[idx].shape[2] // last_inner.shape[2]
        td = jnp.repeat(jnp.repeat(last_inner, rh, axis=1), rw, axis=2)
        last_inner = inner[idx] + td
        results.insert(0, _ref_conv2d(last_inner, params[f"fpn_layer_w{idx}"],
                                      params[f"fpn_layer_b{idx}"], pad=1))
    results.append(results[-1][:, ::2, ::2, :])
    names = ["0", "1", "2", "pool"]
    return {nm: jnp.transpose(o, (0, 3, 1, 2)) for nm, o in zip(names, results)}


if __name__ == "__main__":
    key = jax.random.PRNGKey(0)
    pkey, xkey = jax.random.split(key)
    params = init_params(pkey)
    x = jax.random.normal(xkey, (2, 4, 16, 16), jnp.float32)     # NCHW

    kp = prepare_kernel_params(params, input_hw=(16, 16))        # one-time prepare
    fwd = jax.jit(backbone_with_fpn_forward)
    out = fwd(kp, x)
    jax.block_until_ready(out)

    expected = {"0": (2, 16, 8, 8), "1": (2, 16, 4, 4),
                "2": (2, 16, 2, 2), "pool": (2, 16, 1, 1)}
    assert {k: tuple(v.shape) for k, v in out.items()} == expected

    # loose check vs the f32 reference (kernels use bf16 MXU operands, f32 accum)
    ref = _reference_forward(params, x)
    max_err = max(float(jnp.max(jnp.abs(out[k] - ref[k]))) for k in expected)
    assert max_err < 3e-2, f"numerical mismatch vs f32 reference: {max_err}"

    print("KERNEL_OK")
</pallas_src>

<mosaic_0001>
module attributes {stable_mosaic.version = 11 : i64} {
  func.func @_conv3x3_s2_relu_kernel(%arg0: i32, %arg1: memref<4x1x9x36xf32, #tpu.memory_space<vmem>>, %arg2: memref<9x32x64xbf16, #tpu.memory_space<vmem>>, %arg3: memref<1x64xf32, #tpu.memory_space<vmem>>, %arg4: memref<1x8x64xf32, #tpu.memory_space<vmem>>) attributes {dimension_semantics = [#tpu.dimension_semantics<parallel>], iteration_bounds = array<i64: 2>, scalar_prefetch = 0 : i64, scratch_operands = 0 : i64, tpu.core_type = #tpu.core_type<tc>, window_params = [{transform_indices = @transform_0, window_bounds = array<i64: 4, 1, 9, 36>}, {pipeline_mode = #tpu.pipeline_mode<synchronous>, transform_indices = @transform_1, window_bounds = array<i64: 9, 32, 64>}, {pipeline_mode = #tpu.pipeline_mode<synchronous>, transform_indices = @transform_2, window_bounds = array<i64: 1, 64>}, {transform_indices = @transform_3, window_bounds = array<i64: 1, 8, 64>}]} {
    %cst = arith.constant 0.000000e+00 : f32
    %0 = vector.broadcast %cst : f32 to vector<8x64xf32>
    %c0 = arith.constant 0 : index
    %c0_0 = arith.constant 0 : index
    %c0_1 = arith.constant 0 : index
    %c0_2 = arith.constant 0 : index
    %1 = vector.load %arg1[%c0, %c0_0, %c0_1, %c0_2] : memref<4x1x9x36xf32, #tpu.memory_space<vmem>>, vector<1x1x8x32xf32>
    %2 = vector.shape_cast %1 : vector<1x1x8x32xf32> to vector<8x32xf32>
    %3 = arith.truncf %2 : vector<8x32xf32> to vector<8x32xbf16>
    %c0_3 = arith.constant 0 : index
    %c0_4 = arith.constant 0 : index
    %c0_5 = arith.constant 0 : index
    %4 = vector.load %arg2[%c0_3, %c0_4, %c0_5] : memref<9x32x64xbf16, #tpu.memory_space<vmem>>, vector<1x32x64xbf16>
    %5 = vector.shape_cast %4 : vector<1x32x64xbf16> to vector<32x64xbf16>
    %cst_6 = arith.constant dense<0.000000e+00> : vector<8x64xf32>
    %6 = tpu.matmul %3, %5, %cst_6 {dimension_numbers = #tpu.dot_dimension_numbers<[1], [0], [0], [1], [0, 0, 1, 1], [], []>} : vector<8x32xbf16>, vector<32x64xbf16>, vector<8x64xf32> -> vector<8x64xf32>
    %7 = arith.addf %0, %6 : vector<8x64xf32>
    %c1 = arith.constant 1 : index
    %c0_7 = arith.constant 0 : index
    %c0_8 = arith.constant 0 : index
    %c0_9 = arith.constant 0 : index
    %8 = vector.load %arg1[%c1, %c0_7, %c0_8, %c0_9] : memref<4x1x9x36xf32, #tpu.memory_space<vmem>>, vector<1x1x8x32xf32>
    %9 = vector.shape_cast %8 : vector<1x1x8x32xf32> to vector<8x32xf32>
    %10 = arith.truncf %9 : vector<8x32xf32> to vector<8x32xbf16>
    %c1_10 = arith.constant 1 : index
    %c0_11 = arith.constant 0 : index
    %c0_12 = arith.constant 0 : index
    %11 = vector.load %arg2[%c1_10, %c0_11, %c0_12] : memref<9x32x64xbf16, #tpu.memory_space<vmem>>, vector<1x32x64xbf16>
    %12 = vector.shape_cast %11 : vector<1x32x64xbf16> to vector<32x64xbf16>
    %cst_13 = arith.constant dense<0.000000e+00> : vector<8x64xf32>
    %13 = tpu.matmul %10, %12, %cst_13 {dimension_numbers = #tpu.dot_dimension_numbers<[1], [0], [0], [1], [0, 0, 1, 1], [], []>} : vector<8x32xbf16>, vector<32x64xbf16>, vector<8x64xf32> -> vector<8x64xf32>
    %14 = arith.addf %7, %13 : vector<8x64xf32>
    %c0_14 = arith.constant 0 : index
    %c0_15 = arith.constant 0 : index
    %c0_16 = arith.constant 0 : index
    %c4 = arith.constant 4 : index
    %15 = vector.load %arg1[%c0_14, %c0_15, %c0_16, %c4] : memref<4x1x9x36xf32, #tpu.memory_space<vmem>>, vector<1x1x8x32xf32>
    %16 = vector.shape_cast %15 : vector<1x1x8x32xf32> to vector<8x32xf32>
    %17 = arith.truncf %16 : vector<8x32xf32> to vector<8x32xbf16>
    %c2 = arith.constant 2 : index
    %c0_17 = arith.constant 0 : index
    %c0_18 = arith.constant 0 : index
    %18 = vector.load %arg2[%c2, %c0_17, %c0_18] : memref<9x32x64xbf16, #tpu.memory_space<vmem>>, vector<1x32x64xbf16>
    %19 = vector.shape_cast %18 : vector<1x32x64xbf16> to vector<32x64xbf16>
    %cst_19 = arith.constant dense<0.000000e+00> : vector<8x64xf32>
    %20 = tpu.matmul %17, %19, %cst_19 {dimension_numbers = #tpu.dot_dimension_numbers<[1], [0], [0], [1], [0, 0, 1, 1], [], []>} : vector<8x32xbf16>, vector<32x64xbf16>, vector<8x64xf32> -> vector<8x64xf32>
    %21 = arith.addf %14, %20 : vector<8x64xf32>
    %c2_20 = arith.constant 2 : index
    %c0_21 = arith.constant 0 : index
    %c0_22 = arith.constant 0 : index
    %c0_23 = arith.constant 0 : index
    %22 = vector.load %arg1[%c2_20, %c0_21, %c0_22, %c0_23] : memref<4x1x9x36xf32, #tpu.memory_space<vmem>>, vector<1x1x8x32xf32>
    %23 = vector.shape_cast %22 : vector<1x1x8x32xf32> to vector<8x32xf32>
    %24 = arith.truncf %23 : vector<8x32xf32> to vector<8x32xbf16>
    %c3 = arith.constant 3 : index
    %c0_24 = arith.constant 0 : index
    %c0_25 = arith.constant 0 : index
    %25 = vector.load %arg2[%c3, %c0_24, %c0_25] : memref<9x32x64xbf16, #tpu.memory_space<vmem>>, vector<1x32x64xbf16>
    %26 = vector.shape_cast %25 : vector<1x32x64xbf16> to vector<32x64xbf16>
    %cst_26 = arith.constant dense<0.000000e+00> : vector<8x64xf32>
    %27 = tpu.matmul %24, %26, %cst_26 {dimension_numbers = #tpu.dot_dimension_numbers<[1], [0], [0], [1], [0, 0, 1, 1], [], []>} : vector<8x32xbf16>, vector<32x64xbf16>, vector<8x64xf32> -> vector<8x64xf32>
    %28 = arith.addf %21, %27 : vector<8x64xf32>
    %c3_27 = arith.constant 3 : index
    %c0_28 = arith.constant 0 : index
    %c0_29 = arith.constant 0 : index
    %c0_30 = arith.constant 0 : index
    %29 = vector.load %arg1[%c3_27, %c0_28, %c0_29, %c0_30] : memref<4x1x9x36xf32, #tpu.memory_space<vmem>>, vector<1x1x8x32xf32>
    %30 = vector.shape_cast %29 : vector<1x1x8x32xf32> to vector<8x32xf32>
    %31 = arith.truncf %30 : vector<8x32xf32> to vector<8x32xbf16>
    %c4_31 = arith.constant 4 : index
    %c0_32 = arith.constant 0 : index
    %c0_33 = arith.constant 0 : index
    %32 = vector.load %arg2[%c4_31, %c0_32, %c0_33] : memref<9x32x64xbf16, #tpu.memory_space<vmem>>, vector<1x32x64xbf16>
    %33 = vector.shape_cast %32 : vector<1x32x64xbf16> to vector<32x64xbf16>
    %cst_34 = arith.constant dense<0.000000e+00> : vector<8x64xf32>
    %34 = tpu.matmul %31, %33, %cst_34 {dimension_numbers = #tpu.dot_dimension_numbers<[1], [0], [0], [1], [0, 0, 1, 1], [], []>} : vector<8x32xbf16>, vector<32x64xbf16>, vector<8x64xf32> -> vector<8x64xf32>
    %35 = arith.addf %28, %34 : vector<8x64xf32>
    %c2_35 = arith.constant 2 : index
    %c0_36 = arith.constant 0 : index
    %c0_37 = arith.constant 0 : index
    %c4_38 = arith.constant 4 : index
    %36 = vector.load %arg1[%c2_35, %c0_36, %c0_37, %c4_38] : memref<4x1x9x36xf32, #tpu.memory_space<vmem>>, vector<1x1x8x32xf32>
    %37 = vector.shape_cast %36 : vector<1x1x8x32xf32> to vector<8x32xf32>
    %38 = arith.truncf %37 : vector<8x32xf32> to vector<8x32xbf16>
    %c5 = arith.constant 5 : index
    %c0_39 = arith.constant 0 : index
    %c0_40 = arith.constant 0 : index
    %39 = vector.load %arg2[%c5, %c0_39, %c0_40] : memref<9x32x64xbf16, #tpu.memory_space<vmem>>, vector<1x32x64xbf16>
    %40 = vector.shape_cast %39 : vector<1x32x64xbf16> to vector<32x64xbf16>
    %cst_41 = arith.constant dense<0.000000e+00> : vector<8x64xf32>
    %41 = tpu.matmul %38, %40, %cst_41 {dimension_numbers = #tpu.dot_dimension_numbers<[1], [0], [0], [1], [0, 0, 1, 1], [], []>} : vector<8x32xbf16>, vector<32x64xbf16>, vector<8x64xf32> -> vector<8x64xf32>
    %42 = arith.addf %35, %41 : vector<8x64xf32>
    %c0_42 = arith.constant 0 : index
    %c0_43 = arith.constant 0 : index
    %c1_44 = arith.constant 1 : index
    %c0_45 = arith.constant 0 : index
    %43 = vector.load %arg1[%c0_42, %c0_43, %c1_44, %c0_45] : memref<4x1x9x36xf32, #tpu.memory_space<vmem>>, vector<1x1x8x32xf32>
    %44 = vector.shape_cast %43 : vector<1x1x8x32xf32> to vector<8x32xf32>
    %45 = arith.truncf %44 : vector<8x32xf32> to vector<8x32xbf16>
    %c6 = arith.constant 6 : index
    %c0_46 = arith.constant 0 : index
    %c0_47 = arith.constant 0 : index
    %46 = vector.load %arg2[%c6, %c0_46, %c0_47] : memref<9x32x64xbf16, #tpu.memory_space<vmem>>, vector<1x32x64xbf16>
    %47 = vector.shape_cast %46 : vector<1x32x64xbf16> to vector<32x64xbf16>
    %cst_48 = arith.constant dense<0.000000e+00> : vector<8x64xf32>
    %48 = tpu.matmul %45, %47, %cst_48 {dimension_numbers = #tpu.dot_dimension_numbers<[1], [0], [0], [1], [0, 0, 1, 1], [], []>} : vector<8x32xbf16>, vector<32x64xbf16>, vector<8x64xf32> -> vector<8x64xf32>
    %49 = arith.addf %42, %48 : vector<8x64xf32>
    %c1_49 = arith.constant 1 : index
    %c0_50 = arith.constant 0 : index
    %c1_51 = arith.constant 1 : index
    %c0_52 = arith.constant 0 : index
    %50 = vector.load %arg1[%c1_49, %c0_50, %c1_51, %c0_52] : memref<4x1x9x36xf32, #tpu.memory_space<vmem>>, vector<1x1x8x32xf32>
    %51 = vector.shape_cast %50 : vector<1x1x8x32xf32> to vector<8x32xf32>
    %52 = arith.truncf %51 : vector<8x32xf32> to vector<8x32xbf16>
    %c7 = arith.constant 7 : index
    %c0_53 = arith.constant 0 : index
    %c0_54 = arith.constant 0 : index
    %53 = vector.load %arg2[%c7, %c0_53, %c0_54] : memref<9x32x64xbf16, #tpu.memory_space<vmem>>, vector<1x32x64xbf16>
    %54 = vector.shape_cast %53 : vector<1x32x64xbf16> to vector<32x64xbf16>
    %cst_55 = arith.constant dense<0.000000e+00> : vector<8x64xf32>
    %55 = tpu.matmul %52, %54, %cst_55 {dimension_numbers = #tpu.dot_dimension_numbers<[1], [0], [0], [1], [0, 0, 1, 1], [], []>} : vector<8x32xbf16>, vector<32x64xbf16>, vector<8x64xf32> -> vector<8x64xf32>
    %56 = arith.addf %49, %55 : vector<8x64xf32>
    %c0_56 = arith.constant 0 : index
    %c0_57 = arith.constant 0 : index
    %c1_58 = arith.constant 1 : index
    %c4_59 = arith.constant 4 : index
    %57 = vector.load %arg1[%c0_56, %c0_57, %c1_58, %c4_59] : memref<4x1x9x36xf32, #tpu.memory_space<vmem>>, vector<1x1x8x32xf32>
    %58 = vector.shape_cast %57 : vector<1x1x8x32xf32> to vector<8x32xf32>
    %59 = arith.truncf %58 : vector<8x32xf32> to vector<8x32xbf16>
    %c8 = arith.constant 8 : index
    %c0_60 = arith.constant 0 : index
    %c0_61 = arith.constant 0 : index
    %60 = vector.load %arg2[%c8, %c0_60, %c0_61] : memref<9x32x64xbf16, #tpu.memory_space<vmem>>, vector<1x32x64xbf16>
    %61 = vector.shape_cast %60 : vector<1x32x64xbf16> to vector<32x64xbf16>
    %cst_62 = arith.constant dense<0.000000e+00> : vector<8x64xf32>
    %62 = tpu.matmul %59, %61, %cst_62 {dimension_numbers = #tpu.dot_dimension_numbers<[1], [0], [0], [1], [0, 0, 1, 1], [], []>} : vector<8x32xbf16>, vector<32x64xbf16>, vector<8x64xf32> -> vector<8x64xf32>
    %63 = arith.addf %56, %62 : vector<8x64xf32>
    %c0_63 = arith.constant 0 : index
    %c0_64 = arith.constant 0 : index
    %64 = vector.load %arg3[%c0_63, %c0_64] : memref<1x64xf32, #tpu.memory_space<vmem>>, vector<1x64xf32>
    %65 = vector.broadcast %64 : vector<1x64xf32> to vector<8x64xf32>
    %66 = arith.addf %63, %65 : vector<8x64xf32>
    %cst_65 = arith.constant 0.000000e+00 : f32
    %67 = vector.broadcast %cst_65 : f32 to vector<8x64xf32>
    %68 = arith.maximumf %66, %67 : vector<8x64xf32>
    %c0_66 = arith.constant 0 : index
    %c0_67 = arith.constant 0 : index
    %c0_68 = arith.constant 0 : index
    %69 = vector.load %arg4[%c0_66, %c0_67, %c0_68] : memref<1x8x64xf32, #tpu.memory_space<vmem>>, vector<1x8x64xf32>
    %70 = vector.shape_cast %69 : vector<1x8x64xf32> to vector<8x64xf32>
    %71 = vector.shape_cast %68 : vector<8x64xf32> to vector<1x8x64xf32>
    tpu.vector_store %arg4[%c0_66, %c0_67, %c0_68], %71 {strides = array<i32>} : memref<1x8x64xf32, #tpu.memory_space<vmem>>, vector<1x8x64xf32>,
    return
  }
  func.func @transform_0(%arg0: i32) -> (i32, i32, i32, i32) {
    %c0_i32 = arith.constant 0 : i32
    %c0_i32_0 = arith.constant 0 : i32
    %c0_i32_1 = arith.constant 0 : i32
    %c0_i32_2 = arith.constant 0 : i32
    return %c0_i32, %arg0, %c0_i32_0, %c0_i32_1 : i32, i32, i32, i32
  }
  func.func @transform_1(%arg0: i32) -> (i32, i32, i32) {
    %c0_i32 = arith.constant 0 : i32
    %c0_i32_0 = arith.constant 0 : i32
    %c0_i32_1 = arith.constant 0 : i32
    %c0_i32_2 = arith.constant 0 : i32
    return %c0_i32, %c0_i32_0, %c0_i32_1 : i32, i32, i32
  }
  func.func @transform_2(%arg0: i32) -> (i32, i32) {
    %c0_i32 = arith.constant 0 : i32
    %c0_i32_0 = arith.constant 0 : i32
    %c0_i32_1 = arith.constant 0 : i32
    return %c0_i32, %c0_i32_0 : i32, i32
  }
  func.func @transform_3(%arg0: i32) -> (i32, i32, i32) {
    %c0_i32 = arith.constant 0 : i32
    %c0_i32_0 = arith.constant 0 : i32
    %c0_i32_1 = arith.constant 0 : i32
    return %arg0, %c0_i32, %c0_i32_0 : i32, i32, i32
  }
}

module attributes {stable_mosaic.version = 11 : i64} {
  func.func @_conv3x3_s2_relu_kernel(%arg0: i32, %arg1: memref<4x1x5x40xf32, #tpu.memory_space<vmem>>, %arg2: memref<9x32x64xbf16, #tpu.memory_space<vmem>>, %arg3: memref<1x64xf32, #tpu.memory_space<vmem>>, %arg4: memref<1x4x64xf32, #tpu.memory_space<vmem>>) attributes {dimension_semantics = [#tpu.dimension_semantics<parallel>], iteration_bounds = array<i64: 2>, scalar_prefetch = 0 : i64, scratch_operands = 0 : i64, tpu.core_type = #tpu.core_type<tc>, window_params = [{transform_indices = @transform_0, window_bounds = array<i64: 4, 1, 5, 40>}, {pipeline_mode = #tpu.pipeline_mode<synchronous>, transform_indices = @transform_1, window_bounds = array<i64: 9, 32, 64>}, {pipeline_mode = #tpu.pipeline_mode<synchronous>, transform_indices = @transform_2, window_bounds = array<i64: 1, 64>}, {transform_indices = @transform_3, window_bounds = array<i64: 1, 4, 64>}]} {
    %cst = arith.constant 0.000000e+00 : f32
    %0 = vector.broadcast %cst : f32 to vector<4x64xf32>
    %c0 = arith.constant 0 : index
    %c0_0 = arith.constant 0 : index
    %c0_1 = arith.constant 0 : index
    %c0_2 = arith.constant 0 : index
    %1 = vector.load %arg1[%c0, %c0_0, %c0_1, %c0_2] : memref<4x1x5x40xf32, #tpu.memory_space<vmem>>, vector<1x1x4x32xf32>
    %2 = vector.shape_cast %1 : vector<1x1x4x32xf32> to vector<4x32xf32>
    %3 = arith.truncf %2 : vector<4x32xf32> to vector<4x32xbf16>
    %c0_3 = arith.constant 0 : index
    %c0_4 = arith.constant 0 : index
    %c0_5 = arith.constant 0 : index
    %4 = vector.load %arg2[%c0_3, %c0_4, %c0_5] : memref<9x32x64xbf16, #tpu.memory_space<vmem>>, vector<1x32x64xbf16>
    %5 = vector.shape_cast %4 : vector<1x32x64xbf16> to vector<32x64xbf16>
    %cst_6 = arith.constant dense<0.000000e+00> : vector<4x64xf32>
    %6 = tpu.matmul %3, %5, %cst_6 {dimension_numbers = #tpu.dot_dimension_numbers<[1], [0], [0], [1], [0, 0, 1, 1], [], []>} : vector<4x32xbf16>, vector<32x64xbf16>, vector<4x64xf32> -> vector<4x64xf32>
    %7 = arith.addf %0, %6 : vector<4x64xf32>
    %c1 = arith.constant 1 : index
    %c0_7 = arith.constant 0 : index
    %c0_8 = arith.constant 0 : index
    %c0_9 = arith.constant 0 : index
    %8 = vector.load %arg1[%c1, %c0_7, %c0_8, %c0_9] : memref<4x1x5x40xf32, #tpu.memory_space<vmem>>, vector<1x1x4x32xf32>
    %9 = vector.shape_cast %8 : vector<1x1x4x32xf32> to vector<4x32xf32>
    %10 = arith.truncf %9 : vector<4x32xf32> to vector<4x32xbf16>
    %c1_10 = arith.constant 1 : index
    %c0_11 = arith.constant 0 : index
    %c0_12 = arith.constant 0 : index
    %11 = vector.load %arg2[%c1_10, %c0_11, %c0_12] : memref<9x32x64xbf16, #tpu.memory_space<vmem>>, vector<1x32x64xbf16>
    %12 = vector.shape_cast %11 : vector<1x32x64xbf16> to vector<32x64xbf16>
    %cst_13 = arith.constant dense<0.000000e+00> : vector<4x64xf32>
    %13 = tpu.matmul %10, %12, %cst_13 {dimension_numbers = #tpu.dot_dimension_numbers<[1], [0], [0], [1], [0, 0, 1, 1], [], []>} : vector<4x32xbf16>, vector<32x64xbf16>, vector<4x64xf32> -> vector<4x64xf32>
    %14 = arith.addf %7, %13 : vector<4x64xf32>
    %c0_14 = arith.constant 0 : index
    %c0_15 = arith.constant 0 : index
    %c0_16 = arith.constant 0 : index
    %c8 = arith.constant 8 : index
    %15 = vector.load %arg1[%c0_14, %c0_15, %c0_16, %c8] : memref<4x1x5x40xf32, #tpu.memory_space<vmem>>, vector<1x1x4x32xf32>
    %16 = vector.shape_cast %15 : vector<1x1x4x32xf32> to vector<4x32xf32>
    %17 = arith.truncf %16 : vector<4x32xf32> to vector<4x32xbf16>
    %c2 = arith.constant 2 : index
    %c0_17 = arith.constant 0 : index
    %c0_18 = arith.constant 0 : index
    %18 = vector.load %arg2[%c2, %c0_17, %c0_18] : memref<9x32x64xbf16, #tpu.memory_space<vmem>>, vector<1x32x64xbf16>
    %19 = vector.shape_cast %18 : vector<1x32x64xbf16> to vector<32x64xbf16>
    %cst_19 = arith.constant dense<0.000000e+00> : vector<4x64xf32>
    %20 = tpu.matmul %17, %19, %cst_19 {dimension_numbers = #tpu.dot_dimension_numbers<[1], [0], [0], [1], [0, 0, 1, 1], [], []>} : vector<4x32xbf16>, vector<32x64xbf16>, vector<4x64xf32> -> vector<4x64xf32>
    %21 = arith.addf %14, %20 : vector<4x64xf32>
    %c2_20 = arith.constant 2 : index
    %c0_21 = arith.constant 0 : index
    %c0_22 = arith.constant 0 : index
    %c0_23 = arith.constant 0 : index
    %22 = vector.load %arg1[%c2_20, %c0_21, %c0_22, %c0_23] : memref<4x1x5x40xf32, #tpu.memory_space<vmem>>, vector<1x1x4x32xf32>
    %23 = vector.shape_cast %22 : vector<1x1x4x32xf32> to vector<4x32xf32>
    %24 = arith.truncf %23 : vector<4x32xf32> to vector<4x32xbf16>
    %c3 = arith.constant 3 : index
    %c0_24 = arith.constant 0 : index
    %c0_25 = arith.constant 0 : index
    %25 = vector.load %arg2[%c3, %c0_24, %c0_25] : memref<9x32x64xbf16, #tpu.memory_space<vmem>>, vector<1x32x64xbf16>
    %26 = vector.shape_cast %25 : vector<1x32x64xbf16> to vector<32x64xbf16>
    %cst_26 = arith.constant dense<0.000000e+00> : vector<4x64xf32>
    %27 = tpu.matmul %24, %26, %cst_26 {dimension_numbers = #tpu.dot_dimension_numbers<[1], [0], [0], [1], [0, 0, 1, 1], [], []>} : vector<4x32xbf16>, vector<32x64xbf16>, vector<4x64xf32> -> vector<4x64xf32>
    %28 = arith.addf %21, %27 : vector<4x64xf32>
    %c3_27 = arith.constant 3 : index
    %c0_28 = arith.constant 0 : index
    %c0_29 = arith.constant 0 : index
    %c0_30 = arith.constant 0 : index
    %29 = vector.load %arg1[%c3_27, %c0_28, %c0_29, %c0_30] : memref<4x1x5x40xf32, #tpu.memory_space<vmem>>, vector<1x1x4x32xf32>
    %30 = vector.shape_cast %29 : vector<1x1x4x32xf32> to vector<4x32xf32>
    %31 = arith.truncf %30 : vector<4x32xf32> to vector<4x32xbf16>
    %c4 = arith.constant 4 : index
    %c0_31 = arith.constant 0 : index
    %c0_32 = arith.constant 0 : index
    %32 = vector.load %arg2[%c4, %c0_31, %c0_32] : memref<9x32x64xbf16, #tpu.memory_space<vmem>>, vector<1x32x64xbf16>
    %33 = vector.shape_cast %32 : vector<1x32x64xbf16> to vector<32x64xbf16>
    %cst_33 = arith.constant dense<0.000000e+00> : vector<4x64xf32>
    %34 = tpu.matmul %31, %33, %cst_33 {dimension_numbers = #tpu.dot_dimension_numbers<[1], [0], [0], [1], [0, 0, 1, 1], [], []>} : vector<4x32xbf16>, vector<32x64xbf16>, vector<4x64xf32> -> vector<4x64xf32>
    %35 = arith.addf %28, %34 : vector<4x64xf32>
    %c2_34 = arith.constant 2 : index
    %c0_35 = arith.constant 0 : index
    %c0_36 = arith.constant 0 : index
    %c8_37 = arith.constant 8 : index
    %36 = vector.load %arg1[%c2_34, %c0_35, %c0_36, %c8_37] : memref<4x1x5x40xf32, #tpu.memory_space<vmem>>, vector<1x1x4x32xf32>
    %37 = vector.shape_cast %36 : vector<1x1x4x32xf32> to vector<4x32xf32>
    %38 = arith.truncf %37 : vector<4x32xf32> to vector<4x32xbf16>
    %c5 = arith.constant 5 : index
    %c0_38 = arith.constant 0 : index
    %c0_39 = arith.constant 0 : index
    %39 = vector.load %arg2[%c5, %c0_38, %c0_39] : memref<9x32x64xbf16, #tpu.memory_space<vmem>>, vector<1x32x64xbf16>
    %40 = vector.shape_cast %39 : vector<1x32x64xbf16> to vector<32x64xbf16>
    %cst_40 = arith.constant dense<0.000000e+00> : vector<4x64xf32>
    %41 = tpu.matmul %38, %40, %cst_40 {dimension_numbers = #tpu.dot_dimension_numbers<[1], [0], [0], [1], [0, 0, 1, 1], [], []>} : vector<4x32xbf16>, vector<32x64xbf16>, vector<4x64xf32> -> vector<4x64xf32>
    %42 = arith.addf %35, %41 : vector<4x64xf32>
    %c0_41 = arith.constant 0 : index
    %c0_42 = arith.constant 0 : index
    %c1_43 = arith.constant 1 : index
    %c0_44 = arith.constant 0 : index
    %43 = vector.load %arg1[%c0_41, %c0_42, %c1_43, %c0_44] : memref<4x1x5x40xf32, #tpu.memory_space<vmem>>, vector<1x1x4x32xf32>
    %44 = vector.shape_cast %43 : vector<1x1x4x32xf32> to vector<4x32xf32>
    %45 = arith.truncf %44 : vector<4x32xf32> to vector<4x32xbf16>
    %c6 = arith.constant 6 : index
    %c0_45 = arith.constant 0 : index
    %c0_46 = arith.constant 0 : index
    %46 = vector.load %arg2[%c6, %c0_45, %c0_46] : memref<9x32x64xbf16, #tpu.memory_space<vmem>>, vector<1x32x64xbf16>
    %47 = vector.shape_cast %46 : vector<1x32x64xbf16> to vector<32x64xbf16>
    %cst_47 = arith.constant dense<0.000000e+00> : vector<4x64xf32>
    %48 = tpu.matmul %45, %47, %cst_47 {dimension_numbers = #tpu.dot_dimension_numbers<[1], [0], [0], [1], [0, 0, 1, 1], [], []>} : vector<4x32xbf16>, vector<32x64xbf16>, vector<4x64xf32> -> vector<4x64xf32>
    %49 = arith.addf %42, %48 : vector<4x64xf32>
    %c1_48 = arith.constant 1 : index
    %c0_49 = arith.constant 0 : index
    %c1_50 = arith.constant 1 : index
    %c0_51 = arith.constant 0 : index
    %50 = vector.load %arg1[%c1_48, %c0_49, %c1_50, %c0_51] : memref<4x1x5x40xf32, #tpu.memory_space<vmem>>, vector<1x1x4x32xf32>
    %51 = vector.shape_cast %50 : vector<1x1x4x32xf32> to vector<4x32xf32>
    %52 = arith.truncf %51 : vector<4x32xf32> to vector<4x32xbf16>
    %c7 = arith.constant 7 : index
    %c0_52 = arith.constant 0 : index
    %c0_53 = arith.constant 0 : index
    %53 = vector.load %arg2[%c7, %c0_52, %c0_53] : memref<9x32x64xbf16, #tpu.memory_space<vmem>>, vector<1x32x64xbf16>
    %54 = vector.shape_cast %53 : vector<1x32x64xbf16> to vector<32x64xbf16>
    %cst_54 = arith.constant dense<0.000000e+00> : vector<4x64xf32>
    %55 = tpu.matmul %52, %54, %cst_54 {dimension_numbers = #tpu.dot_dimension_numbers<[1], [0], [0], [1], [0, 0, 1, 1], [], []>} : vector<4x32xbf16>, vector<32x64xbf16>, vector<4x64xf32> -> vector<4x64xf32>
    %56 = arith.addf %49, %55 : vector<4x64xf32>
    %c0_55 = arith.constant 0 : index
    %c0_56 = arith.constant 0 : index
    %c1_57 = arith.constant 1 : index
    %c8_58 = arith.constant 8 : index
    %57 = vector.load %arg1[%c0_55, %c0_56, %c1_57, %c8_58] : memref<4x1x5x40xf32, #tpu.memory_space<vmem>>, vector<1x1x4x32xf32>
    %58 = vector.shape_cast %57 : vector<1x1x4x32xf32> to vector<4x32xf32>
    %59 = arith.truncf %58 : vector<4x32xf32> to vector<4x32xbf16>
    %c8_59 = arith.constant 8 : index
    %c0_60 = arith.constant 0 : index
    %c0_61 = arith.constant 0 : index
    %60 = vector.load %arg2[%c8_59, %c0_60, %c0_61] : memref<9x32x64xbf16, #tpu.memory_space<vmem>>, vector<1x32x64xbf16>
    %61 = vector.shape_cast %60 : vector<1x32x64xbf16> to vector<32x64xbf16>
    %cst_62 = arith.constant dense<0.000000e+00> : vector<4x64xf32>
    %62 = tpu.matmul %59, %61, %cst_62 {dimension_numbers = #tpu.dot_dimension_numbers<[1], [0], [0], [1], [0, 0, 1, 1], [], []>} : vector<4x32xbf16>, vector<32x64xbf16>, vector<4x64xf32> -> vector<4x64xf32>
    %63 = arith.addf %56, %62 : vector<4x64xf32>
    %c0_63 = arith.constant 0 : index
    %c0_64 = arith.constant 0 : index
    %64 = vector.load %arg3[%c0_63, %c0_64] : memref<1x64xf32, #tpu.memory_space<vmem>>, vector<1x64xf32>
    %65 = vector.broadcast %64 : vector<1x64xf32> to vector<4x64xf32>
    %66 = arith.addf %63, %65 : vector<4x64xf32>
    %cst_65 = arith.constant 0.000000e+00 : f32
    %67 = vector.broadcast %cst_65 : f32 to vector<4x64xf32>
    %68 = arith.maximumf %66, %67 : vector<4x64xf32>
    %c0_66 = arith.constant 0 : index
    %c0_67 = arith.constant 0 : index
    %c0_68 = arith.constant 0 : index
    %69 = vector.load %arg4[%c0_66, %c0_67, %c0_68] : memref<1x4x64xf32, #tpu.memory_space<vmem>>, vector<1x4x64xf32>
    %70 = vector.shape_cast %69 : vector<1x4x64xf32> to vector<4x64xf32>
    %71 = vector.shape_cast %68 : vector<4x64xf32> to vector<1x4x64xf32>
    tpu.vector_store %arg4[%c0_66, %c0_67, %c0_68], %71 {strides = array<i32>} : memref<1x4x64xf32, #tpu.memory_space<vmem>>, vector<1x4x64xf32>,
    return
  }
  func.func @transform_0(%arg0: i32) -> (i32, i32, i32, i32) {
    %c0_i32 = arith.constant 0 : i32
    %c0_i32_0 = arith.constant 0 : i32
    %c0_i32_1 = arith.constant 0 : i32
    %c0_i32_2 = arith.constant 0 : i32
    return %c0_i32, %arg0, %c0_i32_0, %c0_i32_1 : i32, i32, i32, i32
  }
  func.func @transform_1(%arg0: i32) -> (i32, i32, i32) {
    %c0_i32 = arith.constant 0 : i32
    %c0_i32_0 = arith.constant 0 : i32
    %c0_i32_1 = arith.constant 0 : i32
    %c0_i32_2 = arith.constant 0 : i32
    return %c0_i32, %c0_i32_0, %c0_i32_1 : i32, i32, i32
  }
  func.func @transform_2(%arg0: i32) -> (i32, i32) {
    %c0_i32 = arith.constant 0 : i32
    %c0_i32_0 = arith.constant 0 : i32
    %c0_i32_1 = arith.constant 0 : i32
    return %c0_i32, %c0_i32_0 : i32, i32
  }
  func.func @transform_3(%arg0: i32) -> (i32, i32, i32) {
    %c0_i32 = arith.constant 0 : i32
    %c0_i32_0 = arith.constant 0 : i32
    %c0_i32_1 = arith.constant 0 : i32
    return %arg0, %c0_i32, %c0_i32_0 : i32, i32, i32
  }
}

module attributes {stable_mosaic.version = 11 : i64} {
  func.func @_conv3x3_s2_relu_kernel(%arg0: i32, %arg1: memref<4x1x3x48xf32, #tpu.memory_space<vmem>>, %arg2: memref<9x32x64xbf16, #tpu.memory_space<vmem>>, %arg3: memref<1x64xf32, #tpu.memory_space<vmem>>, %arg4: memref<1x2x64xf32, #tpu.memory_space<vmem>>) attributes {dimension_semantics = [#tpu.dimension_semantics<parallel>], iteration_bounds = array<i64: 2>, scalar_prefetch = 0 : i64, scratch_operands = 0 : i64, tpu.core_type = #tpu.core_type<tc>, window_params = [{transform_indices = @transform_0, window_bounds = array<i64: 4, 1, 3, 48>}, {pipeline_mode = #tpu.pipeline_mode<synchronous>, transform_indices = @transform_1, window_bounds = array<i64: 9, 32, 64>}, {pipeline_mode = #tpu.pipeline_mode<synchronous>, transform_indices = @transform_2, window_bounds = array<i64: 1, 64>}, {transform_indices = @transform_3, window_bounds = array<i64: 1, 2, 64>}]} {
    %cst = arith.constant 0.000000e+00 : f32
    %0 = vector.broadcast %cst : f32 to vector<2x64xf32>
    %c0 = arith.constant 0 : index
    %c0_0 = arith.constant 0 : index
    %c0_1 = arith.constant 0 : index
    %c0_2 = arith.constant 0 : index
    %1 = vector.load %arg1[%c0, %c0_0, %c0_1, %c0_2] : memref<4x1x3x48xf32, #tpu.memory_space<vmem>>, vector<1x1x2x32xf32>
    %2 = vector.shape_cast %1 : vector<1x1x2x32xf32> to vector<2x32xf32>
    %3 = arith.truncf %2 : vector<2x32xf32> to vector<2x32xbf16>
    %c0_3 = arith.constant 0 : index
    %c0_4 = arith.constant 0 : index
    %c0_5 = arith.constant 0 : index
    %4 = vector.load %arg2[%c0_3, %c0_4, %c0_5] : memref<9x32x64xbf16, #tpu.memory_space<vmem>>, vector<1x32x64xbf16>
    %5 = vector.shape_cast %4 : vector<1x32x64xbf16> to vector<32x64xbf16>
    %cst_6 = arith.constant dense<0.000000e+00> : vector<2x64xf32>
    %6 = tpu.matmul %3, %5, %cst_6 {dimension_numbers = #tpu.dot_dimension_numbers<[1], [0], [0], [1], [0, 0, 1, 1], [], []>} : vector<2x32xbf16>, vector<32x64xbf16>, vector<2x64xf32> -> vector<2x64xf32>
    %7 = arith.addf %0, %6 : vector<2x64xf32>
    %c1 = arith.constant 1 : index
    %c0_7 = arith.constant 0 : index
    %c0_8 = arith.constant 0 : index
    %c0_9 = arith.constant 0 : index
    %8 = vector.load %arg1[%c1, %c0_7, %c0_8, %c0_9] : memref<4x1x3x48xf32, #tpu.memory_space<vmem>>, vector<1x1x2x32xf32>
    %9 = vector.shape_cast %8 : vector<1x1x2x32xf32> to vector<2x32xf32>
    %10 = arith.truncf %9 : vector<2x32xf32> to vector<2x32xbf16>
    %c1_10 = arith.constant 1 : index
    %c0_11 = arith.constant 0 : index
    %c0_12 = arith.constant 0 : index
    %11 = vector.load %arg2[%c1_10, %c0_11, %c0_12] : memref<9x32x64xbf16, #tpu.memory_space<vmem>>, vector<1x32x64xbf16>
    %12 = vector.shape_cast %11 : vector<1x32x64xbf16> to vector<32x64xbf16>
    %cst_13 = arith.constant dense<0.000000e+00> : vector<2x64xf32>
    %13 = tpu.matmul %10, %12, %cst_13 {dimension_numbers = #tpu.dot_dimension_numbers<[1], [0], [0], [1], [0, 0, 1, 1], [], []>} : vector<2x32xbf16>, vector<32x64xbf16>, vector<2x64xf32> -> vector<2x64xf32>
    %14 = arith.addf %7, %13 : vector<2x64xf32>
    %c0_14 = arith.constant 0 : index
    %c0_15 = arith.constant 0 : index
    %c0_16 = arith.constant 0 : index
    %c16 = arith.constant 16 : index
    %15 = vector.load %arg1[%c0_14, %c0_15, %c0_16, %c16] : memref<4x1x3x48xf32, #tpu.memory_space<vmem>>, vector<1x1x2x32xf32>
    %16 = vector.shape_cast %15 : vector<1x1x2x32xf32> to vector<2x32xf32>
    %17 = arith.truncf %16 : vector<2x32xf32> to vector<2x32xbf16>
    %c2 = arith.constant 2 : index
    %c0_17 = arith.constant 0 : index
    %c0_18 = arith.constant 0 : index
    %18 = vector.load %arg2[%c2, %c0_17, %c0_18] : memref<9x32x64xbf16, #tpu.memory_space<vmem>>, vector<1x32x64xbf16>
    %19 = vector.shape_cast %18 : vector<1x32x64xbf16> to vector<32x64xbf16>
    %cst_19 = arith.constant dense<0.000000e+00> : vector<2x64xf32>
    %20 = tpu.matmul %17, %19, %cst_19 {dimension_numbers = #tpu.dot_dimension_numbers<[1], [0], [0], [1], [0, 0, 1, 1], [], []>} : vector<2x32xbf16>, vector<32x64xbf16>, vector<2x64xf32> -> vector<2x64xf32>
    %21 = arith.addf %14, %20 : vector<2x64xf32>
    %c2_20 = arith.constant 2 : index
    %c0_21 = arith.constant 0 : index
    %c0_22 = arith.constant 0 : index
    %c0_23 = arith.constant 0 : index
    %22 = vector.load %arg1[%c2_20, %c0_21, %c0_22, %c0_23] : memref<4x1x3x48xf32, #tpu.memory_space<vmem>>, vector<1x1x2x32xf32>
    %23 = vector.shape_cast %22 : vector<1x1x2x32xf32> to vector<2x32xf32>
    %24 = arith.truncf %23 : vector<2x32xf32> to vector<2x32xbf16>
    %c3 = arith.constant 3 : index
    %c0_24 = arith.constant 0 : index
    %c0_25 = arith.constant 0 : index
    %25 = vector.load %arg2[%c3, %c0_24, %c0_25] : memref<9x32x64xbf16, #tpu.memory_space<vmem>>, vector<1x32x64xbf16>
    %26 = vector.shape_cast %25 : vector<1x32x64xbf16> to vector<32x64xbf16>
    %cst_26 = arith.constant dense<0.000000e+00> : vector<2x64xf32>
    %27 = tpu.matmul %24, %26, %cst_26 {dimension_numbers = #tpu.dot_dimension_numbers<[1], [0], [0], [1], [0, 0, 1, 1], [], []>} : vector<2x32xbf16>, vector<32x64xbf16>, vector<2x64xf32> -> vector<2x64xf32>
    %28 = arith.addf %21, %27 : vector<2x64xf32>
    %c3_27 = arith.constant 3 : index
    %c0_28 = arith.constant 0 : index
    %c0_29 = arith.constant 0 : index
    %c0_30 = arith.constant 0 : index
    %29 = vector.load %arg1[%c3_27, %c0_28, %c0_29, %c0_30] : memref<4x1x3x48xf32, #tpu.memory_space<vmem>>, vector<1x1x2x32xf32>
    %30 = vector.shape_cast %29 : vector<1x1x2x32xf32> to vector<2x32xf32>
    %31 = arith.truncf %30 : vector<2x32xf32> to vector<2x32xbf16>
    %c4 = arith.constant 4 : index
    %c0_31 = arith.constant 0 : index
    %c0_32 = arith.constant 0 : index
    %32 = vector.load %arg2[%c4, %c0_31, %c0_32] : memref<9x32x64xbf16, #tpu.memory_space<vmem>>, vector<1x32x64xbf16>
    %33 = vector.shape_cast %32 : vector<1x32x64xbf16> to vector<32x64xbf16>
    %cst_33 = arith.constant dense<0.000000e+00> : vector<2x64xf32>
    %34 = tpu.matmul %31, %33, %cst_33 {dimension_numbers = #tpu.dot_dimension_numbers<[1], [0], [0], [1], [0, 0, 1, 1], [], []>} : vector<2x32xbf16>, vector<32x64xbf16>, vector<2x64xf32> -> vector<2x64xf32>
    %35 = arith.addf %28, %34 : vector<2x64xf32>
    %c2_34 = arith.constant 2 : index
    %c0_35 = arith.constant 0 : index
    %c0_36 = arith.constant 0 : index
    %c16_37 = arith.constant 16 : index
    %36 = vector.load %arg1[%c2_34, %c0_35, %c0_36, %c16_37] : memref<4x1x3x48xf32, #tpu.memory_space<vmem>>, vector<1x1x2x32xf32>
    %37 = vector.shape_cast %36 : vector<1x1x2x32xf32> to vector<2x32xf32>
    %38 = arith.truncf %37 : vector<2x32xf32> to vector<2x32xbf16>
    %c5 = arith.constant 5 : index
    %c0_38 = arith.constant 0 : index
    %c0_39 = arith.constant 0 : index
    %39 = vector.load %arg2[%c5, %c0_38, %c0_39] : memref<9x32x64xbf16, #tpu.memory_space<vmem>>, vector<1x32x64xbf16>
    %40 = vector.shape_cast %39 : vector<1x32x64xbf16> to vector<32x64xbf16>
    %cst_40 = arith.constant dense<0.000000e+00> : vector<2x64xf32>
    %41 = tpu.matmul %38, %40, %cst_40 {dimension_numbers = #tpu.dot_dimension_numbers<[1], [0], [0], [1], [0, 0, 1, 1], [], []>} : vector<2x32xbf16>, vector<32x64xbf16>, vector<2x64xf32> -> vector<2x64xf32>
    %42 = arith.addf %35, %41 : vector<2x64xf32>
    %c0_41 = arith.constant 0 : index
    %c0_42 = arith.constant 0 : index
    %c1_43 = arith.constant 1 : index
    %c0_44 = arith.constant 0 : index
    %43 = vector.load %arg1[%c0_41, %c0_42, %c1_43, %c0_44] : memref<4x1x3x48xf32, #tpu.memory_space<vmem>>, vector<1x1x2x32xf32>
    %44 = vector.shape_cast %43 : vector<1x1x2x32xf32> to vector<2x32xf32>
    %45 = arith.truncf %44 : vector<2x32xf32> to vector<2x32xbf16>
    %c6 = arith.constant 6 : index
    %c0_45 = arith.constant 0 : index
    %c0_46 = arith.constant 0 : index
    %46 = vector.load %arg2[%c6, %c0_45, %c0_46] : memref<9x32x64xbf16, #tpu.memory_space<vmem>>, vector<1x32x64xbf16>
    %47 = vector.shape_cast %46 : vector<1x32x64xbf16> to vector<32x64xbf16>
    %cst_47 = arith.constant dense<0.000000e+00> : vector<2x64xf32>
    %48 = tpu.matmul %45, %47, %cst_47 {dimension_numbers = #tpu.dot_dimension_numbers<[1], [0], [0], [1], [0, 0, 1, 1], [], []>} : vector<2x32xbf16>, vector<32x64xbf16>, vector<2x64xf32> -> vector<2x64xf32>
    %49 = arith.addf %42, %48 : vector<2x64xf32>
    %c1_48 = arith.constant 1 : index
    %c0_49 = arith.constant 0 : index
    %c1_50 = arith.constant 1 : index
    %c0_51 = arith.constant 0 : index
    %50 = vector.load %arg1[%c1_48, %c0_49, %c1_50, %c0_51] : memref<4x1x3x48xf32, #tpu.memory_space<vmem>>, vector<1x1x2x32xf32>
    %51 = vector.shape_cast %50 : vector<1x1x2x32xf32> to vector<2x32xf32>
    %52 = arith.truncf %51 : vector<2x32xf32> to vector<2x32xbf16>
    %c7 = arith.constant 7 : index
    %c0_52 = arith.constant 0 : index
    %c0_53 = arith.constant 0 : index
    %53 = vector.load %arg2[%c7, %c0_52, %c0_53] : memref<9x32x64xbf16, #tpu.memory_space<vmem>>, vector<1x32x64xbf16>
    %54 = vector.shape_cast %53 : vector<1x32x64xbf16> to vector<32x64xbf16>
    %cst_54 = arith.constant dense<0.000000e+00> : vector<2x64xf32>
    %55 = tpu.matmul %52, %54, %cst_54 {dimension_numbers = #tpu.dot_dimension_numbers<[1], [0], [0], [1], [0, 0, 1, 1], [], []>} : vector<2x32xbf16>, vector<32x64xbf16>, vector<2x64xf32> -> vector<2x64xf32>
    %56 = arith.addf %49, %55 : vector<2x64xf32>
    %c0_55 = arith.constant 0 : index
    %c0_56 = arith.constant 0 : index
    %c1_57 = arith.constant 1 : index
    %c16_58 = arith.constant 16 : index
    %57 = vector.load %arg1[%c0_55, %c0_56, %c1_57, %c16_58] : memref<4x1x3x48xf32, #tpu.memory_space<vmem>>, vector<1x1x2x32xf32>
    %58 = vector.shape_cast %57 : vector<1x1x2x32xf32> to vector<2x32xf32>
    %59 = arith.truncf %58 : vector<2x32xf32> to vector<2x32xbf16>
    %c8 = arith.constant 8 : index
    %c0_59 = arith.constant 0 : index
    %c0_60 = arith.constant 0 : index
    %60 = vector.load %arg2[%c8, %c0_59, %c0_60] : memref<9x32x64xbf16, #tpu.memory_space<vmem>>, vector<1x32x64xbf16>
    %61 = vector.shape_cast %60 : vector<1x32x64xbf16> to vector<32x64xbf16>
    %cst_61 = arith.constant dense<0.000000e+00> : vector<2x64xf32>
    %62 = tpu.matmul %59, %61, %cst_61 {dimension_numbers = #tpu.dot_dimension_numbers<[1], [0], [0], [1], [0, 0, 1, 1], [], []>} : vector<2x32xbf16>, vector<32x64xbf16>, vector<2x64xf32> -> vector<2x64xf32>
    %63 = arith.addf %56, %62 : vector<2x64xf32>
    %c0_62 = arith.constant 0 : index
    %c0_63 = arith.constant 0 : index
    %64 = vector.load %arg3[%c0_62, %c0_63] : memref<1x64xf32, #tpu.memory_space<vmem>>, vector<1x64xf32>
    %65 = vector.broadcast %64 : vector<1x64xf32> to vector<2x64xf32>
    %66 = arith.addf %63, %65 : vector<2x64xf32>
    %cst_64 = arith.constant 0.000000e+00 : f32
    %67 = vector.broadcast %cst_64 : f32 to vector<2x64xf32>
    %68 = arith.maximumf %66, %67 : vector<2x64xf32>
    %c0_65 = arith.constant 0 : index
    %c0_66 = arith.constant 0 : index
    %c0_67 = arith.constant 0 : index
    %69 = vector.load %arg4[%c0_65, %c0_66, %c0_67] : memref<1x2x64xf32, #tpu.memory_space<vmem>>, vector<1x2x64xf32>
    %70 = vector.shape_cast %69 : vector<1x2x64xf32> to vector<2x64xf32>
    %71 = vector.shape_cast %68 : vector<2x64xf32> to vector<1x2x64xf32>
    tpu.vector_store %arg4[%c0_65, %c0_66, %c0_67], %71 {strides = array<i32>} : memref<1x2x64xf32, #tpu.memory_space<vmem>>, vector<1x2x64xf32>,
    return
  }
  func.func @transform_0(%arg0: i32) -> (i32, i32, i32, i32) {
    %c0_i32 = arith.constant 0 : i32
    %c0_i32_0 = arith.constant 0 : i32
    %c0_i32_1 = arith.constant 0 : i32
    %c0_i32_2 = arith.constant 0 : i32
    return %c0_i32, %arg0, %c0_i32_0, %c0_i32_1 : i32, i32, i32, i32
  }
  func.func @transform_1(%arg0: i32) -> (i32, i32, i32) {
    %c0_i32 = arith.constant 0 : i32
    %c0_i32_0 = arith.constant 0 : i32
    %c0_i32_1 = arith.constant 0 : i32
    %c0_i32_2 = arith.constant 0 : i32
    return %c0_i32, %c0_i32_0, %c0_i32_1 : i32, i32, i32
  }
  func.func @transform_2(%arg0: i32) -> (i32, i32) {
    %c0_i32 = arith.constant 0 : i32
    %c0_i32_0 = arith.constant 0 : i32
    %c0_i32_1 = arith.constant 0 : i32
    return %c0_i32, %c0_i32_0 : i32, i32
  }
  func.func @transform_3(%arg0: i32) -> (i32, i32, i32) {
    %c0_i32 = arith.constant 0 : i32
    %c0_i32_0 = arith.constant 0 : i32
    %c0_i32_1 = arith.constant 0 : i32
    return %arg0, %c0_i32, %c0_i32_0 : i32, i32, i32
  }
}

module attributes {stable_mosaic.version = 11 : i64} {
  func.func @kernel(%arg0: i32, %arg1: memref<1x2x64xf32, #tpu.memory_space<vmem>>, %arg2: memref<64x32xbf16, #tpu.memory_space<vmem>>, %arg3: memref<1x32xf32, #tpu.memory_space<vmem>>, %arg4: memref<9x32x32xbf16, #tpu.memory_space<vmem>>, %arg5: memref<1x32xf32, #tpu.memory_space<vmem>>, %arg6: memref<1x2x32xf32, #tpu.memory_space<vmem>>, %arg7: memref<1x2x32xf32, #tpu.memory_space<vmem>>, %arg8: memref<4x64xbf16, #tpu.memory_space<vmem>>) attributes {dimension_semantics = [#tpu.dimension_semantics<parallel>], iteration_bounds = array<i64: 2>, scalar_prefetch = 0 : i64, scratch_operands = 1 : i64, tpu.core_type = #tpu.core_type<tc>, window_params = [{transform_indices = @transform_0, window_bounds = array<i64: 1, 2, 64>}, {pipeline_mode = #tpu.pipeline_mode<synchronous>, transform_indices = @transform_1, window_bounds = array<i64: 64, 32>}, {pipeline_mode = #tpu.pipeline_mode<synchronous>, transform_indices = @transform_2, window_bounds = array<i64: 1, 32>}, {pipeline_mode = #tpu.pipeline_mode<synchronous>, transform_indices = @transform_3, window_bounds = array<i64: 9, 32, 32>}, {pipeline_mode = #tpu.pipeline_mode<synchronous>, transform_indices = @transform_4, window_bounds = array<i64: 1, 32>}, {transform_indices = @transform_5, window_bounds = array<i64: 1, 2, 32>}, {transform_indices = @transform_6, window_bounds = array<i64: 1, 2, 32>}]} {
    %c0 = arith.constant 0 : index
    %c0_0 = arith.constant 0 : index
    %c0_1 = arith.constant 0 : index
    %0 = vector.load %arg1[%c0, %c0_0, %c0_1] : memref<1x2x64xf32, #tpu.memory_space<vmem>>, vector<1x2x64xf32>
    %1 = vector.shape_cast %0 : vector<1x2x64xf32> to vector<2x64xf32>
    %2 = arith.truncf %1 : vector<2x64xf32> to vector<2x64xbf16>
    %c0_2 = arith.constant 0 : index
    %c0_3 = arith.constant 0 : index
    %3 = vector.load %arg2[%c0_2, %c0_3] : memref<64x32xbf16, #tpu.memory_space<vmem>>, vector<64x32xbf16>
    %cst = arith.constant dense<0.000000e+00> : vector<2x32xf32>
    %4 = tpu.matmul %2, %3, %cst {dimension_numbers = #tpu.dot_dimension_numbers<[1], [0], [0], [1], [0, 0, 1, 1], [], []>} : vector<2x64xbf16>, vector<64x32xbf16>, vector<2x32xf32> -> vector<2x32xf32>
    %c0_4 = arith.constant 0 : index
    %c0_5 = arith.constant 0 : index
    %5 = vector.load %arg3[%c0_4, %c0_5] : memref<1x32xf32, #tpu.memory_space<vmem>>, vector<1x32xf32>
    %6 = vector.broadcast %5 : vector<1x32xf32> to vector<2x32xf32>
    %7 = arith.addf %4, %6 : vector<2x32xf32>
    %c0_6 = arith.constant 0 : index
    %c0_7 = arith.constant 0 : index
    %c0_8 = arith.constant 0 : index
    %8 = vector.load %arg7[%c0_6, %c0_7, %c0_8] : memref<1x2x32xf32, #tpu.memory_space<vmem>>, vector<1x2x32xf32>
    %9 = vector.shape_cast %8 : vector<1x2x32xf32> to vector<2x32xf32>
    %10 = vector.shape_cast %7 : vector<2x32xf32> to vector<1x2x32xf32>
    tpu.vector_store %arg7[%c0_6, %c0_7, %c0_8], %10 {strides = array<i32>} : memref<1x2x32xf32, #tpu.memory_space<vmem>>, vector<1x2x32xf32>,
    %cst_9 = arith.constant 0.000000e+00 : bf16
    %11 = vector.broadcast %cst_9 : bf16 to vector<4x64xbf16>
    %c0_10 = arith.constant 0 : index
    %c0_11 = arith.constant 0 : index
    %12 = vector.load %arg8[%c0_10, %c0_11] : memref<4x64xbf16, #tpu.memory_space<vmem>>, vector<4x64xbf16>
    tpu.vector_store %arg8[%c0_10, %c0_11], %11 {strides = array<i32>} : memref<4x64xbf16, #tpu.memory_space<vmem>>, vector<4x64xbf16>,
    %13 = arith.truncf %7 : vector<2x32xf32> to vector<2x32xbf16>
    %c1 = arith.constant 1 : index
    %c16 = arith.constant 16 : index
    %14 = vector.load %arg8[%c1, %c16] : memref<4x64xbf16, #tpu.memory_space<vmem>>, vector<2x32xbf16>
    tpu.vector_store %arg8[%c1, %c16], %13 {strides = array<i32>} : memref<4x64xbf16, #tpu.memory_space<vmem>>, vector<2x32xbf16>,
    %c0_12 = arith.constant 0 : index
    %c0_13 = arith.constant 0 : index
    %15 = vector.load %arg8[%c0_12, %c0_13] : memref<4x64xbf16, #tpu.memory_space<vmem>>, vector<4x64xbf16>
    %cst_14 = arith.constant 0.000000e+00 : f32
    %16 = vector.broadcast %cst_14 : f32 to vector<2x32xf32>
    %17 = vector.extract_strided_slice %15 {offsets = [0, 0], sizes = [2, 32], strides = [1, 1]} : vector<4x64xbf16> to vector<2x32xbf16>
    %c0_15 = arith.constant 0 : index
    %c0_16 = arith.constant 0 : index
    %c0_17 = arith.constant 0 : index
    %18 = vector.load %arg4[%c0_15, %c0_16, %c0_17] : memref<9x32x32xbf16, #tpu.memory_space<vmem>>, vector<1x32x32xbf16>
    %19 = vector.shape_cast %18 : vector<1x32x32xbf16> to vector<32x32xbf16>
    %cst_18 = arith.constant dense<0.000000e+00> : vector<2x32xf32>
    %20 = tpu.matmul %17, %19, %cst_18 {dimension_numbers = #tpu.dot_dimension_numbers<[1], [0], [0], [1], [0, 0, 1, 1], [], []>} : vector<2x32xbf16>, vector<32x32xbf16>, vector<2x32xf32> -> vector<2x32xf32>
    %21 = arith.addf %16, %20 : vector<2x32xf32>
    %22 = vector.extract_strided_slice %15 {offsets = [0, 16], sizes = [2, 32], strides = [1, 1]} : vector<4x64xbf16> to vector<2x32xbf16>
    %c1_19 = arith.constant 1 : index
    %c0_20 = arith.constant 0 : index
    %c0_21 = arith.constant 0 : index
    %23 = vector.load %arg4[%c1_19, %c0_20, %c0_21] : memref<9x32x32xbf16, #tpu.memory_space<vmem>>, vector<1x32x32xbf16>
    %24 = vector.shape_cast %23 : vector<1x32x32xbf16> to vector<32x32xbf16>
    %cst_22 = arith.constant dense<0.000000e+00> : vector<2x32xf32>
    %25 = tpu.matmul %22, %24, %cst_22 {dimension_numbers = #tpu.dot_dimension_numbers<[1], [0], [0], [1], [0, 0, 1, 1], [], []>} : vector<2x32xbf16>, vector<32x32xbf16>, vector<2x32xf32> -> vector<2x32xf32>
    %26 = arith.addf %21, %25 : vector<2x32xf32>
    %27 = vector.extract_strided_slice %15 {offsets = [0, 32], sizes = [2, 32], strides = [1, 1]} : vector<4x64xbf16> to vector<2x32xbf16>
    %c2 = arith.constant 2 : index
    %c0_23 = arith.constant 0 : index
    %c0_24 = arith.constant 0 : index
    %28 = vector.load %arg4[%c2, %c0_23, %c0_24] : memref<9x32x32xbf16, #tpu.memory_space<vmem>>, vector<1x32x32xbf16>
    %29 = vector.shape_cast %28 : vector<1x32x32xbf16> to vector<32x32xbf16>
    %cst_25 = arith.constant dense<0.000000e+00> : vector<2x32xf32>
    %30 = tpu.matmul %27, %29, %cst_25 {dimension_numbers = #tpu.dot_dimension_numbers<[1], [0], [0], [1], [0, 0, 1, 1], [], []>} : vector<2x32xbf16>, vector<32x32xbf16>, vector<2x32xf32> -> vector<2x32xf32>
    %31 = arith.addf %26, %30 : vector<2x32xf32>
    %32 = vector.extract_strided_slice %15 {offsets = [1, 0], sizes = [2, 32], strides = [1, 1]} : vector<4x64xbf16> to vector<2x32xbf16>
    %c3 = arith.constant 3 : index
    %c0_26 = arith.constant 0 : index
    %c0_27 = arith.constant 0 : index
    %33 = vector.load %arg4[%c3, %c0_26, %c0_27] : memref<9x32x32xbf16, #tpu.memory_space<vmem>>, vector<1x32x32xbf16>
    %34 = vector.shape_cast %33 : vector<1x32x32xbf16> to vector<32x32xbf16>
    %cst_28 = arith.constant dense<0.000000e+00> : vector<2x32xf32>
    %35 = tpu.matmul %32, %34, %cst_28 {dimension_numbers = #tpu.dot_dimension_numbers<[1], [0], [0], [1], [0, 0, 1, 1], [], []>} : vector<2x32xbf16>, vector<32x32xbf16>, vector<2x32xf32> -> vector<2x32xf32>
    %36 = arith.addf %31, %35 : vector<2x32xf32>
    %37 = vector.extract_strided_slice %15 {offsets = [1, 16], sizes = [2, 32], strides = [1, 1]} : vector<4x64xbf16> to vector<2x32xbf16>
    %c4 = arith.constant 4 : index
    %c0_29 = arith.constant 0 : index
    %c0_30 = arith.constant 0 : index
    %38 = vector.load %arg4[%c4, %c0_29, %c0_30] : memref<9x32x32xbf16, #tpu.memory_space<vmem>>, vector<1x32x32xbf16>
    %39 = vector.shape_cast %38 : vector<1x32x32xbf16> to vector<32x32xbf16>
    %cst_31 = arith.constant dense<0.000000e+00> : vector<2x32xf32>
    %40 = tpu.matmul %37, %39, %cst_31 {dimension_numbers = #tpu.dot_dimension_numbers<[1], [0], [0], [1], [0, 0, 1, 1], [], []>} : vector<2x32xbf16>, vector<32x32xbf16>, vector<2x32xf32> -> vector<2x32xf32>
    %41 = arith.addf %36, %40 : vector<2x32xf32>
    %42 = vector.extract_strided_slice %15 {offsets = [1, 32], sizes = [2, 32], strides = [1, 1]} : vector<4x64xbf16> to vector<2x32xbf16>
    %c5 = arith.constant 5 : index
    %c0_32 = arith.constant 0 : index
    %c0_33 = arith.constant 0 : index
    %43 = vector.load %arg4[%c5, %c0_32, %c0_33] : memref<9x32x32xbf16, #tpu.memory_space<vmem>>, vector<1x32x32xbf16>
    %44 = vector.shape_cast %43 : vector<1x32x32xbf16> to vector<32x32xbf16>
    %cst_34 = arith.constant dense<0.000000e+00> : vector<2x32xf32>
    %45 = tpu.matmul %42, %44, %cst_34 {dimension_numbers = #tpu.dot_dimension_numbers<[1], [0], [0], [1], [0, 0, 1, 1], [], []>} : vector<2x32xbf16>, vector<32x32xbf16>, vector<2x32xf32> -> vector<2x32xf32>
    %46 = arith.addf %41, %45 : vector<2x32xf32>
    %47 = vector.extract_strided_slice %15 {offsets = [2, 0], sizes = [2, 32], strides = [1, 1]} : vector<4x64xbf16> to vector<2x32xbf16>
    %c6 = arith.constant 6 : index
    %c0_35 = arith.constant 0 : index
    %c0_36 = arith.constant 0 : index
    %48 = vector.load %arg4[%c6, %c0_35, %c0_36] : memref<9x32x32xbf16, #tpu.memory_space<vmem>>, vector<1x32x32xbf16>
    %49 = vector.shape_cast %48 : vector<1x32x32xbf16> to vector<32x32xbf16>
    %cst_37 = arith.constant dense<0.000000e+00> : vector<2x32xf32>
    %50 = tpu.matmul %47, %49, %cst_37 {dimension_numbers = #tpu.dot_dimension_numbers<[1], [0], [0], [1], [0, 0, 1, 1], [], []>} : vector<2x32xbf16>, vector<32x32xbf16>, vector<2x32xf32> -> vector<2x32xf32>
    %51 = arith.addf %46, %50 : vector<2x32xf32>
    %52 = vector.extract_strided_slice %15 {offsets = [2, 16], sizes = [2, 32], strides = [1, 1]} : vector<4x64xbf16> to vector<2x32xbf16>
    %c7 = arith.constant 7 : index
    %c0_38 = arith.constant 0 : index
    %c0_39 = arith.constant 0 : index
    %53 = vector.load %arg4[%c7, %c0_38, %c0_39] : memref<9x32x32xbf16, #tpu.memory_space<vmem>>, vector<1x32x32xbf16>
    %54 = vector.shape_cast %53 : vector<1x32x32xbf16> to vector<32x32xbf16>
    %cst_40 = arith.constant dense<0.000000e+00> : vector<2x32xf32>
    %55 = tpu.matmul %52, %54, %cst_40 {dimension_numbers = #tpu.dot_dimension_numbers<[1], [0], [0], [1], [0, 0, 1, 1], [], []>} : vector<2x32xbf16>, vector<32x32xbf16>, vector<2x32xf32> -> vector<2x32xf32>
    %56 = arith.addf %51, %55 : vector<2x32xf32>
    %57 = vector.extract_strided_slice %15 {offsets = [2, 32], sizes = [2, 32], strides = [1, 1]} : vector<4x64xbf16> to vector<2x32xbf16>
    %c8 = arith.constant 8 : index
    %c0_41 = arith.constant 0 : index
    %c0_42 = arith.constant 0 : index
    %58 = vector.load %arg4[%c8, %c0_41, %c0_42] : memref<9x32x32xbf16, #tpu.memory_space<vmem>>, vector<1x32x32xbf16>
    %59 = vector.shape_cast %58 : vector<1x32x32xbf16> to vector<32x32xbf16>
    %cst_43 = arith.constant dense<0.000000e+00> : vector<2x32xf32>
    %60 = tpu.matmul %57, %59, %cst_43 {dimension_numbers = #tpu.dot_dimension_numbers<[1], [0], [0], [1], [0, 0, 1, 1], [], []>} : vector<2x32xbf16>, vector<32x32xbf16>, vector<2x32xf32> -> vector<2x32xf32>
    %61 = arith.addf %56, %60 : vector<2x32xf32>
    %c0_44 = arith.constant 0 : index
    %c0_45 = arith.constant 0 : index
    %62 = vector.load %arg5[%c0_44, %c0_45] : memref<1x32xf32, #tpu.memory_space<vmem>>, vector<1x32xf32>
    %63 = vector.broadcast %62 : vector<1x32xf32> to vector<2x32xf32>
    %64 = arith.addf %61, %63 : vector<2x32xf32>
    %c0_46 = arith.constant 0 : index
    %c0_47 = arith.constant 0 : index
    %c0_48 = arith.constant 0 : index
    %65 = vector.load %arg6[%c0_46, %c0_47, %c0_48] : memref<1x2x32xf32, #tpu.memory_space<vmem>>, vector<1x2x32xf32>
    %66 = vector.shape_cast %65 : vector<1x2x32xf32> to vector<2x32xf32>
    %67 = vector.shape_cast %64 : vector<2x32xf32> to vector<1x2x32xf32>
    tpu.vector_store %arg6[%c0_46, %c0_47, %c0_48], %67 {strides = array<i32>} : memref<1x2x32xf32, #tpu.memory_space<vmem>>, vector<1x2x32xf32>,
    return
  }
  func.func @transform_0(%arg0: i32) -> (i32, i32, i32) {
    %c0_i32 = arith.constant 0 : i32
    %c0_i32_0 = arith.constant 0 : i32
    %c0_i32_1 = arith.constant 0 : i32
    return %arg0, %c0_i32, %c0_i32_0 : i32, i32, i32
  }
  func.func @transform_1(%arg0: i32) -> (i32, i32) {
    %c0_i32 = arith.constant 0 : i32
    %c0_i32_0 = arith.constant 0 : i32
    %c0_i32_1 = arith.constant 0 : i32
    return %c0_i32, %c0_i32_0 : i32, i32
  }
  func.func @transform_2(%arg0: i32) -> (i32, i32) {
    %c0_i32 = arith.constant 0 : i32
    %c0_i32_0 = arith.constant 0 : i32
    %c0_i32_1 = arith.constant 0 : i32
    return %c0_i32, %c0_i32_0 : i32, i32
  }
  func.func @transform_3(%arg0: i32) -> (i32, i32, i32) {
    %c0_i32 = arith.constant 0 : i32
    %c0_i32_0 = arith.constant 0 : i32
    %c0_i32_1 = arith.constant 0 : i32
    %c0_i32_2 = arith.constant 0 : i32
    return %c0_i32, %c0_i32_0, %c0_i32_1 : i32, i32, i32
  }
  func.func @transform_4(%arg0: i32) -> (i32, i32) {
    %c0_i32 = arith.constant 0 : i32
    %c0_i32_0 = arith.constant 0 : i32
    %c0_i32_1 = arith.constant 0 : i32
    return %c0_i32, %c0_i32_0 : i32, i32
  }
  func.func @transform_5(%arg0: i32) -> (i32, i32, i32) {
    %c0_i32 = arith.constant 0 : i32
    %c0_i32_0 = arith.constant 0 : i32
    %c0_i32_1 = arith.constant 0 : i32
    return %arg0, %c0_i32, %c0_i32_0 : i32, i32, i32
  }
  func.func @transform_6(%arg0: i32) -> (i32, i32, i32) {
    %c0_i32 = arith.constant 0 : i32
    %c0_i32_0 = arith.constant 0 : i32
    %c0_i32_1 = arith.constant 0 : i32
    return %arg0, %c0_i32, %c0_i32_0 : i32, i32, i32
  }
}

module attributes {stable_mosaic.version = 11 : i64} {
  func.func @kernel(%arg0: i32, %arg1: memref<1x4x64xf32, #tpu.memory_space<vmem>>, %arg2: memref<1x2x32xf32, #tpu.memory_space<vmem>>, %arg3: memref<4x2xbf16, #tpu.memory_space<vmem>>, %arg4: memref<32x64xbf16, #tpu.memory_space<vmem>>, %arg5: memref<64x64xbf16, #tpu.memory_space<vmem>>, %arg6: memref<1x64xf32, #tpu.memory_space<vmem>>, %arg7: memref<9x64x64xbf16, #tpu.memory_space<vmem>>, %arg8: memref<1x64xf32, #tpu.memory_space<vmem>>, %arg9: memref<1x4x64xf32, #tpu.memory_space<vmem>>, %arg10: memref<1x4x64xf32, #tpu.memory_space<vmem>>, %arg11: memref<6x96xbf16, #tpu.memory_space<vmem>>) attributes {dimension_semantics = [#tpu.dimension_semantics<parallel>], iteration_bounds = array<i64: 2>, scalar_prefetch = 0 : i64, scratch_operands = 1 : i64, tpu.core_type = #tpu.core_type<tc>, window_params = [{transform_indices = @transform_0, window_bounds = array<i64: 1, 4, 64>}, {transform_indices = @transform_1, window_bounds = array<i64: 1, 2, 32>}, {pipeline_mode = #tpu.pipeline_mode<synchronous>, transform_indices = @transform_2, window_bounds = array<i64: 4, 2>}, {pipeline_mode = #tpu.pipeline_mode<synchronous>, transform_indices = @transform_3, window_bounds = array<i64: 32, 64>}, {pipeline_mode = #tpu.pipeline_mode<synchronous>, transform_indices = @transform_4, window_bounds = array<i64: 64, 64>}, {pipeline_mode = #tpu.pipeline_mode<synchronous>, transform_indices = @transform_5, window_bounds = array<i64: 1, 64>}, {pipeline_mode = #tpu.pipeline_mode<synchronous>, transform_indices = @transform_6, window_bounds = array<i64: 9, 64, 64>}, {pipeline_mode = #tpu.pipeline_mode<synchronous>, transform_indices = @transform_7, window_bounds = array<i64: 1, 64>}, {transform_indices = @transform_8, window_bounds = array<i64: 1, 4, 64>}, {transform_indices = @transform_9, window_bounds = array<i64: 1, 4, 64>}]} {
    %c0 = arith.constant 0 : index
    %c0_0 = arith.constant 0 : index
    %c0_1 = arith.constant 0 : index
    %0 = vector.load %arg1[%c0, %c0_0, %c0_1] : memref<1x4x64xf32, #tpu.memory_space<vmem>>, vector<1x4x64xf32>
    %1 = vector.shape_cast %0 : vector<1x4x64xf32> to vector<4x64xf32>
    %2 = arith.truncf %1 : vector<4x64xf32> to vector<4x64xbf16>
    %c0_2 = arith.constant 0 : index
    %c0_3 = arith.constant 0 : index
    %3 = vector.load %arg5[%c0_2, %c0_3] : memref<64x64xbf16, #tpu.memory_space<vmem>>, vector<64x64xbf16>
    %cst = arith.constant dense<0.000000e+00> : vector<4x64xf32>
    %4 = tpu.matmul %2, %3, %cst {dimension_numbers = #tpu.dot_dimension_numbers<[1], [0], [0], [1], [0, 0, 1, 1], [], []>} : vector<4x64xbf16>, vector<64x64xbf16>, vector<4x64xf32> -> vector<4x64xf32>
    %c0_4 = arith.constant 0 : index
    %c0_5 = arith.constant 0 : index
    %5 = vector.load %arg6[%c0_4, %c0_5] : memref<1x64xf32, #tpu.memory_space<vmem>>, vector<1x64xf32>
    %6 = vector.broadcast %5 : vector<1x64xf32> to vector<4x64xf32>
    %7 = arith.addf %4, %6 : vector<4x64xf32>
    %c0_6 = arith.constant 0 : index
    %c0_7 = arith.constant 0 : index
    %c0_8 = arith.constant 0 : index
    %8 = vector.load %arg2[%c0_6, %c0_7, %c0_8] : memref<1x2x32xf32, #tpu.memory_space<vmem>>, vector<1x2x32xf32>
    %9 = vector.shape_cast %8 : vector<1x2x32xf32> to vector<2x32xf32>
    %10 = arith.truncf %9 : vector<2x32xf32> to vector<2x32xbf16>
    %c0_9 = arith.constant 0 : index
    %c0_10 = arith.constant 0 : index
    %11 = vector.load %arg3[%c0_9, %c0_10] : memref<4x2xbf16, #tpu.memory_space<vmem>>, vector<4x2xbf16>
    %cst_11 = arith.constant dense<0.000000e+00> : vector<4x32xf32>
    %12 = tpu.matmul %11, %10, %cst_11 {dimension_numbers = #tpu.dot_dimension_numbers<[1], [0], [0], [1], [0, 0, 1, 1], [], []>} : vector<4x2xbf16>, vector<2x32xbf16>, vector<4x32xf32> -> vector<4x32xf32>
    %13 = arith.truncf %12 : vector<4x32xf32> to vector<4x32xbf16>
    %c0_12 = arith.constant 0 : index
    %c0_13 = arith.constant 0 : index
    %14 = vector.load %arg4[%c0_12, %c0_13] : memref<32x64xbf16, #tpu.memory_space<vmem>>, vector<32x64xbf16>
    %cst_14 = arith.constant dense<0.000000e+00> : vector<4x64xf32>
    %15 = tpu.matmul %13, %14, %cst_14 {dimension_numbers = #tpu.dot_dimension_numbers<[1], [0], [0], [1], [0, 0, 1, 1], [], []>} : vector<4x32xbf16>, vector<32x64xbf16>, vector<4x64xf32> -> vector<4x64xf32>
    %16 = arith.addf %7, %15 : vector<4x64xf32>
    %c0_15 = arith.constant 0 : index
    %c0_16 = arith.constant 0 : index
    %c0_17 = arith.constant 0 : index
    %17 = vector.load %arg10[%c0_15, %c0_16, %c0_17] : memref<1x4x64xf32, #tpu.memory_space<vmem>>, vector<1x4x64xf32>
    %18 = vector.shape_cast %17 : vector<1x4x64xf32> to vector<4x64xf32>
    %19 = vector.shape_cast %16 : vector<4x64xf32> to vector<1x4x64xf32>
    tpu.vector_store %arg10[%c0_15, %c0_16, %c0_17], %19 {strides = array<i32>} : memref<1x4x64xf32, #tpu.memory_space<vmem>>, vector<1x4x64xf32>,
    %cst_18 = arith.constant 0.000000e+00 : bf16
    %20 = vector.broadcast %cst_18 : bf16 to vector<6x96xbf16>
    %c0_19 = arith.constant 0 : index
    %c0_20 = arith.constant 0 : index
    %21 = vector.load %arg11[%c0_19, %c0_20] : memref<6x96xbf16, #tpu.memory_space<vmem>>, vector<6x96xbf16>
    tpu.vector_store %arg11[%c0_19, %c0_20], %20 {strides = array<i32>} : memref<6x96xbf16, #tpu.memory_space<vmem>>, vector<6x96xbf16>,
    %22 = arith.truncf %16 : vector<4x64xf32> to vector<4x64xbf16>
    %c1 = arith.constant 1 : index
    %c16 = arith.constant 16 : index
    %23 = vector.load %arg11[%c1, %c16] : memref<6x96xbf16, #tpu.memory_space<vmem>>, vector<4x64xbf16>
    tpu.vector_store %arg11[%c1, %c16], %22 {strides = array<i32>} : memref<6x96xbf16, #tpu.memory_space<vmem>>, vector<4x64xbf16>,
    %c0_21 = arith.constant 0 : index
    %c0_22 = arith.constant 0 : index
    %24 = vector.load %arg11[%c0_21, %c0_22] : memref<6x96xbf16, #tpu.memory_space<vmem>>, vector<6x96xbf16>
    %cst_23 = arith.constant 0.000000e+00 : f32
    %25 = vector.broadcast %cst_23 : f32 to vector<4x64xf32>
    %26 = vector.extract_strided_slice %24 {offsets = [0, 0], sizes = [4, 64], strides = [1, 1]} : vector<6x96xbf16> to vector<4x64xbf16>
    %c0_24 = arith.constant 0 : index
    %c0_25 = arith.constant 0 : index
    %c0_26 = arith.constant 0 : index
    %27 = vector.load %arg7[%c0_24, %c0_25, %c0_26] : memref<9x64x64xbf16, #tpu.memory_space<vmem>>, vector<1x64x64xbf16>
    %28 = vector.shape_cast %27 : vector<1x64x64xbf16> to vector<64x64xbf16>
    %cst_27 = arith.constant dense<0.000000e+00> : vector<4x64xf32>
    %29 = tpu.matmul %26, %28, %cst_27 {dimension_numbers = #tpu.dot_dimension_numbers<[1], [0], [0], [1], [0, 0, 1, 1], [], []>} : vector<4x64xbf16>, vector<64x64xbf16>, vector<4x64xf32> -> vector<4x64xf32>
    %30 = arith.addf %25, %29 : vector<4x64xf32>
    %31 = vector.extract_strided_slice %24 {offsets = [0, 16], sizes = [4, 64], strides = [1, 1]} : vector<6x96xbf16> to vector<4x64xbf16>
    %c1_28 = arith.constant 1 : index
    %c0_29 = arith.constant 0 : index
    %c0_30 = arith.constant 0 : index
    %32 = vector.load %arg7[%c1_28, %c0_29, %c0_30] : memref<9x64x64xbf16, #tpu.memory_space<vmem>>, vector<1x64x64xbf16>
    %33 = vector.shape_cast %32 : vector<1x64x64xbf16> to vector<64x64xbf16>
    %cst_31 = arith.constant dense<0.000000e+00> : vector<4x64xf32>
    %34 = tpu.matmul %31, %33, %cst_31 {dimension_numbers = #tpu.dot_dimension_numbers<[1], [0], [0], [1], [0, 0, 1, 1], [], []>} : vector<4x64xbf16>, vector<64x64xbf16>, vector<4x64xf32> -> vector<4x64xf32>
    %35 = arith.addf %30, %34 : vector<4x64xf32>
    %36 = vector.extract_strided_slice %24 {offsets = [0, 32], sizes = [4, 64], strides = [1, 1]} : vector<6x96xbf16> to vector<4x64xbf16>
    %c2 = arith.constant 2 : index
    %c0_32 = arith.constant 0 : index
    %c0_33 = arith.constant 0 : index
    %37 = vector.load %arg7[%c2, %c0_32, %c0_33] : memref<9x64x64xbf16, #tpu.memory_space<vmem>>, vector<1x64x64xbf16>
    %38 = vector.shape_cast %37 : vector<1x64x64xbf16> to vector<64x64xbf16>
    %cst_34 = arith.constant dense<0.000000e+00> : vector<4x64xf32>
    %39 = tpu.matmul %36, %38, %cst_34 {dimension_numbers = #tpu.dot_dimension_numbers<[1], [0], [0], [1], [0, 0, 1, 1], [], []>} : vector<4x64xbf16>, vector<64x64xbf16>, vector<4x64xf32> -> vector<4x64xf32>
    %40 = arith.addf %35, %39 : vector<4x64xf32>
    %41 = vector.extract_strided_slice %24 {offsets = [1, 0], sizes = [4, 64], strides = [1, 1]} : vector<6x96xbf16> to vector<4x64xbf16>
    %c3 = arith.constant 3 : index
    %c0_35 = arith.constant 0 : index
    %c0_36 = arith.constant 0 : index
    %42 = vector.load %arg7[%c3, %c0_35, %c0_36] : memref<9x64x64xbf16, #tpu.memory_space<vmem>>, vector<1x64x64xbf16>
    %43 = vector.shape_cast %42 : vector<1x64x64xbf16> to vector<64x64xbf16>
    %cst_37 = arith.constant dense<0.000000e+00> : vector<4x64xf32>
    %44 = tpu.matmul %41, %43, %cst_37 {dimension_numbers = #tpu.dot_dimension_numbers<[1], [0], [0], [1], [0, 0, 1, 1], [], []>} : vector<4x64xbf16>, vector<64x64xbf16>, vector<4x64xf32> -> vector<4x64xf32>
    %45 = arith.addf %40, %44 : vector<4x64xf32>
    %46 = vector.extract_strided_slice %24 {offsets = [1, 16], sizes = [4, 64], strides = [1, 1]} : vector<6x96xbf16> to vector<4x64xbf16>
    %c4 = arith.constant 4 : index
    %c0_38 = arith.constant 0 : index
    %c0_39 = arith.constant 0 : index
    %47 = vector.load %arg7[%c4, %c0_38, %c0_39] : memref<9x64x64xbf16, #tpu.memory_space<vmem>>, vector<1x64x64xbf16>
    %48 = vector.shape_cast %47 : vector<1x64x64xbf16> to vector<64x64xbf16>
    %cst_40 = arith.constant dense<0.000000e+00> : vector<4x64xf32>
    %49 = tpu.matmul %46, %48, %cst_40 {dimension_numbers = #tpu.dot_dimension_numbers<[1], [0], [0], [1], [0, 0, 1, 1], [], []>} : vector<4x64xbf16>, vector<64x64xbf16>, vector<4x64xf32> -> vector<4x64xf32>
    %50 = arith.addf %45, %49 : vector<4x64xf32>
    %51 = vector.extract_strided_slice %24 {offsets = [1, 32], sizes = [4, 64], strides = [1, 1]} : vector<6x96xbf16> to vector<4x64xbf16>
    %c5 = arith.constant 5 : index
    %c0_41 = arith.constant 0 : index
    %c0_42 = arith.constant 0 : index
    %52 = vector.load %arg7[%c5, %c0_41, %c0_42] : memref<9x64x64xbf16, #tpu.memory_space<vmem>>, vector<1x64x64xbf16>
    %53 = vector.shape_cast %52 : vector<1x64x64xbf16> to vector<64x64xbf16>
    %cst_43 = arith.constant dense<0.000000e+00> : vector<4x64xf32>
    %54 = tpu.matmul %51, %53, %cst_43 {dimension_numbers = #tpu.dot_dimension_numbers<[1], [0], [0], [1], [0, 0, 1, 1], [], []>} : vector<4x64xbf16>, vector<64x64xbf16>, vector<4x64xf32> -> vector<4x64xf32>
    %55 = arith.addf %50, %54 : vector<4x64xf32>
    %56 = vector.extract_strided_slice %24 {offsets = [2, 0], sizes = [4, 64], strides = [1, 1]} : vector<6x96xbf16> to vector<4x64xbf16>
    %c6 = arith.constant 6 : index
    %c0_44 = arith.constant 0 : index
    %c0_45 = arith.constant 0 : index
    %57 = vector.load %arg7[%c6, %c0_44, %c0_45] : memref<9x64x64xbf16, #tpu.memory_space<vmem>>, vector<1x64x64xbf16>
    %58 = vector.shape_cast %57 : vector<1x64x64xbf16> to vector<64x64xbf16>
    %cst_46 = arith.constant dense<0.000000e+00> : vector<4x64xf32>
    %59 = tpu.matmul %56, %58, %cst_46 {dimension_numbers = #tpu.dot_dimension_numbers<[1], [0], [0], [1], [0, 0, 1, 1], [], []>} : vector<4x64xbf16>, vector<64x64xbf16>, vector<4x64xf32> -> vector<4x64xf32>
    %60 = arith.addf %55, %59 : vector<4x64xf32>
    %61 = vector.extract_strided_slice %24 {offsets = [2, 16], sizes = [4, 64], strides = [1, 1]} : vector<6x96xbf16> to vector<4x64xbf16>
    %c7 = arith.constant 7 : index
    %c0_47 = arith.constant 0 : index
    %c0_48 = arith.constant 0 : index
    %62 = vector.load %arg7[%c7, %c0_47, %c0_48] : memref<9x64x64xbf16, #tpu.memory_space<vmem>>, vector<1x64x64xbf16>
    %63 = vector.shape_cast %62 : vector<1x64x64xbf16> to vector<64x64xbf16>
    %cst_49 = arith.constant dense<0.000000e+00> : vector<4x64xf32>
    %64 = tpu.matmul %61, %63, %cst_49 {dimension_numbers = #tpu.dot_dimension_numbers<[1], [0], [0], [1], [0, 0, 1, 1], [], []>} : vector<4x64xbf16>, vector<64x64xbf16>, vector<4x64xf32> -> vector<4x64xf32>
    %65 = arith.addf %60, %64 : vector<4x64xf32>
    %66 = vector.extract_strided_slice %24 {offsets = [2, 32], sizes = [4, 64], strides = [1, 1]} : vector<6x96xbf16> to vector<4x64xbf16>
    %c8 = arith.constant 8 : index
    %c0_50 = arith.constant 0 : index
    %c0_51 = arith.constant 0 : index
    %67 = vector.load %arg7[%c8, %c0_50, %c0_51] : memref<9x64x64xbf16, #tpu.memory_space<vmem>>, vector<1x64x64xbf16>
    %68 = vector.shape_cast %67 : vector<1x64x64xbf16> to vector<64x64xbf16>
    %cst_52 = arith.constant dense<0.000000e+00> : vector<4x64xf32>
    %69 = tpu.matmul %66, %68, %cst_52 {dimension_numbers = #tpu.dot_dimension_numbers<[1], [0], [0], [1], [0, 0, 1, 1], [], []>} : vector<4x64xbf16>, vector<64x64xbf16>, vector<4x64xf32> -> vector<4x64xf32>
    %70 = arith.addf %65, %69 : vector<4x64xf32>
    %c0_53 = arith.constant 0 : index
    %c0_54 = arith.constant 0 : index
    %71 = vector.load %arg8[%c0_53, %c0_54] : memref<1x64xf32, #tpu.memory_space<vmem>>, vector<1x64xf32>
    %72 = vector.broadcast %71 : vector<1x64xf32> to vector<4x64xf32>
    %73 = arith.addf %70, %72 : vector<4x64xf32>
    %c0_55 = arith.constant 0 : index
    %c0_56 = arith.constant 0 : index
    %c0_57 = arith.constant 0 : index
    %74 = vector.load %arg9[%c0_55, %c0_56, %c0_57] : memref<1x4x64xf32, #tpu.memory_space<vmem>>, vector<1x4x64xf32>
    %75 = vector.shape_cast %74 : vector<1x4x64xf32> to vector<4x64xf32>
    %76 = vector.shape_cast %73 : vector<4x64xf32> to vector<1x4x64xf32>
    tpu.vector_store %arg9[%c0_55, %c0_56, %c0_57], %76 {strides = array<i32>} : memref<1x4x64xf32, #tpu.memory_space<vmem>>, vector<1x4x64xf32>,
    return
  }
  func.func @transform_0(%arg0: i32) -> (i32, i32, i32) {
    %c0_i32 = arith.constant 0 : i32
    %c0_i32_0 = arith.constant 0 : i32
    %c0_i32_1 = arith.constant 0 : i32
    return %arg0, %c0_i32, %c0_i32_0 : i32, i32, i32
  }
  func.func @transform_1(%arg0: i32) -> (i32, i32, i32) {
    %c0_i32 = arith.constant 0 : i32
    %c0_i32_0 = arith.constant 0 : i32
    %c0_i32_1 = arith.constant 0 : i32
    return %arg0, %c0_i32, %c0_i32_0 : i32, i32, i32
  }
  func.func @transform_2(%arg0: i32) -> (i32, i32) {
    %c0_i32 = arith.constant 0 : i32
    %c0_i32_0 = arith.constant 0 : i32
    %c0_i32_1 = arith.constant 0 : i32
    return %c0_i32, %c0_i32_0 : i32, i32
  }
  func.func @transform_3(%arg0: i32) -> (i32, i32) {
    %c0_i32 = arith.constant 0 : i32
    %c0_i32_0 = arith.constant 0 : i32
    %c0_i32_1 = arith.constant 0 : i32
    return %c0_i32, %c0_i32_0 : i32, i32
  }
  func.func @transform_4(%arg0: i32) -> (i32, i32) {
    %c0_i32 = arith.constant 0 : i32
    %c0_i32_0 = arith.constant 0 : i32
    %c0_i32_1 = arith.constant 0 : i32
    return %c0_i32, %c0_i32_0 : i32, i32
  }
  func.func @transform_5(%arg0: i32) -> (i32, i32) {
    %c0_i32 = arith.constant 0 : i32
    %c0_i32_0 = arith.constant 0 : i32
    %c0_i32_1 = arith.constant 0 : i32
    return %c0_i32, %c0_i32_0 : i32, i32
  }
  func.func @transform_6(%arg0: i32) -> (i32, i32, i32) {
    %c0_i32 = arith.constant 0 : i32
    %c0_i32_0 = arith.constant 0 : i32
    %c0_i32_1 = arith.constant 0 : i32
    %c0_i32_2 = arith.constant 0 : i32
    return %c0_i32, %c0_i32_0, %c0_i32_1 : i32, i32, i32
  }
  func.func @transform_7(%arg0: i32) -> (i32, i32) {
    %c0_i32 = arith.constant 0 : i32
    %c0_i32_0 = arith.constant 0 : i32
    %c0_i32_1 = arith.constant 0 : i32
    return %c0_i32, %c0_i32_0 : i32, i32
  }
  func.func @transform_8(%arg0: i32) -> (i32, i32, i32) {
    %c0_i32 = arith.constant 0 : i32
    %c0_i32_0 = arith.constant 0 : i32
    %c0_i32_1 = arith.constant 0 : i32
    return %arg0, %c0_i32, %c0_i32_0 : i32, i32, i32
  }
  func.func @transform_9(%arg0: i32) -> (i32, i32, i32) {
    %c0_i32 = arith.constant 0 : i32
    %c0_i32_0 = arith.constant 0 : i32
    %c0_i32_1 = arith.constant 0 : i32
    return %arg0, %c0_i32, %c0_i32_0 : i32, i32, i32
  }
}

module attributes {stable_mosaic.version = 11 : i64} {
  func.func @kernel(%arg0: i32, %arg1: memref<1x8x64xf32, #tpu.memory_space<vmem>>, %arg2: memref<1x4x64xf32, #tpu.memory_space<vmem>>, %arg3: memref<8x4xbf16, #tpu.memory_space<vmem>>, %arg4: memref<64x128xbf16, #tpu.memory_space<vmem>>, %arg5: memref<64x128xbf16, #tpu.memory_space<vmem>>, %arg6: memref<1x128xf32, #tpu.memory_space<vmem>>, %arg7: memref<9x128x128xbf16, #tpu.memory_space<vmem>>, %arg8: memref<1x128xf32, #tpu.memory_space<vmem>>, %arg9: memref<1x8x128xf32, #tpu.memory_space<vmem>>, %arg10: memref<1x8x128xf32, #tpu.memory_space<vmem>>, %arg11: memref<10x160xbf16, #tpu.memory_space<vmem>>) attributes {dimension_semantics = [#tpu.dimension_semantics<parallel>], iteration_bounds = array<i64: 2>, scalar_prefetch = 0 : i64, scratch_operands = 1 : i64, tpu.core_type = #tpu.core_type<tc>, window_params = [{transform_indices = @transform_0, window_bounds = array<i64: 1, 8, 64>}, {transform_indices = @transform_1, window_bounds = array<i64: 1, 4, 64>}, {pipeline_mode = #tpu.pipeline_mode<synchronous>, transform_indices = @transform_2, window_bounds = array<i64: 8, 4>}, {pipeline_mode = #tpu.pipeline_mode<synchronous>, transform_indices = @transform_3, window_bounds = array<i64: 64, 128>}, {pipeline_mode = #tpu.pipeline_mode<synchronous>, transform_indices = @transform_4, window_bounds = array<i64: 64, 128>}, {pipeline_mode = #tpu.pipeline_mode<synchronous>, transform_indices = @transform_5, window_bounds = array<i64: 1, 128>}, {pipeline_mode = #tpu.pipeline_mode<synchronous>, transform_indices = @transform_6, window_bounds = array<i64: 9, 128, 128>}, {pipeline_mode = #tpu.pipeline_mode<synchronous>, transform_indices = @transform_7, window_bounds = array<i64: 1, 128>}, {transform_indices = @transform_8, window_bounds = array<i64: 1, 8, 128>}, {transform_indices = @transform_9, window_bounds = array<i64: 1, 8, 128>}]} {
    %c0 = arith.constant 0 : index
    %c0_0 = arith.constant 0 : index
    %c0_1 = arith.constant 0 : index
    %0 = vector.load %arg1[%c0, %c0_0, %c0_1] : memref<1x8x64xf32, #tpu.memory_space<vmem>>, vector<1x8x64xf32>
    %1 = vector.shape_cast %0 : vector<1x8x64xf32> to vector<8x64xf32>
    %2 = arith.truncf %1 : vector<8x64xf32> to vector<8x64xbf16>
    %c0_2 = arith.constant 0 : index
    %c0_3 = arith.constant 0 : index
    %3 = vector.load %arg5[%c0_2, %c0_3] : memref<64x128xbf16, #tpu.memory_space<vmem>>, vector<64x128xbf16>
    %cst = arith.constant dense<0.000000e+00> : vector<8x128xf32>
    %4 = tpu.matmul %2, %3, %cst {dimension_numbers = #tpu.dot_dimension_numbers<[1], [0], [0], [1], [0, 0, 1, 1], [], []>} : vector<8x64xbf16>, vector<64x128xbf16>, vector<8x128xf32> -> vector<8x128xf32>
    %c0_4 = arith.constant 0 : index
    %c0_5 = arith.constant 0 : index
    %5 = vector.load %arg6[%c0_4, %c0_5] : memref<1x128xf32, #tpu.memory_space<vmem>>, vector<1x128xf32>
    %6 = vector.broadcast %5 : vector<1x128xf32> to vector<8x128xf32>
    %7 = arith.addf %4, %6 : vector<8x128xf32>
    %c0_6 = arith.constant 0 : index
    %c0_7 = arith.constant 0 : index
    %c0_8 = arith.constant 0 : index
    %8 = vector.load %arg2[%c0_6, %c0_7, %c0_8] : memref<1x4x64xf32, #tpu.memory_space<vmem>>, vector<1x4x64xf32>
    %9 = vector.shape_cast %8 : vector<1x4x64xf32> to vector<4x64xf32>
    %10 = arith.truncf %9 : vector<4x64xf32> to vector<4x64xbf16>
    %c0_9 = arith.constant 0 : index
    %c0_10 = arith.constant 0 : index
    %11 = vector.load %arg3[%c0_9, %c0_10] : memref<8x4xbf16, #tpu.memory_space<vmem>>, vector<8x4xbf16>
    %cst_11 = arith.constant dense<0.000000e+00> : vector<8x64xf32>
    %12 = tpu.matmul %11, %10, %cst_11 {dimension_numbers = #tpu.dot_dimension_numbers<[1], [0], [0], [1], [0, 0, 1, 1], [], []>} : vector<8x4xbf16>, vector<4x64xbf16>, vector<8x64xf32> -> vector<8x64xf32>
    %13 = arith.truncf %12 : vector<8x64xf32> to vector<8x64xbf16>
    %c0_12 = arith.constant 0 : index
    %c0_13 = arith.constant 0 : index
    %14 = vector.load %arg4[%c0_12, %c0_13] : memref<64x128xbf16, #tpu.memory_space<vmem>>, vector<64x128xbf16>
    %cst_14 = arith.constant dense<0.000000e+00> : vector<8x128xf32>
    %15 = tpu.matmul %13, %14, %cst_14 {dimension_numbers = #tpu.dot_dimension_numbers<[1], [0], [0], [1], [0, 0, 1, 1], [], []>} : vector<8x64xbf16>, vector<64x128xbf16>, vector<8x128xf32> -> vector<8x128xf32>
    %16 = arith.addf %7, %15 : vector<8x128xf32>
    %c0_15 = arith.constant 0 : index
    %c0_16 = arith.constant 0 : index
    %c0_17 = arith.constant 0 : index
    %17 = vector.load %arg10[%c0_15, %c0_16, %c0_17] : memref<1x8x128xf32, #tpu.memory_space<vmem>>, vector<1x8x128xf32>
    %18 = vector.shape_cast %17 : vector<1x8x128xf32> to vector<8x128xf32>
    %19 = vector.shape_cast %16 : vector<8x128xf32> to vector<1x8x128xf32>
    tpu.vector_store %arg10[%c0_15, %c0_16, %c0_17], %19 {strides = array<i32>} : memref<1x8x128xf32, #tpu.memory_space<vmem>>, vector<1x8x128xf32>,
    %cst_18 = arith.constant 0.000000e+00 : bf16
    %20 = vector.broadcast %cst_18 : bf16 to vector<10x160xbf16>
    %c0_19 = arith.constant 0 : index
    %c0_20 = arith.constant 0 : index
    %21 = vector.load %arg11[%c0_19, %c0_20] : memref<10x160xbf16, #tpu.memory_space<vmem>>, vector<10x160xbf16>
    tpu.vector_store %arg11[%c0_19, %c0_20], %20 {strides = array<i32>} : memref<10x160xbf16, #tpu.memory_space<vmem>>, vector<10x160xbf16>,
    %22 = arith.truncf %16 : vector<8x128xf32> to vector<8x128xbf16>
    %c1 = arith.constant 1 : index
    %c16 = arith.constant 16 : index
    %23 = vector.load %arg11[%c1, %c16] : memref<10x160xbf16, #tpu.memory_space<vmem>>, vector<8x128xbf16>
    tpu.vector_store %arg11[%c1, %c16], %22 {strides = array<i32>} : memref<10x160xbf16, #tpu.memory_space<vmem>>, vector<8x128xbf16>,
    %c0_21 = arith.constant 0 : index
    %c0_22 = arith.constant 0 : index
    %24 = vector.load %arg11[%c0_21, %c0_22] : memref<10x160xbf16, #tpu.memory_space<vmem>>, vector<10x160xbf16>
    %cst_23 = arith.constant 0.000000e+00 : f32
    %25 = vector.broadcast %cst_23 : f32 to vector<8x128xf32>
    %26 = vector.extract_strided_slice %24 {offsets = [0, 0], sizes = [8, 128], strides = [1, 1]} : vector<10x160xbf16> to vector<8x128xbf16>
    %c0_24 = arith.constant 0 : index
    %c0_25 = arith.constant 0 : index
    %c0_26 = arith.constant 0 : index
    %27 = vector.load %arg7[%c0_24, %c0_25, %c0_26] : memref<9x128x128xbf16, #tpu.memory_space<vmem>>, vector<1x128x128xbf16>
    %28 = vector.shape_cast %27 : vector<1x128x128xbf16> to vector<128x128xbf16>
    %cst_27 = arith.constant dense<0.000000e+00> : vector<8x128xf32>
    %29 = tpu.matmul %26, %28, %cst_27 {dimension_numbers = #tpu.dot_dimension_numbers<[1], [0], [0], [1], [0, 0, 1, 1], [], []>} : vector<8x128xbf16>, vector<128x128xbf16>, vector<8x128xf32> -> vector<8x128xf32>
    %30 = arith.addf %25, %29 : vector<8x128xf32>
    %31 = vector.extract_strided_slice %24 {offsets = [0, 16], sizes = [8, 128], strides = [1, 1]} : vector<10x160xbf16> to vector<8x128xbf16>
    %c1_28 = arith.constant 1 : index
    %c0_29 = arith.constant 0 : index
    %c0_30 = arith.constant 0 : index
    %32 = vector.load %arg7[%c1_28, %c0_29, %c0_30] : memref<9x128x128xbf16, #tpu.memory_space<vmem>>, vector<1x128x128xbf16>
    %33 = vector.shape_cast %32 : vector<1x128x128xbf16> to vector<128x128xbf16>
    %cst_31 = arith.constant dense<0.000000e+00> : vector<8x128xf32>
    %34 = tpu.matmul %31, %33, %cst_31 {dimension_numbers = #tpu.dot_dimension_numbers<[1], [0], [0], [1], [0, 0, 1, 1], [], []>} : vector<8x128xbf16>, vector<128x128xbf16>, vector<8x128xf32> -> vector<8x128xf32>
    %35 = arith.addf %30, %34 : vector<8x128xf32>
    %36 = vector.extract_strided_slice %24 {offsets = [0, 32], sizes = [8, 128], strides = [1, 1]} : vector<10x160xbf16> to vector<8x128xbf16>
    %c2 = arith.constant 2 : index
    %c0_32 = arith.constant 0 : index
    %c0_33 = arith.constant 0 : index
    %37 = vector.load %arg7[%c2, %c0_32, %c0_33] : memref<9x128x128xbf16, #tpu.memory_space<vmem>>, vector<1x128x128xbf16>
    %38 = vector.shape_cast %37 : vector<1x128x128xbf16> to vector<128x128xbf16>
    %cst_34 = arith.constant dense<0.000000e+00> : vector<8x128xf32>
    %39 = tpu.matmul %36, %38, %cst_34 {dimension_numbers = #tpu.dot_dimension_numbers<[1], [0], [0], [1], [0, 0, 1, 1], [], []>} : vector<8x128xbf16>, vector<128x128xbf16>, vector<8x128xf32> -> vector<8x128xf32>
    %40 = arith.addf %35, %39 : vector<8x128xf32>
    %41 = vector.extract_strided_slice %24 {offsets = [1, 0], sizes = [8, 128], strides = [1, 1]} : vector<10x160xbf16> to vector<8x128xbf16>
    %c3 = arith.constant 3 : index
    %c0_35 = arith.constant 0 : index
    %c0_36 = arith.constant 0 : index
    %42 = vector.load %arg7[%c3, %c0_35, %c0_36] : memref<9x128x128xbf16, #tpu.memory_space<vmem>>, vector<1x128x128xbf16>
    %43 = vector.shape_cast %42 : vector<1x128x128xbf16> to vector<128x128xbf16>
    %cst_37 = arith.constant dense<0.000000e+00> : vector<8x128xf32>
    %44 = tpu.matmul %41, %43, %cst_37 {dimension_numbers = #tpu.dot_dimension_numbers<[1], [0], [0], [1], [0, 0, 1, 1], [], []>} : vector<8x128xbf16>, vector<128x128xbf16>, vector<8x128xf32> -> vector<8x128xf32>
    %45 = arith.addf %40, %44 : vector<8x128xf32>
    %46 = vector.extract_strided_slice %24 {offsets = [1, 16], sizes = [8, 128], strides = [1, 1]} : vector<10x160xbf16> to vector<8x128xbf16>
    %c4 = arith.constant 4 : index
    %c0_38 = arith.constant 0 : index
    %c0_39 = arith.constant 0 : index
    %47 = vector.load %arg7[%c4, %c0_38, %c0_39] : memref<9x128x128xbf16, #tpu.memory_space<vmem>>, vector<1x128x128xbf16>
    %48 = vector.shape_cast %47 : vector<1x128x128xbf16> to vector<128x128xbf16>
    %cst_40 = arith.constant dense<0.000000e+00> : vector<8x128xf32>
    %49 = tpu.matmul %46, %48, %cst_40 {dimension_numbers = #tpu.dot_dimension_numbers<[1], [0], [0], [1], [0, 0, 1, 1], [], []>} : vector<8x128xbf16>, vector<128x128xbf16>, vector<8x128xf32> -> vector<8x128xf32>
    %50 = arith.addf %45, %49 : vector<8x128xf32>
    %51 = vector.extract_strided_slice %24 {offsets = [1, 32], sizes = [8, 128], strides = [1, 1]} : vector<10x160xbf16> to vector<8x128xbf16>
    %c5 = arith.constant 5 : index
    %c0_41 = arith.constant 0 : index
    %c0_42 = arith.constant 0 : index
    %52 = vector.load %arg7[%c5, %c0_41, %c0_42] : memref<9x128x128xbf16, #tpu.memory_space<vmem>>, vector<1x128x128xbf16>
    %53 = vector.shape_cast %52 : vector<1x128x128xbf16> to vector<128x128xbf16>
    %cst_43 = arith.constant dense<0.000000e+00> : vector<8x128xf32>
    %54 = tpu.matmul %51, %53, %cst_43 {dimension_numbers = #tpu.dot_dimension_numbers<[1], [0], [0], [1], [0, 0, 1, 1], [], []>} : vector<8x128xbf16>, vector<128x128xbf16>, vector<8x128xf32> -> vector<8x128xf32>
    %55 = arith.addf %50, %54 : vector<8x128xf32>
    %56 = vector.extract_strided_slice %24 {offsets = [2, 0], sizes = [8, 128], strides = [1, 1]} : vector<10x160xbf16> to vector<8x128xbf16>
    %c6 = arith.constant 6 : index
    %c0_44 = arith.constant 0 : index
    %c0_45 = arith.constant 0 : index
    %57 = vector.load %arg7[%c6, %c0_44, %c0_45] : memref<9x128x128xbf16, #tpu.memory_space<vmem>>, vector<1x128x128xbf16>
    %58 = vector.shape_cast %57 : vector<1x128x128xbf16> to vector<128x128xbf16>
    %cst_46 = arith.constant dense<0.000000e+00> : vector<8x128xf32>
    %59 = tpu.matmul %56, %58, %cst_46 {dimension_numbers = #tpu.dot_dimension_numbers<[1], [0], [0], [1], [0, 0, 1, 1], [], []>} : vector<8x128xbf16>, vector<128x128xbf16>, vector<8x128xf32> -> vector<8x128xf32>
    %60 = arith.addf %55, %59 : vector<8x128xf32>
    %61 = vector.extract_strided_slice %24 {offsets = [2, 16], sizes = [8, 128], strides = [1, 1]} : vector<10x160xbf16> to vector<8x128xbf16>
    %c7 = arith.constant 7 : index
    %c0_47 = arith.constant 0 : index
    %c0_48 = arith.constant 0 : index
    %62 = vector.load %arg7[%c7, %c0_47, %c0_48] : memref<9x128x128xbf16, #tpu.memory_space<vmem>>, vector<1x128x128xbf16>
    %63 = vector.shape_cast %62 : vector<1x128x128xbf16> to vector<128x128xbf16>
    %cst_49 = arith.constant dense<0.000000e+00> : vector<8x128xf32>
    %64 = tpu.matmul %61, %63, %cst_49 {dimension_numbers = #tpu.dot_dimension_numbers<[1], [0], [0], [1], [0, 0, 1, 1], [], []>} : vector<8x128xbf16>, vector<128x128xbf16>, vector<8x128xf32> -> vector<8x128xf32>
    %65 = arith.addf %60, %64 : vector<8x128xf32>
    %66 = vector.extract_strided_slice %24 {offsets = [2, 32], sizes = [8, 128], strides = [1, 1]} : vector<10x160xbf16> to vector<8x128xbf16>
    %c8 = arith.constant 8 : index
    %c0_50 = arith.constant 0 : index
    %c0_51 = arith.constant 0 : index
    %67 = vector.load %arg7[%c8, %c0_50, %c0_51] : memref<9x128x128xbf16, #tpu.memory_space<vmem>>, vector<1x128x128xbf16>
    %68 = vector.shape_cast %67 : vector<1x128x128xbf16> to vector<128x128xbf16>
    %cst_52 = arith.constant dense<0.000000e+00> : vector<8x128xf32>
    %69 = tpu.matmul %66, %68, %cst_52 {dimension_numbers = #tpu.dot_dimension_numbers<[1], [0], [0], [1], [0, 0, 1, 1], [], []>} : vector<8x128xbf16>, vector<128x128xbf16>, vector<8x128xf32> -> vector<8x128xf32>
    %70 = arith.addf %65, %69 : vector<8x128xf32>
    %c0_53 = arith.constant 0 : index
    %c0_54 = arith.constant 0 : index
    %71 = vector.load %arg8[%c0_53, %c0_54] : memref<1x128xf32, #tpu.memory_space<vmem>>, vector<1x128xf32>
    %72 = vector.broadcast %71 : vector<1x128xf32> to vector<8x128xf32>
    %73 = arith.addf %70, %72 : vector<8x128xf32>
    %c0_55 = arith.constant 0 : index
    %c0_56 = arith.constant 0 : index
    %c0_57 = arith.constant 0 : index
    %74 = vector.load %arg9[%c0_55, %c0_56, %c0_57] : memref<1x8x128xf32, #tpu.memory_space<vmem>>, vector<1x8x128xf32>
    %75 = vector.shape_cast %74 : vector<1x8x128xf32> to vector<8x128xf32>
    %76 = vector.shape_cast %73 : vector<8x128xf32> to vector<1x8x128xf32>
    tpu.vector_store %arg9[%c0_55, %c0_56, %c0_57], %76 {strides = array<i32>} : memref<1x8x128xf32, #tpu.memory_space<vmem>>, vector<1x8x128xf32>,
    return
  }
  func.func @transform_0(%arg0: i32) -> (i32, i32, i32) {
    %c0_i32 = arith.constant 0 : i32
    %c0_i32_0 = arith.constant 0 : i32
    %c0_i32_1 = arith.constant 0 : i32
    return %arg0, %c0_i32, %c0_i32_0 : i32, i32, i32
  }
  func.func @transform_1(%arg0: i32) -> (i32, i32, i32) {
    %c0_i32 = arith.constant 0 : i32
    %c0_i32_0 = arith.constant 0 : i32
    %c0_i32_1 = arith.constant 0 : i32
    return %arg0, %c0_i32, %c0_i32_0 : i32, i32, i32
  }
  func.func @transform_2(%arg0: i32) -> (i32, i32) {
    %c0_i32 = arith.constant 0 : i32
    %c0_i32_0 = arith.constant 0 : i32
    %c0_i32_1 = arith.constant 0 : i32
    return %c0_i32, %c0_i32_0 : i32, i32
  }
  func.func @transform_3(%arg0: i32) -> (i32, i32) {
    %c0_i32 = arith.constant 0 : i32
    %c0_i32_0 = arith.constant 0 : i32
    %c0_i32_1 = arith.constant 0 : i32
    return %c0_i32, %c0_i32_0 : i32, i32
  }
  func.func @transform_4(%arg0: i32) -> (i32, i32) {
    %c0_i32 = arith.constant 0 : i32
    %c0_i32_0 = arith.constant 0 : i32
    %c0_i32_1 = arith.constant 0 : i32
    return %c0_i32, %c0_i32_0 : i32, i32
  }
  func.func @transform_5(%arg0: i32) -> (i32, i32) {
    %c0_i32 = arith.constant 0 : i32
    %c0_i32_0 = arith.constant 0 : i32
    %c0_i32_1 = arith.constant 0 : i32
    return %c0_i32, %c0_i32_0 : i32, i32
  }
  func.func @transform_6(%arg0: i32) -> (i32, i32, i32) {
    %c0_i32 = arith.constant 0 : i32
    %c0_i32_0 = arith.constant 0 : i32
    %c0_i32_1 = arith.constant 0 : i32
    %c0_i32_2 = arith.constant 0 : i32
    return %c0_i32, %c0_i32_0, %c0_i32_1 : i32, i32, i32
  }
  func.func @transform_7(%arg0: i32) -> (i32, i32) {
    %c0_i32 = arith.constant 0 : i32
    %c0_i32_0 = arith.constant 0 : i32
    %c0_i32_1 = arith.constant 0 : i32
    return %c0_i32, %c0_i32_0 : i32, i32
  }
  func.func @transform_8(%arg0: i32) -> (i32, i32, i32) {
    %c0_i32 = arith.constant 0 : i32
    %c0_i32_0 = arith.constant 0 : i32
    %c0_i32_1 = arith.constant 0 : i32
    return %arg0, %c0_i32, %c0_i32_0 : i32, i32, i32
  }
  func.func @transform_9(%arg0: i32) -> (i32, i32, i32) {
    %c0_i32 = arith.constant 0 : i32
    %c0_i32_0 = arith.constant 0 : i32
    %c0_i32_1 = arith.constant 0 : i32
    return %arg0, %c0_i32, %c0_i32_0 : i32, i32, i32
  }
}

</mosaic_0001>

<llo_original>
// kernel: backbone_with_fpn_forward.6
$region0: #{backbone_with_fpn_forward.6}
  #allocation0 [shape = 'u32[]', space=smem, size = 0x4, offset = 0x4, fixed_abs, tag = 'smem constant byte address 0x4 - core index']
  #allocation1 [shape = 'u32[144,128]{1,0:T(1,128)}', space=vmem, size = 0x12000, scoped, tag = 'internal scratch']
  %s0 = inlined_call_operand.vmem [shape: f32[4,2,9,36], index: 0, kind: input, shape index: {}]
  %s1 = inlined_call_operand.vmem [shape: bf16[9,32,64], index: 1, kind: input, shape index: {}]
  %s2 = inlined_call_operand.vmem [shape: f32[1,64], index: 2, kind: input, shape index: {}]
  %s3 = inlined_call_operand.vmem [shape: f32[2,8,64], index: 3, kind: output, shape index: {}]
  %s4 = sld [smem:[#allocation0]]
  $region83: #{backbone_with_fpn_forward.6} parent=0
    _
  %s6 = ssub.s32 1, %s4
  %s7 = scalar_select 0, %s6, %s4
  $region1: #{backbone_with_fpn_forward.6} parent=0
    #allocation2 [shape = 'u8[65536]{0}', space=vmem, size = 0x10000, scoped, tag = 'input window, operand 0']
    loop: start=0, step=1, limit=4
    $region2: #{backbone_with_fpn_forward.6} parent=1 // loop_pre_header
      _
    $region3: #{backbone_with_fpn_forward.6} parent=1 // loop_header
      %s9 = sphi 0, %s13
      %p10 = scmp.ge.s32.totalorder %s9, 4
      %s19 = sphi 0, %s21
      %s22 = sphi 0, %s19
      %s23 = sphi 0, %s22
      %s39 = sphi 0, %s23
      %s43 = sphi 0, %s43
      %s45 = sphi 0, %s43
      %s46 = sphi 0, %s45
      %s60 = sphi 0, %s46
      %s64 = sphi 0, %s64
      %s66 = sphi 0, %s64
      %s67 = sphi 0, %s66
      %s81 = sphi 0, %s67
      %s87 = sphi 0, %s89
      %s90 = sphi 0, %s87
      %s91 = sphi 0, %s90
      %s107 = sphi 0, %s91
    $region4: #{backbone_with_fpn_forward.6} parent=1 // loop_header_branch
      %12 = sbr.rel (%p10) target = $region8
    $region5: #{backbone_with_fpn_forward.6} parent=1 // loop_body
      %s14 = ssub.s32 %s9, 1
      %s15 = ssub.s32 %s9, 2
      %s16 = sadd.s32 %s9, 1
      %s17 = ssub.s32 %s9, %s16
      %p18 = scmp.eq.s32.totalorder %s17, 0
      %s20 = sadd.s32 %s19, 1
      %s21 = scalar_select %p18, %s19, %s20
      %p24 = pneg %p18
      %p25 = scmp.eq.s32.totalorder %s9, 1
      %p26 = por %p24, %p25
      %p27 = scmp.ne.s32.totalorder %s19, %s22
      %p28 = scmp.eq.s32.totalorder %s9, 0
      %p29 = por %p27, %p28
      %p30 = scmp.ne.s32.totalorder %s19, %s22
      %p31 = scmp.eq.s32.totalorder %s14, 1
      %p32 = por %p30, %p31
      %p33 = scmp.ne.s32.totalorder %s22, %s23
      %p34 = scmp.eq.s32.totalorder %s14, 0
      %p35 = por %p33, %p34
      %p36 = scmp.ne.s32.totalorder %s22, %s23
      %p37 = scmp.eq.s32.totalorder %s15, 1
      %p38 = por %p36, %p37
      %p40 = scmp.ne.s32.totalorder %s23, %s39
      %p41 = scmp.eq.s32.totalorder %s15, 0
      %p42 = por %p40, %p41
      %s44 = sadd.s32 %s43, 1
      %p47 = scmp.eq.s32.totalorder %s9, 1
      %p48 = scmp.ne.s32.totalorder %s43, %s45
      %p49 = scmp.eq.s32.totalorder %s9, 0
      %p50 = por %p48, %p49
      %p51 = scmp.ne.s32.totalorder %s43, %s45
      %p52 = scmp.eq.s32.totalorder %s14, 1
      %p53 = por %p51, %p52
      %p54 = scmp.ne.s32.totalorder %s45, %s46
      %p55 = scmp.eq.s32.totalorder %s14, 0
      %p56 = por %p54, %p55
      %p57 = scmp.ne.s32.totalorder %s45, %s46
      %p58 = scmp.eq.s32.totalorder %s15, 1
      %p59 = por %p57, %p58
      %p61 = scmp.ne.s32.totalorder %s46, %s60
      %p62 = scmp.eq.s32.totalorder %s15, 0
      %p63 = por %p61, %p62
      %s65 = sadd.s32 %s64, 1
      %p68 = scmp.eq.s32.totalorder %s9, 1
      %p69 = scmp.ne.s32.totalorder %s64, %s66
      %p70 = scmp.eq.s32.totalorder %s9, 0
      %p71 = por %p69, %p70
      %p72 = scmp.ne.s32.totalorder %s64, %s66
      %p73 = scmp.eq.s32.totalorder %s14, 1
      %p74 = por %p72, %p73
      %p75 = scmp.ne.s32.totalorder %s66, %s67
      %p76 = scmp.eq.s32.totalorder %s14, 0
      %p77 = por %p75, %p76
      %p78 = scmp.ne.s32.totalorder %s66, %s67
      %p79 = scmp.eq.s32.totalorder %s15, 1
      %p80 = por %p78, %p79
      %p82 = scmp.ne.s32.totalorder %s67, %s81
      %p83 = scmp.eq.s32.totalorder %s15, 0
      %p84 = por %p82, %p83
      %s85 = ssub.s32 %s9, %s16
      %p86 = scmp.eq.s32.totalorder %s85, 0
      %s88 = sadd.s32 %s87, 1
      %s89 = scalar_select %p86, %s87, %s88
      %p92 = pneg %p86
      %p93 = scmp.eq.s32.totalorder %s9, 1
      %p94 = por %p92, %p93
      %p95 = scmp.ne.s32.totalorder %s87, %s90
      %p96 = scmp.eq.s32.totalorder %s9, 0
      %p97 = por %p95, %p96
      %p98 = scmp.ne.s32.totalorder %s87, %s90
      %p99 = scmp.eq.s32.totalorder %s14, 1
      %p100 = por %p98, %p99
      %p101 = scmp.ne.s32.totalorder %s90, %s91
      %p102 = scmp.eq.s32.totalorder %s14, 0
      %p103 = por %p101, %p102
      %p104 = scmp.ne.s32.totalorder %s90, %s91
      %p105 = scmp.eq.s32.totalorder %s15, 1
      %p106 = por %p104, %p105
      %p108 = scmp.ne.s32.totalorder %s91, %s107
      %p109 = scmp.eq.s32.totalorder %s15, 0
      %p110 = por %p108, %p109
      %p111 = scmp.le.s32.totalorder 1, %s9
      %p112 = scmp.lt.s32.totalorder %s9, 3
      %p113 = pnand %p111, %p112
      %p114 = pneg %p113
      // Predicated region
      $region9: #{backbone_with_fpn_forward.6} parent=5 // pred_check
        _
      $region10: #{backbone_with_fpn_forward.6} parent=5 // pred_check_branch
        %116 = sbr.rel (%p113) target = $region12
      $region11: #{backbone_with_fpn_forward.6} parent=5 // pred_region
        %s117 = ssub.s32 %s9, 1
        // Predicated region
        $region13: #{backbone_with_fpn_forward.6} parent=11 // pred_check
          %p118 = pneg %p56
        $region14: #{backbone_with_fpn_forward.6} parent=11 // pred_check_branch
          %120 = sbr.rel (%p118) target = $region16
        $region15: #{backbone_with_fpn_forward.6} parent=11 // pred_region
          _
        $region16: #{backbone_with_fpn_forward.6} parent=11 // pred_fallthru
          _
        // Predicated region
        $region17: #{backbone_with_fpn_forward.6} parent=11 // pred_check
          %p121 = pneg %p77
        $region18: #{backbone_with_fpn_forward.6} parent=11 // pred_check_branch
          %123 = sbr.rel (%p121) target = $region20
        $region19: #{backbone_with_fpn_forward.6} parent=11 // pred_region
          _
        $region20: #{backbone_with_fpn_forward.6} parent=11 // pred_fallthru
          _
      $region12: #{backbone_with_fpn_forward.6} parent=5 // pred_fallthru
        _
      %p124 = scmp.lt.s32.totalorder %s9, 2
      // Predicated region
      $region21: #{backbone_with_fpn_forward.6} parent=5 // pred_check
        %p125 = pneg %p124
      $region22: #{backbone_with_fpn_forward.6} parent=5 // pred_check_branch
        %127 = sbr.rel (%p125) target = $region24
      $region23: #{backbone_with_fpn_forward.6} parent=5 // pred_region
        // Predicated region
        $region25: #{backbone_with_fpn_forward.6} parent=23 // pred_check
          %p128 = pneg %p29
        $region26: #{backbone_with_fpn_forward.6} parent=23 // pred_check_branch
          %130 = sbr.rel (%p128) target = $region28
        $region27: #{backbone_with_fpn_forward.6} parent=23 // pred_region
          %s131 = sand.u32 %s19, 1
          %s132 = sand.u32 %s19, 1
          %s133 = smul.addr %s132, 64
          %s134 = scalar_lea.vmem [#allocation2], %s133
          %s135 = smul.addr %s9, 2
          %s136 = smul.addr %s135, 8
          %s137 = scalar_lea.vmem %s0, %s136
          // Predicated region
          $region29: #{backbone_with_fpn_forward.6} parent=27 // pred_check
            _
          $region30: #{backbone_with_fpn_forward.6} parent=27 // pred_check_branch
            %139 = sbr.rel (0) target = $region32
          $region31: #{backbone_with_fpn_forward.6} parent=27 // pred_region
            // Predicated region
            $region33: #{backbone_with_fpn_forward.6} parent=31 // pred_check
              _
            $region34: #{backbone_with_fpn_forward.6} parent=31 // pred_check_branch
              %141 = sbr.rel (0) target = $region36
            $region35: #{backbone_with_fpn_forward.6} parent=31 // pred_region
              // Predicated region
              $region48: #{backbone_with_fpn_forward.6} parent=35 // pred_check
                _
              $region49: #{backbone_with_fpn_forward.6} parent=35 // pred_check_branch
                %170 = sbr.rel (0) target = $region51
              $region50: #{backbone_with_fpn_forward.6} parent=35 // pred_region
                loop: start=0, step=1, limit=1
                $region52: #{backbone_with_fpn_forward.6} parent=50 // loop_pre_header
                  _
                $region53: #{backbone_with_fpn_forward.6} parent=50 // loop_header
                  %s172 = sphi 0, %s176
                  %p173 = scmp.ge.s32.totalorder %s172, 1
                  %s177 = sphi %s137, %s137
                  %s178 = sphi %s134, %s134
                $region54: #{backbone_with_fpn_forward.6} parent=50 // loop_header_branch
                  %175 = sbr.rel (%p173) target = $region58
                $region55: #{backbone_with_fpn_forward.6} parent=50 // loop_body
                  %v179 = vld [vmem:[%s177] sm:$0xff]
                  %180 = vst [vmem:[%s178] sm:$0xff] %v179
                  %v181 = vld [vmem:[%s177 + $0x8] sm:$0xff]
                  %182 = vst [vmem:[%s178 + $0x8] sm:$0xff] %v181
                  %v183 = vld [vmem:[%s177 + $0x20] sm:$0xff]
                  %184 = vst [vmem:[%s178 + $0x10] sm:$0xff] %v183
                  %v185 = vld [vmem:[%s177 + $0x28] sm:$0xff]
                  %186 = vst [vmem:[%s178 + $0x18] sm:$0xff] %v185
                  %v187 = vld [vmem:[%s177 + $0x40] sm:$0xff]
                  %188 = vst [vmem:[%s178 + $0x20] sm:$0xff] %v187
                  %v189 = vld [vmem:[%s177 + $0x48] sm:$0xff]
                  %190 = vst [vmem:[%s178 + $0x28] sm:$0xff] %v189
                  %v191 = vld [vmem:[%s177 + $0x60] sm:$0xff]
                  %192 = vst [vmem:[%s178 + $0x30] sm:$0xff] %v191
                  %v193 = vld [vmem:[%s177 + $0x68] sm:$0xff]
                  %194 = vst [vmem:[%s178 + $0x38] sm:$0xff] %v193
                $region56: #{backbone_with_fpn_forward.6} parent=50 // loop_footer
                  %s176 = sadd.s32 1, %s172
                $region57: #{backbone_with_fpn_forward.6} parent=50 // loop_footer_branch
                  %171 = sbr.rel target = $region53
                $region58: #{backbone_with_fpn_forward.6} parent=50 // loop_exit
                  _
              $region51: #{backbone_with_fpn_forward.6} parent=35 // pred_fallthru
                _
              // Predicated region
              $region59: #{backbone_with_fpn_forward.6} parent=35 // pred_check
                _
              $region60: #{backbone_with_fpn_forward.6} parent=35 // pred_check_branch
                %196 = sbr.rel target = $region62
              $region61: #{backbone_with_fpn_forward.6} parent=35 // pred_region
                _
              $region62: #{backbone_with_fpn_forward.6} parent=35 // pred_fallthru
                _
            $region36: #{backbone_with_fpn_forward.6} parent=31 // pred_fallthru
              _
            // Predicated region
            $region37: #{backbone_with_fpn_forward.6} parent=31 // pred_check
              _
            $region38: #{backbone_with_fpn_forward.6} parent=31 // pred_check_branch
              %143 = sbr.rel target = $region40
            $region39: #{backbone_with_fpn_forward.6} parent=31 // pred_region
              loop: start=0, step=1, limit=1
              $region41: #{backbone_with_fpn_forward.6} parent=39 // loop_pre_header
                _
              $region42: #{backbone_with_fpn_forward.6} parent=39 // loop_header
                %s146 = sphi 0, %s150
                %p147 = scmp.ge.s32.totalorder %s146, 1
                %s151 = sphi %s137, %s137
                %s152 = sphi %s134, %s134
              $region43: #{backbone_with_fpn_forward.6} parent=39 // loop_header_branch
                %149 = sbr.rel (%p147) target = $region47
              $region44: #{backbone_with_fpn_forward.6} parent=39 // loop_body
                %v153 = vld [vmem:[%s151] sm:$0xff]
                %154 = vst [vmem:[%s152] sm:$0xff] %v153
                %v155 = vld [vmem:[%s151 + $0x8] sm:$0xff]
                %156 = vst [vmem:[%s152 + $0x8] sm:$0xff] %v155
                %v157 = vld [vmem:[%s151 + $0x20] sm:$0xff]
                %158 = vst [vmem:[%s152 + $0x10] sm:$0xff] %v157
                %v159 = vld [vmem:[%s151 + $0x28] sm:$0xff]
                %160 = vst [vmem:[%s152 + $0x18] sm:$0xff] %v159
                %v161 = vld [vmem:[%s151 + $0x40] sm:$0xff]
                %162 = vst [vmem:[%s152 + $0x20] sm:$0xff] %v161
                %v163 = vld [vmem:[%s151 + $0x48] sm:$0xff]
                %164 = vst [vmem:[%s152 + $0x28] sm:$0xff] %v163
                %v165 = vld [vmem:[%s151 + $0x60] sm:$0xff]
                %166 = vst [vmem:[%s152 + $0x30] sm:$0xff] %v165
                %v167 = vld [vmem:[%s151 + $0x68] sm:$0xff]
                %168 = vst [vmem:[%s152 + $0x38] sm:$0xff] %v167
              $region45: #{backbone_with_fpn_forward.6} parent=39 // loop_footer
                %s150 = sadd.s32 1, %s146
              $region46: #{backbone_with_fpn_forward.6} parent=39 // loop_footer_branch
                %145 = sbr.rel target = $region42
              $region47: #{backbone_with_fpn_forward.6} parent=39 // loop_exit
                _
            $region40: #{backbone_with_fpn_forward.6} parent=31 // pred_fallthru
              _
          $region32: #{backbone_with_fpn_forward.6} parent=27 // pred_fallthru
            _
          %197 = vnop
        $region28: #{backbone_with_fpn_forward.6} parent=23 // pred_fallthru
          _
      $region24: #{backbone_with_fpn_forward.6} parent=5 // pred_fallthru
        _
      %p198 = scmp.le.s32.totalorder 1, %s9
      %p199 = scmp.lt.s32.totalorder %s9, 3
      %p200 = pnand %p198, %p199
      %p201 = pneg %p200
      // Predicated region
      $region63: #{backbone_with_fpn_forward.6} parent=5 // pred_check
        _
      $region64: #{backbone_with_fpn_forward.6} parent=5 // pred_check_branch
        %203 = sbr.rel (%p200) target = $region66
      $region65: #{backbone_with_fpn_forward.6} parent=5 // pred_region
        %s204 = ssub.s32 %s9, 1
        %s205 = sand.u32 %s22, 1
        %s206 = sand.u32 %s22, 1
        %s207 = smul.addr %s206, 64
        %s208 = scalar_lea.vmem [#allocation2], %s207
        // Predicated region
        $region67: #{backbone_with_fpn_forward.6} parent=65 // pred_check
          %p209 = pneg %p35
        $region68: #{backbone_with_fpn_forward.6} parent=65 // pred_check_branch
          %211 = sbr.rel (%p209) target = $region70
        $region69: #{backbone_with_fpn_forward.6} parent=65 // pred_region
          _
        $region70: #{backbone_with_fpn_forward.6} parent=65 // pred_fallthru
          _
        %s212 = sand.u32 %s22, 1
        %s213 = sand.u32 %s22, 1
        %s214 = smul.addr %s213, 64
        %s215 = scalar_lea.vmem [#allocation2], %s214
        %p216 = pneg %p35
        %p217 = pneg %p32
        %p218 = pneg %p56
        %p219 = pneg %p53
        %p220 = pneg %p77
        %p221 = pneg %p74
        %p222 = pneg %p103
        %p223 = pneg %p100
        %p224 = scmp.lt.s32.totalorder %s14, 1
        %s225 = scalar_select %p224, %s14, 1
        %s226 = smul.addr %s225, 8
        %s227 = scalar_lea.vmem %s3, %s226
        %p228 = scmp.lt.s32.totalorder %s14, 1
        %s229 = scalar_select %p228, %s14, 1
        %s230 = smul.addr %s229, 8
        %s231 = scalar_lea.vmem %s3, %s230
        %v233 = vld [vmem:[%s208] sm:$0xff]
        %v234 = vpack.c.bf16 %v233, %v233
        %v235 = vld [vmem:[%s1] sm:$0xf]
        %v236 = vld [vmem:[%s1 + $0x4] sm:$0xf]
        %v237 = vld [vmem:[%s1 + $0x8] sm:$0xf]
        %v238 = vld [vmem:[%s1 + $0xc] sm:$0xf]
        %s239 = scalar_lea.vmem %s208, 16 [#allocation2]
        %v240 = vld [vmem:[%s239] sm:$0xff]
        %v241 = vpack.c.bf16 %v240, %v240
        %s242 = scalar_lea.vmem %s1, 16
        %v243 = vld [vmem:[%s242] sm:$0xf]
        %v244 = vld [vmem:[%s242 + $0x4] sm:$0xf]
        %v245 = vld [vmem:[%s242 + $0x8] sm:$0xf]
        %v246 = vld [vmem:[%s242 + $0xc] sm:$0xf]
        %v251 = vunpack.c.l.b16 %v243
        %v252 = vunpack.c.l.b16 %v244
        %v253 = vunpack.c.l.b16 %v245
        %v254 = vunpack.c.l.b16 %v246
        %v255 = vpack.c.b16 %v252, %v251
        %v256 = vpack.c.b16 %v254, %v253
        %vm259 = vcmask 261120
        %v261 = vsel %vm259, %v241, 0
        %263 = vmatprep.subr.bf16.mxu0 0
        %264 = vmatpush1.bf16.msra.mxu0 %v255
        %265 = vmatprep.subr.bf16.mxu0 0
        %266 = vmatpush1.bf16.msra.mxu0 %v256
        %267 = vmatprep.subr.bf16.mxu0 0
        %268 = vmatpush1.bf16.msra.mxu0 0
        %269 = vmatprep.subr.bf16.mxu0 0
        %270 = vmatpush1.bf16.msra.mxu0 0
        %271 = vmatprep.subr.bf16.mxu0 0
        %272 = vmatpush1.bf16.msra.mxu0 0
        %273 = vmatprep.subr.bf16.mxu0 0
        %274 = vmatpush1.bf16.msra.mxu0 0
        %275 = vmatprep.subr.bf16.mxu0 0
        %276 = vmatpush1.bf16.msra.mxu0 0
        %277 = vmatprep.subr.bf16.mxu0 0
        %278 = vmatpush1.bf16.msra.mxu0 0
        %279 = vmatprep.subr.bf16.mxu0 0
        %280 = vmatpush1.bf16.msra.mxu0 0
        %281 = vmatprep.subr.bf16.mxu0 0
        %282 = vmatpush1.bf16.msra.mxu0 0
        %283 = vmatprep.subr.bf16.mxu0 0
        %284 = vmatpush1.bf16.msra.mxu0 0
        %285 = vmatprep.subr.bf16.mxu0 0
        %286 = vmatpush1.bf16.msra.mxu0 0
        %287 = vmatprep.subr.bf16.mxu0 0
        %288 = vmatpush1.bf16.msra.mxu0 0
        %289 = vmatprep.subr.bf16.mxu0 0
        %290 = vmatpush1.bf16.msra.mxu0 0
        %291 = vmatprep.subr.bf16.mxu0 0
        %292 = vmatpush1.bf16.msra.mxu0 0
        %293 = vmatprep.subr.bf16.mxu0 0
        %294 = vmatpush1.bf16.msra.mxu0 0
        %295 = vmatprep.mubr.bf16.mxu0 0
        %296 = vmatmul.mubr.bf16.gmra.mrb[0].mxu0 %v261
        %v297 = vpop.f32.mrb[0].mxu0
        %v298 = vadd.f32 0.0, %v297
        %v299 = vpop.f32.mrb[0].mxu0
        %v300 = vpop.f32.mrb[0].mxu0
        %v301 = vpop.f32.mrb[0].mxu0
        %302 = vdwg.mxu0
        %v307 = vunpack.c.l.b16 %v235
        %v308 = vunpack.c.l.b16 %v236
        %v309 = vunpack.c.l.b16 %v237
        %v310 = vunpack.c.l.b16 %v238
        %v311 = vpack.c.b16 %v308, %v307
        %v312 = vpack.c.b16 %v310, %v309
        %v316 = vsel %vm259, %v234, 0
        %318 = vmatprep.subr.bf16.mxu0 0
        %319 = vmatpush1.bf16.msra.mxu0 %v311
        %320 = vmatprep.subr.bf16.mxu0 0
        %321 = vmatpush1.bf16.msra.mxu0 %v312
        %322 = vmatprep.subr.bf16.mxu0 0
        %323 = vmatpush1.bf16.msra.mxu0 0
        %324 = vmatprep.subr.bf16.mxu0 0
        %325 = vmatpush1.bf16.msra.mxu0 0
        %326 = vmatprep.subr.bf16.mxu0 0
        %327 = vmatpush1.bf16.msra.mxu0 0
        %328 = vmatprep.subr.bf16.mxu0 0
        %329 = vmatpush1.bf16.msra.mxu0 0
        %330 = vmatprep.subr.bf16.mxu0 0
        %331 = vmatpush1.bf16.msra.mxu0 0
        %332 = vmatprep.subr.bf16.mxu0 0
        %333 = vmatpush1.bf16.msra.mxu0 0
        %334 = vmatprep.subr.bf16.mxu0 0
        %335 = vmatpush1.bf16.msra.mxu0 0
        %336 = vmatprep.subr.bf16.mxu0 0
        %337 = vmatpush1.bf16.msra.mxu0 0
        %338 = vmatprep.subr.bf16.mxu0 0
        %339 = vmatpush1.bf16.msra.mxu0 0
        %340 = vmatprep.subr.bf16.mxu0 0
        %341 = vmatpush1.bf16.msra.mxu0 0
        %342 = vmatprep.subr.bf16.mxu0 0
        %343 = vmatpush1.bf16.msra.mxu0 0
        %344 = vmatprep.subr.bf16.mxu0 0
        %345 = vmatpush1.bf16.msra.mxu0 0
        %346 = vmatprep.subr.bf16.mxu0 0
        %347 = vmatpush1.bf16.msra.mxu0 0
        %348 = vmatprep.subr.bf16.mxu0 0
        %349 = vmatpush1.bf16.msra.mxu0 0
        %350 = vmatprep.mubr.bf16.mxu0 0
        %351 = vmatmul.mubr.bf16.gmra.mrb[0].mxu0 %v316
        %v352 = vpop.f32.mrb[0].mxu0
        %v353 = vadd.f32 %v298, %v352
        %v354 = vpop.f32.mrb[0].mxu0
        %v355 = vpop.f32.mrb[0].mxu0
        %v356 = vpop.f32.mrb[0].mxu0
        %357 = vdwg.mxu0
        %s358 = scalar_lea.vmem %s1, 32
        %v359 = vld [vmem:[%s358] sm:$0xf]
        %v360 = vld [vmem:[%s358 + $0x4] sm:$0xf]
        %v361 = vld [vmem:[%s358 + $0x8] sm:$0xf]
        %v362 = vld [vmem:[%s358 + $0xc] sm:$0xf]
        %364 = vrot.lane.b32.xlu0 %v234, 124
        %v365 = vpop.permute.xlu0 %364
        %v370 = vunpack.c.l.b16 %v359
        %v371 = vunpack.c.l.b16 %v360
        %v372 = vunpack.c.l.b16 %v361
        %v373 = vunpack.c.l.b16 %v362
        %v374 = vpack.c.b16 %v371, %v370
        %v375 = vpack.c.b16 %v373, %v372
        %v379 = vsel %vm259, %v365, 0
        %381 = vmatprep.subr.bf16.mxu0 0
        %382 = vmatpush1.bf16.msra.mxu0 %v374
        %383 = vmatprep.subr.bf16.mxu0 0
        %384 = vmatpush1.bf16.msra.mxu0 %v375
        %385 = vmatprep.subr.bf16.mxu0 0
        %386 = vmatpush1.bf16.msra.mxu0 0
        %387 = vmatprep.subr.bf16.mxu0 0
        %388 = vmatpush1.bf16.msra.mxu0 0
        %389 = vmatprep.subr.bf16.mxu0 0
        %390 = vmatpush1.bf16.msra.mxu0 0
        %391 = vmatprep.subr.bf16.mxu0 0
        %392 = vmatpush1.bf16.msra.mxu0 0
        %393 = vmatprep.subr.bf16.mxu0 0
        %394 = vmatpush1.bf16.msra.mxu0 0
        %395 = vmatprep.subr.bf16.mxu0 0
        %396 = vmatpush1.bf16.msra.mxu0 0
        %397 = vmatprep.subr.bf16.mxu0 0
        %398 = vmatpush1.bf16.msra.mxu0 0
        %399 = vmatprep.subr.bf16.mxu0 0
        %400 = vmatpush1.bf16.msra.mxu0 0
        %401 = vmatprep.subr.bf16.mxu0 0
        %402 = vmatpush1.bf16.msra.mxu0 0
        %403 = vmatprep.subr.bf16.mxu0 0
        %404 = vmatpush1.bf16.msra.mxu0 0
        %405 = vmatprep.subr.bf16.mxu0 0
        %406 = vmatpush1.bf16.msra.mxu0 0
        %407 = vmatprep.subr.bf16.mxu0 0
        %408 = vmatpush1.bf16.msra.mxu0 0
        %409 = vmatprep.subr.bf16.mxu0 0
        %410 = vmatpush1.bf16.msra.mxu0 0
        %411 = vmatprep.subr.bf16.mxu0 0
        %412 = vmatpush1.bf16.msra.mxu0 0
        %413 = vmatprep.mubr.bf16.mxu0 0
        %414 = vmatmul.mubr.bf16.gmra.mrb[0].mxu0 %v379
        %v415 = vpop.f32.mrb[0].mxu0
        %v416 = vadd.f32 0.0, %v415
        %v417 = vpop.f32.mrb[0].mxu0
        %v418 = vpop.f32.mrb[0].mxu0
        %v419 = vpop.f32.mrb[0].mxu0
        %420 = vdwg.mxu0
        %v421 = vadd.f32 %v353, %v416
        %s422 = scalar_lea.vmem %s208, 32 [#allocation2]
        %v423 = vld [vmem:[%s422] sm:$0xff]
        %v424 = vpack.c.bf16 %v423, %v423
        %s425 = scalar_lea.vmem %s1, 48
        %v426 = vld [vmem:[%s425] sm:$0xf]
        %v427 = vld [vmem:[%s425 + $0x4] sm:$0xf]
        %v428 = vld [vmem:[%s425 + $0x8] sm:$0xf]
        %v429 = vld [vmem:[%s425 + $0xc] sm:$0xf]
        %v434 = vunpack.c.l.b16 %v426
        %v435 = vunpack.c.l.b16 %v427
        %v436 = vunpack.c.l.b16 %v428
        %v437 = vunpack.c.l.b16 %v429
        %v438 = vpack.c.b16 %v435, %v434
        %v439 = vpack.c.b16 %v437, %v436
        %v443 = vsel %vm259, %v424, 0
        %445 = vmatprep.subr.bf16.mxu0 0
        %446 = vmatpush1.bf16.msra.mxu0 %v438
        %447 = vmatprep.subr.bf16.mxu0 0
        %448 = vmatpush1.bf16.msra.mxu0 %v439
        %449 = vmatprep.subr.bf16.mxu0 0
        %450 = vmatpush1.bf16.msra.mxu0 0
        %451 = vmatprep.subr.bf16.mxu0 0
        %452 = vmatpush1.bf16.msra.mxu0 0
        %453 = vmatprep.subr.bf16.mxu0 0
        %454 = vmatpush1.bf16.msra.mxu0 0
        %455 = vmatprep.subr.bf16.mxu0 0
        %456 = vmatpush1.bf16.msra.mxu0 0
        %457 = vmatprep.subr.bf16.mxu0 0
        %458 = vmatpush1.bf16.msra.mxu0 0
        %459 = vmatprep.subr.bf16.mxu0 0
        %460 = vmatpush1.bf16.msra.mxu0 0
        %461 = vmatprep.subr.bf16.mxu0 0
        %462 = vmatpush1.bf16.msra.mxu0 0
        %463 = vmatprep.subr.bf16.mxu0 0
        %464 = vmatpush1.bf16.msra.mxu0 0
        %465 = vmatprep.subr.bf16.mxu0 0
        %466 = vmatpush1.bf16.msra.mxu0 0
        %467 = vmatprep.subr.bf16.mxu0 0
        %468 = vmatpush1.bf16.msra.mxu0 0
        %469 = vmatprep.subr.bf16.mxu0 0
        %470 = vmatpush1.bf16.msra.mxu0 0
        %471 = vmatprep.subr.bf16.mxu0 0
        %472 = vmatpush1.bf16.msra.mxu0 0
        %473 = vmatprep.subr.bf16.mxu0 0
        %474 = vmatpush1.bf16.msra.mxu0 0
        %475 = vmatprep.subr.bf16.mxu0 0
        %476 = vmatpush1.bf16.msra.mxu0 0
        %477 = vmatprep.mubr.bf16.mxu0 0
        %478 = vmatmul.mubr.bf16.gmra.mrb[0].mxu0 %v443
        %v479 = vpop.f32.mrb[0].mxu0
        %v480 = vadd.f32 0.0, %v479
        %v481 = vpop.f32.mrb[0].mxu0
        %v482 = vpop.f32.mrb[0].mxu0
        %v483 = vpop.f32.mrb[0].mxu0
        %484 = vdwg.mxu0
        %v485 = vadd.f32 %v421, %v480
        %s486 = scalar_lea.vmem %s208, 48 [#allocation2]
        %v487 = vld [vmem:[%s486] sm:$0xff]
        %v488 = vpack.c.bf16 %v487, %v487
        %s489 = scalar_lea.vmem %s1, 64
        %v490 = vld [vmem:[%s489] sm:$0xf]
        %v491 = vld [vmem:[%s489 + $0x4] sm:$0xf]
        %v492 = vld [vmem:[%s489 + $0x8] sm:$0xf]
        %v493 = vld [vmem:[%s489 + $0xc] sm:$0xf]
        %v498 = vunpack.c.l.b16 %v490
        %v499 = vunpack.c.l.b16 %v491
        %v500 = vunpack.c.l.b16 %v492
        %v501 = vunpack.c.l.b16 %v493
        %v502 = vpack.c.b16 %v499, %v498
        %v503 = vpack.c.b16 %v501, %v500
        %v507 = vsel %vm259, %v488, 0
        %509 = vmatprep.subr.bf16.mxu0 0
        %510 = vmatpush1.bf16.msra.mxu0 %v502
        %511 = vmatprep.subr.bf16.mxu0 0
        %512 = vmatpush1.bf16.msra.mxu0 %v503
        %513 = vmatprep.subr.bf16.mxu0 0
        %514 = vmatpush1.bf16.msra.mxu0 0
        %515 = vmatprep.subr.bf16.mxu0 0
        %516 = vmatpush1.bf16.msra.mxu0 0
        %517 = vmatprep.subr.bf16.mxu0 0
        %518 = vmatpush1.bf16.msra.mxu0 0
        %519 = vmatprep.subr.bf16.mxu0 0
        %520 = vmatpush1.bf16.msra.mxu0 0
        %521 = vmatprep.subr.bf16.mxu0 0
        %522 = vmatpush1.bf16.msra.mxu0 0
        %523 = vmatprep.subr.bf16.mxu0 0
        %524 = vmatpush1.bf16.msra.mxu0 0
        %525 = vmatprep.subr.bf16.mxu0 0
        %526 = vmatpush1.bf16.msra.mxu0 0
        %527 = vmatprep.subr.bf16.mxu0 0
        %528 = vmatpush1.bf16.msra.mxu0 0
        %529 = vmatprep.subr.bf16.mxu0 0
        %530 = vmatpush1.bf16.msra.mxu0 0
        %531 = vmatprep.subr.bf16.mxu0 0
        %532 = vmatpush1.bf16.msra.mxu0 0
        %533 = vmatprep.subr.bf16.mxu0 0
        %534 = vmatpush1.bf16.msra.mxu0 0
        %535 = vmatprep.subr.bf16.mxu0 0
        %536 = vmatpush1.bf16.msra.mxu0 0
        %537 = vmatprep.subr.bf16.mxu0 0
        %538 = vmatpush1.bf16.msra.mxu0 0
        %539 = vmatprep.subr.bf16.mxu0 0
        %540 = vmatpush1.bf16.msra.mxu0 0
        %541 = vmatprep.mubr.bf16.mxu0 0
        %542 = vmatmul.mubr.bf16.gmra.mrb[0].mxu0 %v507
        %v543 = vpop.f32.mrb[0].mxu0
        %v544 = vadd.f32 0.0, %v543
        %v545 = vpop.f32.mrb[0].mxu0
        %v546 = vpop.f32.mrb[0].mxu0
        %v547 = vpop.f32.mrb[0].mxu0
        %548 = vdwg.mxu0
        %v549 = vadd.f32 %v485, %v544
        %s550 = scalar_lea.vmem %s1, 80
        %v551 = vld [vmem:[%s550] sm:$0xf]
        %v552 = vld [vmem:[%s550 + $0x4] sm:$0xf]
        %v553 = vld [vmem:[%s550 + $0x8] sm:$0xf]
        %v554 = vld [vmem:[%s550 + $0xc] sm:$0xf]
        %556 = vrot.lane.b32.xlu0 %v424, 124
        %v557 = vpop.permute.xlu0 %556
        %v562 = vunpack.c.l.b16 %v551
        %v563 = vunpack.c.l.b16 %v552
        %v564 = vunpack.c.l.b16 %v553
        %v565 = vunpack.c.l.b16 %v554
        %v566 = vpack.c.b16 %v563, %v562
        %v567 = vpack.c.b16 %v565, %v564
        %v571 = vsel %vm259, %v557, 0
        %573 = vmatprep.subr.bf16.mxu0 0
        %574 = vmatpush1.bf16.msra.mxu0 %v566
        %575 = vmatprep.subr.bf16.mxu0 0
        %576 = vmatpush1.bf16.msra.mxu0 %v567
        %577 = vmatprep.subr.bf16.mxu0 0
        %578 = vmatpush1.bf16.msra.mxu0 0
        %579 = vmatprep.subr.bf16.mxu0 0
        %580 = vmatpush1.bf16.msra.mxu0 0
        %581 = vmatprep.subr.bf16.mxu0 0
        %582 = vmatpush1.bf16.msra.mxu0 0
        %583 = vmatprep.subr.bf16.mxu0 0
        %584 = vmatpush1.bf16.msra.mxu0 0
        %585 = vmatprep.subr.bf16.mxu0 0
        %586 = vmatpush1.bf16.msra.mxu0 0
        %587 = vmatprep.subr.bf16.mxu0 0
        %588 = vmatpush1.bf16.msra.mxu0 0
        %589 = vmatprep.subr.bf16.mxu0 0
        %590 = vmatpush1.bf16.msra.mxu0 0
        %591 = vmatprep.subr.bf16.mxu0 0
        %592 = vmatpush1.bf16.msra.mxu0 0
        %593 = vmatprep.subr.bf16.mxu0 0
        %594 = vmatpush1.bf16.msra.mxu0 0
        %595 = vmatprep.subr.bf16.mxu0 0
        %596 = vmatpush1.bf16.msra.mxu0 0
        %597 = vmatprep.subr.bf16.mxu0 0
        %598 = vmatpush1.bf16.msra.mxu0 0
        %599 = vmatprep.subr.bf16.mxu0 0
        %600 = vmatpush1.bf16.msra.mxu0 0
        %601 = vmatprep.subr.bf16.mxu0 0
        %602 = vmatpush1.bf16.msra.mxu0 0
        %603 = vmatprep.subr.bf16.mxu0 0
        %604 = vmatpush1.bf16.msra.mxu0 0
        %605 = vmatprep.mubr.bf16.mxu0 0
        %606 = vmatmul.mubr.bf16.gmra.mrb[0].mxu0 %v571
        %v607 = vpop.f32.mrb[0].mxu0
        %v608 = vadd.f32 0.0, %v607
        %v609 = vpop.f32.mrb[0].mxu0
        %v610 = vpop.f32.mrb[0].mxu0
        %v611 = vpop.f32.mrb[0].mxu0
        %612 = vdwg.mxu0
        %v613 = vadd.f32 %v549, %v608
        %v614 = vld [vmem:[%s208 + $0x1] sm:$0xff]
        %v615 = vpack.c.bf16 %v614, %v614
        %s616 = scalar_lea.vmem %s1, 96
        %v617 = vld [vmem:[%s616] sm:$0xf]
        %v618 = vld [vmem:[%s616 + $0x4] sm:$0xf]
        %v619 = vld [vmem:[%s616 + $0x8] sm:$0xf]
        %v620 = vld [vmem:[%s616 + $0xc] sm:$0xf]
        %v625 = vunpack.c.l.b16 %v617
        %v626 = vunpack.c.l.b16 %v618
        %v627 = vunpack.c.l.b16 %v619
        %v628 = vunpack.c.l.b16 %v620
        %v629 = vpack.c.b16 %v626, %v625
        %v630 = vpack.c.b16 %v628, %v627
        %v634 = vsel %vm259, %v615, 0
        %636 = vmatprep.subr.bf16.mxu0 0
        %637 = vmatpush1.bf16.msra.mxu0 %v629
        %638 = vmatprep.subr.bf16.mxu0 0
        %639 = vmatpush1.bf16.msra.mxu0 %v630
        %640 = vmatprep.subr.bf16.mxu0 0
        %641 = vmatpush1.bf16.msra.mxu0 0
        %642 = vmatprep.subr.bf16.mxu0 0
        %643 = vmatpush1.bf16.msra.mxu0 0
        %644 = vmatprep.subr.bf16.mxu0 0
        %645 = vmatpush1.bf16.msra.mxu0 0
        %646 = vmatprep.subr.bf16.mxu0 0
        %647 = vmatpush1.bf16.msra.mxu0 0
        %648 = vmatprep.subr.bf16.mxu0 0
        %649 = vmatpush1.bf16.msra.mxu0 0
        %650 = vmatprep.subr.bf16.mxu0 0
        %651 = vmatpush1.bf16.msra.mxu0 0
        %652 = vmatprep.subr.bf16.mxu0 0
        %653 = vmatpush1.bf16.msra.mxu0 0
        %654 = vmatprep.subr.bf16.mxu0 0
        %655 = vmatpush1.bf16.msra.mxu0 0
        %656 = vmatprep.subr.bf16.mxu0 0
        %657 = vmatpush1.bf16.msra.mxu0 0
        %658 = vmatprep.subr.bf16.mxu0 0
        %659 = vmatpush1.bf16.msra.mxu0 0
        %660 = vmatprep.subr.bf16.mxu0 0
        %661 = vmatpush1.bf16.msra.mxu0 0
        %662 = vmatprep.subr.bf16.mxu0 0
        %663 = vmatpush1.bf16.msra.mxu0 0
        %664 = vmatprep.subr.bf16.mxu0 0
        %665 = vmatpush1.bf16.msra.mxu0 0
        %666 = vmatprep.subr.bf16.mxu0 0
        %667 = vmatpush1.bf16.msra.mxu0 0
        %668 = vmatprep.mubr.bf16.mxu0 0
        %669 = vmatmul.mubr.bf16.gmra.mrb[0].mxu0 %v634
        %v670 = vpop.f32.mrb[0].mxu0
        %v671 = vadd.f32 0.0, %v670
        %v672 = vpop.f32.mrb[0].mxu0
        %v673 = vpop.f32.mrb[0].mxu0
        %v674 = vpop.f32.mrb[0].mxu0
        %675 = vdwg.mxu0
        %v676 = vadd.f32 %v613, %v671
        %v677 = vld [vmem:[%s239 + $0x1] sm:$0xff]
        %v678 = vpack.c.bf16 %v677, %v677
        %s679 = scalar_lea.vmem %s1, 112
        %v680 = vld [vmem:[%s679] sm:$0xf]
        %v681 = vld [vmem:[%s679 + $0x4] sm:$0xf]
        %v682 = vld [vmem:[%s679 + $0x8] sm:$0xf]
        %v683 = vld [vmem:[%s679 + $0xc] sm:$0xf]
        %v688 = vunpack.c.l.b16 %v680
        %v689 = vunpack.c.l.b16 %v681
        %v690 = vunpack.c.l.b16 %v682
        %v691 = vunpack.c.l.b16 %v683
        %v692 = vpack.c.b16 %v689, %v688
        %v693 = vpack.c.b16 %v691, %v690
        %v697 = vsel %vm259, %v678, 0
        %699 = vmatprep.subr.bf16.mxu0 0
        %700 = vmatpush1.bf16.msra.mxu0 %v692
        %701 = vmatprep.subr.bf16.mxu0 0
        %702 = vmatpush1.bf16.msra.mxu0 %v693
        %703 = vmatprep.subr.bf16.mxu0 0
        %704 = vmatpush1.bf16.msra.mxu0 0
        %705 = vmatprep.subr.bf16.mxu0 0
        %706 = vmatpush1.bf16.msra.mxu0 0
        %707 = vmatprep.subr.bf16.mxu0 0
        %708 = vmatpush1.bf16.msra.mxu0 0
        %709 = vmatprep.subr.bf16.mxu0 0
        %710 = vmatpush1.bf16.msra.mxu0 0
        %711 = vmatprep.subr.bf16.mxu0 0
        %712 = vmatpush1.bf16.msra.mxu0 0
        %713 = vmatprep.subr.bf16.mxu0 0
        %714 = vmatpush1.bf16.msra.mxu0 0
        %715 = vmatprep.subr.bf16.mxu0 0
        %716 = vmatpush1.bf16.msra.mxu0 0
        %717 = vmatprep.subr.bf16.mxu0 0
        %718 = vmatpush1.bf16.msra.mxu0 0
        %719 = vmatprep.subr.bf16.mxu0 0
        %720 = vmatpush1.bf16.msra.mxu0 0
        %721 = vmatprep.subr.bf16.mxu0 0
        %722 = vmatpush1.bf16.msra.mxu0 0
        %723 = vmatprep.subr.bf16.mxu0 0
        %724 = vmatpush1.bf16.msra.mxu0 0
        %725 = vmatprep.subr.bf16.mxu0 0
        %726 = vmatpush1.bf16.msra.mxu0 0
        %727 = vmatprep.subr.bf16.mxu0 0
        %728 = vmatpush1.bf16.msra.mxu0 0
        %729 = vmatprep.subr.bf16.mxu0 0
        %730 = vmatpush1.bf16.msra.mxu0 0
        %731 = vmatprep.mubr.bf16.mxu0 0
        %732 = vmatmul.mubr.bf16.gmra.mrb[0].mxu0 %v697
        %v733 = vpop.f32.mrb[0].mxu0
        %v734 = vadd.f32 0.0, %v733
        %v735 = vpop.f32.mrb[0].mxu0
        %v736 = vpop.f32.mrb[0].mxu0
        %v737 = vpop.f32.mrb[0].mxu0
        %738 = vdwg.mxu0
        %v739 = vadd.f32 %v676, %v734
        %s740 = scalar_lea.vmem %s1, 128
        %v741 = vld [vmem:[%s740] sm:$0xf]
        %v742 = vld [vmem:[%s740 + $0x4] sm:$0xf]
        %v743 = vld [vmem:[%s740 + $0x8] sm:$0xf]
        %v744 = vld [vmem:[%s740 + $0xc] sm:$0xf]
        %746 = vrot.lane.b32.xlu0 %v615, 124
        %v747 = vpop.permute.xlu0 %746
        %v752 = vunpack.c.l.b16 %v741
        %v753 = vunpack.c.l.b16 %v742
        %v754 = vunpack.c.l.b16 %v743
        %v755 = vunpack.c.l.b16 %v744
        %v756 = vpack.c.b16 %v753, %v752
        %v757 = vpack.c.b16 %v755, %v754
        %v761 = vsel %vm259, %v747, 0
        %763 = vmatprep.subr.bf16.mxu0 0
        %764 = vmatpush1.bf16.msra.mxu0 %v756
        %765 = vmatprep.subr.bf16.mxu0 0
        %766 = vmatpush1.bf16.msra.mxu0 %v757
        %767 = vmatprep.subr.bf16.mxu0 0
        %768 = vmatpush1.bf16.msra.mxu0 0
        %769 = vmatprep.subr.bf16.mxu0 0
        %770 = vmatpush1.bf16.msra.mxu0 0
        %771 = vmatprep.subr.bf16.mxu0 0
        %772 = vmatpush1.bf16.msra.mxu0 0
        %773 = vmatprep.subr.bf16.mxu0 0
        %774 = vmatpush1.bf16.msra.mxu0 0
        %775 = vmatprep.subr.bf16.mxu0 0
        %776 = vmatpush1.bf16.msra.mxu0 0
        %777 = vmatprep.subr.bf16.mxu0 0
        %778 = vmatpush1.bf16.msra.mxu0 0
        %779 = vmatprep.subr.bf16.mxu0 0
        %780 = vmatpush1.bf16.msra.mxu0 0
        %781 = vmatprep.subr.bf16.mxu0 0
        %782 = vmatpush1.bf16.msra.mxu0 0
        %783 = vmatprep.subr.bf16.mxu0 0
        %784 = vmatpush1.bf16.msra.mxu0 0
        %785 = vmatprep.subr.bf16.mxu0 0
        %786 = vmatpush1.bf16.msra.mxu0 0
        %787 = vmatprep.subr.bf16.mxu0 0
        %788 = vmatpush1.bf16.msra.mxu0 0
        %789 = vmatprep.subr.bf16.mxu0 0
        %790 = vmatpush1.bf16.msra.mxu0 0
        %791 = vmatprep.subr.bf16.mxu0 0
        %792 = vmatpush1.bf16.msra.mxu0 0
        %793 = vmatprep.subr.bf16.mxu0 0
        %794 = vmatpush1.bf16.msra.mxu0 0
        %795 = vmatprep.mubr.bf16.mxu0 0
        %796 = vmatmul.mubr.bf16.gmra.mrb[0].mxu0 %v761
        %v797 = vpop.f32.mrb[0].mxu0
        %v798 = vadd.f32 0.0, %v797
        %v799 = vpop.f32.mrb[0].mxu0
        %v800 = vpop.f32.mrb[0].mxu0
        %v801 = vpop.f32.mrb[0].mxu0
        %802 = vdwg.mxu0
        %v803 = vadd.f32 %v739, %v798
        %v804 = vld [vmem:[%s2] sm:$0x1]
        %v806 = vlaneseq
        %v807 = vshrl.u32 %v806, 7
        %v808 = vsub.s32 0, %v807
        %v809 = vrot.slane %v804, %v808
        %v811 = vadd.f32 %v803, %v809
        %v812 = vmax.f32 %v811, 0.0
        %vm813 = vcmask 523264
        %814 = vst.msk [vmem:[%s231] sm:$0xff] %vm813, %v812
        %p815 = scmp.lt.s32.totalorder %s14, 1
        %s816 = scalar_select %p815, %s14, 1
        %s817 = smul.addr %s816, 8
        %s818 = scalar_lea.vmem %s3, %s817
        // Predicated region
        $region71: #{backbone_with_fpn_forward.6} parent=65 // pred_check
          %p819 = pneg %p100
        $region72: #{backbone_with_fpn_forward.6} parent=65 // pred_check_branch
          %821 = sbr.rel (%p819) target = $region74
        $region73: #{backbone_with_fpn_forward.6} parent=65 // pred_region
          _
        $region74: #{backbone_with_fpn_forward.6} parent=65 // pred_fallthru
          _
      $region66: #{backbone_with_fpn_forward.6} parent=5 // pred_fallthru
        _
      %p822 = scmp.le.s32.totalorder 2, %s9
      // Predicated region
      $region75: #{backbone_with_fpn_forward.6} parent=5 // pred_check
        %p823 = pneg %p822
      $region76: #{backbone_with_fpn_forward.6} parent=5 // pred_check_branch
        %825 = sbr.rel (%p823) target = $region78
      $region77: #{backbone_with_fpn_forward.6} parent=5 // pred_region
        %s826 = ssub.s32 %s9, 2
        // Predicated region
        $region79: #{backbone_with_fpn_forward.6} parent=77 // pred_check
          %p827 = pneg %p106
        $region80: #{backbone_with_fpn_forward.6} parent=77 // pred_check_branch
          %829 = sbr.rel (%p827) target = $region82
        $region81: #{backbone_with_fpn_forward.6} parent=77 // pred_region
          %p830 = scmp.lt.s32.totalorder %s15, 1
          %s831 = scalar_select %p830, %s15, 1
          %s832 = smul.addr %s831, 8
          %s833 = scalar_lea.vmem %s3, %s832
        $region82: #{backbone_with_fpn_forward.6} parent=77 // pred_fallthru
          _
      $region78: #{backbone_with_fpn_forward.6} parent=5 // pred_fallthru
        _
    $region6: #{backbone_with_fpn_forward.6} parent=1 // loop_footer
      %s13 = sadd.s32 1, %s9
    $region7: #{backbone_with_fpn_forward.6} parent=1 // loop_footer_branch
      %8 = sbr.rel target = $region3
    $region8: #{backbone_with_fpn_forward.6} parent=1 // loop_exit
      _

// kernel: backbone_with_fpn_forward.7
$region0: #{backbone_with_fpn_forward.7}
  #allocation0 [shape = 'u32[]', space=smem, size = 0x4, offset = 0x4, fixed_abs, tag = 'smem constant byte address 0x4 - core index']
  #allocation1 [shape = 'u32[144,128]{1,0:T(1,128)}', space=vmem, size = 0x12000, scoped, tag = 'internal scratch']
  %s0 = inlined_call_operand.vmem [shape: f32[4,2,5,40], index: 0, kind: input, shape index: {}]
  %s1 = inlined_call_operand.vmem [shape: bf16[9,32,64], index: 1, kind: input, shape index: {}]
  %s2 = inlined_call_operand.vmem [shape: f32[1,64], index: 2, kind: input, shape index: {}]
  %s3 = inlined_call_operand.vmem [shape: f32[2,4,64], index: 3, kind: output, shape index: {}]
  %s4 = sld [smem:[#allocation0]]
  $region83: #{backbone_with_fpn_forward.7} parent=0
    _
  %s6 = ssub.s32 1, %s4
  %s7 = scalar_select 0, %s6, %s4
  $region1: #{backbone_with_fpn_forward.7} parent=0
    #allocation2 [shape = 'u8[32768]{0}', space=vmem, size = 0x8000, scoped, tag = 'input window, operand 0']
    loop: start=0, step=1, limit=4
    $region2: #{backbone_with_fpn_forward.7} parent=1 // loop_pre_header
      _
    $region3: #{backbone_with_fpn_forward.7} parent=1 // loop_header
      %s9 = sphi 0, %s13
      %p10 = scmp.ge.s32.totalorder %s9, 4
      %s19 = sphi 0, %s21
      %s22 = sphi 0, %s19
      %s23 = sphi 0, %s22
      %s39 = sphi 0, %s23
      %s43 = sphi 0, %s43
      %s45 = sphi 0, %s43
      %s46 = sphi 0, %s45
      %s60 = sphi 0, %s46
      %s64 = sphi 0, %s64
      %s66 = sphi 0, %s64
      %s67 = sphi 0, %s66
      %s81 = sphi 0, %s67
      %s87 = sphi 0, %s89
      %s90 = sphi 0, %s87
      %s91 = sphi 0, %s90
      %s107 = sphi 0, %s91
    $region4: #{backbone_with_fpn_forward.7} parent=1 // loop_header_branch
      %12 = sbr.rel (%p10) target = $region8
    $region5: #{backbone_with_fpn_forward.7} parent=1 // loop_body
      %s14 = ssub.s32 %s9, 1
      %s15 = ssub.s32 %s9, 2
      %s16 = sadd.s32 %s9, 1
      %s17 = ssub.s32 %s9, %s16
      %p18 = scmp.eq.s32.totalorder %s17, 0
      %s20 = sadd.s32 %s19, 1
      %s21 = scalar_select %p18, %s19, %s20
      %p24 = pneg %p18
      %p25 = scmp.eq.s32.totalorder %s9, 1
      %p26 = por %p24, %p25
      %p27 = scmp.ne.s32.totalorder %s19, %s22
      %p28 = scmp.eq.s32.totalorder %s9, 0
      %p29 = por %p27, %p28
      %p30 = scmp.ne.s32.totalorder %s19, %s22
      %p31 = scmp.eq.s32.totalorder %s14, 1
      %p32 = por %p30, %p31
      %p33 = scmp.ne.s32.totalorder %s22, %s23
      %p34 = scmp.eq.s32.totalorder %s14, 0
      %p35 = por %p33, %p34
      %p36 = scmp.ne.s32.totalorder %s22, %s23
      %p37 = scmp.eq.s32.totalorder %s15, 1
      %p38 = por %p36, %p37
      %p40 = scmp.ne.s32.totalorder %s23, %s39
      %p41 = scmp.eq.s32.totalorder %s15, 0
      %p42 = por %p40, %p41
      %s44 = sadd.s32 %s43, 1
      %p47 = scmp.eq.s32.totalorder %s9, 1
      %p48 = scmp.ne.s32.totalorder %s43, %s45
      %p49 = scmp.eq.s32.totalorder %s9, 0
      %p50 = por %p48, %p49
      %p51 = scmp.ne.s32.totalorder %s43, %s45
      %p52 = scmp.eq.s32.totalorder %s14, 1
      %p53 = por %p51, %p52
      %p54 = scmp.ne.s32.totalorder %s45, %s46
      %p55 = scmp.eq.s32.totalorder %s14, 0
      %p56 = por %p54, %p55
      %p57 = scmp.ne.s32.totalorder %s45, %s46
      %p58 = scmp.eq.s32.totalorder %s15, 1
      %p59 = por %p57, %p58
      %p61 = scmp.ne.s32.totalorder %s46, %s60
      %p62 = scmp.eq.s32.totalorder %s15, 0
      %p63 = por %p61, %p62
      %s65 = sadd.s32 %s64, 1
      %p68 = scmp.eq.s32.totalorder %s9, 1
      %p69 = scmp.ne.s32.totalorder %s64, %s66
      %p70 = scmp.eq.s32.totalorder %s9, 0
      %p71 = por %p69, %p70
      %p72 = scmp.ne.s32.totalorder %s64, %s66
      %p73 = scmp.eq.s32.totalorder %s14, 1
      %p74 = por %p72, %p73
      %p75 = scmp.ne.s32.totalorder %s66, %s67
      %p76 = scmp.eq.s32.totalorder %s14, 0
      %p77 = por %p75, %p76
      %p78 = scmp.ne.s32.totalorder %s66, %s67
      %p79 = scmp.eq.s32.totalorder %s15, 1
      %p80 = por %p78, %p79
      %p82 = scmp.ne.s32.totalorder %s67, %s81
      %p83 = scmp.eq.s32.totalorder %s15, 0
      %p84 = por %p82, %p83
      %s85 = ssub.s32 %s9, %s16
      %p86 = scmp.eq.s32.totalorder %s85, 0
      %s88 = sadd.s32 %s87, 1
      %s89 = scalar_select %p86, %s87, %s88
      %p92 = pneg %p86
      %p93 = scmp.eq.s32.totalorder %s9, 1
      %p94 = por %p92, %p93
      %p95 = scmp.ne.s32.totalorder %s87, %s90
      %p96 = scmp.eq.s32.totalorder %s9, 0
      %p97 = por %p95, %p96
      %p98 = scmp.ne.s32.totalorder %s87, %s90
      %p99 = scmp.eq.s32.totalorder %s14, 1
      %p100 = por %p98, %p99
      %p101 = scmp.ne.s32.totalorder %s90, %s91
      %p102 = scmp.eq.s32.totalorder %s14, 0
      %p103 = por %p101, %p102
      %p104 = scmp.ne.s32.totalorder %s90, %s91
      %p105 = scmp.eq.s32.totalorder %s15, 1
      %p106 = por %p104, %p105
      %p108 = scmp.ne.s32.totalorder %s91, %s107
      %p109 = scmp.eq.s32.totalorder %s15, 0
      %p110 = por %p108, %p109
      %p111 = scmp.le.s32.totalorder 1, %s9
      %p112 = scmp.lt.s32.totalorder %s9, 3
      %p113 = pnand %p111, %p112
      %p114 = pneg %p113
      // Predicated region
      $region9: #{backbone_with_fpn_forward.7} parent=5 // pred_check
        _
      $region10: #{backbone_with_fpn_forward.7} parent=5 // pred_check_branch
        %116 = sbr.rel (%p113) target = $region12
      $region11: #{backbone_with_fpn_forward.7} parent=5 // pred_region
        %s117 = ssub.s32 %s9, 1
        // Predicated region
        $region13: #{backbone_with_fpn_forward.7} parent=11 // pred_check
          %p118 = pneg %p56
        $region14: #{backbone_with_fpn_forward.7} parent=11 // pred_check_branch
          %120 = sbr.rel (%p118) target = $region16
        $region15: #{backbone_with_fpn_forward.7} parent=11 // pred_region
          _
        $region16: #{backbone_with_fpn_forward.7} parent=11 // pred_fallthru
          _
        // Predicated region
        $region17: #{backbone_with_fpn_forward.7} parent=11 // pred_check
          %p121 = pneg %p77
        $region18: #{backbone_with_fpn_forward.7} parent=11 // pred_check_branch
          %123 = sbr.rel (%p121) target = $region20
        $region19: #{backbone_with_fpn_forward.7} parent=11 // pred_region
          _
        $region20: #{backbone_with_fpn_forward.7} parent=11 // pred_fallthru
          _
      $region12: #{backbone_with_fpn_forward.7} parent=5 // pred_fallthru
        _
      %p124 = scmp.lt.s32.totalorder %s9, 2
      // Predicated region
      $region21: #{backbone_with_fpn_forward.7} parent=5 // pred_check
        %p125 = pneg %p124
      $region22: #{backbone_with_fpn_forward.7} parent=5 // pred_check_branch
        %127 = sbr.rel (%p125) target = $region24
      $region23: #{backbone_with_fpn_forward.7} parent=5 // pred_region
        // Predicated region
        $region25: #{backbone_with_fpn_forward.7} parent=23 // pred_check
          %p128 = pneg %p29
        $region26: #{backbone_with_fpn_forward.7} parent=23 // pred_check_branch
          %130 = sbr.rel (%p128) target = $region28
        $region27: #{backbone_with_fpn_forward.7} parent=23 // pred_region
          %s131 = sand.u32 %s19, 1
          %s132 = sand.u32 %s19, 1
          %s133 = smul.addr %s132, 32
          %s134 = scalar_lea.vmem [#allocation2], %s133
          %s135 = smul.addr %s9, 8
          %s136 = scalar_lea.vmem %s0, %s135
          // Predicated region
          $region29: #{backbone_with_fpn_forward.7} parent=27 // pred_check
            _
          $region30: #{backbone_with_fpn_forward.7} parent=27 // pred_check_branch
            %138 = sbr.rel (0) target = $region32
          $region31: #{backbone_with_fpn_forward.7} parent=27 // pred_region
            // Predicated region
            $region33: #{backbone_with_fpn_forward.7} parent=31 // pred_check
              _
            $region34: #{backbone_with_fpn_forward.7} parent=31 // pred_check_branch
              %140 = sbr.rel (0) target = $region36
            $region35: #{backbone_with_fpn_forward.7} parent=31 // pred_region
              // Predicated region
              $region48: #{backbone_with_fpn_forward.7} parent=35 // pred_check
                _
              $region49: #{backbone_with_fpn_forward.7} parent=35 // pred_check_branch
                %161 = sbr.rel (0) target = $region51
              $region50: #{backbone_with_fpn_forward.7} parent=35 // pred_region
                loop: start=0, step=1, limit=1
                $region52: #{backbone_with_fpn_forward.7} parent=50 // loop_pre_header
                  _
                $region53: #{backbone_with_fpn_forward.7} parent=50 // loop_header
                  %s163 = sphi 0, %s167
                  %p164 = scmp.ge.s32.totalorder %s163, 1
                  %s168 = sphi %s136, %s136
                  %s169 = sphi %s134, %s134
                $region54: #{backbone_with_fpn_forward.7} parent=50 // loop_header_branch
                  %166 = sbr.rel (%p164) target = $region58
                $region55: #{backbone_with_fpn_forward.7} parent=50 // loop_body
                  %v170 = vld [vmem:[%s168] sm:$0xff]
                  %171 = vst [vmem:[%s169] sm:$0xff] %v170
                  %v172 = vld [vmem:[%s168 + $0x10] sm:$0xff]
                  %173 = vst [vmem:[%s169 + $0x8] sm:$0xff] %v172
                  %v174 = vld [vmem:[%s168 + $0x20] sm:$0xff]
                  %175 = vst [vmem:[%s169 + $0x10] sm:$0xff] %v174
                  %v176 = vld [vmem:[%s168 + $0x30] sm:$0xff]
                  %177 = vst [vmem:[%s169 + $0x18] sm:$0xff] %v176
                $region56: #{backbone_with_fpn_forward.7} parent=50 // loop_footer
                  %s167 = sadd.s32 1, %s163
                $region57: #{backbone_with_fpn_forward.7} parent=50 // loop_footer_branch
                  %162 = sbr.rel target = $region53
                $region58: #{backbone_with_fpn_forward.7} parent=50 // loop_exit
                  _
              $region51: #{backbone_with_fpn_forward.7} parent=35 // pred_fallthru
                _
              // Predicated region
              $region59: #{backbone_with_fpn_forward.7} parent=35 // pred_check
                _
              $region60: #{backbone_with_fpn_forward.7} parent=35 // pred_check_branch
                %179 = sbr.rel target = $region62
              $region61: #{backbone_with_fpn_forward.7} parent=35 // pred_region
                _
              $region62: #{backbone_with_fpn_forward.7} parent=35 // pred_fallthru
                _
            $region36: #{backbone_with_fpn_forward.7} parent=31 // pred_fallthru
              _
            // Predicated region
            $region37: #{backbone_with_fpn_forward.7} parent=31 // pred_check
              _
            $region38: #{backbone_with_fpn_forward.7} parent=31 // pred_check_branch
              %142 = sbr.rel target = $region40
            $region39: #{backbone_with_fpn_forward.7} parent=31 // pred_region
              loop: start=0, step=1, limit=1
              $region41: #{backbone_with_fpn_forward.7} parent=39 // loop_pre_header
                _
              $region42: #{backbone_with_fpn_forward.7} parent=39 // loop_header
                %s145 = sphi 0, %s149
                %p146 = scmp.ge.s32.totalorder %s145, 1
                %s150 = sphi %s136, %s136
                %s151 = sphi %s134, %s134
              $region43: #{backbone_with_fpn_forward.7} parent=39 // loop_header_branch
                %148 = sbr.rel (%p146) target = $region47
              $region44: #{backbone_with_fpn_forward.7} parent=39 // loop_body
                %v152 = vld [vmem:[%s150] sm:$0xff]
                %153 = vst [vmem:[%s151] sm:$0xff] %v152
                %v154 = vld [vmem:[%s150 + $0x10] sm:$0xff]
                %155 = vst [vmem:[%s151 + $0x8] sm:$0xff] %v154
                %v156 = vld [vmem:[%s150 + $0x20] sm:$0xff]
                %157 = vst [vmem:[%s151 + $0x10] sm:$0xff] %v156
                %v158 = vld [vmem:[%s150 + $0x30] sm:$0xff]
                %159 = vst [vmem:[%s151 + $0x18] sm:$0xff] %v158
              $region45: #{backbone_with_fpn_forward.7} parent=39 // loop_footer
                %s149 = sadd.s32 1, %s145
              $region46: #{backbone_with_fpn_forward.7} parent=39 // loop_footer_branch
                %144 = sbr.rel target = $region42
              $region47: #{backbone_with_fpn_forward.7} parent=39 // loop_exit
                _
            $region40: #{backbone_with_fpn_forward.7} parent=31 // pred_fallthru
              _
          $region32: #{backbone_with_fpn_forward.7} parent=27 // pred_fallthru
            _
          %180 = vnop
        $region28: #{backbone_with_fpn_forward.7} parent=23 // pred_fallthru
          _
      $region24: #{backbone_with_fpn_forward.7} parent=5 // pred_fallthru
        _
      %p181 = scmp.le.s32.totalorder 1, %s9
      %p182 = scmp.lt.s32.totalorder %s9, 3
      %p183 = pnand %p181, %p182
      %p184 = pneg %p183
      // Predicated region
      $region63: #{backbone_with_fpn_forward.7} parent=5 // pred_check
        _
      $region64: #{backbone_with_fpn_forward.7} parent=5 // pred_check_branch
        %186 = sbr.rel (%p183) target = $region66
      $region65: #{backbone_with_fpn_forward.7} parent=5 // pred_region
        %s187 = ssub.s32 %s9, 1
        %s188 = sand.u32 %s22, 1
        %s189 = sand.u32 %s22, 1
        %s190 = smul.addr %s189, 32
        %s191 = scalar_lea.vmem [#allocation2], %s190
        // Predicated region
        $region67: #{backbone_with_fpn_forward.7} parent=65 // pred_check
          %p192 = pneg %p35
        $region68: #{backbone_with_fpn_forward.7} parent=65 // pred_check_branch
          %194 = sbr.rel (%p192) target = $region70
        $region69: #{backbone_with_fpn_forward.7} parent=65 // pred_region
          _
        $region70: #{backbone_with_fpn_forward.7} parent=65 // pred_fallthru
          _
        %s195 = sand.u32 %s22, 1
        %s196 = sand.u32 %s22, 1
        %s197 = smul.addr %s196, 32
        %s198 = scalar_lea.vmem [#allocation2], %s197
        %p199 = pneg %p35
        %p200 = pneg %p32
        %p201 = pneg %p56
        %p202 = pneg %p53
        %p203 = pneg %p77
        %p204 = pneg %p74
        %p205 = pneg %p103
        %p206 = pneg %p100
        %p207 = scmp.lt.s32.totalorder %s14, 1
        %s208 = scalar_select %p207, %s14, 1
        %s209 = smul.addr %s208, 4
        %s210 = scalar_lea.vmem %s3, %s209
        %p211 = scmp.lt.s32.totalorder %s14, 1
        %s212 = scalar_select %p211, %s14, 1
        %s213 = smul.addr %s212, 4
        %s214 = scalar_lea.vmem %s3, %s213
        %v216 = vld [vmem:[%s191] sm:$0xf]
        %v217 = vpack.c.bf16 %v216, %v216
        %v218 = vld [vmem:[%s1] sm:$0xf]
        %v219 = vld [vmem:[%s1 + $0x4] sm:$0xf]
        %v220 = vld [vmem:[%s1 + $0x8] sm:$0xf]
        %v221 = vld [vmem:[%s1 + $0xc] sm:$0xf]
        %s222 = scalar_lea.vmem %s191, 8 [#allocation2]
        %v223 = vld [vmem:[%s222] sm:$0xf]
        %v224 = vpack.c.bf16 %v223, %v223
        %s225 = scalar_lea.vmem %s1, 16
        %v226 = vld [vmem:[%s225] sm:$0xf]
        %v227 = vld [vmem:[%s225 + $0x4] sm:$0xf]
        %v228 = vld [vmem:[%s225 + $0x8] sm:$0xf]
        %v229 = vld [vmem:[%s225 + $0xc] sm:$0xf]
        %v234 = vunpack.c.l.b16 %v226
        %v235 = vunpack.c.l.b16 %v227
        %v236 = vunpack.c.l.b16 %v228
        %v237 = vunpack.c.l.b16 %v229
        %v238 = vpack.c.b16 %v235, %v234
        %v239 = vpack.c.b16 %v237, %v236
        %vm242 = vcmask 261120
        %v244 = vsel %vm242, %v224, 0
        %246 = vmatprep.subr.bf16.mxu0 0
        %247 = vmatpush1.bf16.msra.mxu0 %v238
        %248 = vmatprep.subr.bf16.mxu0 0
        %249 = vmatpush1.bf16.msra.mxu0 %v239
        %250 = vmatprep.subr.bf16.mxu0 0
        %251 = vmatpush1.bf16.msra.mxu0 0
        %252 = vmatprep.subr.bf16.mxu0 0
        %253 = vmatpush1.bf16.msra.mxu0 0
        %254 = vmatprep.subr.bf16.mxu0 0
        %255 = vmatpush1.bf16.msra.mxu0 0
        %256 = vmatprep.subr.bf16.mxu0 0
        %257 = vmatpush1.bf16.msra.mxu0 0
        %258 = vmatprep.subr.bf16.mxu0 0
        %259 = vmatpush1.bf16.msra.mxu0 0
        %260 = vmatprep.subr.bf16.mxu0 0
        %261 = vmatpush1.bf16.msra.mxu0 0
        %262 = vmatprep.subr.bf16.mxu0 0
        %263 = vmatpush1.bf16.msra.mxu0 0
        %264 = vmatprep.subr.bf16.mxu0 0
        %265 = vmatpush1.bf16.msra.mxu0 0
        %266 = vmatprep.subr.bf16.mxu0 0
        %267 = vmatpush1.bf16.msra.mxu0 0
        %268 = vmatprep.subr.bf16.mxu0 0
        %269 = vmatpush1.bf16.msra.mxu0 0
        %270 = vmatprep.subr.bf16.mxu0 0
        %271 = vmatpush1.bf16.msra.mxu0 0
        %272 = vmatprep.subr.bf16.mxu0 0
        %273 = vmatpush1.bf16.msra.mxu0 0
        %274 = vmatprep.subr.bf16.mxu0 0
        %275 = vmatpush1.bf16.msra.mxu0 0
        %276 = vmatprep.subr.bf16.mxu0 0
        %277 = vmatpush1.bf16.msra.mxu0 0
        %278 = vmatprep.mubr.bf16.mxu0 0
        %279 = vmatmul.mubr.bf16.gmra.mrb[0].mxu0 %v244
        %v280 = vpop.f32.mrb[0].mxu0
        %v281 = vadd.f32 0.0, %v280
        %v282 = vpop.f32.mrb[0].mxu0
        %v283 = vpop.f32.mrb[0].mxu0
        %v284 = vpop.f32.mrb[0].mxu0
        %285 = vdwg.mxu0
        %v290 = vunpack.c.l.b16 %v218
        %v291 = vunpack.c.l.b16 %v219
        %v292 = vunpack.c.l.b16 %v220
        %v293 = vunpack.c.l.b16 %v221
        %v294 = vpack.c.b16 %v291, %v290
        %v295 = vpack.c.b16 %v293, %v292
        %v299 = vsel %vm242, %v217, 0
        %301 = vmatprep.subr.bf16.mxu0 0
        %302 = vmatpush1.bf16.msra.mxu0 %v294
        %303 = vmatprep.subr.bf16.mxu0 0
        %304 = vmatpush1.bf16.msra.mxu0 %v295
        %305 = vmatprep.subr.bf16.mxu0 0
        %306 = vmatpush1.bf16.msra.mxu0 0
        %307 = vmatprep.subr.bf16.mxu0 0
        %308 = vmatpush1.bf16.msra.mxu0 0
        %309 = vmatprep.subr.bf16.mxu0 0
        %310 = vmatpush1.bf16.msra.mxu0 0
        %311 = vmatprep.subr.bf16.mxu0 0
        %312 = vmatpush1.bf16.msra.mxu0 0
        %313 = vmatprep.subr.bf16.mxu0 0
        %314 = vmatpush1.bf16.msra.mxu0 0
        %315 = vmatprep.subr.bf16.mxu0 0
        %316 = vmatpush1.bf16.msra.mxu0 0
        %317 = vmatprep.subr.bf16.mxu0 0
        %318 = vmatpush1.bf16.msra.mxu0 0
        %319 = vmatprep.subr.bf16.mxu0 0
        %320 = vmatpush1.bf16.msra.mxu0 0
        %321 = vmatprep.subr.bf16.mxu0 0
        %322 = vmatpush1.bf16.msra.mxu0 0
        %323 = vmatprep.subr.bf16.mxu0 0
        %324 = vmatpush1.bf16.msra.mxu0 0
        %325 = vmatprep.subr.bf16.mxu0 0
        %326 = vmatpush1.bf16.msra.mxu0 0
        %327 = vmatprep.subr.bf16.mxu0 0
        %328 = vmatpush1.bf16.msra.mxu0 0
        %329 = vmatprep.subr.bf16.mxu0 0
        %330 = vmatpush1.bf16.msra.mxu0 0
        %331 = vmatprep.subr.bf16.mxu0 0
        %332 = vmatpush1.bf16.msra.mxu0 0
        %333 = vmatprep.mubr.bf16.mxu0 0
        %334 = vmatmul.mubr.bf16.gmra.mrb[0].mxu0 %v299
        %v335 = vpop.f32.mrb[0].mxu0
        %v336 = vadd.f32 %v281, %v335
        %v337 = vpop.f32.mrb[0].mxu0
        %v338 = vpop.f32.mrb[0].mxu0
        %v339 = vpop.f32.mrb[0].mxu0
        %340 = vdwg.mxu0
        %s341 = scalar_lea.vmem %s1, 32
        %v342 = vld [vmem:[%s341] sm:$0xf]
        %v343 = vld [vmem:[%s341 + $0x4] sm:$0xf]
        %v344 = vld [vmem:[%s341 + $0x8] sm:$0xf]
        %v345 = vld [vmem:[%s341 + $0xc] sm:$0xf]
        %347 = vrot.lane.b32.xlu0 %v217, 120
        %v348 = vpop.permute.xlu0 %347
        %v353 = vunpack.c.l.b16 %v342
        %v354 = vunpack.c.l.b16 %v343
        %v355 = vunpack.c.l.b16 %v344
        %v356 = vunpack.c.l.b16 %v345
        %v357 = vpack.c.b16 %v354, %v353
        %v358 = vpack.c.b16 %v356, %v355
        %v362 = vsel %vm242, %v348, 0
        %364 = vmatprep.subr.bf16.mxu0 0
        %365 = vmatpush1.bf16.msra.mxu0 %v357
        %366 = vmatprep.subr.bf16.mxu0 0
        %367 = vmatpush1.bf16.msra.mxu0 %v358
        %368 = vmatprep.subr.bf16.mxu0 0
        %369 = vmatpush1.bf16.msra.mxu0 0
        %370 = vmatprep.subr.bf16.mxu0 0
        %371 = vmatpush1.bf16.msra.mxu0 0
        %372 = vmatprep.subr.bf16.mxu0 0
        %373 = vmatpush1.bf16.msra.mxu0 0
        %374 = vmatprep.subr.bf16.mxu0 0
        %375 = vmatpush1.bf16.msra.mxu0 0
        %376 = vmatprep.subr.bf16.mxu0 0
        %377 = vmatpush1.bf16.msra.mxu0 0
        %378 = vmatprep.subr.bf16.mxu0 0
        %379 = vmatpush1.bf16.msra.mxu0 0
        %380 = vmatprep.subr.bf16.mxu0 0
        %381 = vmatpush1.bf16.msra.mxu0 0
        %382 = vmatprep.subr.bf16.mxu0 0
        %383 = vmatpush1.bf16.msra.mxu0 0
        %384 = vmatprep.subr.bf16.mxu0 0
        %385 = vmatpush1.bf16.msra.mxu0 0
        %386 = vmatprep.subr.bf16.mxu0 0
        %387 = vmatpush1.bf16.msra.mxu0 0
        %388 = vmatprep.subr.bf16.mxu0 0
        %389 = vmatpush1.bf16.msra.mxu0 0
        %390 = vmatprep.subr.bf16.mxu0 0
        %391 = vmatpush1.bf16.msra.mxu0 0
        %392 = vmatprep.subr.bf16.mxu0 0
        %393 = vmatpush1.bf16.msra.mxu0 0
        %394 = vmatprep.subr.bf16.mxu0 0
        %395 = vmatpush1.bf16.msra.mxu0 0
        %396 = vmatprep.mubr.bf16.mxu0 0
        %397 = vmatmul.mubr.bf16.gmra.mrb[0].mxu0 %v362
        %v398 = vpop.f32.mrb[0].mxu0
        %v399 = vadd.f32 0.0, %v398
        %v400 = vpop.f32.mrb[0].mxu0
        %v401 = vpop.f32.mrb[0].mxu0
        %v402 = vpop.f32.mrb[0].mxu0
        %403 = vdwg.mxu0
        %v404 = vadd.f32 %v336, %v399
        %s405 = scalar_lea.vmem %s191, 16 [#allocation2]
        %v406 = vld [vmem:[%s405] sm:$0xf]
        %v407 = vpack.c.bf16 %v406, %v406
        %s408 = scalar_lea.vmem %s1, 48
        %v409 = vld [vmem:[%s408] sm:$0xf]
        %v410 = vld [vmem:[%s408 + $0x4] sm:$0xf]
        %v411 = vld [vmem:[%s408 + $0x8] sm:$0xf]
        %v412 = vld [vmem:[%s408 + $0xc] sm:$0xf]
        %v417 = vunpack.c.l.b16 %v409
        %v418 = vunpack.c.l.b16 %v410
        %v419 = vunpack.c.l.b16 %v411
        %v420 = vunpack.c.l.b16 %v412
        %v421 = vpack.c.b16 %v418, %v417
        %v422 = vpack.c.b16 %v420, %v419
        %v426 = vsel %vm242, %v407, 0
        %428 = vmatprep.subr.bf16.mxu0 0
        %429 = vmatpush1.bf16.msra.mxu0 %v421
        %430 = vmatprep.subr.bf16.mxu0 0
        %431 = vmatpush1.bf16.msra.mxu0 %v422
        %432 = vmatprep.subr.bf16.mxu0 0
        %433 = vmatpush1.bf16.msra.mxu0 0
        %434 = vmatprep.subr.bf16.mxu0 0
        %435 = vmatpush1.bf16.msra.mxu0 0
        %436 = vmatprep.subr.bf16.mxu0 0
        %437 = vmatpush1.bf16.msra.mxu0 0
        %438 = vmatprep.subr.bf16.mxu0 0
        %439 = vmatpush1.bf16.msra.mxu0 0
        %440 = vmatprep.subr.bf16.mxu0 0
        %441 = vmatpush1.bf16.msra.mxu0 0
        %442 = vmatprep.subr.bf16.mxu0 0
        %443 = vmatpush1.bf16.msra.mxu0 0
        %444 = vmatprep.subr.bf16.mxu0 0
        %445 = vmatpush1.bf16.msra.mxu0 0
        %446 = vmatprep.subr.bf16.mxu0 0
        %447 = vmatpush1.bf16.msra.mxu0 0
        %448 = vmatprep.subr.bf16.mxu0 0
        %449 = vmatpush1.bf16.msra.mxu0 0
        %450 = vmatprep.subr.bf16.mxu0 0
        %451 = vmatpush1.bf16.msra.mxu0 0
        %452 = vmatprep.subr.bf16.mxu0 0
        %453 = vmatpush1.bf16.msra.mxu0 0
        %454 = vmatprep.subr.bf16.mxu0 0
        %455 = vmatpush1.bf16.msra.mxu0 0
        %456 = vmatprep.subr.bf16.mxu0 0
        %457 = vmatpush1.bf16.msra.mxu0 0
        %458 = vmatprep.subr.bf16.mxu0 0
        %459 = vmatpush1.bf16.msra.mxu0 0
        %460 = vmatprep.mubr.bf16.mxu0 0
        %461 = vmatmul.mubr.bf16.gmra.mrb[0].mxu0 %v426
        %v462 = vpop.f32.mrb[0].mxu0
        %v463 = vadd.f32 0.0, %v462
        %v464 = vpop.f32.mrb[0].mxu0
        %v465 = vpop.f32.mrb[0].mxu0
        %v466 = vpop.f32.mrb[0].mxu0
        %467 = vdwg.mxu0
        %v468 = vadd.f32 %v404, %v463
        %s469 = scalar_lea.vmem %s191, 24 [#allocation2]
        %v470 = vld [vmem:[%s469] sm:$0xf]
        %v471 = vpack.c.bf16 %v470, %v470
        %s472 = scalar_lea.vmem %s1, 64
        %v473 = vld [vmem:[%s472] sm:$0xf]
        %v474 = vld [vmem:[%s472 + $0x4] sm:$0xf]
        %v475 = vld [vmem:[%s472 + $0x8] sm:$0xf]
        %v476 = vld [vmem:[%s472 + $0xc] sm:$0xf]
        %v481 = vunpack.c.l.b16 %v473
        %v482 = vunpack.c.l.b16 %v474
        %v483 = vunpack.c.l.b16 %v475
        %v484 = vunpack.c.l.b16 %v476
        %v485 = vpack.c.b16 %v482, %v481
        %v486 = vpack.c.b16 %v484, %v483
        %v490 = vsel %vm242, %v471, 0
        %492 = vmatprep.subr.bf16.mxu0 0
        %493 = vmatpush1.bf16.msra.mxu0 %v485
        %494 = vmatprep.subr.bf16.mxu0 0
        %495 = vmatpush1.bf16.msra.mxu0 %v486
        %496 = vmatprep.subr.bf16.mxu0 0
        %497 = vmatpush1.bf16.msra.mxu0 0
        %498 = vmatprep.subr.bf16.mxu0 0
        %499 = vmatpush1.bf16.msra.mxu0 0
        %500 = vmatprep.subr.bf16.mxu0 0
        %501 = vmatpush1.bf16.msra.mxu0 0
        %502 = vmatprep.subr.bf16.mxu0 0
        %503 = vmatpush1.bf16.msra.mxu0 0
        %504 = vmatprep.subr.bf16.mxu0 0
        %505 = vmatpush1.bf16.msra.mxu0 0
        %506 = vmatprep.subr.bf16.mxu0 0
        %507 = vmatpush1.bf16.msra.mxu0 0
        %508 = vmatprep.subr.bf16.mxu0 0
        %509 = vmatpush1.bf16.msra.mxu0 0
        %510 = vmatprep.subr.bf16.mxu0 0
        %511 = vmatpush1.bf16.msra.mxu0 0
        %512 = vmatprep.subr.bf16.mxu0 0
        %513 = vmatpush1.bf16.msra.mxu0 0
        %514 = vmatprep.subr.bf16.mxu0 0
        %515 = vmatpush1.bf16.msra.mxu0 0
        %516 = vmatprep.subr.bf16.mxu0 0
        %517 = vmatpush1.bf16.msra.mxu0 0
        %518 = vmatprep.subr.bf16.mxu0 0
        %519 = vmatpush1.bf16.msra.mxu0 0
        %520 = vmatprep.subr.bf16.mxu0 0
        %521 = vmatpush1.bf16.msra.mxu0 0
        %522 = vmatprep.subr.bf16.mxu0 0
        %523 = vmatpush1.bf16.msra.mxu0 0
        %524 = vmatprep.mubr.bf16.mxu0 0
        %525 = vmatmul.mubr.bf16.gmra.mrb[0].mxu0 %v490
        %v526 = vpop.f32.mrb[0].mxu0
        %v527 = vadd.f32 0.0, %v526
        %v528 = vpop.f32.mrb[0].mxu0
        %v529 = vpop.f32.mrb[0].mxu0
        %v530 = vpop.f32.mrb[0].mxu0
        %531 = vdwg.mxu0
        %v532 = vadd.f32 %v468, %v527
        %s533 = scalar_lea.vmem %s1, 80
        %v534 = vld [vmem:[%s533] sm:$0xf]
        %v535 = vld [vmem:[%s533 + $0x4] sm:$0xf]
        %v536 = vld [vmem:[%s533 + $0x8] sm:$0xf]
        %v537 = vld [vmem:[%s533 + $0xc] sm:$0xf]
        %539 = vrot.lane.b32.xlu0 %v407, 120
        %v540 = vpop.permute.xlu0 %539
        %v545 = vunpack.c.l.b16 %v534
        %v546 = vunpack.c.l.b16 %v535
        %v547 = vunpack.c.l.b16 %v536
        %v548 = vunpack.c.l.b16 %v537
        %v549 = vpack.c.b16 %v546, %v545
        %v550 = vpack.c.b16 %v548, %v547
        %v554 = vsel %vm242, %v540, 0
        %556 = vmatprep.subr.bf16.mxu0 0
        %557 = vmatpush1.bf16.msra.mxu0 %v549
        %558 = vmatprep.subr.bf16.mxu0 0
        %559 = vmatpush1.bf16.msra.mxu0 %v550
        %560 = vmatprep.subr.bf16.mxu0 0
        %561 = vmatpush1.bf16.msra.mxu0 0
        %562 = vmatprep.subr.bf16.mxu0 0
        %563 = vmatpush1.bf16.msra.mxu0 0
        %564 = vmatprep.subr.bf16.mxu0 0
        %565 = vmatpush1.bf16.msra.mxu0 0
        %566 = vmatprep.subr.bf16.mxu0 0
        %567 = vmatpush1.bf16.msra.mxu0 0
        %568 = vmatprep.subr.bf16.mxu0 0
        %569 = vmatpush1.bf16.msra.mxu0 0
        %570 = vmatprep.subr.bf16.mxu0 0
        %571 = vmatpush1.bf16.msra.mxu0 0
        %572 = vmatprep.subr.bf16.mxu0 0
        %573 = vmatpush1.bf16.msra.mxu0 0
        %574 = vmatprep.subr.bf16.mxu0 0
        %575 = vmatpush1.bf16.msra.mxu0 0
        %576 = vmatprep.subr.bf16.mxu0 0
        %577 = vmatpush1.bf16.msra.mxu0 0
        %578 = vmatprep.subr.bf16.mxu0 0
        %579 = vmatpush1.bf16.msra.mxu0 0
        %580 = vmatprep.subr.bf16.mxu0 0
        %581 = vmatpush1.bf16.msra.mxu0 0
        %582 = vmatprep.subr.bf16.mxu0 0
        %583 = vmatpush1.bf16.msra.mxu0 0
        %584 = vmatprep.subr.bf16.mxu0 0
        %585 = vmatpush1.bf16.msra.mxu0 0
        %586 = vmatprep.subr.bf16.mxu0 0
        %587 = vmatpush1.bf16.msra.mxu0 0
        %588 = vmatprep.mubr.bf16.mxu0 0
        %589 = vmatmul.mubr.bf16.gmra.mrb[0].mxu0 %v554
        %v590 = vpop.f32.mrb[0].mxu0
        %v591 = vadd.f32 0.0, %v590
        %v592 = vpop.f32.mrb[0].mxu0
        %v593 = vpop.f32.mrb[0].mxu0
        %v594 = vpop.f32.mrb[0].mxu0
        %595 = vdwg.mxu0
        %v596 = vadd.f32 %v532, %v591
        %v597 = vld [vmem:[%s191 + $0x1] sm:$0xf]
        %v598 = vpack.c.bf16 %v597, %v597
        %s599 = scalar_lea.vmem %s1, 96
        %v600 = vld [vmem:[%s599] sm:$0xf]
        %v601 = vld [vmem:[%s599 + $0x4] sm:$0xf]
        %v602 = vld [vmem:[%s599 + $0x8] sm:$0xf]
        %v603 = vld [vmem:[%s599 + $0xc] sm:$0xf]
        %v608 = vunpack.c.l.b16 %v600
        %v609 = vunpack.c.l.b16 %v601
        %v610 = vunpack.c.l.b16 %v602
        %v611 = vunpack.c.l.b16 %v603
        %v612 = vpack.c.b16 %v609, %v608
        %v613 = vpack.c.b16 %v611, %v610
        %v617 = vsel %vm242, %v598, 0
        %619 = vmatprep.subr.bf16.mxu0 0
        %620 = vmatpush1.bf16.msra.mxu0 %v612
        %621 = vmatprep.subr.bf16.mxu0 0
        %622 = vmatpush1.bf16.msra.mxu0 %v613
        %623 = vmatprep.subr.bf16.mxu0 0
        %624 = vmatpush1.bf16.msra.mxu0 0
        %625 = vmatprep.subr.bf16.mxu0 0
        %626 = vmatpush1.bf16.msra.mxu0 0
        %627 = vmatprep.subr.bf16.mxu0 0
        %628 = vmatpush1.bf16.msra.mxu0 0
        %629 = vmatprep.subr.bf16.mxu0 0
        %630 = vmatpush1.bf16.msra.mxu0 0
        %631 = vmatprep.subr.bf16.mxu0 0
        %632 = vmatpush1.bf16.msra.mxu0 0
        %633 = vmatprep.subr.bf16.mxu0 0
        %634 = vmatpush1.bf16.msra.mxu0 0
        %635 = vmatprep.subr.bf16.mxu0 0
        %636 = vmatpush1.bf16.msra.mxu0 0
        %637 = vmatprep.subr.bf16.mxu0 0
        %638 = vmatpush1.bf16.msra.mxu0 0
        %639 = vmatprep.subr.bf16.mxu0 0
        %640 = vmatpush1.bf16.msra.mxu0 0
        %641 = vmatprep.subr.bf16.mxu0 0
        %642 = vmatpush1.bf16.msra.mxu0 0
        %643 = vmatprep.subr.bf16.mxu0 0
        %644 = vmatpush1.bf16.msra.mxu0 0
        %645 = vmatprep.subr.bf16.mxu0 0
        %646 = vmatpush1.bf16.msra.mxu0 0
        %647 = vmatprep.subr.bf16.mxu0 0
        %648 = vmatpush1.bf16.msra.mxu0 0
        %649 = vmatprep.subr.bf16.mxu0 0
        %650 = vmatpush1.bf16.msra.mxu0 0
        %651 = vmatprep.mubr.bf16.mxu0 0
        %652 = vmatmul.mubr.bf16.gmra.mrb[0].mxu0 %v617
        %v653 = vpop.f32.mrb[0].mxu0
        %v654 = vadd.f32 0.0, %v653
        %v655 = vpop.f32.mrb[0].mxu0
        %v656 = vpop.f32.mrb[0].mxu0
        %v657 = vpop.f32.mrb[0].mxu0
        %658 = vdwg.mxu0
        %v659 = vadd.f32 %v596, %v654
        %v660 = vld [vmem:[%s222 + $0x1] sm:$0xf]
        %v661 = vpack.c.bf16 %v660, %v660
        %s662 = scalar_lea.vmem %s1, 112
        %v663 = vld [vmem:[%s662] sm:$0xf]
        %v664 = vld [vmem:[%s662 + $0x4] sm:$0xf]
        %v665 = vld [vmem:[%s662 + $0x8] sm:$0xf]
        %v666 = vld [vmem:[%s662 + $0xc] sm:$0xf]
        %v671 = vunpack.c.l.b16 %v663
        %v672 = vunpack.c.l.b16 %v664
        %v673 = vunpack.c.l.b16 %v665
        %v674 = vunpack.c.l.b16 %v666
        %v675 = vpack.c.b16 %v672, %v671
        %v676 = vpack.c.b16 %v674, %v673
        %v680 = vsel %vm242, %v661, 0
        %682 = vmatprep.subr.bf16.mxu0 0
        %683 = vmatpush1.bf16.msra.mxu0 %v675
        %684 = vmatprep.subr.bf16.mxu0 0
        %685 = vmatpush1.bf16.msra.mxu0 %v676
        %686 = vmatprep.subr.bf16.mxu0 0
        %687 = vmatpush1.bf16.msra.mxu0 0
        %688 = vmatprep.subr.bf16.mxu0 0
        %689 = vmatpush1.bf16.msra.mxu0 0
        %690 = vmatprep.subr.bf16.mxu0 0
        %691 = vmatpush1.bf16.msra.mxu0 0
        %692 = vmatprep.subr.bf16.mxu0 0
        %693 = vmatpush1.bf16.msra.mxu0 0
        %694 = vmatprep.subr.bf16.mxu0 0
        %695 = vmatpush1.bf16.msra.mxu0 0
        %696 = vmatprep.subr.bf16.mxu0 0
        %697 = vmatpush1.bf16.msra.mxu0 0
        %698 = vmatprep.subr.bf16.mxu0 0
        %699 = vmatpush1.bf16.msra.mxu0 0
        %700 = vmatprep.subr.bf16.mxu0 0
        %701 = vmatpush1.bf16.msra.mxu0 0
        %702 = vmatprep.subr.bf16.mxu0 0
        %703 = vmatpush1.bf16.msra.mxu0 0
        %704 = vmatprep.subr.bf16.mxu0 0
        %705 = vmatpush1.bf16.msra.mxu0 0
        %706 = vmatprep.subr.bf16.mxu0 0
        %707 = vmatpush1.bf16.msra.mxu0 0
        %708 = vmatprep.subr.bf16.mxu0 0
        %709 = vmatpush1.bf16.msra.mxu0 0
        %710 = vmatprep.subr.bf16.mxu0 0
        %711 = vmatpush1.bf16.msra.mxu0 0
        %712 = vmatprep.subr.bf16.mxu0 0
        %713 = vmatpush1.bf16.msra.mxu0 0
        %714 = vmatprep.mubr.bf16.mxu0 0
        %715 = vmatmul.mubr.bf16.gmra.mrb[0].mxu0 %v680
        %v716 = vpop.f32.mrb[0].mxu0
        %v717 = vadd.f32 0.0, %v716
        %v718 = vpop.f32.mrb[0].mxu0
        %v719 = vpop.f32.mrb[0].mxu0
        %v720 = vpop.f32.mrb[0].mxu0
        %721 = vdwg.mxu0
        %v722 = vadd.f32 %v659, %v717
        %s723 = scalar_lea.vmem %s1, 128
        %v724 = vld [vmem:[%s723] sm:$0xf]
        %v725 = vld [vmem:[%s723 + $0x4] sm:$0xf]
        %v726 = vld [vmem:[%s723 + $0x8] sm:$0xf]
        %v727 = vld [vmem:[%s723 + $0xc] sm:$0xf]
        %729 = vrot.lane.b32.xlu0 %v598, 120
        %v730 = vpop.permute.xlu0 %729
        %v735 = vunpack.c.l.b16 %v724
        %v736 = vunpack.c.l.b16 %v725
        %v737 = vunpack.c.l.b16 %v726
        %v738 = vunpack.c.l.b16 %v727
        %v739 = vpack.c.b16 %v736, %v735
        %v740 = vpack.c.b16 %v738, %v737
        %v744 = vsel %vm242, %v730, 0
        %746 = vmatprep.subr.bf16.mxu0 0
        %747 = vmatpush1.bf16.msra.mxu0 %v739
        %748 = vmatprep.subr.bf16.mxu0 0
        %749 = vmatpush1.bf16.msra.mxu0 %v740
        %750 = vmatprep.subr.bf16.mxu0 0
        %751 = vmatpush1.bf16.msra.mxu0 0
        %752 = vmatprep.subr.bf16.mxu0 0
        %753 = vmatpush1.bf16.msra.mxu0 0
        %754 = vmatprep.subr.bf16.mxu0 0
        %755 = vmatpush1.bf16.msra.mxu0 0
        %756 = vmatprep.subr.bf16.mxu0 0
        %757 = vmatpush1.bf16.msra.mxu0 0
        %758 = vmatprep.subr.bf16.mxu0 0
        %759 = vmatpush1.bf16.msra.mxu0 0
        %760 = vmatprep.subr.bf16.mxu0 0
        %761 = vmatpush1.bf16.msra.mxu0 0
        %762 = vmatprep.subr.bf16.mxu0 0
        %763 = vmatpush1.bf16.msra.mxu0 0
        %764 = vmatprep.subr.bf16.mxu0 0
        %765 = vmatpush1.bf16.msra.mxu0 0
        %766 = vmatprep.subr.bf16.mxu0 0
        %767 = vmatpush1.bf16.msra.mxu0 0
        %768 = vmatprep.subr.bf16.mxu0 0
        %769 = vmatpush1.bf16.msra.mxu0 0
        %770 = vmatprep.subr.bf16.mxu0 0
        %771 = vmatpush1.bf16.msra.mxu0 0
        %772 = vmatprep.subr.bf16.mxu0 0
        %773 = vmatpush1.bf16.msra.mxu0 0
        %774 = vmatprep.subr.bf16.mxu0 0
        %775 = vmatpush1.bf16.msra.mxu0 0
        %776 = vmatprep.subr.bf16.mxu0 0
        %777 = vmatpush1.bf16.msra.mxu0 0
        %778 = vmatprep.mubr.bf16.mxu0 0
        %779 = vmatmul.mubr.bf16.gmra.mrb[0].mxu0 %v744
        %v780 = vpop.f32.mrb[0].mxu0
        %v781 = vadd.f32 0.0, %v780
        %v782 = vpop.f32.mrb[0].mxu0
        %v783 = vpop.f32.mrb[0].mxu0
        %v784 = vpop.f32.mrb[0].mxu0
        %785 = vdwg.mxu0
        %v786 = vadd.f32 %v722, %v781
        %v787 = vld [vmem:[%s2] sm:$0x1]
        %v789 = vlaneseq
        %v790 = vshrl.u32 %v789, 7
        %v791 = vsub.s32 0, %v790
        %v792 = vrot.slane %v787, %v791
        %v794 = vadd.f32 %v786, %v792
        %v795 = vmax.f32 %v794, 0.0
        %vm796 = vcmask 519168
        %797 = vst.msk [vmem:[%s214] sm:$0xf] %vm796, %v795
        %p798 = scmp.lt.s32.totalorder %s14, 1
        %s799 = scalar_select %p798, %s14, 1
        %s800 = smul.addr %s799, 4
        %s801 = scalar_lea.vmem %s3, %s800
        // Predicated region
        $region71: #{backbone_with_fpn_forward.7} parent=65 // pred_check
          %p802 = pneg %p100
        $region72: #{backbone_with_fpn_forward.7} parent=65 // pred_check_branch
          %804 = sbr.rel (%p802) target = $region74
        $region73: #{backbone_with_fpn_forward.7} parent=65 // pred_region
          _
        $region74: #{backbone_with_fpn_forward.7} parent=65 // pred_fallthru
          _
      $region66: #{backbone_with_fpn_forward.7} parent=5 // pred_fallthru
        _
      %p805 = scmp.le.s32.totalorder 2, %s9
      // Predicated region
      $region75: #{backbone_with_fpn_forward.7} parent=5 // pred_check
        %p806 = pneg %p805
      $region76: #{backbone_with_fpn_forward.7} parent=5 // pred_check_branch
        %808 = sbr.rel (%p806) target = $region78
      $region77: #{backbone_with_fpn_forward.7} parent=5 // pred_region
        %s809 = ssub.s32 %s9, 2
        // Predicated region
        $region79: #{backbone_with_fpn_forward.7} parent=77 // pred_check
          %p810 = pneg %p106
        $region80: #{backbone_with_fpn_forward.7} parent=77 // pred_check_branch
          %812 = sbr.rel (%p810) target = $region82
        $region81: #{backbone_with_fpn_forward.7} parent=77 // pred_region
          %p813 = scmp.lt.s32.totalorder %s15, 1
          %s814 = scalar_select %p813, %s15, 1
          %s815 = smul.addr %s814, 4
          %s816 = scalar_lea.vmem %s3, %s815
        $region82: #{backbone_with_fpn_forward.7} parent=77 // pred_fallthru
          _
      $region78: #{backbone_with_fpn_forward.7} parent=5 // pred_fallthru
        _
    $region6: #{backbone_with_fpn_forward.7} parent=1 // loop_footer
      %s13 = sadd.s32 1, %s9
    $region7: #{backbone_with_fpn_forward.7} parent=1 // loop_footer_branch
      %8 = sbr.rel target = $region3
    $region8: #{backbone_with_fpn_forward.7} parent=1 // loop_exit
      _

// kernel: backbone_with_fpn_forward.8
$region0: #{backbone_with_fpn_forward.8}
  #allocation0 [shape = 'u32[]', space=smem, size = 0x4, offset = 0x4, fixed_abs, tag = 'smem constant byte address 0x4 - core index']
  #allocation1 [shape = 'u32[144,128]{1,0:T(1,128)}', space=vmem, size = 0x12000, scoped, tag = 'internal scratch']
  %s0 = inlined_call_operand.vmem [shape: f32[4,2,3,48], index: 0, kind: input, shape index: {}]
  %s1 = inlined_call_operand.vmem [shape: bf16[9,32,64], index: 1, kind: input, shape index: {}]
  %s2 = inlined_call_operand.vmem [shape: f32[1,64], index: 2, kind: input, shape index: {}]
  %s3 = inlined_call_operand.vmem [shape: f32[2,2,64], index: 3, kind: output, shape index: {}]
  %s4 = sld [smem:[#allocation0]]
  $region86: #{backbone_with_fpn_forward.8} parent=0
    _
  %s6 = ssub.s32 1, %s4
  %s7 = scalar_select 0, %s6, %s4
  $region1: #{backbone_with_fpn_forward.8} parent=0
    #allocation2 [shape = 'u8[16384]{0}', space=vmem, size = 0x4000, scoped, tag = 'input window, operand 0']
    loop: start=0, step=1, limit=4
    $region2: #{backbone_with_fpn_forward.8} parent=1 // loop_pre_header
      _
    $region3: #{backbone_with_fpn_forward.8} parent=1 // loop_header
      %s9 = sphi 0, %s13
      %p10 = scmp.ge.s32.totalorder %s9, 4
      %s19 = sphi 0, %s21
      %s22 = sphi 0, %s19
      %s23 = sphi 0, %s22
      %s39 = sphi 0, %s23
      %s43 = sphi 0, %s43
      %s45 = sphi 0, %s43
      %s46 = sphi 0, %s45
      %s60 = sphi 0, %s46
      %s64 = sphi 0, %s64
      %s66 = sphi 0, %s64
      %s67 = sphi 0, %s66
      %s81 = sphi 0, %s67
      %s87 = sphi 0, %s89
      %s90 = sphi 0, %s87
      %s91 = sphi 0, %s90
      %s107 = sphi 0, %s91
    $region4: #{backbone_with_fpn_forward.8} parent=1 // loop_header_branch
      %12 = sbr.rel (%p10) target = $region8
    $region5: #{backbone_with_fpn_forward.8} parent=1 // loop_body
      %s14 = ssub.s32 %s9, 1
      %s15 = ssub.s32 %s9, 2
      %s16 = sadd.s32 %s9, 1
      %s17 = ssub.s32 %s9, %s16
      %p18 = scmp.eq.s32.totalorder %s17, 0
      %s20 = sadd.s32 %s19, 1
      %s21 = scalar_select %p18, %s19, %s20
      %p24 = pneg %p18
      %p25 = scmp.eq.s32.totalorder %s9, 1
      %p26 = por %p24, %p25
      %p27 = scmp.ne.s32.totalorder %s19, %s22
      %p28 = scmp.eq.s32.totalorder %s9, 0
      %p29 = por %p27, %p28
      %p30 = scmp.ne.s32.totalorder %s19, %s22
      %p31 = scmp.eq.s32.totalorder %s14, 1
      %p32 = por %p30, %p31
      %p33 = scmp.ne.s32.totalorder %s22, %s23
      %p34 = scmp.eq.s32.totalorder %s14, 0
      %p35 = por %p33, %p34
      %p36 = scmp.ne.s32.totalorder %s22, %s23
      %p37 = scmp.eq.s32.totalorder %s15, 1
      %p38 = por %p36, %p37
      %p40 = scmp.ne.s32.totalorder %s23, %s39
      %p41 = scmp.eq.s32.totalorder %s15, 0
      %p42 = por %p40, %p41
      %s44 = sadd.s32 %s43, 1
      %p47 = scmp.eq.s32.totalorder %s9, 1
      %p48 = scmp.ne.s32.totalorder %s43, %s45
      %p49 = scmp.eq.s32.totalorder %s9, 0
      %p50 = por %p48, %p49
      %p51 = scmp.ne.s32.totalorder %s43, %s45
      %p52 = scmp.eq.s32.totalorder %s14, 1
      %p53 = por %p51, %p52
      %p54 = scmp.ne.s32.totalorder %s45, %s46
      %p55 = scmp.eq.s32.totalorder %s14, 0
      %p56 = por %p54, %p55
      %p57 = scmp.ne.s32.totalorder %s45, %s46
      %p58 = scmp.eq.s32.totalorder %s15, 1
      %p59 = por %p57, %p58
      %p61 = scmp.ne.s32.totalorder %s46, %s60
      %p62 = scmp.eq.s32.totalorder %s15, 0
      %p63 = por %p61, %p62
      %s65 = sadd.s32 %s64, 1
      %p68 = scmp.eq.s32.totalorder %s9, 1
      %p69 = scmp.ne.s32.totalorder %s64, %s66
      %p70 = scmp.eq.s32.totalorder %s9, 0
      %p71 = por %p69, %p70
      %p72 = scmp.ne.s32.totalorder %s64, %s66
      %p73 = scmp.eq.s32.totalorder %s14, 1
      %p74 = por %p72, %p73
      %p75 = scmp.ne.s32.totalorder %s66, %s67
      %p76 = scmp.eq.s32.totalorder %s14, 0
      %p77 = por %p75, %p76
      %p78 = scmp.ne.s32.totalorder %s66, %s67
      %p79 = scmp.eq.s32.totalorder %s15, 1
      %p80 = por %p78, %p79
      %p82 = scmp.ne.s32.totalorder %s67, %s81
      %p83 = scmp.eq.s32.totalorder %s15, 0
      %p84 = por %p82, %p83
      %s85 = ssub.s32 %s9, %s16
      %p86 = scmp.eq.s32.totalorder %s85, 0
      %s88 = sadd.s32 %s87, 1
      %s89 = scalar_select %p86, %s87, %s88
      %p92 = pneg %p86
      %p93 = scmp.eq.s32.totalorder %s9, 1
      %p94 = por %p92, %p93
      %p95 = scmp.ne.s32.totalorder %s87, %s90
      %p96 = scmp.eq.s32.totalorder %s9, 0
      %p97 = por %p95, %p96
      %p98 = scmp.ne.s32.totalorder %s87, %s90
      %p99 = scmp.eq.s32.totalorder %s14, 1
      %p100 = por %p98, %p99
      %p101 = scmp.ne.s32.totalorder %s90, %s91
      %p102 = scmp.eq.s32.totalorder %s14, 0
      %p103 = por %p101, %p102
      %p104 = scmp.ne.s32.totalorder %s90, %s91
      %p105 = scmp.eq.s32.totalorder %s15, 1
      %p106 = por %p104, %p105
      %p108 = scmp.ne.s32.totalorder %s91, %s107
      %p109 = scmp.eq.s32.totalorder %s15, 0
      %p110 = por %p108, %p109
      %p111 = scmp.le.s32.totalorder 1, %s9
      %p112 = scmp.lt.s32.totalorder %s9, 3
      %p113 = pnand %p111, %p112
      %p114 = pneg %p113
      // Predicated region
      $region9: #{backbone_with_fpn_forward.8} parent=5 // pred_check
        _
      $region10: #{backbone_with_fpn_forward.8} parent=5 // pred_check_branch
        %116 = sbr.rel (%p113) target = $region12
      $region11: #{backbone_with_fpn_forward.8} parent=5 // pred_region
        %s117 = ssub.s32 %s9, 1
        // Predicated region
        $region13: #{backbone_with_fpn_forward.8} parent=11 // pred_check
          %p118 = pneg %p56
        $region14: #{backbone_with_fpn_forward.8} parent=11 // pred_check_branch
          %120 = sbr.rel (%p118) target = $region16
        $region15: #{backbone_with_fpn_forward.8} parent=11 // pred_region
          _
        $region16: #{backbone_with_fpn_forward.8} parent=11 // pred_fallthru
          _
        // Predicated region
        $region17: #{backbone_with_fpn_forward.8} parent=11 // pred_check
          %p121 = pneg %p77
        $region18: #{backbone_with_fpn_forward.8} parent=11 // pred_check_branch
          %123 = sbr.rel (%p121) target = $region20
        $region19: #{backbone_with_fpn_forward.8} parent=11 // pred_region
          _
        $region20: #{backbone_with_fpn_forward.8} parent=11 // pred_fallthru
          _
      $region12: #{backbone_with_fpn_forward.8} parent=5 // pred_fallthru
        _
      %p124 = scmp.lt.s32.totalorder %s9, 2
      // Predicated region
      $region21: #{backbone_with_fpn_forward.8} parent=5 // pred_check
        %p125 = pneg %p124
      $region22: #{backbone_with_fpn_forward.8} parent=5 // pred_check_branch
        %127 = sbr.rel (%p125) target = $region24
      $region23: #{backbone_with_fpn_forward.8} parent=5 // pred_region
        // Predicated region
        $region25: #{backbone_with_fpn_forward.8} parent=23 // pred_check
          %p128 = pneg %p29
        $region26: #{backbone_with_fpn_forward.8} parent=23 // pred_check_branch
          %130 = sbr.rel (%p128) target = $region28
        $region27: #{backbone_with_fpn_forward.8} parent=23 // pred_region
          %s131 = sand.u32 %s19, 1
          %s132 = sand.u32 %s19, 1
          %s133 = smul.addr %s132, 16
          %s134 = scalar_lea.vmem [#allocation2], %s133
          %s135 = smul.addr %s9, 4
          %s136 = scalar_lea.vmem %s0, %s135
          // Predicated region
          $region29: #{backbone_with_fpn_forward.8} parent=27 // pred_check
            _
          $region30: #{backbone_with_fpn_forward.8} parent=27 // pred_check_branch
            %138 = sbr.rel (0) target = $region32
          $region31: #{backbone_with_fpn_forward.8} parent=27 // pred_region
            // Predicated region
            $region33: #{backbone_with_fpn_forward.8} parent=31 // pred_check
              _
            $region34: #{backbone_with_fpn_forward.8} parent=31 // pred_check_branch
              %140 = sbr.rel target = $region36
            $region35: #{backbone_with_fpn_forward.8} parent=31 // pred_region
              // Predicated region
              $region48: #{backbone_with_fpn_forward.8} parent=35 // pred_check
                _
              $region49: #{backbone_with_fpn_forward.8} parent=35 // pred_check_branch
                %161 = sbr.rel (0) target = $region51
              $region50: #{backbone_with_fpn_forward.8} parent=35 // pred_region
                loop: start=0, step=1, limit=1
                $region52: #{backbone_with_fpn_forward.8} parent=50 // loop_pre_header
                  _
                $region53: #{backbone_with_fpn_forward.8} parent=50 // loop_header
                  %s163 = sphi 0, %s167
                  %p164 = scmp.ge.s32.totalorder %s163, 1
                  %s168 = sphi %s136, %s136
                  %s169 = sphi %s134, %s134
                $region54: #{backbone_with_fpn_forward.8} parent=50 // loop_header_branch
                  %166 = sbr.rel (%p164) target = $region58
                $region55: #{backbone_with_fpn_forward.8} parent=50 // loop_body
                  _
                $region56: #{backbone_with_fpn_forward.8} parent=50 // loop_footer
                  %s167 = sadd.s32 1, %s163
                $region57: #{backbone_with_fpn_forward.8} parent=50 // loop_footer_branch
                  %162 = sbr.rel target = $region53
                $region58: #{backbone_with_fpn_forward.8} parent=50 // loop_exit
                  _
                loop: start=0, step=1, limit=1
                $region59: #{backbone_with_fpn_forward.8} parent=50 // loop_pre_header
                  _
                $region60: #{backbone_with_fpn_forward.8} parent=50 // loop_header
                  %s172 = sphi 0, %s176
                  %p173 = scmp.ge.s32.totalorder %s172, 1
                  %s177 = sphi %s136, %s136
                  %s178 = sphi %s134, %s134
                $region61: #{backbone_with_fpn_forward.8} parent=50 // loop_header_branch
                  %175 = sbr.rel (%p173) target = $region65
                $region62: #{backbone_with_fpn_forward.8} parent=50 // loop_body
                  %v179 = vld [vmem:[%s177] sm:$0xf]
                  %180 = vst [vmem:[%s178] sm:$0xf] %v179
                  %v181 = vld [vmem:[%s177 + $0x8] sm:$0xf]
                  %182 = vst [vmem:[%s178 + $0x4] sm:$0xf] %v181
                  %v183 = vld [vmem:[%s177 + $0x10] sm:$0xf]
                  %184 = vst [vmem:[%s178 + $0x8] sm:$0xf] %v183
                  %v185 = vld [vmem:[%s177 + $0x18] sm:$0xf]
                  %186 = vst [vmem:[%s178 + $0xc] sm:$0xf] %v185
                $region63: #{backbone_with_fpn_forward.8} parent=50 // loop_footer
                  %s176 = sadd.s32 1, %s172
                $region64: #{backbone_with_fpn_forward.8} parent=50 // loop_footer_branch
                  %171 = sbr.rel target = $region60
                $region65: #{backbone_with_fpn_forward.8} parent=50 // loop_exit
                  _
              $region51: #{backbone_with_fpn_forward.8} parent=35 // pred_fallthru
                _
            $region36: #{backbone_with_fpn_forward.8} parent=31 // pred_fallthru
              _
            // Predicated region
            $region37: #{backbone_with_fpn_forward.8} parent=31 // pred_check
              _
            $region38: #{backbone_with_fpn_forward.8} parent=31 // pred_check_branch
              %142 = sbr.rel (0) target = $region40
            $region39: #{backbone_with_fpn_forward.8} parent=31 // pred_region
              loop: start=0, step=1, limit=1
              $region41: #{backbone_with_fpn_forward.8} parent=39 // loop_pre_header
                _
              $region42: #{backbone_with_fpn_forward.8} parent=39 // loop_header
                %s145 = sphi 0, %s149
                %p146 = scmp.ge.s32.totalorder %s145, 1
                %s150 = sphi %s136, %s136
                %s151 = sphi %s134, %s134
              $region43: #{backbone_with_fpn_forward.8} parent=39 // loop_header_branch
                %148 = sbr.rel (%p146) target = $region47
              $region44: #{backbone_with_fpn_forward.8} parent=39 // loop_body
                %v152 = vld [vmem:[%s150] sm:$0xf]
                %153 = vst [vmem:[%s151] sm:$0xf] %v152
                %v154 = vld [vmem:[%s150 + $0x8] sm:$0xf]
                %155 = vst [vmem:[%s151 + $0x4] sm:$0xf] %v154
                %v156 = vld [vmem:[%s150 + $0x10] sm:$0xf]
                %157 = vst [vmem:[%s151 + $0x8] sm:$0xf] %v156
                %v158 = vld [vmem:[%s150 + $0x18] sm:$0xf]
                %159 = vst [vmem:[%s151 + $0xc] sm:$0xf] %v158
              $region45: #{backbone_with_fpn_forward.8} parent=39 // loop_footer
                %s149 = sadd.s32 1, %s145
              $region46: #{backbone_with_fpn_forward.8} parent=39 // loop_footer_branch
                %144 = sbr.rel target = $region42
              $region47: #{backbone_with_fpn_forward.8} parent=39 // loop_exit
                _
            $region40: #{backbone_with_fpn_forward.8} parent=31 // pred_fallthru
              _
          $region32: #{backbone_with_fpn_forward.8} parent=27 // pred_fallthru
            _
          %187 = vnop
        $region28: #{backbone_with_fpn_forward.8} parent=23 // pred_fallthru
          _
      $region24: #{backbone_with_fpn_forward.8} parent=5 // pred_fallthru
        _
      %p188 = scmp.le.s32.totalorder 1, %s9
      %p189 = scmp.lt.s32.totalorder %s9, 3
      %p190 = pnand %p188, %p189
      %p191 = pneg %p190
      // Predicated region
      $region66: #{backbone_with_fpn_forward.8} parent=5 // pred_check
        _
      $region67: #{backbone_with_fpn_forward.8} parent=5 // pred_check_branch
        %193 = sbr.rel (%p190) target = $region69
      $region68: #{backbone_with_fpn_forward.8} parent=5 // pred_region
        %s194 = ssub.s32 %s9, 1
        %s195 = sand.u32 %s22, 1
        %s196 = sand.u32 %s22, 1
        %s197 = smul.addr %s196, 16
        %s198 = scalar_lea.vmem [#allocation2], %s197
        // Predicated region
        $region70: #{backbone_with_fpn_forward.8} parent=68 // pred_check
          %p199 = pneg %p35
        $region71: #{backbone_with_fpn_forward.8} parent=68 // pred_check_branch
          %201 = sbr.rel (%p199) target = $region73
        $region72: #{backbone_with_fpn_forward.8} parent=68 // pred_region
          _
        $region73: #{backbone_with_fpn_forward.8} parent=68 // pred_fallthru
          _
        %s202 = sand.u32 %s22, 1
        %s203 = sand.u32 %s22, 1
        %s204 = smul.addr %s203, 16
        %s205 = scalar_lea.vmem [#allocation2], %s204
        %p206 = pneg %p35
        %p207 = pneg %p32
        %p208 = pneg %p56
        %p209 = pneg %p53
        %p210 = pneg %p77
        %p211 = pneg %p74
        %p212 = pneg %p103
        %p213 = pneg %p100
        %p214 = scmp.lt.s32.totalorder %s14, 1
        %s215 = scalar_select %p214, %s14, 1
        %s216 = smul.addr %s215, 2
        %s217 = scalar_lea.vmem %s3, %s216
        %p218 = scmp.lt.s32.totalorder %s14, 1
        %s219 = scalar_select %p218, %s14, 1
        %s220 = smul.addr %s219, 2
        %s221 = scalar_lea.vmem %s3, %s220
        %v223 = vld [vmem:[%s198] sm:$0x3]
        %v224 = vpack.c.bf16 %v223, %v223
        %v225 = vld [vmem:[%s1] sm:$0xf]
        %v226 = vld [vmem:[%s1 + $0x4] sm:$0xf]
        %v227 = vld [vmem:[%s1 + $0x8] sm:$0xf]
        %v228 = vld [vmem:[%s1 + $0xc] sm:$0xf]
        %s229 = scalar_lea.vmem %s198, 4 [#allocation2]
        %v230 = vld [vmem:[%s229] sm:$0x3]
        %v231 = vpack.c.bf16 %v230, %v230
        %s232 = scalar_lea.vmem %s1, 16
        %v233 = vld [vmem:[%s232] sm:$0xf]
        %v234 = vld [vmem:[%s232 + $0x4] sm:$0xf]
        %v235 = vld [vmem:[%s232 + $0x8] sm:$0xf]
        %v236 = vld [vmem:[%s232 + $0xc] sm:$0xf]
        %v241 = vunpack.c.l.b16 %v233
        %v242 = vunpack.c.l.b16 %v234
        %v243 = vunpack.c.l.b16 %v235
        %v244 = vunpack.c.l.b16 %v236
        %v245 = vpack.c.b16 %v242, %v241
        %v246 = vpack.c.b16 %v244, %v243
        %vm249 = vcmask 261120
        %v251 = vsel %vm249, %v231, 0
        %253 = vmatprep.subr.bf16.mxu0 0
        %254 = vmatpush1.bf16.msra.mxu0 %v245
        %255 = vmatprep.subr.bf16.mxu0 0
        %256 = vmatpush1.bf16.msra.mxu0 %v246
        %257 = vmatprep.subr.bf16.mxu0 0
        %258 = vmatpush1.bf16.msra.mxu0 0
        %259 = vmatprep.subr.bf16.mxu0 0
        %260 = vmatpush1.bf16.msra.mxu0 0
        %261 = vmatprep.subr.bf16.mxu0 0
        %262 = vmatpush1.bf16.msra.mxu0 0
        %263 = vmatprep.subr.bf16.mxu0 0
        %264 = vmatpush1.bf16.msra.mxu0 0
        %265 = vmatprep.subr.bf16.mxu0 0
        %266 = vmatpush1.bf16.msra.mxu0 0
        %267 = vmatprep.subr.bf16.mxu0 0
        %268 = vmatpush1.bf16.msra.mxu0 0
        %269 = vmatprep.subr.bf16.mxu0 0
        %270 = vmatpush1.bf16.msra.mxu0 0
        %271 = vmatprep.subr.bf16.mxu0 0
        %272 = vmatpush1.bf16.msra.mxu0 0
        %273 = vmatprep.subr.bf16.mxu0 0
        %274 = vmatpush1.bf16.msra.mxu0 0
        %275 = vmatprep.subr.bf16.mxu0 0
        %276 = vmatpush1.bf16.msra.mxu0 0
        %277 = vmatprep.subr.bf16.mxu0 0
        %278 = vmatpush1.bf16.msra.mxu0 0
        %279 = vmatprep.subr.bf16.mxu0 0
        %280 = vmatpush1.bf16.msra.mxu0 0
        %281 = vmatprep.subr.bf16.mxu0 0
        %282 = vmatpush1.bf16.msra.mxu0 0
        %283 = vmatprep.subr.bf16.mxu0 0
        %284 = vmatpush1.bf16.msra.mxu0 0
        %285 = vmatprep.mubr.bf16.mxu0 0
        %286 = vmatmul.mubr.bf16.gmra.mrb[0].mxu0 %v251
        %v287 = vpop.f32.mrb[0].mxu0
        %v288 = vadd.f32 0.0, %v287
        %v289 = vpop.f32.mrb[0].mxu0
        %v290 = vpop.f32.mrb[0].mxu0
        %v291 = vpop.f32.mrb[0].mxu0
        %292 = vdwg.mxu0
        %v297 = vunpack.c.l.b16 %v225
        %v298 = vunpack.c.l.b16 %v226
        %v299 = vunpack.c.l.b16 %v227
        %v300 = vunpack.c.l.b16 %v228
        %v301 = vpack.c.b16 %v298, %v297
        %v302 = vpack.c.b16 %v300, %v299
        %v306 = vsel %vm249, %v224, 0
        %308 = vmatprep.subr.bf16.mxu0 0
        %309 = vmatpush1.bf16.msra.mxu0 %v301
        %310 = vmatprep.subr.bf16.mxu0 0
        %311 = vmatpush1.bf16.msra.mxu0 %v302
        %312 = vmatprep.subr.bf16.mxu0 0
        %313 = vmatpush1.bf16.msra.mxu0 0
        %314 = vmatprep.subr.bf16.mxu0 0
        %315 = vmatpush1.bf16.msra.mxu0 0
        %316 = vmatprep.subr.bf16.mxu0 0
        %317 = vmatpush1.bf16.msra.mxu0 0
        %318 = vmatprep.subr.bf16.mxu0 0
        %319 = vmatpush1.bf16.msra.mxu0 0
        %320 = vmatprep.subr.bf16.mxu0 0
        %321 = vmatpush1.bf16.msra.mxu0 0
        %322 = vmatprep.subr.bf16.mxu0 0
        %323 = vmatpush1.bf16.msra.mxu0 0
        %324 = vmatprep.subr.bf16.mxu0 0
        %325 = vmatpush1.bf16.msra.mxu0 0
        %326 = vmatprep.subr.bf16.mxu0 0
        %327 = vmatpush1.bf16.msra.mxu0 0
        %328 = vmatprep.subr.bf16.mxu0 0
        %329 = vmatpush1.bf16.msra.mxu0 0
        %330 = vmatprep.subr.bf16.mxu0 0
        %331 = vmatpush1.bf16.msra.mxu0 0
        %332 = vmatprep.subr.bf16.mxu0 0
        %333 = vmatpush1.bf16.msra.mxu0 0
        %334 = vmatprep.subr.bf16.mxu0 0
        %335 = vmatpush1.bf16.msra.mxu0 0
        %336 = vmatprep.subr.bf16.mxu0 0
        %337 = vmatpush1.bf16.msra.mxu0 0
        %338 = vmatprep.subr.bf16.mxu0 0
        %339 = vmatpush1.bf16.msra.mxu0 0
        %340 = vmatprep.mubr.bf16.mxu0 0
        %341 = vmatmul.mubr.bf16.gmra.mrb[0].mxu0 %v306
        %v342 = vpop.f32.mrb[0].mxu0
        %v343 = vadd.f32 %v288, %v342
        %v344 = vpop.f32.mrb[0].mxu0
        %v345 = vpop.f32.mrb[0].mxu0
        %v346 = vpop.f32.mrb[0].mxu0
        %347 = vdwg.mxu0
        %s348 = scalar_lea.vmem %s1, 32
        %v349 = vld [vmem:[%s348] sm:$0xf]
        %v350 = vld [vmem:[%s348 + $0x4] sm:$0xf]
        %v351 = vld [vmem:[%s348 + $0x8] sm:$0xf]
        %v352 = vld [vmem:[%s348 + $0xc] sm:$0xf]
        %354 = vrot.lane.b32.xlu0 %v224, 112
        %v355 = vpop.permute.xlu0 %354
        %v360 = vunpack.c.l.b16 %v349
        %v361 = vunpack.c.l.b16 %v350
        %v362 = vunpack.c.l.b16 %v351
        %v363 = vunpack.c.l.b16 %v352
        %v364 = vpack.c.b16 %v361, %v360
        %v365 = vpack.c.b16 %v363, %v362
        %v369 = vsel %vm249, %v355, 0
        %371 = vmatprep.subr.bf16.mxu0 0
        %372 = vmatpush1.bf16.msra.mxu0 %v364
        %373 = vmatprep.subr.bf16.mxu0 0
        %374 = vmatpush1.bf16.msra.mxu0 %v365
        %375 = vmatprep.subr.bf16.mxu0 0
        %376 = vmatpush1.bf16.msra.mxu0 0
        %377 = vmatprep.subr.bf16.mxu0 0
        %378 = vmatpush1.bf16.msra.mxu0 0
        %379 = vmatprep.subr.bf16.mxu0 0
        %380 = vmatpush1.bf16.msra.mxu0 0
        %381 = vmatprep.subr.bf16.mxu0 0
        %382 = vmatpush1.bf16.msra.mxu0 0
        %383 = vmatprep.subr.bf16.mxu0 0
        %384 = vmatpush1.bf16.msra.mxu0 0
        %385 = vmatprep.subr.bf16.mxu0 0
        %386 = vmatpush1.bf16.msra.mxu0 0
        %387 = vmatprep.subr.bf16.mxu0 0
        %388 = vmatpush1.bf16.msra.mxu0 0
        %389 = vmatprep.subr.bf16.mxu0 0
        %390 = vmatpush1.bf16.msra.mxu0 0
        %391 = vmatprep.subr.bf16.mxu0 0
        %392 = vmatpush1.bf16.msra.mxu0 0
        %393 = vmatprep.subr.bf16.mxu0 0
        %394 = vmatpush1.bf16.msra.mxu0 0
        %395 = vmatprep.subr.bf16.mxu0 0
        %396 = vmatpush1.bf16.msra.mxu0 0
        %397 = vmatprep.subr.bf16.mxu0 0
        %398 = vmatpush1.bf16.msra.mxu0 0
        %399 = vmatprep.subr.bf16.mxu0 0
        %400 = vmatpush1.bf16.msra.mxu0 0
        %401 = vmatprep.subr.bf16.mxu0 0
        %402 = vmatpush1.bf16.msra.mxu0 0
        %403 = vmatprep.mubr.bf16.mxu0 0
        %404 = vmatmul.mubr.bf16.gmra.mrb[0].mxu0 %v369
        %v405 = vpop.f32.mrb[0].mxu0
        %v406 = vadd.f32 0.0, %v405
        %v407 = vpop.f32.mrb[0].mxu0
        %v408 = vpop.f32.mrb[0].mxu0
        %v409 = vpop.f32.mrb[0].mxu0
        %410 = vdwg.mxu0
        %v411 = vadd.f32 %v343, %v406
        %s412 = scalar_lea.vmem %s198, 8 [#allocation2]
        %v413 = vld [vmem:[%s412] sm:$0x3]
        %v414 = vpack.c.bf16 %v413, %v413
        %s415 = scalar_lea.vmem %s1, 48
        %v416 = vld [vmem:[%s415] sm:$0xf]
        %v417 = vld [vmem:[%s415 + $0x4] sm:$0xf]
        %v418 = vld [vmem:[%s415 + $0x8] sm:$0xf]
        %v419 = vld [vmem:[%s415 + $0xc] sm:$0xf]
        %v424 = vunpack.c.l.b16 %v416
        %v425 = vunpack.c.l.b16 %v417
        %v426 = vunpack.c.l.b16 %v418
        %v427 = vunpack.c.l.b16 %v419
        %v428 = vpack.c.b16 %v425, %v424
        %v429 = vpack.c.b16 %v427, %v426
        %v433 = vsel %vm249, %v414, 0
        %435 = vmatprep.subr.bf16.mxu0 0
        %436 = vmatpush1.bf16.msra.mxu0 %v428
        %437 = vmatprep.subr.bf16.mxu0 0
        %438 = vmatpush1.bf16.msra.mxu0 %v429
        %439 = vmatprep.subr.bf16.mxu0 0
        %440 = vmatpush1.bf16.msra.mxu0 0
        %441 = vmatprep.subr.bf16.mxu0 0
        %442 = vmatpush1.bf16.msra.mxu0 0
        %443 = vmatprep.subr.bf16.mxu0 0
        %444 = vmatpush1.bf16.msra.mxu0 0
        %445 = vmatprep.subr.bf16.mxu0 0
        %446 = vmatpush1.bf16.msra.mxu0 0
        %447 = vmatprep.subr.bf16.mxu0 0
        %448 = vmatpush1.bf16.msra.mxu0 0
        %449 = vmatprep.subr.bf16.mxu0 0
        %450 = vmatpush1.bf16.msra.mxu0 0
        %451 = vmatprep.subr.bf16.mxu0 0
        %452 = vmatpush1.bf16.msra.mxu0 0
        %453 = vmatprep.subr.bf16.mxu0 0
        %454 = vmatpush1.bf16.msra.mxu0 0
        %455 = vmatprep.subr.bf16.mxu0 0
        %456 = vmatpush1.bf16.msra.mxu0 0
        %457 = vmatprep.subr.bf16.mxu0 0
        %458 = vmatpush1.bf16.msra.mxu0 0
        %459 = vmatprep.subr.bf16.mxu0 0
        %460 = vmatpush1.bf16.msra.mxu0 0
        %461 = vmatprep.subr.bf16.mxu0 0
        %462 = vmatpush1.bf16.msra.mxu0 0
        %463 = vmatprep.subr.bf16.mxu0 0
        %464 = vmatpush1.bf16.msra.mxu0 0
        %465 = vmatprep.subr.bf16.mxu0 0
        %466 = vmatpush1.bf16.msra.mxu0 0
        %467 = vmatprep.mubr.bf16.mxu0 0
        %468 = vmatmul.mubr.bf16.gmra.mrb[0].mxu0 %v433
        %v469 = vpop.f32.mrb[0].mxu0
        %v470 = vadd.f32 0.0, %v469
        %v471 = vpop.f32.mrb[0].mxu0
        %v472 = vpop.f32.mrb[0].mxu0
        %v473 = vpop.f32.mrb[0].mxu0
        %474 = vdwg.mxu0
        %v475 = vadd.f32 %v411, %v470
        %s476 = scalar_lea.vmem %s198, 12 [#allocation2]
        %v477 = vld [vmem:[%s476] sm:$0x3]
        %v478 = vpack.c.bf16 %v477, %v477
        %s479 = scalar_lea.vmem %s1, 64
        %v480 = vld [vmem:[%s479] sm:$0xf]
        %v481 = vld [vmem:[%s479 + $0x4] sm:$0xf]
        %v482 = vld [vmem:[%s479 + $0x8] sm:$0xf]
        %v483 = vld [vmem:[%s479 + $0xc] sm:$0xf]
        %v488 = vunpack.c.l.b16 %v480
        %v489 = vunpack.c.l.b16 %v481
        %v490 = vunpack.c.l.b16 %v482
        %v491 = vunpack.c.l.b16 %v483
        %v492 = vpack.c.b16 %v489, %v488
        %v493 = vpack.c.b16 %v491, %v490
        %v497 = vsel %vm249, %v478, 0
        %499 = vmatprep.subr.bf16.mxu0 0
        %500 = vmatpush1.bf16.msra.mxu0 %v492
        %501 = vmatprep.subr.bf16.mxu0 0
        %502 = vmatpush1.bf16.msra.mxu0 %v493
        %503 = vmatprep.subr.bf16.mxu0 0
        %504 = vmatpush1.bf16.msra.mxu0 0
        %505 = vmatprep.subr.bf16.mxu0 0
        %506 = vmatpush1.bf16.msra.mxu0 0
        %507 = vmatprep.subr.bf16.mxu0 0
        %508 = vmatpush1.bf16.msra.mxu0 0
        %509 = vmatprep.subr.bf16.mxu0 0
        %510 = vmatpush1.bf16.msra.mxu0 0
        %511 = vmatprep.subr.bf16.mxu0 0
        %512 = vmatpush1.bf16.msra.mxu0 0
        %513 = vmatprep.subr.bf16.mxu0 0
        %514 = vmatpush1.bf16.msra.mxu0 0
        %515 = vmatprep.subr.bf16.mxu0 0
        %516 = vmatpush1.bf16.msra.mxu0 0
        %517 = vmatprep.subr.bf16.mxu0 0
        %518 = vmatpush1.bf16.msra.mxu0 0
        %519 = vmatprep.subr.bf16.mxu0 0
        %520 = vmatpush1.bf16.msra.mxu0 0
        %521 = vmatprep.subr.bf16.mxu0 0
        %522 = vmatpush1.bf16.msra.mxu0 0
        %523 = vmatprep.subr.bf16.mxu0 0
        %524 = vmatpush1.bf16.msra.mxu0 0
        %525 = vmatprep.subr.bf16.mxu0 0
        %526 = vmatpush1.bf16.msra.mxu0 0
        %527 = vmatprep.subr.bf16.mxu0 0
        %528 = vmatpush1.bf16.msra.mxu0 0
        %529 = vmatprep.subr.bf16.mxu0 0
        %530 = vmatpush1.bf16.msra.mxu0 0
        %531 = vmatprep.mubr.bf16.mxu0 0
        %532 = vmatmul.mubr.bf16.gmra.mrb[0].mxu0 %v497
        %v533 = vpop.f32.mrb[0].mxu0
        %v534 = vadd.f32 0.0, %v533
        %v535 = vpop.f32.mrb[0].mxu0
        %v536 = vpop.f32.mrb[0].mxu0
        %v537 = vpop.f32.mrb[0].mxu0
        %538 = vdwg.mxu0
        %v539 = vadd.f32 %v475, %v534
        %s540 = scalar_lea.vmem %s1, 80
        %v541 = vld [vmem:[%s540] sm:$0xf]
        %v542 = vld [vmem:[%s540 + $0x4] sm:$0xf]
        %v543 = vld [vmem:[%s540 + $0x8] sm:$0xf]
        %v544 = vld [vmem:[%s540 + $0xc] sm:$0xf]
        %546 = vrot.lane.b32.xlu0 %v414, 112
        %v547 = vpop.permute.xlu0 %546
        %v552 = vunpack.c.l.b16 %v541
        %v553 = vunpack.c.l.b16 %v542
        %v554 = vunpack.c.l.b16 %v543
        %v555 = vunpack.c.l.b16 %v544
        %v556 = vpack.c.b16 %v553, %v552
        %v557 = vpack.c.b16 %v555, %v554
        %v561 = vsel %vm249, %v547, 0
        %563 = vmatprep.subr.bf16.mxu0 0
        %564 = vmatpush1.bf16.msra.mxu0 %v556
        %565 = vmatprep.subr.bf16.mxu0 0
        %566 = vmatpush1.bf16.msra.mxu0 %v557
        %567 = vmatprep.subr.bf16.mxu0 0
        %568 = vmatpush1.bf16.msra.mxu0 0
        %569 = vmatprep.subr.bf16.mxu0 0
        %570 = vmatpush1.bf16.msra.mxu0 0
        %571 = vmatprep.subr.bf16.mxu0 0
        %572 = vmatpush1.bf16.msra.mxu0 0
        %573 = vmatprep.subr.bf16.mxu0 0
        %574 = vmatpush1.bf16.msra.mxu0 0
        %575 = vmatprep.subr.bf16.mxu0 0
        %576 = vmatpush1.bf16.msra.mxu0 0
        %577 = vmatprep.subr.bf16.mxu0 0
        %578 = vmatpush1.bf16.msra.mxu0 0
        %579 = vmatprep.subr.bf16.mxu0 0
        %580 = vmatpush1.bf16.msra.mxu0 0
        %581 = vmatprep.subr.bf16.mxu0 0
        %582 = vmatpush1.bf16.msra.mxu0 0
        %583 = vmatprep.subr.bf16.mxu0 0
        %584 = vmatpush1.bf16.msra.mxu0 0
        %585 = vmatprep.subr.bf16.mxu0 0
        %586 = vmatpush1.bf16.msra.mxu0 0
        %587 = vmatprep.subr.bf16.mxu0 0
        %588 = vmatpush1.bf16.msra.mxu0 0
        %589 = vmatprep.subr.bf16.mxu0 0
        %590 = vmatpush1.bf16.msra.mxu0 0
        %591 = vmatprep.subr.bf16.mxu0 0
        %592 = vmatpush1.bf16.msra.mxu0 0
        %593 = vmatprep.subr.bf16.mxu0 0
        %594 = vmatpush1.bf16.msra.mxu0 0
        %595 = vmatprep.mubr.bf16.mxu0 0
        %596 = vmatmul.mubr.bf16.gmra.mrb[0].mxu0 %v561
        %v597 = vpop.f32.mrb[0].mxu0
        %v598 = vadd.f32 0.0, %v597
        %v599 = vpop.f32.mrb[0].mxu0
        %v600 = vpop.f32.mrb[0].mxu0
        %v601 = vpop.f32.mrb[0].mxu0
        %602 = vdwg.mxu0
        %v603 = vadd.f32 %v539, %v598
        %v604 = vld [vmem:[%s198 + $0x1] sm:$0x3]
        %v605 = vpack.c.bf16 %v604, %v604
        %s606 = scalar_lea.vmem %s1, 96
        %v607 = vld [vmem:[%s606] sm:$0xf]
        %v608 = vld [vmem:[%s606 + $0x4] sm:$0xf]
        %v609 = vld [vmem:[%s606 + $0x8] sm:$0xf]
        %v610 = vld [vmem:[%s606 + $0xc] sm:$0xf]
        %v615 = vunpack.c.l.b16 %v607
        %v616 = vunpack.c.l.b16 %v608
        %v617 = vunpack.c.l.b16 %v609
        %v618 = vunpack.c.l.b16 %v610
        %v619 = vpack.c.b16 %v616, %v615
        %v620 = vpack.c.b16 %v618, %v617
        %v624 = vsel %vm249, %v605, 0
        %626 = vmatprep.subr.bf16.mxu0 0
        %627 = vmatpush1.bf16.msra.mxu0 %v619
        %628 = vmatprep.subr.bf16.mxu0 0
        %629 = vmatpush1.bf16.msra.mxu0 %v620
        %630 = vmatprep.subr.bf16.mxu0 0
        %631 = vmatpush1.bf16.msra.mxu0 0
        %632 = vmatprep.subr.bf16.mxu0 0
        %633 = vmatpush1.bf16.msra.mxu0 0
        %634 = vmatprep.subr.bf16.mxu0 0
        %635 = vmatpush1.bf16.msra.mxu0 0
        %636 = vmatprep.subr.bf16.mxu0 0
        %637 = vmatpush1.bf16.msra.mxu0 0
        %638 = vmatprep.subr.bf16.mxu0 0
        %639 = vmatpush1.bf16.msra.mxu0 0
        %640 = vmatprep.subr.bf16.mxu0 0
        %641 = vmatpush1.bf16.msra.mxu0 0
        %642 = vmatprep.subr.bf16.mxu0 0
        %643 = vmatpush1.bf16.msra.mxu0 0
        %644 = vmatprep.subr.bf16.mxu0 0
        %645 = vmatpush1.bf16.msra.mxu0 0
        %646 = vmatprep.subr.bf16.mxu0 0
        %647 = vmatpush1.bf16.msra.mxu0 0
        %648 = vmatprep.subr.bf16.mxu0 0
        %649 = vmatpush1.bf16.msra.mxu0 0
        %650 = vmatprep.subr.bf16.mxu0 0
        %651 = vmatpush1.bf16.msra.mxu0 0
        %652 = vmatprep.subr.bf16.mxu0 0
        %653 = vmatpush1.bf16.msra.mxu0 0
        %654 = vmatprep.subr.bf16.mxu0 0
        %655 = vmatpush1.bf16.msra.mxu0 0
        %656 = vmatprep.subr.bf16.mxu0 0
        %657 = vmatpush1.bf16.msra.mxu0 0
        %658 = vmatprep.mubr.bf16.mxu0 0
        %659 = vmatmul.mubr.bf16.gmra.mrb[0].mxu0 %v624
        %v660 = vpop.f32.mrb[0].mxu0
        %v661 = vadd.f32 0.0, %v660
        %v662 = vpop.f32.mrb[0].mxu0
        %v663 = vpop.f32.mrb[0].mxu0
        %v664 = vpop.f32.mrb[0].mxu0
        %665 = vdwg.mxu0
        %v666 = vadd.f32 %v603, %v661
        %v667 = vld [vmem:[%s229 + $0x1] sm:$0x3]
        %v668 = vpack.c.bf16 %v667, %v667
        %s669 = scalar_lea.vmem %s1, 112
        %v670 = vld [vmem:[%s669] sm:$0xf]
        %v671 = vld [vmem:[%s669 + $0x4] sm:$0xf]
        %v672 = vld [vmem:[%s669 + $0x8] sm:$0xf]
        %v673 = vld [vmem:[%s669 + $0xc] sm:$0xf]
        %v678 = vunpack.c.l.b16 %v670
        %v679 = vunpack.c.l.b16 %v671
        %v680 = vunpack.c.l.b16 %v672
        %v681 = vunpack.c.l.b16 %v673
        %v682 = vpack.c.b16 %v679, %v678
        %v683 = vpack.c.b16 %v681, %v680
        %v687 = vsel %vm249, %v668, 0
        %689 = vmatprep.subr.bf16.mxu0 0
        %690 = vmatpush1.bf16.msra.mxu0 %v682
        %691 = vmatprep.subr.bf16.mxu0 0
        %692 = vmatpush1.bf16.msra.mxu0 %v683
        %693 = vmatprep.subr.bf16.mxu0 0
        %694 = vmatpush1.bf16.msra.mxu0 0
        %695 = vmatprep.subr.bf16.mxu0 0
        %696 = vmatpush1.bf16.msra.mxu0 0
        %697 = vmatprep.subr.bf16.mxu0 0
        %698 = vmatpush1.bf16.msra.mxu0 0
        %699 = vmatprep.subr.bf16.mxu0 0
        %700 = vmatpush1.bf16.msra.mxu0 0
        %701 = vmatprep.subr.bf16.mxu0 0
        %702 = vmatpush1.bf16.msra.mxu0 0
        %703 = vmatprep.subr.bf16.mxu0 0
        %704 = vmatpush1.bf16.msra.mxu0 0
        %705 = vmatprep.subr.bf16.mxu0 0
        %706 = vmatpush1.bf16.msra.mxu0 0
        %707 = vmatprep.subr.bf16.mxu0 0
        %708 = vmatpush1.bf16.msra.mxu0 0
        %709 = vmatprep.subr.bf16.mxu0 0
        %710 = vmatpush1.bf16.msra.mxu0 0
        %711 = vmatprep.subr.bf16.mxu0 0
        %712 = vmatpush1.bf16.msra.mxu0 0
        %713 = vmatprep.subr.bf16.mxu0 0
        %714 = vmatpush1.bf16.msra.mxu0 0
        %715 = vmatprep.subr.bf16.mxu0 0
        %716 = vmatpush1.bf16.msra.mxu0 0
        %717 = vmatprep.subr.bf16.mxu0 0
        %718 = vmatpush1.bf16.msra.mxu0 0
        %719 = vmatprep.subr.bf16.mxu0 0
        %720 = vmatpush1.bf16.msra.mxu0 0
        %721 = vmatprep.mubr.bf16.mxu0 0
        %722 = vmatmul.mubr.bf16.gmra.mrb[0].mxu0 %v687
        %v723 = vpop.f32.mrb[0].mxu0
        %v724 = vadd.f32 0.0, %v723
        %v725 = vpop.f32.mrb[0].mxu0
        %v726 = vpop.f32.mrb[0].mxu0
        %v727 = vpop.f32.mrb[0].mxu0
        %728 = vdwg.mxu0
        %v729 = vadd.f32 %v666, %v724
        %s730 = scalar_lea.vmem %s1, 128
        %v731 = vld [vmem:[%s730] sm:$0xf]
        %v732 = vld [vmem:[%s730 + $0x4] sm:$0xf]
        %v733 = vld [vmem:[%s730 + $0x8] sm:$0xf]
        %v734 = vld [vmem:[%s730 + $0xc] sm:$0xf]
        %736 = vrot.lane.b32.xlu0 %v605, 112
        %v737 = vpop.permute.xlu0 %736
        %v742 = vunpack.c.l.b16 %v731
        %v743 = vunpack.c.l.b16 %v732
        %v744 = vunpack.c.l.b16 %v733
        %v745 = vunpack.c.l.b16 %v734
        %v746 = vpack.c.b16 %v743, %v742
        %v747 = vpack.c.b16 %v745, %v744
        %v751 = vsel %vm249, %v737, 0
        %753 = vmatprep.subr.bf16.mxu0 0
        %754 = vmatpush1.bf16.msra.mxu0 %v746
        %755 = vmatprep.subr.bf16.mxu0 0
        %756 = vmatpush1.bf16.msra.mxu0 %v747
        %757 = vmatprep.subr.bf16.mxu0 0
        %758 = vmatpush1.bf16.msra.mxu0 0
        %759 = vmatprep.subr.bf16.mxu0 0
        %760 = vmatpush1.bf16.msra.mxu0 0
        %761 = vmatprep.subr.bf16.mxu0 0
        %762 = vmatpush1.bf16.msra.mxu0 0
        %763 = vmatprep.subr.bf16.mxu0 0
        %764 = vmatpush1.bf16.msra.mxu0 0
        %765 = vmatprep.subr.bf16.mxu0 0
        %766 = vmatpush1.bf16.msra.mxu0 0
        %767 = vmatprep.subr.bf16.mxu0 0
        %768 = vmatpush1.bf16.msra.mxu0 0
        %769 = vmatprep.subr.bf16.mxu0 0
        %770 = vmatpush1.bf16.msra.mxu0 0
        %771 = vmatprep.subr.bf16.mxu0 0
        %772 = vmatpush1.bf16.msra.mxu0 0
        %773 = vmatprep.subr.bf16.mxu0 0
        %774 = vmatpush1.bf16.msra.mxu0 0
        %775 = vmatprep.subr.bf16.mxu0 0
        %776 = vmatpush1.bf16.msra.mxu0 0
        %777 = vmatprep.subr.bf16.mxu0 0
        %778 = vmatpush1.bf16.msra.mxu0 0
        %779 = vmatprep.subr.bf16.mxu0 0
        %780 = vmatpush1.bf16.msra.mxu0 0
        %781 = vmatprep.subr.bf16.mxu0 0
        %782 = vmatpush1.bf16.msra.mxu0 0
        %783 = vmatprep.subr.bf16.mxu0 0
        %784 = vmatpush1.bf16.msra.mxu0 0
        %785 = vmatprep.mubr.bf16.mxu0 0
        %786 = vmatmul.mubr.bf16.gmra.mrb[0].mxu0 %v751
        %v787 = vpop.f32.mrb[0].mxu0
        %v788 = vadd.f32 0.0, %v787
        %v789 = vpop.f32.mrb[0].mxu0
        %v790 = vpop.f32.mrb[0].mxu0
        %v791 = vpop.f32.mrb[0].mxu0
        %792 = vdwg.mxu0
        %v793 = vadd.f32 %v729, %v788
        %v794 = vld [vmem:[%s2] sm:$0x1]
        %v796 = vlaneseq
        %v797 = vshrl.u32 %v796, 7
        %v798 = vsub.s32 0, %v797
        %v799 = vrot.slane %v794, %v798
        %v801 = vadd.f32 %v793, %v799
        %v802 = vmax.f32 %v801, 0.0
        %vm803 = vcmask 517120
        %804 = vst.msk [vmem:[%s221] sm:$0x3] %vm803, %v802
        %p805 = scmp.lt.s32.totalorder %s14, 1
        %s806 = scalar_select %p805, %s14, 1
        %s807 = smul.addr %s806, 2
        %s808 = scalar_lea.vmem %s3, %s807
        // Predicated region
        $region74: #{backbone_with_fpn_forward.8} parent=68 // pred_check
          %p809 = pneg %p100
        $region75: #{backbone_with_fpn_forward.8} parent=68 // pred_check_branch
          %811 = sbr.rel (%p809) target = $region77
        $region76: #{backbone_with_fpn_forward.8} parent=68 // pred_region
          _
        $region77: #{backbone_with_fpn_forward.8} parent=68 // pred_fallthru
          _
      $region69: #{backbone_with_fpn_forward.8} parent=5 // pred_fallthru
        _
      %p812 = scmp.le.s32.totalorder 2, %s9
      // Predicated region
      $region78: #{backbone_with_fpn_forward.8} parent=5 // pred_check
        %p813 = pneg %p812
      $region79: #{backbone_with_fpn_forward.8} parent=5 // pred_check_branch
        %815 = sbr.rel (%p813) target = $region81
      $region80: #{backbone_with_fpn_forward.8} parent=5 // pred_region
        %s816 = ssub.s32 %s9, 2
        // Predicated region
        $region82: #{backbone_with_fpn_forward.8} parent=80 // pred_check
          %p817 = pneg %p106
        $region83: #{backbone_with_fpn_forward.8} parent=80 // pred_check_branch
          %819 = sbr.rel (%p817) target = $region85
        $region84: #{backbone_with_fpn_forward.8} parent=80 // pred_region
          %p820 = scmp.lt.s32.totalorder %s15, 1
          %s821 = scalar_select %p820, %s15, 1
          %s822 = smul.addr %s821, 2
          %s823 = scalar_lea.vmem %s3, %s822
        $region85: #{backbone_with_fpn_forward.8} parent=80 // pred_fallthru
          _
      $region81: #{backbone_with_fpn_forward.8} parent=5 // pred_fallthru
        _
    $region6: #{backbone_with_fpn_forward.8} parent=1 // loop_footer
      %s13 = sadd.s32 1, %s9
    $region7: #{backbone_with_fpn_forward.8} parent=1 // loop_footer_branch
      %8 = sbr.rel target = $region3
    $region8: #{backbone_with_fpn_forward.8} parent=1 // loop_exit
      _

// kernel: backbone_with_fpn_forward.9
$region0: #{backbone_with_fpn_forward.9}
  #allocation0 [shape = 'u32[]', space=smem, size = 0x4, offset = 0x4, fixed_abs, tag = 'smem constant byte address 0x4 - core index']
  #allocation1 [shape = 'u32[144,128]{1,0:T(1,128)}', space=vmem, size = 0x12000, scoped, tag = 'internal scratch']
  #allocation2 [shape = 'bf16[4,64]{1,0:T(4,128)(2,1)}', space=vmem, size = 0x400, scoped, tag = 'scratch operand']
  %s0 = inlined_call_operand.vmem [shape: f32[2,2,64], index: 0, kind: input, shape index: {}]
  %s1 = inlined_call_operand.vmem [shape: bf16[64,32], index: 1, kind: input, shape index: {}]
  %s2 = inlined_call_operand.vmem [shape: f32[1,32], index: 2, kind: input, shape index: {}]
  %s3 = inlined_call_operand.vmem [shape: bf16[9,32,32], index: 3, kind: input, shape index: {}]
  %s4 = inlined_call_operand.vmem [shape: f32[1,32], index: 4, kind: input, shape index: {}]
  %s5 = inlined_call_operand.vmem [shape: f32[2,2,32], index: 5, kind: output, shape index: {0}]
  %s6 = inlined_call_operand.vmem [shape: f32[2,2,32], index: 6, kind: output, shape index: {1}]
  %7 = xla_tuple %s5, %s6
  %s8 = sld [smem:[#allocation0]]
  $region61: #{backbone_with_fpn_forward.9} parent=0
    _
  %s10 = ssub.s32 1, %s8
  %s11 = scalar_select 0, %s10, %s8
  loop: start=0, step=1, limit=4
  $region2: #{backbone_with_fpn_forward.9} parent=0 // loop_pre_header
    _
  $region3: #{backbone_with_fpn_forward.9} parent=0 // loop_header
    %s13 = sphi 0, %s17
    %p14 = scmp.ge.s32.totalorder %s13, 4
    %s23 = sphi 0, %s25
    %s26 = sphi 0, %s23
    %s27 = sphi 0, %s26
    %s43 = sphi 0, %s27
    %s47 = sphi 0, %s47
    %s49 = sphi 0, %s47
    %s50 = sphi 0, %s49
    %s64 = sphi 0, %s50
    %s68 = sphi 0, %s68
    %s70 = sphi 0, %s68
    %s71 = sphi 0, %s70
    %s85 = sphi 0, %s71
    %s89 = sphi 0, %s89
    %s91 = sphi 0, %s89
    %s92 = sphi 0, %s91
    %s106 = sphi 0, %s92
    %s110 = sphi 0, %s110
    %s112 = sphi 0, %s110
    %s113 = sphi 0, %s112
    %s127 = sphi 0, %s113
    %s133 = sphi 0, %s135
    %s136 = sphi 0, %s133
    %s137 = sphi 0, %s136
    %s153 = sphi 0, %s137
    %s159 = sphi 0, %s161
    %s162 = sphi 0, %s159
    %s163 = sphi 0, %s162
    %s179 = sphi 0, %s163
  $region4: #{backbone_with_fpn_forward.9} parent=0 // loop_header_branch
    %16 = sbr.rel (%p14) target = $region8
  $region5: #{backbone_with_fpn_forward.9} parent=0 // loop_body
    %s18 = ssub.s32 %s13, 1
    %s19 = ssub.s32 %s13, 2
    %s20 = sadd.s32 %s13, 1
    %s21 = ssub.s32 %s13, %s20
    %p22 = scmp.eq.s32.totalorder %s21, 0
    %s24 = sadd.s32 %s23, 1
    %s25 = scalar_select %p22, %s23, %s24
    %p28 = pneg %p22
    %p29 = scmp.eq.s32.totalorder %s13, 1
    %p30 = por %p28, %p29
    %p31 = scmp.ne.s32.totalorder %s23, %s26
    %p32 = scmp.eq.s32.totalorder %s13, 0
    %p33 = por %p31, %p32
    %p34 = scmp.ne.s32.totalorder %s23, %s26
    %p35 = scmp.eq.s32.totalorder %s18, 1
    %p36 = por %p34, %p35
    %p37 = scmp.ne.s32.totalorder %s26, %s27
    %p38 = scmp.eq.s32.totalorder %s18, 0
    %p39 = por %p37, %p38
    %p40 = scmp.ne.s32.totalorder %s26, %s27
    %p41 = scmp.eq.s32.totalorder %s19, 1
    %p42 = por %p40, %p41
    %p44 = scmp.ne.s32.totalorder %s27, %s43
    %p45 = scmp.eq.s32.totalorder %s19, 0
    %p46 = por %p44, %p45
    %s48 = sadd.s32 %s47, 1
    %p51 = scmp.eq.s32.totalorder %s13, 1
    %p52 = scmp.ne.s32.totalorder %s47, %s49
    %p53 = scmp.eq.s32.totalorder %s13, 0
    %p54 = por %p52, %p53
    %p55 = scmp.ne.s32.totalorder %s47, %s49
    %p56 = scmp.eq.s32.totalorder %s18, 1
    %p57 = por %p55, %p56
    %p58 = scmp.ne.s32.totalorder %s49, %s50
    %p59 = scmp.eq.s32.totalorder %s18, 0
    %p60 = por %p58, %p59
    %p61 = scmp.ne.s32.totalorder %s49, %s50
    %p62 = scmp.eq.s32.totalorder %s19, 1
    %p63 = por %p61, %p62
    %p65 = scmp.ne.s32.totalorder %s50, %s64
    %p66 = scmp.eq.s32.totalorder %s19, 0
    %p67 = por %p65, %p66
    %s69 = sadd.s32 %s68, 1
    %p72 = scmp.eq.s32.totalorder %s13, 1
    %p73 = scmp.ne.s32.totalorder %s68, %s70
    %p74 = scmp.eq.s32.totalorder %s13, 0
    %p75 = por %p73, %p74
    %p76 = scmp.ne.s32.totalorder %s68, %s70
    %p77 = scmp.eq.s32.totalorder %s18, 1
    %p78 = por %p76, %p77
    %p79 = scmp.ne.s32.totalorder %s70, %s71
    %p80 = scmp.eq.s32.totalorder %s18, 0
    %p81 = por %p79, %p80
    %p82 = scmp.ne.s32.totalorder %s70, %s71
    %p83 = scmp.eq.s32.totalorder %s19, 1
    %p84 = por %p82, %p83
    %p86 = scmp.ne.s32.totalorder %s71, %s85
    %p87 = scmp.eq.s32.totalorder %s19, 0
    %p88 = por %p86, %p87
    %s90 = sadd.s32 %s89, 1
    %p93 = scmp.eq.s32.totalorder %s13, 1
    %p94 = scmp.ne.s32.totalorder %s89, %s91
    %p95 = scmp.eq.s32.totalorder %s13, 0
    %p96 = por %p94, %p95
    %p97 = scmp.ne.s32.totalorder %s89, %s91
    %p98 = scmp.eq.s32.totalorder %s18, 1
    %p99 = por %p97, %p98
    %p100 = scmp.ne.s32.totalorder %s91, %s92
    %p101 = scmp.eq.s32.totalorder %s18, 0
    %p102 = por %p100, %p101
    %p103 = scmp.ne.s32.totalorder %s91, %s92
    %p104 = scmp.eq.s32.totalorder %s19, 1
    %p105 = por %p103, %p104
    %p107 = scmp.ne.s32.totalorder %s92, %s106
    %p108 = scmp.eq.s32.totalorder %s19, 0
    %p109 = por %p107, %p108
    %s111 = sadd.s32 %s110, 1
    %p114 = scmp.eq.s32.totalorder %s13, 1
    %p115 = scmp.ne.s32.totalorder %s110, %s112
    %p116 = scmp.eq.s32.totalorder %s13, 0
    %p117 = por %p115, %p116
    %p118 = scmp.ne.s32.totalorder %s110, %s112
    %p119 = scmp.eq.s32.totalorder %s18, 1
    %p120 = por %p118, %p119
    %p121 = scmp.ne.s32.totalorder %s112, %s113
    %p122 = scmp.eq.s32.totalorder %s18, 0
    %p123 = por %p121, %p122
    %p124 = scmp.ne.s32.totalorder %s112, %s113
    %p125 = scmp.eq.s32.totalorder %s19, 1
    %p126 = por %p124, %p125
    %p128 = scmp.ne.s32.totalorder %s113, %s127
    %p129 = scmp.eq.s32.totalorder %s19, 0
    %p130 = por %p128, %p129
    %s131 = ssub.s32 %s13, %s20
    %p132 = scmp.eq.s32.totalorder %s131, 0
    %s134 = sadd.s32 %s133, 1
    %s135 = scalar_select %p132, %s133, %s134
    %p138 = pneg %p132
    %p139 = scmp.eq.s32.totalorder %s13, 1
    %p140 = por %p138, %p139
    %p141 = scmp.ne.s32.totalorder %s133, %s136
    %p142 = scmp.eq.s32.totalorder %s13, 0
    %p143 = por %p141, %p142
    %p144 = scmp.ne.s32.totalorder %s133, %s136
    %p145 = scmp.eq.s32.totalorder %s18, 1
    %p146 = por %p144, %p145
    %p147 = scmp.ne.s32.totalorder %s136, %s137
    %p148 = scmp.eq.s32.totalorder %s18, 0
    %p149 = por %p147, %p148
    %p150 = scmp.ne.s32.totalorder %s136, %s137
    %p151 = scmp.eq.s32.totalorder %s19, 1
    %p152 = por %p150, %p151
    %p154 = scmp.ne.s32.totalorder %s137, %s153
    %p155 = scmp.eq.s32.totalorder %s19, 0
    %p156 = por %p154, %p155
    %s157 = ssub.s32 %s13, %s20
    %p158 = scmp.eq.s32.totalorder %s157, 0
    %s160 = sadd.s32 %s159, 1
    %s161 = scalar_select %p158, %s159, %s160
    %p164 = pneg %p158
    %p165 = scmp.eq.s32.totalorder %s13, 1
    %p166 = por %p164, %p165
    %p167 = scmp.ne.s32.totalorder %s159, %s162
    %p168 = scmp.eq.s32.totalorder %s13, 0
    %p169 = por %p167, %p168
    %p170 = scmp.ne.s32.totalorder %s159, %s162
    %p171 = scmp.eq.s32.totalorder %s18, 1
    %p172 = por %p170, %p171
    %p173 = scmp.ne.s32.totalorder %s162, %s163
    %p174 = scmp.eq.s32.totalorder %s18, 0
    %p175 = por %p173, %p174
    %p176 = scmp.ne.s32.totalorder %s162, %s163
    %p177 = scmp.eq.s32.totalorder %s19, 1
    %p178 = por %p176, %p177
    %p180 = scmp.ne.s32.totalorder %s163, %s179
    %p181 = scmp.eq.s32.totalorder %s19, 0
    %p182 = por %p180, %p181
    %p183 = scmp.le.s32.totalorder 1, %s13
    %p184 = scmp.lt.s32.totalorder %s13, 3
    %p185 = pnand %p183, %p184
    %p186 = pneg %p185
    // Predicated region
    $region9: #{backbone_with_fpn_forward.9} parent=5 // pred_check
      _
    $region10: #{backbone_with_fpn_forward.9} parent=5 // pred_check_branch
      %188 = sbr.rel (%p185) target = $region12
    $region11: #{backbone_with_fpn_forward.9} parent=5 // pred_region
      %s189 = ssub.s32 %s13, 1
      // Predicated region
      $region13: #{backbone_with_fpn_forward.9} parent=11 // pred_check
        %p190 = pneg %p60
      $region14: #{backbone_with_fpn_forward.9} parent=11 // pred_check_branch
        %192 = sbr.rel (%p190) target = $region16
      $region15: #{backbone_with_fpn_forward.9} parent=11 // pred_region
        _
      $region16: #{backbone_with_fpn_forward.9} parent=11 // pred_fallthru
        _
      // Predicated region
      $region17: #{backbone_with_fpn_forward.9} parent=11 // pred_check
        %p193 = pneg %p81
      $region18: #{backbone_with_fpn_forward.9} parent=11 // pred_check_branch
        %195 = sbr.rel (%p193) target = $region20
      $region19: #{backbone_with_fpn_forward.9} parent=11 // pred_region
        _
      $region20: #{backbone_with_fpn_forward.9} parent=11 // pred_fallthru
        _
      // Predicated region
      $region21: #{backbone_with_fpn_forward.9} parent=11 // pred_check
        %p196 = pneg %p102
      $region22: #{backbone_with_fpn_forward.9} parent=11 // pred_check_branch
        %198 = sbr.rel (%p196) target = $region24
      $region23: #{backbone_with_fpn_forward.9} parent=11 // pred_region
        _
      $region24: #{backbone_with_fpn_forward.9} parent=11 // pred_fallthru
        _
      // Predicated region
      $region25: #{backbone_with_fpn_forward.9} parent=11 // pred_check
        %p199 = pneg %p123
      $region26: #{backbone_with_fpn_forward.9} parent=11 // pred_check_branch
        %201 = sbr.rel (%p199) target = $region28
      $region27: #{backbone_with_fpn_forward.9} parent=11 // pred_region
        _
      $region28: #{backbone_with_fpn_forward.9} parent=11 // pred_fallthru
        _
    $region12: #{backbone_with_fpn_forward.9} parent=5 // pred_fallthru
      _
    %p202 = scmp.lt.s32.totalorder %s13, 2
    // Predicated region
    $region29: #{backbone_with_fpn_forward.9} parent=5 // pred_check
      %p203 = pneg %p202
    $region30: #{backbone_with_fpn_forward.9} parent=5 // pred_check_branch
      %205 = sbr.rel (%p203) target = $region32
    $region31: #{backbone_with_fpn_forward.9} parent=5 // pred_region
      // Predicated region
      $region33: #{backbone_with_fpn_forward.9} parent=31 // pred_check
        %p206 = pneg %p33
      $region34: #{backbone_with_fpn_forward.9} parent=31 // pred_check_branch
        %208 = sbr.rel (%p206) target = $region36
      $region35: #{backbone_with_fpn_forward.9} parent=31 // pred_region
        %p209 = scmp.lt.s32.totalorder %s13, 1
        %s210 = scalar_select %p209, %s13, 1
        %s211 = smul.addr %s210, 2
        %s212 = scalar_lea.vmem %s0, %s211
      $region36: #{backbone_with_fpn_forward.9} parent=31 // pred_fallthru
        _
    $region32: #{backbone_with_fpn_forward.9} parent=5 // pred_fallthru
      _
    %p213 = scmp.le.s32.totalorder 1, %s13
    %p214 = scmp.lt.s32.totalorder %s13, 3
    %p215 = pnand %p213, %p214
    %p216 = pneg %p215
    // Predicated region
    $region37: #{backbone_with_fpn_forward.9} parent=5 // pred_check
      _
    $region38: #{backbone_with_fpn_forward.9} parent=5 // pred_check_branch
      %218 = sbr.rel (%p215) target = $region40
    $region39: #{backbone_with_fpn_forward.9} parent=5 // pred_region
      %s219 = ssub.s32 %s13, 1
      %p220 = scmp.lt.s32.totalorder %s18, 1
      %s221 = scalar_select %p220, %s18, 1
      %s222 = smul.addr %s221, 2
      %s223 = scalar_lea.vmem %s0, %s222
      %p224 = pneg %p39
      %p225 = pneg %p36
      %p226 = pneg %p60
      %p227 = pneg %p57
      %p228 = pneg %p81
      %p229 = pneg %p78
      %p230 = pneg %p102
      %p231 = pneg %p99
      %p232 = pneg %p123
      %p233 = pneg %p120
      %p234 = pneg %p149
      %p235 = pneg %p146
      %p236 = scmp.lt.s32.totalorder %s18, 1
      %s237 = scalar_select %p236, %s18, 1
      %s238 = smul.addr %s237, 2
      %s239 = scalar_lea.vmem %s5, %s238
      %p240 = pneg %p175
      %p241 = pneg %p172
      %p242 = scmp.lt.s32.totalorder %s18, 1
      %s243 = scalar_select %p242, %s18, 1
      %s244 = smul.addr %s243, 2
      %s245 = scalar_lea.vmem %s6, %s244
      %p246 = scmp.lt.s32.totalorder %s18, 1
      %s247 = scalar_select %p246, %s18, 1
      %s248 = smul.addr %s247, 2
      %s249 = scalar_lea.vmem %s0, %s248
      %p250 = scmp.lt.s32.totalorder %s18, 1
      %s251 = scalar_select %p250, %s18, 1
      %s252 = smul.addr %s251, 2
      %s253 = scalar_lea.vmem %s5, %s252
      %p254 = scmp.lt.s32.totalorder %s18, 1
      %s255 = scalar_select %p254, %s18, 1
      %s256 = smul.addr %s255, 2
      %s257 = scalar_lea.vmem %s6, %s256
      %v259 = vld [vmem:[%s249] sm:$0x3]
      %v260 = vpack.c.bf16 %v259, %v259
      %v261 = vld [vmem:[%s1] sm:$0xf]
      %v262 = vld [vmem:[%s1 + $0x4] sm:$0xf]
      %v263 = vld [vmem:[%s1 + $0x8] sm:$0xf]
      %v264 = vld [vmem:[%s1 + $0xc] sm:$0xf]
      %v265 = vld [vmem:[%s1 + $0x10] sm:$0xf]
      %v266 = vld [vmem:[%s1 + $0x14] sm:$0xf]
      %v267 = vld [vmem:[%s1 + $0x18] sm:$0xf]
      %v268 = vld [vmem:[%s1 + $0x1c] sm:$0xf]
      %v269 = vld [vmem:[%s2] sm:$0x1]
      %v271 = vlaneseq
      %v272 = vshrl.u32 %v271, 7
      %v273 = vsub.s32 0, %v272
      %v274 = vrot.slane %v269, %v273
      %v284 = vunpack.c.l.b16 %v261
      %v285 = vunpack.c.l.b16 %v262
      %v286 = vunpack.c.l.b16 %v263
      %v287 = vunpack.c.l.b16 %v264
      %v288 = vunpack.c.l.b16 %v265
      %v289 = vunpack.c.l.b16 %v266
      %v290 = vunpack.c.l.b16 %v267
      %v291 = vunpack.c.l.b16 %v268
      %v292 = vpack.c.b16 %v285, %v284
      %v293 = vpack.c.b16 %v287, %v286
      %v294 = vpack.c.b16 %v289, %v288
      %v295 = vpack.c.b16 %v291, %v290
      %vm300 = vcmask 523264
      %v302 = vsel %vm300, %v260, 0
      %304 = vmatprep.subr.bf16.mxu0 0
      %305 = vmatpush1.bf16.msra.mxu0 %v292
      %306 = vmatprep.subr.bf16.mxu0 0
      %307 = vmatpush1.bf16.msra.mxu0 %v293
      %308 = vmatprep.subr.bf16.mxu0 0
      %309 = vmatpush1.bf16.msra.mxu0 %v294
      %310 = vmatprep.subr.bf16.mxu0 0
      %311 = vmatpush1.bf16.msra.mxu0 %v295
      %312 = vmatprep.subr.bf16.mxu0 0
      %313 = vmatpush1.bf16.msra.mxu0 0
      %314 = vmatprep.subr.bf16.mxu0 0
      %315 = vmatpush1.bf16.msra.mxu0 0
      %316 = vmatprep.subr.bf16.mxu0 0
      %317 = vmatpush1.bf16.msra.mxu0 0
      %318 = vmatprep.subr.bf16.mxu0 0
      %319 = vmatpush1.bf16.msra.mxu0 0
      %320 = vmatprep.subr.bf16.mxu0 0
      %321 = vmatpush1.bf16.msra.mxu0 0
      %322 = vmatprep.subr.bf16.mxu0 0
      %323 = vmatpush1.bf16.msra.mxu0 0
      %324 = vmatprep.subr.bf16.mxu0 0
      %325 = vmatpush1.bf16.msra.mxu0 0
      %326 = vmatprep.subr.bf16.mxu0 0
      %327 = vmatpush1.bf16.msra.mxu0 0
      %328 = vmatprep.subr.bf16.mxu0 0
      %329 = vmatpush1.bf16.msra.mxu0 0
      %330 = vmatprep.subr.bf16.mxu0 0
      %331 = vmatpush1.bf16.msra.mxu0 0
      %332 = vmatprep.subr.bf16.mxu0 0
      %333 = vmatpush1.bf16.msra.mxu0 0
      %334 = vmatprep.subr.bf16.mxu0 0
      %335 = vmatpush1.bf16.msra.mxu0 0
      %336 = vmatprep.mubr.bf16.mxu0 0
      %337 = vmatmul.mubr.bf16.gmra.mrb[0].mxu0 %v302
      %v338 = vpop.f32.mrb[0].mxu0
      %v339 = vadd.f32 %v274, %v338
      %v340 = vpop.f32.mrb[0].mxu0
      %v341 = vpop.f32.mrb[0].mxu0
      %v342 = vpop.f32.mrb[0].mxu0
      %343 = vdwg.mxu0
      %vm344 = vcmask 254976
      %345 = vst.msk [vmem:[%s257] sm:$0x3] %vm344, %v339
      %vm346 = vcmask 517120
      %347 = vst.msk [vmem:[#allocation2] sm:$0x3] %vm346, 0
      %v348 = vpack.c.bf16 %v339, %v339
      %v351 = vunpack.c.l.s4 1983009808
      %v352 = vunpack.c.0.s8 %v351
      %v353 = vlaneseq
      %v354 = vshrl.u32 %v353, 7
      %v355 = vsub.s32 %v352, %v354
      %v356 = vrot.slane %v348, %v355
      %v358 = vshrl.u32 %v356, 16
      %v360 = vrot.slane %v358, 7
      %v361 = vshll.u32 %v356, 16
      %v363 = vor.u32 %v360, %v361
      %364 = vrot.lane.b32.xlu0 %v363, 16
      %v365 = vpop.permute.xlu0 %364
      %vm367 = vcmask 386176
      %vm368 = vsmask.f32 1282
      %vm369 = vmand %vm367, %vm368
      %v370 = vld [vmem:[#allocation2] sm:$0x3]
      %v371 = vsel %vm369, %v365, %v370
      %372 = vst [vmem:[#allocation2] sm:$0x3] %v371
      %v373 = vld [vmem:[#allocation2] sm:$0x3]
      %v374 = vld [vmem:[%s3] sm:$0xf]
      %v375 = vld [vmem:[%s3 + $0x4] sm:$0xf]
      %v376 = vld [vmem:[%s3 + $0x8] sm:$0xf]
      %v377 = vld [vmem:[%s3 + $0xc] sm:$0xf]
      %s378 = scalar_lea.vmem %s3, 16
      %v379 = vld [vmem:[%s378] sm:$0xf]
      %v380 = vld [vmem:[%s378 + $0x4] sm:$0xf]
      %v381 = vld [vmem:[%s378 + $0x8] sm:$0xf]
      %v382 = vld [vmem:[%s378 + $0xc] sm:$0xf]
      %v385 = vunpack.c.l.s4 1983009808
      %v386 = vunpack.c.0.s8 %v385
      %v387 = vlaneseq
      %v388 = vshrl.u32 %v387, 7
      %v389 = vsub.s32 %v386, %v388
      %v390 = vrot.slane %v373, %v389
      %391 = vrot.lane.b32.xlu0 %v390, 112
      %v392 = vpop.permute.xlu0 %391
      %v397 = vunpack.c.l.b16 %v379
      %v398 = vunpack.c.l.b16 %v380
      %v399 = vunpack.c.l.b16 %v381
      %v400 = vunpack.c.l.b16 %v382
      %v401 = vpack.c.b16 %v398, %v397
      %v402 = vpack.c.b16 %v400, %v399
      %vm405 = vcmask 261120
      %v407 = vsel %vm405, %v392, 0
      %409 = vmatprep.subr.bf16.mxu0 0
      %410 = vmatpush1.bf16.msra.mxu0 %v401
      %411 = vmatprep.subr.bf16.mxu0 0
      %412 = vmatpush1.bf16.msra.mxu0 %v402
      %413 = vmatprep.subr.bf16.mxu0 0
      %414 = vmatpush1.bf16.msra.mxu0 0
      %415 = vmatprep.subr.bf16.mxu0 0
      %416 = vmatpush1.bf16.msra.mxu0 0
      %417 = vmatprep.subr.bf16.mxu0 0
      %418 = vmatpush1.bf16.msra.mxu0 0
      %419 = vmatprep.subr.bf16.mxu0 0
      %420 = vmatpush1.bf16.msra.mxu0 0
      %421 = vmatprep.subr.bf16.mxu0 0
      %422 = vmatpush1.bf16.msra.mxu0 0
      %423 = vmatprep.subr.bf16.mxu0 0
      %424 = vmatpush1.bf16.msra.mxu0 0
      %425 = vmatprep.subr.bf16.mxu0 0
      %426 = vmatpush1.bf16.msra.mxu0 0
      %427 = vmatprep.subr.bf16.mxu0 0
      %428 = vmatpush1.bf16.msra.mxu0 0
      %429 = vmatprep.subr.bf16.mxu0 0
      %430 = vmatpush1.bf16.msra.mxu0 0
      %431 = vmatprep.subr.bf16.mxu0 0
      %432 = vmatpush1.bf16.msra.mxu0 0
      %433 = vmatprep.subr.bf16.mxu0 0
      %434 = vmatpush1.bf16.msra.mxu0 0
      %435 = vmatprep.subr.bf16.mxu0 0
      %436 = vmatpush1.bf16.msra.mxu0 0
      %437 = vmatprep.subr.bf16.mxu0 0
      %438 = vmatpush1.bf16.msra.mxu0 0
      %439 = vmatprep.subr.bf16.mxu0 0
      %440 = vmatpush1.bf16.msra.mxu0 0
      %441 = vmatprep.mubr.bf16.mxu0 0
      %442 = vmatmul.mubr.bf16.gmra.mrb[0].mxu0 %v407
      %v443 = vpop.f32.mrb[0].mxu0
      %v444 = vadd.f32 0.0, %v443
      %v445 = vpop.f32.mrb[0].mxu0
      %v446 = vpop.f32.mrb[0].mxu0
      %v447 = vpop.f32.mrb[0].mxu0
      %448 = vdwg.mxu0
      %v453 = vunpack.c.l.b16 %v374
      %v454 = vunpack.c.l.b16 %v375
      %v455 = vunpack.c.l.b16 %v376
      %v456 = vunpack.c.l.b16 %v377
      %v457 = vpack.c.b16 %v454, %v453
      %v458 = vpack.c.b16 %v456, %v455
      %v462 = vsel %vm405, %v373, 0
      %464 = vmatprep.subr.bf16.mxu0 0
      %465 = vmatpush1.bf16.msra.mxu0 %v457
      %466 = vmatprep.subr.bf16.mxu0 0
      %467 = vmatpush1.bf16.msra.mxu0 %v458
      %468 = vmatprep.subr.bf16.mxu0 0
      %469 = vmatpush1.bf16.msra.mxu0 0
      %470 = vmatprep.subr.bf16.mxu0 0
      %471 = vmatpush1.bf16.msra.mxu0 0
      %472 = vmatprep.subr.bf16.mxu0 0
      %473 = vmatpush1.bf16.msra.mxu0 0
      %474 = vmatprep.subr.bf16.mxu0 0
      %475 = vmatpush1.bf16.msra.mxu0 0
      %476 = vmatprep.subr.bf16.mxu0 0
      %477 = vmatpush1.bf16.msra.mxu0 0
      %478 = vmatprep.subr.bf16.mxu0 0
      %479 = vmatpush1.bf16.msra.mxu0 0
      %480 = vmatprep.subr.bf16.mxu0 0
      %481 = vmatpush1.bf16.msra.mxu0 0
      %482 = vmatprep.subr.bf16.mxu0 0
      %483 = vmatpush1.bf16.msra.mxu0 0
      %484 = vmatprep.subr.bf16.mxu0 0
      %485 = vmatpush1.bf16.msra.mxu0 0
      %486 = vmatprep.subr.bf16.mxu0 0
      %487 = vmatpush1.bf16.msra.mxu0 0
      %488 = vmatprep.subr.bf16.mxu0 0
      %489 = vmatpush1.bf16.msra.mxu0 0
      %490 = vmatprep.subr.bf16.mxu0 0
      %491 = vmatpush1.bf16.msra.mxu0 0
      %492 = vmatprep.subr.bf16.mxu0 0
      %493 = vmatpush1.bf16.msra.mxu0 0
      %494 = vmatprep.subr.bf16.mxu0 0
      %495 = vmatpush1.bf16.msra.mxu0 0
      %496 = vmatprep.mubr.bf16.mxu0 0
      %497 = vmatmul.mubr.bf16.gmra.mrb[0].mxu0 %v462
      %v498 = vpop.f32.mrb[0].mxu0
      %v499 = vadd.f32 %v444, %v498
      %v500 = vpop.f32.mrb[0].mxu0
      %v501 = vpop.f32.mrb[0].mxu0
      %v502 = vpop.f32.mrb[0].mxu0
      %503 = vdwg.mxu0
      %s504 = scalar_lea.vmem %s3, 32
      %v505 = vld [vmem:[%s504] sm:$0xf]
      %v506 = vld [vmem:[%s504 + $0x4] sm:$0xf]
      %v507 = vld [vmem:[%s504 + $0x8] sm:$0xf]
      %v508 = vld [vmem:[%s504 + $0xc] sm:$0xf]
      %509 = vrot.lane.b32.xlu0 %v390, 96
      %v510 = vpop.permute.xlu0 %509
      %v515 = vunpack.c.l.b16 %v505
      %v516 = vunpack.c.l.b16 %v506
      %v517 = vunpack.c.l.b16 %v507
      %v518 = vunpack.c.l.b16 %v508
      %v519 = vpack.c.b16 %v516, %v515
      %v520 = vpack.c.b16 %v518, %v517
      %v524 = vsel %vm405, %v510, 0
      %526 = vmatprep.subr.bf16.mxu0 0
      %527 = vmatpush1.bf16.msra.mxu0 %v519
      %528 = vmatprep.subr.bf16.mxu0 0
      %529 = vmatpush1.bf16.msra.mxu0 %v520
      %530 = vmatprep.subr.bf16.mxu0 0
      %531 = vmatpush1.bf16.msra.mxu0 0
      %532 = vmatprep.subr.bf16.mxu0 0
      %533 = vmatpush1.bf16.msra.mxu0 0
      %534 = vmatprep.subr.bf16.mxu0 0
      %535 = vmatpush1.bf16.msra.mxu0 0
      %536 = vmatprep.subr.bf16.mxu0 0
      %537 = vmatpush1.bf16.msra.mxu0 0
      %538 = vmatprep.subr.bf16.mxu0 0
      %539 = vmatpush1.bf16.msra.mxu0 0
      %540 = vmatprep.subr.bf16.mxu0 0
      %541 = vmatpush1.bf16.msra.mxu0 0
      %542 = vmatprep.subr.bf16.mxu0 0
      %543 = vmatpush1.bf16.msra.mxu0 0
      %544 = vmatprep.subr.bf16.mxu0 0
      %545 = vmatpush1.bf16.msra.mxu0 0
      %546 = vmatprep.subr.bf16.mxu0 0
      %547 = vmatpush1.bf16.msra.mxu0 0
      %548 = vmatprep.subr.bf16.mxu0 0
      %549 = vmatpush1.bf16.msra.mxu0 0
      %550 = vmatprep.subr.bf16.mxu0 0
      %551 = vmatpush1.bf16.msra.mxu0 0
      %552 = vmatprep.subr.bf16.mxu0 0
      %553 = vmatpush1.bf16.msra.mxu0 0
      %554 = vmatprep.subr.bf16.mxu0 0
      %555 = vmatpush1.bf16.msra.mxu0 0
      %556 = vmatprep.subr.bf16.mxu0 0
      %557 = vmatpush1.bf16.msra.mxu0 0
      %558 = vmatprep.mubr.bf16.mxu0 0
      %559 = vmatmul.mubr.bf16.gmra.mrb[0].mxu0 %v524
      %v560 = vpop.f32.mrb[0].mxu0
      %v561 = vadd.f32 0.0, %v560
      %v562 = vpop.f32.mrb[0].mxu0
      %v563 = vpop.f32.mrb[0].mxu0
      %v564 = vpop.f32.mrb[0].mxu0
      %565 = vdwg.mxu0
      %v566 = vadd.f32 %v499, %v561
      %s567 = scalar_lea.vmem %s3, 48
      %v568 = vld [vmem:[%s567] sm:$0xf]
      %v569 = vld [vmem:[%s567 + $0x4] sm:$0xf]
      %v570 = vld [vmem:[%s567 + $0x8] sm:$0xf]
      %v571 = vld [vmem:[%s567 + $0xc] sm:$0xf]
      %v573 = vshrl.u32 %v390, 16
      %v575 = vshll.u32 %v390, 16
      %v577 = vrot.slane %v575, 1
      %v578 = vor.u32 %v573, %v577
      %v583 = vunpack.c.l.b16 %v568
      %v584 = vunpack.c.l.b16 %v569
      %v585 = vunpack.c.l.b16 %v570
      %v586 = vunpack.c.l.b16 %v571
      %v587 = vpack.c.b16 %v584, %v583
      %v588 = vpack.c.b16 %v586, %v585
      %v592 = vsel %vm405, %v578, 0
      %594 = vmatprep.subr.bf16.mxu0 0
      %595 = vmatpush1.bf16.msra.mxu0 %v587
      %596 = vmatprep.subr.bf16.mxu0 0
      %597 = vmatpush1.bf16.msra.mxu0 %v588
      %598 = vmatprep.subr.bf16.mxu0 0
      %599 = vmatpush1.bf16.msra.mxu0 0
      %600 = vmatprep.subr.bf16.mxu0 0
      %601 = vmatpush1.bf16.msra.mxu0 0
      %602 = vmatprep.subr.bf16.mxu0 0
      %603 = vmatpush1.bf16.msra.mxu0 0
      %604 = vmatprep.subr.bf16.mxu0 0
      %605 = vmatpush1.bf16.msra.mxu0 0
      %606 = vmatprep.subr.bf16.mxu0 0
      %607 = vmatpush1.bf16.msra.mxu0 0
      %608 = vmatprep.subr.bf16.mxu0 0
      %609 = vmatpush1.bf16.msra.mxu0 0
      %610 = vmatprep.subr.bf16.mxu0 0
      %611 = vmatpush1.bf16.msra.mxu0 0
      %612 = vmatprep.subr.bf16.mxu0 0
      %613 = vmatpush1.bf16.msra.mxu0 0
      %614 = vmatprep.subr.bf16.mxu0 0
      %615 = vmatpush1.bf16.msra.mxu0 0
      %616 = vmatprep.subr.bf16.mxu0 0
      %617 = vmatpush1.bf16.msra.mxu0 0
      %618 = vmatprep.subr.bf16.mxu0 0
      %619 = vmatpush1.bf16.msra.mxu0 0
      %620 = vmatprep.subr.bf16.mxu0 0
      %621 = vmatpush1.bf16.msra.mxu0 0
      %622 = vmatprep.subr.bf16.mxu0 0
      %623 = vmatpush1.bf16.msra.mxu0 0
      %624 = vmatprep.subr.bf16.mxu0 0
      %625 = vmatpush1.bf16.msra.mxu0 0
      %626 = vmatprep.mubr.bf16.mxu0 0
      %627 = vmatmul.mubr.bf16.gmra.mrb[0].mxu0 %v592
      %v628 = vpop.f32.mrb[0].mxu0
      %v629 = vadd.f32 0.0, %v628
      %v630 = vpop.f32.mrb[0].mxu0
      %v631 = vpop.f32.mrb[0].mxu0
      %v632 = vpop.f32.mrb[0].mxu0
      %633 = vdwg.mxu0
      %v634 = vadd.f32 %v566, %v629
      %s635 = scalar_lea.vmem %s3, 64
      %v636 = vld [vmem:[%s635] sm:$0xf]
      %v637 = vld [vmem:[%s635 + $0x4] sm:$0xf]
      %v638 = vld [vmem:[%s635 + $0x8] sm:$0xf]
      %v639 = vld [vmem:[%s635 + $0xc] sm:$0xf]
      %640 = vrot.lane.b32.xlu0 %v578, 112
      %v641 = vpop.permute.xlu0 %640
      %v646 = vunpack.c.l.b16 %v636
      %v647 = vunpack.c.l.b16 %v637
      %v648 = vunpack.c.l.b16 %v638
      %v649 = vunpack.c.l.b16 %v639
      %v650 = vpack.c.b16 %v647, %v646
      %v651 = vpack.c.b16 %v649, %v648
      %v655 = vsel %vm405, %v641, 0
      %657 = vmatprep.subr.bf16.mxu0 0
      %658 = vmatpush1.bf16.msra.mxu0 %v650
      %659 = vmatprep.subr.bf16.mxu0 0
      %660 = vmatpush1.bf16.msra.mxu0 %v651
      %661 = vmatprep.subr.bf16.mxu0 0
      %662 = vmatpush1.bf16.msra.mxu0 0
      %663 = vmatprep.subr.bf16.mxu0 0
      %664 = vmatpush1.bf16.msra.mxu0 0
      %665 = vmatprep.subr.bf16.mxu0 0
      %666 = vmatpush1.bf16.msra.mxu0 0
      %667 = vmatprep.subr.bf16.mxu0 0
      %668 = vmatpush1.bf16.msra.mxu0 0
      %669 = vmatprep.subr.bf16.mxu0 0
      %670 = vmatpush1.bf16.msra.mxu0 0
      %671 = vmatprep.subr.bf16.mxu0 0
      %672 = vmatpush1.bf16.msra.mxu0 0
      %673 = vmatprep.subr.bf16.mxu0 0
      %674 = vmatpush1.bf16.msra.mxu0 0
      %675 = vmatprep.subr.bf16.mxu0 0
      %676 = vmatpush1.bf16.msra.mxu0 0
      %677 = vmatprep.subr.bf16.mxu0 0
      %678 = vmatpush1.bf16.msra.mxu0 0
      %679 = vmatprep.subr.bf16.mxu0 0
      %680 = vmatpush1.bf16.msra.mxu0 0
      %681 = vmatprep.subr.bf16.mxu0 0
      %682 = vmatpush1.bf16.msra.mxu0 0
      %683 = vmatprep.subr.bf16.mxu0 0
      %684 = vmatpush1.bf16.msra.mxu0 0
      %685 = vmatprep.subr.bf16.mxu0 0
      %686 = vmatpush1.bf16.msra.mxu0 0
      %687 = vmatprep.subr.bf16.mxu0 0
      %688 = vmatpush1.bf16.msra.mxu0 0
      %689 = vmatprep.mubr.bf16.mxu0 0
      %690 = vmatmul.mubr.bf16.gmra.mrb[0].mxu0 %v655
      %v691 = vpop.f32.mrb[0].mxu0
      %v692 = vadd.f32 0.0, %v691
      %v693 = vpop.f32.mrb[0].mxu0
      %v694 = vpop.f32.mrb[0].mxu0
      %v695 = vpop.f32.mrb[0].mxu0
      %696 = vdwg.mxu0
      %v697 = vadd.f32 %v634, %v692
      %s698 = scalar_lea.vmem %s3, 80
      %v699 = vld [vmem:[%s698] sm:$0xf]
      %v700 = vld [vmem:[%s698 + $0x4] sm:$0xf]
      %v701 = vld [vmem:[%s698 + $0x8] sm:$0xf]
      %v702 = vld [vmem:[%s698 + $0xc] sm:$0xf]
      %703 = vrot.lane.b32.xlu0 %v578, 96
      %v704 = vpop.permute.xlu0 %703
      %v709 = vunpack.c.l.b16 %v699
      %v710 = vunpack.c.l.b16 %v700
      %v711 = vunpack.c.l.b16 %v701
      %v712 = vunpack.c.l.b16 %v702
      %v713 = vpack.c.b16 %v710, %v709
      %v714 = vpack.c.b16 %v712, %v711
      %v718 = vsel %vm405, %v704, 0
      %720 = vmatprep.subr.bf16.mxu0 0
      %721 = vmatpush1.bf16.msra.mxu0 %v713
      %722 = vmatprep.subr.bf16.mxu0 0
      %723 = vmatpush1.bf16.msra.mxu0 %v714
      %724 = vmatprep.subr.bf16.mxu0 0
      %725 = vmatpush1.bf16.msra.mxu0 0
      %726 = vmatprep.subr.bf16.mxu0 0
      %727 = vmatpush1.bf16.msra.mxu0 0
      %728 = vmatprep.subr.bf16.mxu0 0
      %729 = vmatpush1.bf16.msra.mxu0 0
      %730 = vmatprep.subr.bf16.mxu0 0
      %731 = vmatpush1.bf16.msra.mxu0 0
      %732 = vmatprep.subr.bf16.mxu0 0
      %733 = vmatpush1.bf16.msra.mxu0 0
      %734 = vmatprep.subr.bf16.mxu0 0
      %735 = vmatpush1.bf16.msra.mxu0 0
      %736 = vmatprep.subr.bf16.mxu0 0
      %737 = vmatpush1.bf16.msra.mxu0 0
      %738 = vmatprep.subr.bf16.mxu0 0
      %739 = vmatpush1.bf16.msra.mxu0 0
      %740 = vmatprep.subr.bf16.mxu0 0
      %741 = vmatpush1.bf16.msra.mxu0 0
      %742 = vmatprep.subr.bf16.mxu0 0
      %743 = vmatpush1.bf16.msra.mxu0 0
      %744 = vmatprep.subr.bf16.mxu0 0
      %745 = vmatpush1.bf16.msra.mxu0 0
      %746 = vmatprep.subr.bf16.mxu0 0
      %747 = vmatpush1.bf16.msra.mxu0 0
      %748 = vmatprep.subr.bf16.mxu0 0
      %749 = vmatpush1.bf16.msra.mxu0 0
      %750 = vmatprep.subr.bf16.mxu0 0
      %751 = vmatpush1.bf16.msra.mxu0 0
      %752 = vmatprep.mubr.bf16.mxu0 0
      %753 = vmatmul.mubr.bf16.gmra.mrb[0].mxu0 %v718
      %v754 = vpop.f32.mrb[0].mxu0
      %v755 = vadd.f32 0.0, %v754
      %v756 = vpop.f32.mrb[0].mxu0
      %v757 = vpop.f32.mrb[0].mxu0
      %v758 = vpop.f32.mrb[0].mxu0
      %759 = vdwg.mxu0
      %v760 = vadd.f32 %v697, %v755
      %s761 = scalar_lea.vmem %s3, 96
      %v762 = vld [vmem:[%s761] sm:$0xf]
      %v763 = vld [vmem:[%s761 + $0x4] sm:$0xf]
      %v764 = vld [vmem:[%s761 + $0x8] sm:$0xf]
      %v765 = vld [vmem:[%s761 + $0xc] sm:$0xf]
      %v766 = vrot.slane %v390, 1
      %v771 = vunpack.c.l.b16 %v762
      %v772 = vunpack.c.l.b16 %v763
      %v773 = vunpack.c.l.b16 %v764
      %v774 = vunpack.c.l.b16 %v765
      %v775 = vpack.c.b16 %v772, %v771
      %v776 = vpack.c.b16 %v774, %v773
      %v780 = vsel %vm405, %v766, 0
      %782 = vmatprep.subr.bf16.mxu0 0
      %783 = vmatpush1.bf16.msra.mxu0 %v775
      %784 = vmatprep.subr.bf16.mxu0 0
      %785 = vmatpush1.bf16.msra.mxu0 %v776
      %786 = vmatprep.subr.bf16.mxu0 0
      %787 = vmatpush1.bf16.msra.mxu0 0
      %788 = vmatprep.subr.bf16.mxu0 0
      %789 = vmatpush1.bf16.msra.mxu0 0
      %790 = vmatprep.subr.bf16.mxu0 0
      %791 = vmatpush1.bf16.msra.mxu0 0
      %792 = vmatprep.subr.bf16.mxu0 0
      %793 = vmatpush1.bf16.msra.mxu0 0
      %794 = vmatprep.subr.bf16.mxu0 0
      %795 = vmatpush1.bf16.msra.mxu0 0
      %796 = vmatprep.subr.bf16.mxu0 0
      %797 = vmatpush1.bf16.msra.mxu0 0
      %798 = vmatprep.subr.bf16.mxu0 0
      %799 = vmatpush1.bf16.msra.mxu0 0
      %800 = vmatprep.subr.bf16.mxu0 0
      %801 = vmatpush1.bf16.msra.mxu0 0
      %802 = vmatprep.subr.bf16.mxu0 0
      %803 = vmatpush1.bf16.msra.mxu0 0
      %804 = vmatprep.subr.bf16.mxu0 0
      %805 = vmatpush1.bf16.msra.mxu0 0
      %806 = vmatprep.subr.bf16.mxu0 0
      %807 = vmatpush1.bf16.msra.mxu0 0
      %808 = vmatprep.subr.bf16.mxu0 0
      %809 = vmatpush1.bf16.msra.mxu0 0
      %810 = vmatprep.subr.bf16.mxu0 0
      %811 = vmatpush1.bf16.msra.mxu0 0
      %812 = vmatprep.subr.bf16.mxu0 0
      %813 = vmatpush1.bf16.msra.mxu0 0
      %814 = vmatprep.mubr.bf16.mxu0 0
      %815 = vmatmul.mubr.bf16.gmra.mrb[0].mxu0 %v780
      %v816 = vpop.f32.mrb[0].mxu0
      %v817 = vadd.f32 0.0, %v816
      %v818 = vpop.f32.mrb[0].mxu0
      %v819 = vpop.f32.mrb[0].mxu0
      %v820 = vpop.f32.mrb[0].mxu0
      %821 = vdwg.mxu0
      %v822 = vadd.f32 %v760, %v817
      %s823 = scalar_lea.vmem %s3, 112
      %v824 = vld [vmem:[%s823] sm:$0xf]
      %v825 = vld [vmem:[%s823 + $0x4] sm:$0xf]
      %v826 = vld [vmem:[%s823 + $0x8] sm:$0xf]
      %v827 = vld [vmem:[%s823 + $0xc] sm:$0xf]
      %828 = vrot.lane.b32.xlu0 %v766, 112
      %v829 = vpop.permute.xlu0 %828
      %v834 = vunpack.c.l.b16 %v824
      %v835 = vunpack.c.l.b16 %v825
      %v836 = vunpack.c.l.b16 %v826
      %v837 = vunpack.c.l.b16 %v827
      %v838 = vpack.c.b16 %v835, %v834
      %v839 = vpack.c.b16 %v837, %v836
      %v843 = vsel %vm405, %v829, 0
      %845 = vmatprep.subr.bf16.mxu0 0
      %846 = vmatpush1.bf16.msra.mxu0 %v838
      %847 = vmatprep.subr.bf16.mxu0 0
      %848 = vmatpush1.bf16.msra.mxu0 %v839
      %849 = vmatprep.subr.bf16.mxu0 0
      %850 = vmatpush1.bf16.msra.mxu0 0
      %851 = vmatprep.subr.bf16.mxu0 0
      %852 = vmatpush1.bf16.msra.mxu0 0
      %853 = vmatprep.subr.bf16.mxu0 0
      %854 = vmatpush1.bf16.msra.mxu0 0
      %855 = vmatprep.subr.bf16.mxu0 0
      %856 = vmatpush1.bf16.msra.mxu0 0
      %857 = vmatprep.subr.bf16.mxu0 0
      %858 = vmatpush1.bf16.msra.mxu0 0
      %859 = vmatprep.subr.bf16.mxu0 0
      %860 = vmatpush1.bf16.msra.mxu0 0
      %861 = vmatprep.subr.bf16.mxu0 0
      %862 = vmatpush1.bf16.msra.mxu0 0
      %863 = vmatprep.subr.bf16.mxu0 0
      %864 = vmatpush1.bf16.msra.mxu0 0
      %865 = vmatprep.subr.bf16.mxu0 0
      %866 = vmatpush1.bf16.msra.mxu0 0
      %867 = vmatprep.subr.bf16.mxu0 0
      %868 = vmatpush1.bf16.msra.mxu0 0
      %869 = vmatprep.subr.bf16.mxu0 0
      %870 = vmatpush1.bf16.msra.mxu0 0
      %871 = vmatprep.subr.bf16.mxu0 0
      %872 = vmatpush1.bf16.msra.mxu0 0
      %873 = vmatprep.subr.bf16.mxu0 0
      %874 = vmatpush1.bf16.msra.mxu0 0
      %875 = vmatprep.subr.bf16.mxu0 0
      %876 = vmatpush1.bf16.msra.mxu0 0
      %877 = vmatprep.mubr.bf16.mxu0 0
      %878 = vmatmul.mubr.bf16.gmra.mrb[0].mxu0 %v843
      %v879 = vpop.f32.mrb[0].mxu0
      %v880 = vadd.f32 0.0, %v879
      %v881 = vpop.f32.mrb[0].mxu0
      %v882 = vpop.f32.mrb[0].mxu0
      %v883 = vpop.f32.mrb[0].mxu0
      %884 = vdwg.mxu0
      %v885 = vadd.f32 %v822, %v880
      %s886 = scalar_lea.vmem %s3, 128
      %v887 = vld [vmem:[%s886] sm:$0xf]
      %v888 = vld [vmem:[%s886 + $0x4] sm:$0xf]
      %v889 = vld [vmem:[%s886 + $0x8] sm:$0xf]
      %v890 = vld [vmem:[%s886 + $0xc] sm:$0xf]
      %891 = vrot.lane.b32.xlu0 %v766, 96
      %v892 = vpop.permute.xlu0 %891
      %v897 = vunpack.c.l.b16 %v887
      %v898 = vunpack.c.l.b16 %v888
      %v899 = vunpack.c.l.b16 %v889
      %v900 = vunpack.c.l.b16 %v890
      %v901 = vpack.c.b16 %v898, %v897
      %v902 = vpack.c.b16 %v900, %v899
      %v906 = vsel %vm405, %v892, 0
      %908 = vmatprep.subr.bf16.mxu0 0
      %909 = vmatpush1.bf16.msra.mxu0 %v901
      %910 = vmatprep.subr.bf16.mxu0 0
      %911 = vmatpush1.bf16.msra.mxu0 %v902
      %912 = vmatprep.subr.bf16.mxu0 0
      %913 = vmatpush1.bf16.msra.mxu0 0
      %914 = vmatprep.subr.bf16.mxu0 0
      %915 = vmatpush1.bf16.msra.mxu0 0
      %916 = vmatprep.subr.bf16.mxu0 0
      %917 = vmatpush1.bf16.msra.mxu0 0
      %918 = vmatprep.subr.bf16.mxu0 0
      %919 = vmatpush1.bf16.msra.mxu0 0
      %920 = vmatprep.subr.bf16.mxu0 0
      %921 = vmatpush1.bf16.msra.mxu0 0
      %922 = vmatprep.subr.bf16.mxu0 0
      %923 = vmatpush1.bf16.msra.mxu0 0
      %924 = vmatprep.subr.bf16.mxu0 0
      %925 = vmatpush1.bf16.msra.mxu0 0
      %926 = vmatprep.subr.bf16.mxu0 0
      %927 = vmatpush1.bf16.msra.mxu0 0
      %928 = vmatprep.subr.bf16.mxu0 0
      %929 = vmatpush1.bf16.msra.mxu0 0
      %930 = vmatprep.subr.bf16.mxu0 0
      %931 = vmatpush1.bf16.msra.mxu0 0
      %932 = vmatprep.subr.bf16.mxu0 0
      %933 = vmatpush1.bf16.msra.mxu0 0
      %934 = vmatprep.subr.bf16.mxu0 0
      %935 = vmatpush1.bf16.msra.mxu0 0
      %936 = vmatprep.subr.bf16.mxu0 0
      %937 = vmatpush1.bf16.msra.mxu0 0
      %938 = vmatprep.subr.bf16.mxu0 0
      %939 = vmatpush1.bf16.msra.mxu0 0
      %940 = vmatprep.mubr.bf16.mxu0 0
      %941 = vmatmul.mubr.bf16.gmra.mrb[0].mxu0 %v906
      %v942 = vpop.f32.mrb[0].mxu0
      %v943 = vadd.f32 0.0, %v942
      %v944 = vpop.f32.mrb[0].mxu0
      %v945 = vpop.f32.mrb[0].mxu0
      %v946 = vpop.f32.mrb[0].mxu0
      %947 = vdwg.mxu0
      %v948 = vadd.f32 %v885, %v943
      %v949 = vld [vmem:[%s4] sm:$0x1]
      %v951 = vlaneseq
      %v952 = vshrl.u32 %v951, 7
      %v953 = vsub.s32 0, %v952
      %v954 = vrot.slane %v949, %v953
      %v956 = vadd.f32 %v948, %v954
      %957 = vst.msk [vmem:[%s253] sm:$0x3] %vm344, %v956
      %p958 = scmp.lt.s32.totalorder %s18, 1
      %s959 = scalar_select %p958, %s18, 1
      %s960 = smul.addr %s959, 2
      %s961 = scalar_lea.vmem %s5, %s960
      %p962 = scmp.lt.s32.totalorder %s18, 1
      %s963 = scalar_select %p962, %s18, 1
      %s964 = smul.addr %s963, 2
      %s965 = scalar_lea.vmem %s6, %s964
      // Predicated region
      $region41: #{backbone_with_fpn_forward.9} parent=39 // pred_check
        %p966 = pneg %p146
      $region42: #{backbone_with_fpn_forward.9} parent=39 // pred_check_branch
        %968 = sbr.rel (%p966) target = $region44
      $region43: #{backbone_with_fpn_forward.9} parent=39 // pred_region
        _
      $region44: #{backbone_with_fpn_forward.9} parent=39 // pred_fallthru
        _
      // Predicated region
      $region45: #{backbone_with_fpn_forward.9} parent=39 // pred_check
        %p969 = pneg %p172
      $region46: #{backbone_with_fpn_forward.9} parent=39 // pred_check_branch
        %971 = sbr.rel (%p969) target = $region48
      $region47: #{backbone_with_fpn_forward.9} parent=39 // pred_region
        _
      $region48: #{backbone_with_fpn_forward.9} parent=39 // pred_fallthru
        _
    $region40: #{backbone_with_fpn_forward.9} parent=5 // pred_fallthru
      _
    %p972 = scmp.le.s32.totalorder 2, %s13
    // Predicated region
    $region49: #{backbone_with_fpn_forward.9} parent=5 // pred_check
      %p973 = pneg %p972
    $region50: #{backbone_with_fpn_forward.9} parent=5 // pred_check_branch
      %975 = sbr.rel (%p973) target = $region52
    $region51: #{backbone_with_fpn_forward.9} parent=5 // pred_region
      %s976 = ssub.s32 %s13, 2
      // Predicated region
      $region53: #{backbone_with_fpn_forward.9} parent=51 // pred_check
        %p977 = pneg %p152
      $region54: #{backbone_with_fpn_forward.9} parent=51 // pred_check_branch
        %979 = sbr.rel (%p977) target = $region56
      $region55: #{backbone_with_fpn_forward.9} parent=51 // pred_region
        %p980 = scmp.lt.s32.totalorder %s19, 1
        %s981 = scalar_select %p980, %s19, 1
        %s982 = smul.addr %s981, 2
        %s983 = scalar_lea.vmem %s5, %s982
      $region56: #{backbone_with_fpn_forward.9} parent=51 // pred_fallthru
        _
      // Predicated region
      $region57: #{backbone_with_fpn_forward.9} parent=51 // pred_check
        %p984 = pneg %p178
      $region58: #{backbone_with_fpn_forward.9} parent=51 // pred_check_branch
        %986 = sbr.rel (%p984) target = $region60
      $region59: #{backbone_with_fpn_forward.9} parent=51 // pred_region
        %p987 = scmp.lt.s32.totalorder %s19, 1
        %s988 = scalar_select %p987, %s19, 1
        %s989 = smul.addr %s988, 2
        %s990 = scalar_lea.vmem %s6, %s989
      $region60: #{backbone_with_fpn_forward.9} parent=51 // pred_fallthru
        _
    $region52: #{backbone_with_fpn_forward.9} parent=5 // pred_fallthru
      _
  $region6: #{backbone_with_fpn_forward.9} parent=0 // loop_footer
    %s17 = sadd.s32 1, %s13
  $region7: #{backbone_with_fpn_forward.9} parent=0 // loop_footer_branch
    %12 = sbr.rel target = $region3
  $region8: #{backbone_with_fpn_forward.9} parent=0 // loop_exit
    _

// kernel: backbone_with_fpn_forward.10
$region0: #{backbone_with_fpn_forward.10}
  #allocation0 [shape = 'u32[]', space=smem, size = 0x4, offset = 0x4, fixed_abs, tag = 'smem constant byte address 0x4 - core index']
  #allocation1 [shape = 'u32[144,128]{1,0:T(1,128)}', space=vmem, size = 0x12000, scoped, tag = 'internal scratch']
  #allocation2 [shape = 'bf16[6,96]{1,0:T(8,128)(2,1)}', space=vmem, size = 0x800, scoped, tag = 'scratch operand']
  %s0 = inlined_call_operand.vmem [shape: f32[2,4,64], index: 0, kind: input, shape index: {}]
  %s1 = inlined_call_operand.vmem [shape: f32[2,2,32], index: 1, kind: input, shape index: {}]
  %s2 = inlined_call_operand.vmem [shape: bf16[4,2], index: 2, kind: input, shape index: {}]
  %s3 = inlined_call_operand.vmem [shape: bf16[32,64], index: 3, kind: input, shape index: {}]
  %s4 = inlined_call_operand.vmem [shape: bf16[64,64], index: 4, kind: input, shape index: {}]
  %s5 = inlined_call_operand.vmem [shape: f32[1,64], index: 5, kind: input, shape index: {}]
  %s6 = inlined_call_operand.vmem [shape: bf16[9,64,64], index: 6, kind: input, shape index: {}]
  %s7 = inlined_call_operand.vmem [shape: f32[1,64], index: 7, kind: input, shape index: {}]
  %s8 = inlined_call_operand.vmem [shape: f32[2,4,64], index: 8, kind: output, shape index: {0}]
  %s9 = inlined_call_operand.vmem [shape: f32[2,4,64], index: 9, kind: output, shape index: {1}]
  %10 = xla_tuple %s8, %s9
  %s11 = sld [smem:[#allocation0]]
  $region73: #{backbone_with_fpn_forward.10} parent=0
    _
  %s13 = ssub.s32 1, %s11
  %s14 = scalar_select 0, %s13, %s11
  loop: start=0, step=1, limit=4
  $region2: #{backbone_with_fpn_forward.10} parent=0 // loop_pre_header
    _
  $region3: #{backbone_with_fpn_forward.10} parent=0 // loop_header
    %s16 = sphi 0, %s20
    %p17 = scmp.ge.s32.totalorder %s16, 4
    %s26 = sphi 0, %s28
    %s29 = sphi 0, %s26
    %s30 = sphi 0, %s29
    %s46 = sphi 0, %s30
    %s52 = sphi 0, %s54
    %s55 = sphi 0, %s52
    %s56 = sphi 0, %s55
    %s72 = sphi 0, %s56
    %s76 = sphi 0, %s76
    %s78 = sphi 0, %s76
    %s79 = sphi 0, %s78
    %s93 = sphi 0, %s79
    %s97 = sphi 0, %s97
    %s99 = sphi 0, %s97
    %s100 = sphi 0, %s99
    %s114 = sphi 0, %s100
    %s118 = sphi 0, %s118
    %s120 = sphi 0, %s118
    %s121 = sphi 0, %s120
    %s135 = sphi 0, %s121
    %s139 = sphi 0, %s139
    %s141 = sphi 0, %s139
    %s142 = sphi 0, %s141
    %s156 = sphi 0, %s142
    %s160 = sphi 0, %s160
    %s162 = sphi 0, %s160
    %s163 = sphi 0, %s162
    %s177 = sphi 0, %s163
    %s181 = sphi 0, %s181
    %s183 = sphi 0, %s181
    %s184 = sphi 0, %s183
    %s198 = sphi 0, %s184
    %s204 = sphi 0, %s206
    %s207 = sphi 0, %s204
    %s208 = sphi 0, %s207
    %s224 = sphi 0, %s208
    %s230 = sphi 0, %s232
    %s233 = sphi 0, %s230
    %s234 = sphi 0, %s233
    %s250 = sphi 0, %s234
  $region4: #{backbone_with_fpn_forward.10} parent=0 // loop_header_branch
    %19 = sbr.rel (%p17) target = $region8
  $region5: #{backbone_with_fpn_forward.10} parent=0 // loop_body
    %s21 = ssub.s32 %s16, 1
    %s22 = ssub.s32 %s16, 2
    %s23 = sadd.s32 %s16, 1
    %s24 = ssub.s32 %s16, %s23
    %p25 = scmp.eq.s32.totalorder %s24, 0
    %s27 = sadd.s32 %s26, 1
    %s28 = scalar_select %p25, %s26, %s27
    %p31 = pneg %p25
    %p32 = scmp.eq.s32.totalorder %s16, 1
    %p33 = por %p31, %p32
    %p34 = scmp.ne.s32.totalorder %s26, %s29
    %p35 = scmp.eq.s32.totalorder %s16, 0
    %p36 = por %p34, %p35
    %p37 = scmp.ne.s32.totalorder %s26, %s29
    %p38 = scmp.eq.s32.totalorder %s21, 1
    %p39 = por %p37, %p38
    %p40 = scmp.ne.s32.totalorder %s29, %s30
    %p41 = scmp.eq.s32.totalorder %s21, 0
    %p42 = por %p40, %p41
    %p43 = scmp.ne.s32.totalorder %s29, %s30
    %p44 = scmp.eq.s32.totalorder %s22, 1
    %p45 = por %p43, %p44
    %p47 = scmp.ne.s32.totalorder %s30, %s46
    %p48 = scmp.eq.s32.totalorder %s22, 0
    %p49 = por %p47, %p48
    %s50 = ssub.s32 %s16, %s23
    %p51 = scmp.eq.s32.totalorder %s50, 0
    %s53 = sadd.s32 %s52, 1
    %s54 = scalar_select %p51, %s52, %s53
    %p57 = pneg %p51
    %p58 = scmp.eq.s32.totalorder %s16, 1
    %p59 = por %p57, %p58
    %p60 = scmp.ne.s32.totalorder %s52, %s55
    %p61 = scmp.eq.s32.totalorder %s16, 0
    %p62 = por %p60, %p61
    %p63 = scmp.ne.s32.totalorder %s52, %s55
    %p64 = scmp.eq.s32.totalorder %s21, 1
    %p65 = por %p63, %p64
    %p66 = scmp.ne.s32.totalorder %s55, %s56
    %p67 = scmp.eq.s32.totalorder %s21, 0
    %p68 = por %p66, %p67
    %p69 = scmp.ne.s32.totalorder %s55, %s56
    %p70 = scmp.eq.s32.totalorder %s22, 1
    %p71 = por %p69, %p70
    %p73 = scmp.ne.s32.totalorder %s56, %s72
    %p74 = scmp.eq.s32.totalorder %s22, 0
    %p75 = por %p73, %p74
    %s77 = sadd.s32 %s76, 1
    %p80 = scmp.eq.s32.totalorder %s16, 1
    %p81 = scmp.ne.s32.totalorder %s76, %s78
    %p82 = scmp.eq.s32.totalorder %s16, 0
    %p83 = por %p81, %p82
    %p84 = scmp.ne.s32.totalorder %s76, %s78
    %p85 = scmp.eq.s32.totalorder %s21, 1
    %p86 = por %p84, %p85
    %p87 = scmp.ne.s32.totalorder %s78, %s79
    %p88 = scmp.eq.s32.totalorder %s21, 0
    %p89 = por %p87, %p88
    %p90 = scmp.ne.s32.totalorder %s78, %s79
    %p91 = scmp.eq.s32.totalorder %s22, 1
    %p92 = por %p90, %p91
    %p94 = scmp.ne.s32.totalorder %s79, %s93
    %p95 = scmp.eq.s32.totalorder %s22, 0
    %p96 = por %p94, %p95
    %s98 = sadd.s32 %s97, 1
    %p101 = scmp.eq.s32.totalorder %s16, 1
    %p102 = scmp.ne.s32.totalorder %s97, %s99
    %p103 = scmp.eq.s32.totalorder %s16, 0
    %p104 = por %p102, %p103
    %p105 = scmp.ne.s32.totalorder %s97, %s99
    %p106 = scmp.eq.s32.totalorder %s21, 1
    %p107 = por %p105, %p106
    %p108 = scmp.ne.s32.totalorder %s99, %s100
    %p109 = scmp.eq.s32.totalorder %s21, 0
    %p110 = por %p108, %p109
    %p111 = scmp.ne.s32.totalorder %s99, %s100
    %p112 = scmp.eq.s32.totalorder %s22, 1
    %p113 = por %p111, %p112
    %p115 = scmp.ne.s32.totalorder %s100, %s114
    %p116 = scmp.eq.s32.totalorder %s22, 0
    %p117 = por %p115, %p116
    %s119 = sadd.s32 %s118, 1
    %p122 = scmp.eq.s32.totalorder %s16, 1
    %p123 = scmp.ne.s32.totalorder %s118, %s120
    %p124 = scmp.eq.s32.totalorder %s16, 0
    %p125 = por %p123, %p124
    %p126 = scmp.ne.s32.totalorder %s118, %s120
    %p127 = scmp.eq.s32.totalorder %s21, 1
    %p128 = por %p126, %p127
    %p129 = scmp.ne.s32.totalorder %s120, %s121
    %p130 = scmp.eq.s32.totalorder %s21, 0
    %p131 = por %p129, %p130
    %p132 = scmp.ne.s32.totalorder %s120, %s121
    %p133 = scmp.eq.s32.totalorder %s22, 1
    %p134 = por %p132, %p133
    %p136 = scmp.ne.s32.totalorder %s121, %s135
    %p137 = scmp.eq.s32.totalorder %s22, 0
    %p138 = por %p136, %p137
    %s140 = sadd.s32 %s139, 1
    %p143 = scmp.eq.s32.totalorder %s16, 1
    %p144 = scmp.ne.s32.totalorder %s139, %s141
    %p145 = scmp.eq.s32.totalorder %s16, 0
    %p146 = por %p144, %p145
    %p147 = scmp.ne.s32.totalorder %s139, %s141
    %p148 = scmp.eq.s32.totalorder %s21, 1
    %p149 = por %p147, %p148
    %p150 = scmp.ne.s32.totalorder %s141, %s142
    %p151 = scmp.eq.s32.totalorder %s21, 0
    %p152 = por %p150, %p151
    %p153 = scmp.ne.s32.totalorder %s141, %s142
    %p154 = scmp.eq.s32.totalorder %s22, 1
    %p155 = por %p153, %p154
    %p157 = scmp.ne.s32.totalorder %s142, %s156
    %p158 = scmp.eq.s32.totalorder %s22, 0
    %p159 = por %p157, %p158
    %s161 = sadd.s32 %s160, 1
    %p164 = scmp.eq.s32.totalorder %s16, 1
    %p165 = scmp.ne.s32.totalorder %s160, %s162
    %p166 = scmp.eq.s32.totalorder %s16, 0
    %p167 = por %p165, %p166
    %p168 = scmp.ne.s32.totalorder %s160, %s162
    %p169 = scmp.eq.s32.totalorder %s21, 1
    %p170 = por %p168, %p169
    %p171 = scmp.ne.s32.totalorder %s162, %s163
    %p172 = scmp.eq.s32.totalorder %s21, 0
    %p173 = por %p171, %p172
    %p174 = scmp.ne.s32.totalorder %s162, %s163
    %p175 = scmp.eq.s32.totalorder %s22, 1
    %p176 = por %p174, %p175
    %p178 = scmp.ne.s32.totalorder %s163, %s177
    %p179 = scmp.eq.s32.totalorder %s22, 0
    %p180 = por %p178, %p179
    %s182 = sadd.s32 %s181, 1
    %p185 = scmp.eq.s32.totalorder %s16, 1
    %p186 = scmp.ne.s32.totalorder %s181, %s183
    %p187 = scmp.eq.s32.totalorder %s16, 0
    %p188 = por %p186, %p187
    %p189 = scmp.ne.s32.totalorder %s181, %s183
    %p190 = scmp.eq.s32.totalorder %s21, 1
    %p191 = por %p189, %p190
    %p192 = scmp.ne.s32.totalorder %s183, %s184
    %p193 = scmp.eq.s32.totalorder %s21, 0
    %p194 = por %p192, %p193
    %p195 = scmp.ne.s32.totalorder %s183, %s184
    %p196 = scmp.eq.s32.totalorder %s22, 1
    %p197 = por %p195, %p196
    %p199 = scmp.ne.s32.totalorder %s184, %s198
    %p200 = scmp.eq.s32.totalorder %s22, 0
    %p201 = por %p199, %p200
    %s202 = ssub.s32 %s16, %s23
    %p203 = scmp.eq.s32.totalorder %s202, 0
    %s205 = sadd.s32 %s204, 1
    %s206 = scalar_select %p203, %s204, %s205
    %p209 = pneg %p203
    %p210 = scmp.eq.s32.totalorder %s16, 1
    %p211 = por %p209, %p210
    %p212 = scmp.ne.s32.totalorder %s204, %s207
    %p213 = scmp.eq.s32.totalorder %s16, 0
    %p214 = por %p212, %p213
    %p215 = scmp.ne.s32.totalorder %s204, %s207
    %p216 = scmp.eq.s32.totalorder %s21, 1
    %p217 = por %p215, %p216
    %p218 = scmp.ne.s32.totalorder %s207, %s208
    %p219 = scmp.eq.s32.totalorder %s21, 0
    %p220 = por %p218, %p219
    %p221 = scmp.ne.s32.totalorder %s207, %s208
    %p222 = scmp.eq.s32.totalorder %s22, 1
    %p223 = por %p221, %p222
    %p225 = scmp.ne.s32.totalorder %s208, %s224
    %p226 = scmp.eq.s32.totalorder %s22, 0
    %p227 = por %p225, %p226
    %s228 = ssub.s32 %s16, %s23
    %p229 = scmp.eq.s32.totalorder %s228, 0
    %s231 = sadd.s32 %s230, 1
    %s232 = scalar_select %p229, %s230, %s231
    %p235 = pneg %p229
    %p236 = scmp.eq.s32.totalorder %s16, 1
    %p237 = por %p235, %p236
    %p238 = scmp.ne.s32.totalorder %s230, %s233
    %p239 = scmp.eq.s32.totalorder %s16, 0
    %p240 = por %p238, %p239
    %p241 = scmp.ne.s32.totalorder %s230, %s233
    %p242 = scmp.eq.s32.totalorder %s21, 1
    %p243 = por %p241, %p242
    %p244 = scmp.ne.s32.totalorder %s233, %s234
    %p245 = scmp.eq.s32.totalorder %s21, 0
    %p246 = por %p244, %p245
    %p247 = scmp.ne.s32.totalorder %s233, %s234
    %p248 = scmp.eq.s32.totalorder %s22, 1
    %p249 = por %p247, %p248
    %p251 = scmp.ne.s32.totalorder %s234, %s250
    %p252 = scmp.eq.s32.totalorder %s22, 0
    %p253 = por %p251, %p252
    %p254 = scmp.le.s32.totalorder 1, %s16
    %p255 = scmp.lt.s32.totalorder %s16, 3
    %p256 = pnand %p254, %p255
    %p257 = pneg %p256
    // Predicated region
    $region9: #{backbone_with_fpn_forward.10} parent=5 // pred_check
      _
    $region10: #{backbone_with_fpn_forward.10} parent=5 // pred_check_branch
      %259 = sbr.rel (%p256) target = $region12
    $region11: #{backbone_with_fpn_forward.10} parent=5 // pred_region
      %s260 = ssub.s32 %s16, 1
      // Predicated region
      $region13: #{backbone_with_fpn_forward.10} parent=11 // pred_check
        %p261 = pneg %p89
      $region14: #{backbone_with_fpn_forward.10} parent=11 // pred_check_branch
        %263 = sbr.rel (%p261) target = $region16
      $region15: #{backbone_with_fpn_forward.10} parent=11 // pred_region
        _
      $region16: #{backbone_with_fpn_forward.10} parent=11 // pred_fallthru
        _
      // Predicated region
      $region17: #{backbone_with_fpn_forward.10} parent=11 // pred_check
        %p264 = pneg %p110
      $region18: #{backbone_with_fpn_forward.10} parent=11 // pred_check_branch
        %266 = sbr.rel (%p264) target = $region20
      $region19: #{backbone_with_fpn_forward.10} parent=11 // pred_region
        _
      $region20: #{backbone_with_fpn_forward.10} parent=11 // pred_fallthru
        _
      // Predicated region
      $region21: #{backbone_with_fpn_forward.10} parent=11 // pred_check
        %p267 = pneg %p131
      $region22: #{backbone_with_fpn_forward.10} parent=11 // pred_check_branch
        %269 = sbr.rel (%p267) target = $region24
      $region23: #{backbone_with_fpn_forward.10} parent=11 // pred_region
        _
      $region24: #{backbone_with_fpn_forward.10} parent=11 // pred_fallthru
        _
      // Predicated region
      $region25: #{backbone_with_fpn_forward.10} parent=11 // pred_check
        %p270 = pneg %p152
      $region26: #{backbone_with_fpn_forward.10} parent=11 // pred_check_branch
        %272 = sbr.rel (%p270) target = $region28
      $region27: #{backbone_with_fpn_forward.10} parent=11 // pred_region
        _
      $region28: #{backbone_with_fpn_forward.10} parent=11 // pred_fallthru
        _
      // Predicated region
      $region29: #{backbone_with_fpn_forward.10} parent=11 // pred_check
        %p273 = pneg %p173
      $region30: #{backbone_with_fpn_forward.10} parent=11 // pred_check_branch
        %275 = sbr.rel (%p273) target = $region32
      $region31: #{backbone_with_fpn_forward.10} parent=11 // pred_region
        _
      $region32: #{backbone_with_fpn_forward.10} parent=11 // pred_fallthru
        _
      // Predicated region
      $region33: #{backbone_with_fpn_forward.10} parent=11 // pred_check
        %p276 = pneg %p194
      $region34: #{backbone_with_fpn_forward.10} parent=11 // pred_check_branch
        %278 = sbr.rel (%p276) target = $region36
      $region35: #{backbone_with_fpn_forward.10} parent=11 // pred_region
        _
      $region36: #{backbone_with_fpn_forward.10} parent=11 // pred_fallthru
        _
    $region12: #{backbone_with_fpn_forward.10} parent=5 // pred_fallthru
      _
    %p279 = scmp.lt.s32.totalorder %s16, 2
    // Predicated region
    $region37: #{backbone_with_fpn_forward.10} parent=5 // pred_check
      %p280 = pneg %p279
    $region38: #{backbone_with_fpn_forward.10} parent=5 // pred_check_branch
      %282 = sbr.rel (%p280) target = $region40
    $region39: #{backbone_with_fpn_forward.10} parent=5 // pred_region
      // Predicated region
      $region41: #{backbone_with_fpn_forward.10} parent=39 // pred_check
        %p283 = pneg %p36
      $region42: #{backbone_with_fpn_forward.10} parent=39 // pred_check_branch
        %285 = sbr.rel (%p283) target = $region44
      $region43: #{backbone_with_fpn_forward.10} parent=39 // pred_region
        %p286 = scmp.lt.s32.totalorder %s16, 1
        %s287 = scalar_select %p286, %s16, 1
        %s288 = smul.addr %s287, 4
        %s289 = scalar_lea.vmem %s0, %s288
      $region44: #{backbone_with_fpn_forward.10} parent=39 // pred_fallthru
        _
      // Predicated region
      $region45: #{backbone_with_fpn_forward.10} parent=39 // pred_check
        %p290 = pneg %p62
      $region46: #{backbone_with_fpn_forward.10} parent=39 // pred_check_branch
        %292 = sbr.rel (%p290) target = $region48
      $region47: #{backbone_with_fpn_forward.10} parent=39 // pred_region
        %p293 = scmp.lt.s32.totalorder %s16, 1
        %s294 = scalar_select %p293, %s16, 1
        %s295 = smul.addr %s294, 2
        %s296 = scalar_lea.vmem %s1, %s295
      $region48: #{backbone_with_fpn_forward.10} parent=39 // pred_fallthru
        _
    $region40: #{backbone_with_fpn_forward.10} parent=5 // pred_fallthru
      _
    %p297 = scmp.le.s32.totalorder 1, %s16
    %p298 = scmp.lt.s32.totalorder %s16, 3
    %p299 = pnand %p297, %p298
    %p300 = pneg %p299
    // Predicated region
    $region49: #{backbone_with_fpn_forward.10} parent=5 // pred_check
      _
    $region50: #{backbone_with_fpn_forward.10} parent=5 // pred_check_branch
      %302 = sbr.rel (%p299) target = $region52
    $region51: #{backbone_with_fpn_forward.10} parent=5 // pred_region
      %s303 = ssub.s32 %s16, 1
      %p304 = scmp.lt.s32.totalorder %s21, 1
      %s305 = scalar_select %p304, %s21, 1
      %s306 = smul.addr %s305, 4
      %s307 = scalar_lea.vmem %s0, %s306
      %p308 = pneg %p42
      %p309 = pneg %p39
      %p310 = scmp.lt.s32.totalorder %s21, 1
      %s311 = scalar_select %p310, %s21, 1
      %s312 = smul.addr %s311, 2
      %s313 = scalar_lea.vmem %s1, %s312
      %p314 = pneg %p68
      %p315 = pneg %p65
      %p316 = pneg %p89
      %p317 = pneg %p86
      %p318 = pneg %p110
      %p319 = pneg %p107
      %p320 = pneg %p131
      %p321 = pneg %p128
      %p322 = pneg %p152
      %p323 = pneg %p149
      %p324 = pneg %p173
      %p325 = pneg %p170
      %p326 = pneg %p194
      %p327 = pneg %p191
      %p328 = pneg %p220
      %p329 = pneg %p217
      %p330 = scmp.lt.s32.totalorder %s21, 1
      %s331 = scalar_select %p330, %s21, 1
      %s332 = smul.addr %s331, 4
      %s333 = scalar_lea.vmem %s8, %s332
      %p334 = pneg %p246
      %p335 = pneg %p243
      %p336 = scmp.lt.s32.totalorder %s21, 1
      %s337 = scalar_select %p336, %s21, 1
      %s338 = smul.addr %s337, 4
      %s339 = scalar_lea.vmem %s9, %s338
      %p340 = scmp.lt.s32.totalorder %s21, 1
      %s341 = scalar_select %p340, %s21, 1
      %s342 = smul.addr %s341, 4
      %s343 = scalar_lea.vmem %s0, %s342
      %p344 = scmp.lt.s32.totalorder %s21, 1
      %s345 = scalar_select %p344, %s21, 1
      %s346 = smul.addr %s345, 2
      %s347 = scalar_lea.vmem %s1, %s346
      %p348 = scmp.lt.s32.totalorder %s21, 1
      %s349 = scalar_select %p348, %s21, 1
      %s350 = smul.addr %s349, 4
      %s351 = scalar_lea.vmem %s8, %s350
      %p352 = scmp.lt.s32.totalorder %s21, 1
      %s353 = scalar_select %p352, %s21, 1
      %s354 = smul.addr %s353, 4
      %s355 = scalar_lea.vmem %s9, %s354
      %v357 = vld [vmem:[%s343] sm:$0xf]
      %v358 = vpack.c.bf16 %v357, %v357
      %v359 = vld [vmem:[%s4] sm:$0xf]
      %v360 = vld [vmem:[%s4 + $0x4] sm:$0xf]
      %v361 = vld [vmem:[%s4 + $0x8] sm:$0xf]
      %v362 = vld [vmem:[%s4 + $0xc] sm:$0xf]
      %v363 = vld [vmem:[%s4 + $0x10] sm:$0xf]
      %v364 = vld [vmem:[%s4 + $0x14] sm:$0xf]
      %v365 = vld [vmem:[%s4 + $0x18] sm:$0xf]
      %v366 = vld [vmem:[%s4 + $0x1c] sm:$0xf]
      %v367 = vld [vmem:[%s5] sm:$0x1]
      %v369 = vlaneseq
      %v370 = vshrl.u32 %v369, 7
      %v371 = vsub.s32 0, %v370
      %v372 = vrot.slane %v367, %v371
      %v382 = vunpack.c.l.b16 %v359
      %v383 = vunpack.c.l.b16 %v360
      %v384 = vunpack.c.l.b16 %v361
      %v385 = vunpack.c.l.b16 %v362
      %v386 = vunpack.c.l.b16 %v363
      %v387 = vunpack.c.l.b16 %v364
      %v388 = vunpack.c.l.b16 %v365
      %v389 = vunpack.c.l.b16 %v366
      %v390 = vpack.c.b16 %v383, %v382
      %v391 = vpack.c.b16 %v385, %v384
      %v392 = vpack.c.b16 %v387, %v386
      %v393 = vpack.c.b16 %v389, %v388
      %vm398 = vcmask 523264
      %v400 = vsel %vm398, %v358, 0
      %402 = vmatprep.subr.bf16.mxu0 0
      %403 = vmatpush1.bf16.msra.mxu0 %v390
      %404 = vmatprep.subr.bf16.mxu0 0
      %405 = vmatpush1.bf16.msra.mxu0 %v391
      %406 = vmatprep.subr.bf16.mxu0 0
      %407 = vmatpush1.bf16.msra.mxu0 %v392
      %408 = vmatprep.subr.bf16.mxu0 0
      %409 = vmatpush1.bf16.msra.mxu0 %v393
      %410 = vmatprep.subr.bf16.mxu0 0
      %411 = vmatpush1.bf16.msra.mxu0 0
      %412 = vmatprep.subr.bf16.mxu0 0
      %413 = vmatpush1.bf16.msra.mxu0 0
      %414 = vmatprep.subr.bf16.mxu0 0
      %415 = vmatpush1.bf16.msra.mxu0 0
      %416 = vmatprep.subr.bf16.mxu0 0
      %417 = vmatpush1.bf16.msra.mxu0 0
      %418 = vmatprep.subr.bf16.mxu0 0
      %419 = vmatpush1.bf16.msra.mxu0 0
      %420 = vmatprep.subr.bf16.mxu0 0
      %421 = vmatpush1.bf16.msra.mxu0 0
      %422 = vmatprep.subr.bf16.mxu0 0
      %423 = vmatpush1.bf16.msra.mxu0 0
      %424 = vmatprep.subr.bf16.mxu0 0
      %425 = vmatpush1.bf16.msra.mxu0 0
      %426 = vmatprep.subr.bf16.mxu0 0
      %427 = vmatpush1.bf16.msra.mxu0 0
      %428 = vmatprep.subr.bf16.mxu0 0
      %429 = vmatpush1.bf16.msra.mxu0 0
      %430 = vmatprep.subr.bf16.mxu0 0
      %431 = vmatpush1.bf16.msra.mxu0 0
      %432 = vmatprep.subr.bf16.mxu0 0
      %433 = vmatpush1.bf16.msra.mxu0 0
      %434 = vmatprep.mubr.bf16.mxu0 0
      %435 = vmatmul.mubr.bf16.gmra.mrb[0].mxu0 %v400
      %v436 = vpop.f32.mrb[0].mxu0
      %v437 = vadd.f32 %v372, %v436
      %v438 = vpop.f32.mrb[0].mxu0
      %v439 = vpop.f32.mrb[0].mxu0
      %v440 = vpop.f32.mrb[0].mxu0
      %441 = vdwg.mxu0
      %v442 = vld [vmem:[%s347] sm:$0x3]
      %v443 = vpack.c.bf16 %v442, %v442
      %v444 = vld [vmem:[%s2] sm:$0x3]
      %vm445 = vcmask 15360
      %v447 = vsel %vm445, %v444, 0
      %vm449 = vcmask 1040384
      %v451 = vsel %vm449, %v443, 0
      %453 = vmatprep.subr.bf16.mxu0 0
      %454 = vmatpush1.bf16.msra.mxu0 %v451
      %455 = vmatprep.subr.bf16.mxu0 0
      %456 = vmatpush1.bf16.msra.mxu0 0
      %457 = vmatprep.subr.bf16.mxu0 0
      %458 = vmatpush1.bf16.msra.mxu0 0
      %459 = vmatprep.subr.bf16.mxu0 0
      %460 = vmatpush1.bf16.msra.mxu0 0
      %461 = vmatprep.subr.bf16.mxu0 0
      %462 = vmatpush1.bf16.msra.mxu0 0
      %463 = vmatprep.subr.bf16.mxu0 0
      %464 = vmatpush1.bf16.msra.mxu0 0
      %465 = vmatprep.subr.bf16.mxu0 0
      %466 = vmatpush1.bf16.msra.mxu0 0
      %467 = vmatprep.subr.bf16.mxu0 0
      %468 = vmatpush1.bf16.msra.mxu0 0
      %469 = vmatprep.subr.bf16.mxu0 0
      %470 = vmatpush1.bf16.msra.mxu0 0
      %471 = vmatprep.subr.bf16.mxu0 0
      %472 = vmatpush1.bf16.msra.mxu0 0
      %473 = vmatprep.subr.bf16.mxu0 0
      %474 = vmatpush1.bf16.msra.mxu0 0
      %475 = vmatprep.subr.bf16.mxu0 0
      %476 = vmatpush1.bf16.msra.mxu0 0
      %477 = vmatprep.subr.bf16.mxu0 0
      %478 = vmatpush1.bf16.msra.mxu0 0
      %479 = vmatprep.subr.bf16.mxu0 0
      %480 = vmatpush1.bf16.msra.mxu0 0
      %481 = vmatprep.subr.bf16.mxu0 0
      %482 = vmatpush1.bf16.msra.mxu0 0
      %483 = vmatprep.subr.bf16.mxu0 0
      %484 = vmatpush1.bf16.msra.mxu0 0
      %485 = vmatprep.mubr.bf16.mxu0 0
      %486 = vmatmul.mubr.bf16.gmra.mrb[0].mxu0 %v447
      %v487 = vpop.f32.mrb[0].mxu0
      %v488 = vadd.f32 0.0, %v487
      %v489 = vpop.f32.mrb[0].mxu0
      %v490 = vpop.f32.mrb[0].mxu0
      %v491 = vpop.f32.mrb[0].mxu0
      %492 = vdwg.mxu0
      %v493 = vpack.c.bf16 %v488, %v488
      %v494 = vld [vmem:[%s3] sm:$0xf]
      %v495 = vld [vmem:[%s3 + $0x4] sm:$0xf]
      %v496 = vld [vmem:[%s3 + $0x8] sm:$0xf]
      %v497 = vld [vmem:[%s3 + $0xc] sm:$0xf]
      %v502 = vunpack.c.l.b16 %v494
      %v503 = vunpack.c.l.b16 %v495
      %v504 = vunpack.c.l.b16 %v496
      %v505 = vunpack.c.l.b16 %v497
      %v506 = vpack.c.b16 %v503, %v502
      %v507 = vpack.c.b16 %v505, %v504
      %vm510 = vcmask 261120
      %v512 = vsel %vm510, %v493, 0
      %514 = vmatprep.subr.bf16.mxu0 0
      %515 = vmatpush1.bf16.msra.mxu0 %v506
      %516 = vmatprep.subr.bf16.mxu0 0
      %517 = vmatpush1.bf16.msra.mxu0 %v507
      %518 = vmatprep.subr.bf16.mxu0 0
      %519 = vmatpush1.bf16.msra.mxu0 0
      %520 = vmatprep.subr.bf16.mxu0 0
      %521 = vmatpush1.bf16.msra.mxu0 0
      %522 = vmatprep.subr.bf16.mxu0 0
      %523 = vmatpush1.bf16.msra.mxu0 0
      %524 = vmatprep.subr.bf16.mxu0 0
      %525 = vmatpush1.bf16.msra.mxu0 0
      %526 = vmatprep.subr.bf16.mxu0 0
      %527 = vmatpush1.bf16.msra.mxu0 0
      %528 = vmatprep.subr.bf16.mxu0 0
      %529 = vmatpush1.bf16.msra.mxu0 0
      %530 = vmatprep.subr.bf16.mxu0 0
      %531 = vmatpush1.bf16.msra.mxu0 0
      %532 = vmatprep.subr.bf16.mxu0 0
      %533 = vmatpush1.bf16.msra.mxu0 0
      %534 = vmatprep.subr.bf16.mxu0 0
      %535 = vmatpush1.bf16.msra.mxu0 0
      %536 = vmatprep.subr.bf16.mxu0 0
      %537 = vmatpush1.bf16.msra.mxu0 0
      %538 = vmatprep.subr.bf16.mxu0 0
      %539 = vmatpush1.bf16.msra.mxu0 0
      %540 = vmatprep.subr.bf16.mxu0 0
      %541 = vmatpush1.bf16.msra.mxu0 0
      %542 = vmatprep.subr.bf16.mxu0 0
      %543 = vmatpush1.bf16.msra.mxu0 0
      %544 = vmatprep.subr.bf16.mxu0 0
      %545 = vmatpush1.bf16.msra.mxu0 0
      %546 = vmatprep.mubr.bf16.mxu0 0
      %547 = vmatmul.mubr.bf16.gmra.mrb[0].mxu0 %v512
      %v548 = vpop.f32.mrb[0].mxu0
      %v549 = vadd.f32 0.0, %v548
      %v550 = vpop.f32.mrb[0].mxu0
      %v551 = vpop.f32.mrb[0].mxu0
      %v552 = vpop.f32.mrb[0].mxu0
      %553 = vdwg.mxu0
      %v554 = vadd.f32 %v437, %v549
      %vm555 = vcmask 519168
      %556 = vst.msk [vmem:[%s355] sm:$0xf] %vm555, %v554
      %vm557 = vcmask 780288
      %558 = vst.msk [vmem:[#allocation2] sm:$0x7] %vm557, 0
      %v559 = vpack.c.bf16 %v554, %v554
      %v561 = vunpack.c.l.b16 %v559
      %v562 = vpack.c.b16 %v561, %v561
      %v564 = vshrl.u32 %v562, 16
      %v566 = vrot.slane %v564, 7
      %v567 = vshll.u32 %v562, 16
      %v569 = vor.u32 %v566, %v567
      %570 = vrot.lane.b32.xlu0 %v569, 16
      %v571 = vpop.permute.xlu0 %570
      %vm573 = vcmask 649344
      %vm574 = vsmask.f32 2306
      %vm575 = vmand %vm573, %vm574
      %v576 = vld [vmem:[#allocation2] sm:$0x7]
      %v577 = vsel %vm575, %v571, %v576
      %578 = vst [vmem:[#allocation2] sm:$0x7] %v577
      %v579 = vld [vmem:[#allocation2] sm:$0x7]
      %v580 = vld [vmem:[%s6] sm:$0xf]
      %v581 = vld [vmem:[%s6 + $0x4] sm:$0xf]
      %v582 = vld [vmem:[%s6 + $0x8] sm:$0xf]
      %v583 = vld [vmem:[%s6 + $0xc] sm:$0xf]
      %v584 = vld [vmem:[%s6 + $0x10] sm:$0xf]
      %v585 = vld [vmem:[%s6 + $0x14] sm:$0xf]
      %v586 = vld [vmem:[%s6 + $0x18] sm:$0xf]
      %v587 = vld [vmem:[%s6 + $0x1c] sm:$0xf]
      %s588 = scalar_lea.vmem %s6, 32
      %v589 = vld [vmem:[%s588] sm:$0xf]
      %v590 = vld [vmem:[%s588 + $0x4] sm:$0xf]
      %v591 = vld [vmem:[%s588 + $0x8] sm:$0xf]
      %v592 = vld [vmem:[%s588 + $0xc] sm:$0xf]
      %v593 = vld [vmem:[%s588 + $0x10] sm:$0xf]
      %v594 = vld [vmem:[%s588 + $0x14] sm:$0xf]
      %v595 = vld [vmem:[%s588 + $0x18] sm:$0xf]
      %v596 = vld [vmem:[%s588 + $0x1c] sm:$0xf]
      %v598 = vunpack.c.l.b16 %v579
      %v599 = vpack.c.b16 %v598, %v598
      %600 = vrot.lane.b32.xlu0 %v599, 112
      %v601 = vpop.permute.xlu0 %600
      %v610 = vunpack.c.l.b16 %v589
      %v611 = vunpack.c.l.b16 %v590
      %v612 = vunpack.c.l.b16 %v591
      %v613 = vunpack.c.l.b16 %v592
      %v614 = vunpack.c.l.b16 %v593
      %v615 = vunpack.c.l.b16 %v594
      %v616 = vunpack.c.l.b16 %v595
      %v617 = vunpack.c.l.b16 %v596
      %v618 = vpack.c.b16 %v611, %v610
      %v619 = vpack.c.b16 %v613, %v612
      %v620 = vpack.c.b16 %v615, %v614
      %v621 = vpack.c.b16 %v617, %v616
      %v627 = vsel %vm398, %v601, 0
      %629 = vmatprep.subr.bf16.mxu0 0
      %630 = vmatpush1.bf16.msra.mxu0 %v618
      %631 = vmatprep.subr.bf16.mxu0 0
      %632 = vmatpush1.bf16.msra.mxu0 %v619
      %633 = vmatprep.subr.bf16.mxu0 0
      %634 = vmatpush1.bf16.msra.mxu0 %v620
      %635 = vmatprep.subr.bf16.mxu0 0
      %636 = vmatpush1.bf16.msra.mxu0 %v621
      %637 = vmatprep.subr.bf16.mxu0 0
      %638 = vmatpush1.bf16.msra.mxu0 0
      %639 = vmatprep.subr.bf16.mxu0 0
      %640 = vmatpush1.bf16.msra.mxu0 0
      %641 = vmatprep.subr.bf16.mxu0 0
      %642 = vmatpush1.bf16.msra.mxu0 0
      %643 = vmatprep.subr.bf16.mxu0 0
      %644 = vmatpush1.bf16.msra.mxu0 0
      %645 = vmatprep.subr.bf16.mxu0 0
      %646 = vmatpush1.bf16.msra.mxu0 0
      %647 = vmatprep.subr.bf16.mxu0 0
      %648 = vmatpush1.bf16.msra.mxu0 0
      %649 = vmatprep.subr.bf16.mxu0 0
      %650 = vmatpush1.bf16.msra.mxu0 0
      %651 = vmatprep.subr.bf16.mxu0 0
      %652 = vmatpush1.bf16.msra.mxu0 0
      %653 = vmatprep.subr.bf16.mxu0 0
      %654 = vmatpush1.bf16.msra.mxu0 0
      %655 = vmatprep.subr.bf16.mxu0 0
      %656 = vmatpush1.bf16.msra.mxu0 0
      %657 = vmatprep.subr.bf16.mxu0 0
      %658 = vmatpush1.bf16.msra.mxu0 0
      %659 = vmatprep.subr.bf16.mxu0 0
      %660 = vmatpush1.bf16.msra.mxu0 0
      %661 = vmatprep.mubr.bf16.mxu0 0
      %662 = vmatmul.mubr.bf16.gmra.mrb[0].mxu0 %v627
      %v663 = vpop.f32.mrb[0].mxu0
      %v664 = vadd.f32 0.0, %v663
      %v665 = vpop.f32.mrb[0].mxu0
      %v666 = vpop.f32.mrb[0].mxu0
      %v667 = vpop.f32.mrb[0].mxu0
      %668 = vdwg.mxu0
      %v677 = vunpack.c.l.b16 %v580
      %v678 = vunpack.c.l.b16 %v581
      %v679 = vunpack.c.l.b16 %v582
      %v680 = vunpack.c.l.b16 %v583
      %v681 = vunpack.c.l.b16 %v584
      %v682 = vunpack.c.l.b16 %v585
      %v683 = vunpack.c.l.b16 %v586
      %v684 = vunpack.c.l.b16 %v587
      %v685 = vpack.c.b16 %v678, %v677
      %v686 = vpack.c.b16 %v680, %v679
      %v687 = vpack.c.b16 %v682, %v681
      %v688 = vpack.c.b16 %v684, %v683
      %v694 = vsel %vm398, %v579, 0
      %696 = vmatprep.subr.bf16.mxu0 0
      %697 = vmatpush1.bf16.msra.mxu0 %v685
      %698 = vmatprep.subr.bf16.mxu0 0
      %699 = vmatpush1.bf16.msra.mxu0 %v686
      %700 = vmatprep.subr.bf16.mxu0 0
      %701 = vmatpush1.bf16.msra.mxu0 %v687
      %702 = vmatprep.subr.bf16.mxu0 0
      %703 = vmatpush1.bf16.msra.mxu0 %v688
      %704 = vmatprep.subr.bf16.mxu0 0
      %705 = vmatpush1.bf16.msra.mxu0 0
      %706 = vmatprep.subr.bf16.mxu0 0
      %707 = vmatpush1.bf16.msra.mxu0 0
      %708 = vmatprep.subr.bf16.mxu0 0
      %709 = vmatpush1.bf16.msra.mxu0 0
      %710 = vmatprep.subr.bf16.mxu0 0
      %711 = vmatpush1.bf16.msra.mxu0 0
      %712 = vmatprep.subr.bf16.mxu0 0
      %713 = vmatpush1.bf16.msra.mxu0 0
      %714 = vmatprep.subr.bf16.mxu0 0
      %715 = vmatpush1.bf16.msra.mxu0 0
      %716 = vmatprep.subr.bf16.mxu0 0
      %717 = vmatpush1.bf16.msra.mxu0 0
      %718 = vmatprep.subr.bf16.mxu0 0
      %719 = vmatpush1.bf16.msra.mxu0 0
      %720 = vmatprep.subr.bf16.mxu0 0
      %721 = vmatpush1.bf16.msra.mxu0 0
      %722 = vmatprep.subr.bf16.mxu0 0
      %723 = vmatpush1.bf16.msra.mxu0 0
      %724 = vmatprep.subr.bf16.mxu0 0
      %725 = vmatpush1.bf16.msra.mxu0 0
      %726 = vmatprep.subr.bf16.mxu0 0
      %727 = vmatpush1.bf16.msra.mxu0 0
      %728 = vmatprep.mubr.bf16.mxu0 0
      %729 = vmatmul.mubr.bf16.gmra.mrb[0].mxu0 %v694
      %v730 = vpop.f32.mrb[0].mxu0
      %v731 = vadd.f32 %v664, %v730
      %v732 = vpop.f32.mrb[0].mxu0
      %v733 = vpop.f32.mrb[0].mxu0
      %v734 = vpop.f32.mrb[0].mxu0
      %735 = vdwg.mxu0
      %s736 = scalar_lea.vmem %s6, 64
      %v737 = vld [vmem:[%s736] sm:$0xf]
      %v738 = vld [vmem:[%s736 + $0x4] sm:$0xf]
      %v739 = vld [vmem:[%s736 + $0x8] sm:$0xf]
      %v740 = vld [vmem:[%s736 + $0xc] sm:$0xf]
      %v741 = vld [vmem:[%s736 + $0x10] sm:$0xf]
      %v742 = vld [vmem:[%s736 + $0x14] sm:$0xf]
      %v743 = vld [vmem:[%s736 + $0x18] sm:$0xf]
      %v744 = vld [vmem:[%s736 + $0x1c] sm:$0xf]
      %745 = vrot.lane.b32.xlu0 %v599, 96
      %v746 = vpop.permute.xlu0 %745
      %v755 = vunpack.c.l.b16 %v737
      %v756 = vunpack.c.l.b16 %v738
      %v757 = vunpack.c.l.b16 %v739
      %v758 = vunpack.c.l.b16 %v740
      %v759 = vunpack.c.l.b16 %v741
      %v760 = vunpack.c.l.b16 %v742
      %v761 = vunpack.c.l.b16 %v743
      %v762 = vunpack.c.l.b16 %v744
      %v763 = vpack.c.b16 %v756, %v755
      %v764 = vpack.c.b16 %v758, %v757
      %v765 = vpack.c.b16 %v760, %v759
      %v766 = vpack.c.b16 %v762, %v761
      %v772 = vsel %vm398, %v746, 0
      %774 = vmatprep.subr.bf16.mxu0 0
      %775 = vmatpush1.bf16.msra.mxu0 %v763
      %776 = vmatprep.subr.bf16.mxu0 0
      %777 = vmatpush1.bf16.msra.mxu0 %v764
      %778 = vmatprep.subr.bf16.mxu0 0
      %779 = vmatpush1.bf16.msra.mxu0 %v765
      %780 = vmatprep.subr.bf16.mxu0 0
      %781 = vmatpush1.bf16.msra.mxu0 %v766
      %782 = vmatprep.subr.bf16.mxu0 0
      %783 = vmatpush1.bf16.msra.mxu0 0
      %784 = vmatprep.subr.bf16.mxu0 0
      %785 = vmatpush1.bf16.msra.mxu0 0
      %786 = vmatprep.subr.bf16.mxu0 0
      %787 = vmatpush1.bf16.msra.mxu0 0
      %788 = vmatprep.subr.bf16.mxu0 0
      %789 = vmatpush1.bf16.msra.mxu0 0
      %790 = vmatprep.subr.bf16.mxu0 0
      %791 = vmatpush1.bf16.msra.mxu0 0
      %792 = vmatprep.subr.bf16.mxu0 0
      %793 = vmatpush1.bf16.msra.mxu0 0
      %794 = vmatprep.subr.bf16.mxu0 0
      %795 = vmatpush1.bf16.msra.mxu0 0
      %796 = vmatprep.subr.bf16.mxu0 0
      %797 = vmatpush1.bf16.msra.mxu0 0
      %798 = vmatprep.subr.bf16.mxu0 0
      %799 = vmatpush1.bf16.msra.mxu0 0
      %800 = vmatprep.subr.bf16.mxu0 0
      %801 = vmatpush1.bf16.msra.mxu0 0
      %802 = vmatprep.subr.bf16.mxu0 0
      %803 = vmatpush1.bf16.msra.mxu0 0
      %804 = vmatprep.subr.bf16.mxu0 0
      %805 = vmatpush1.bf16.msra.mxu0 0
      %806 = vmatprep.mubr.bf16.mxu0 0
      %807 = vmatmul.mubr.bf16.gmra.mrb[0].mxu0 %v772
      %v808 = vpop.f32.mrb[0].mxu0
      %v809 = vadd.f32 0.0, %v808
      %v810 = vpop.f32.mrb[0].mxu0
      %v811 = vpop.f32.mrb[0].mxu0
      %v812 = vpop.f32.mrb[0].mxu0
      %813 = vdwg.mxu0
      %v814 = vadd.f32 %v731, %v809
      %s815 = scalar_lea.vmem %s6, 96
      %v816 = vld [vmem:[%s815] sm:$0xf]
      %v817 = vld [vmem:[%s815 + $0x4] sm:$0xf]
      %v818 = vld [vmem:[%s815 + $0x8] sm:$0xf]
      %v819 = vld [vmem:[%s815 + $0xc] sm:$0xf]
      %v820 = vld [vmem:[%s815 + $0x10] sm:$0xf]
      %v821 = vld [vmem:[%s815 + $0x14] sm:$0xf]
      %v822 = vld [vmem:[%s815 + $0x18] sm:$0xf]
      %v823 = vld [vmem:[%s815 + $0x1c] sm:$0xf]
      %v825 = vshrl.u32 %v599, 16
      %v827 = vshll.u32 %v599, 16
      %v829 = vrot.slane %v827, 1
      %v830 = vor.u32 %v825, %v829
      %v839 = vunpack.c.l.b16 %v816
      %v840 = vunpack.c.l.b16 %v817
      %v841 = vunpack.c.l.b16 %v818
      %v842 = vunpack.c.l.b16 %v819
      %v843 = vunpack.c.l.b16 %v820
      %v844 = vunpack.c.l.b16 %v821
      %v845 = vunpack.c.l.b16 %v822
      %v846 = vunpack.c.l.b16 %v823
      %v847 = vpack.c.b16 %v840, %v839
      %v848 = vpack.c.b16 %v842, %v841
      %v849 = vpack.c.b16 %v844, %v843
      %v850 = vpack.c.b16 %v846, %v845
      %v856 = vsel %vm398, %v830, 0
      %858 = vmatprep.subr.bf16.mxu0 0
      %859 = vmatpush1.bf16.msra.mxu0 %v847
      %860 = vmatprep.subr.bf16.mxu0 0
      %861 = vmatpush1.bf16.msra.mxu0 %v848
      %862 = vmatprep.subr.bf16.mxu0 0
      %863 = vmatpush1.bf16.msra.mxu0 %v849
      %864 = vmatprep.subr.bf16.mxu0 0
      %865 = vmatpush1.bf16.msra.mxu0 %v850
      %866 = vmatprep.subr.bf16.mxu0 0
      %867 = vmatpush1.bf16.msra.mxu0 0
      %868 = vmatprep.subr.bf16.mxu0 0
      %869 = vmatpush1.bf16.msra.mxu0 0
      %870 = vmatprep.subr.bf16.mxu0 0
      %871 = vmatpush1.bf16.msra.mxu0 0
      %872 = vmatprep.subr.bf16.mxu0 0
      %873 = vmatpush1.bf16.msra.mxu0 0
      %874 = vmatprep.subr.bf16.mxu0 0
      %875 = vmatpush1.bf16.msra.mxu0 0
      %876 = vmatprep.subr.bf16.mxu0 0
      %877 = vmatpush1.bf16.msra.mxu0 0
      %878 = vmatprep.subr.bf16.mxu0 0
      %879 = vmatpush1.bf16.msra.mxu0 0
      %880 = vmatprep.subr.bf16.mxu0 0
      %881 = vmatpush1.bf16.msra.mxu0 0
      %882 = vmatprep.subr.bf16.mxu0 0
      %883 = vmatpush1.bf16.msra.mxu0 0
      %884 = vmatprep.subr.bf16.mxu0 0
      %885 = vmatpush1.bf16.msra.mxu0 0
      %886 = vmatprep.subr.bf16.mxu0 0
      %887 = vmatpush1.bf16.msra.mxu0 0
      %888 = vmatprep.subr.bf16.mxu0 0
      %889 = vmatpush1.bf16.msra.mxu0 0
      %890 = vmatprep.mubr.bf16.mxu0 0
      %891 = vmatmul.mubr.bf16.gmra.mrb[0].mxu0 %v856
      %v892 = vpop.f32.mrb[0].mxu0
      %v893 = vadd.f32 0.0, %v892
      %v894 = vpop.f32.mrb[0].mxu0
      %v895 = vpop.f32.mrb[0].mxu0
      %v896 = vpop.f32.mrb[0].mxu0
      %897 = vdwg.mxu0
      %v898 = vadd.f32 %v814, %v893
      %s899 = scalar_lea.vmem %s6, 128
      %v900 = vld [vmem:[%s899] sm:$0xf]
      %v901 = vld [vmem:[%s899 + $0x4] sm:$0xf]
      %v902 = vld [vmem:[%s899 + $0x8] sm:$0xf]
      %v903 = vld [vmem:[%s899 + $0xc] sm:$0xf]
      %v904 = vld [vmem:[%s899 + $0x10] sm:$0xf]
      %v905 = vld [vmem:[%s899 + $0x14] sm:$0xf]
      %v906 = vld [vmem:[%s899 + $0x18] sm:$0xf]
      %v907 = vld [vmem:[%s899 + $0x1c] sm:$0xf]
      %908 = vrot.lane.b32.xlu0 %v830, 112
      %v909 = vpop.permute.xlu0 %908
      %v918 = vunpack.c.l.b16 %v900
      %v919 = vunpack.c.l.b16 %v901
      %v920 = vunpack.c.l.b16 %v902
      %v921 = vunpack.c.l.b16 %v903
      %v922 = vunpack.c.l.b16 %v904
      %v923 = vunpack.c.l.b16 %v905
      %v924 = vunpack.c.l.b16 %v906
      %v925 = vunpack.c.l.b16 %v907
      %v926 = vpack.c.b16 %v919, %v918
      %v927 = vpack.c.b16 %v921, %v920
      %v928 = vpack.c.b16 %v923, %v922
      %v929 = vpack.c.b16 %v925, %v924
      %v935 = vsel %vm398, %v909, 0
      %937 = vmatprep.subr.bf16.mxu0 0
      %938 = vmatpush1.bf16.msra.mxu0 %v926
      %939 = vmatprep.subr.bf16.mxu0 0
      %940 = vmatpush1.bf16.msra.mxu0 %v927
      %941 = vmatprep.subr.bf16.mxu0 0
      %942 = vmatpush1.bf16.msra.mxu0 %v928
      %943 = vmatprep.subr.bf16.mxu0 0
      %944 = vmatpush1.bf16.msra.mxu0 %v929
      %945 = vmatprep.subr.bf16.mxu0 0
      %946 = vmatpush1.bf16.msra.mxu0 0
      %947 = vmatprep.subr.bf16.mxu0 0
      %948 = vmatpush1.bf16.msra.mxu0 0
      %949 = vmatprep.subr.bf16.mxu0 0
      %950 = vmatpush1.bf16.msra.mxu0 0
      %951 = vmatprep.subr.bf16.mxu0 0
      %952 = vmatpush1.bf16.msra.mxu0 0
      %953 = vmatprep.subr.bf16.mxu0 0
      %954 = vmatpush1.bf16.msra.mxu0 0
      %955 = vmatprep.subr.bf16.mxu0 0
      %956 = vmatpush1.bf16.msra.mxu0 0
      %957 = vmatprep.subr.bf16.mxu0 0
      %958 = vmatpush1.bf16.msra.mxu0 0
      %959 = vmatprep.subr.bf16.mxu0 0
      %960 = vmatpush1.bf16.msra.mxu0 0
      %961 = vmatprep.subr.bf16.mxu0 0
      %962 = vmatpush1.bf16.msra.mxu0 0
      %963 = vmatprep.subr.bf16.mxu0 0
      %964 = vmatpush1.bf16.msra.mxu0 0
      %965 = vmatprep.subr.bf16.mxu0 0
      %966 = vmatpush1.bf16.msra.mxu0 0
      %967 = vmatprep.subr.bf16.mxu0 0
      %968 = vmatpush1.bf16.msra.mxu0 0
      %969 = vmatprep.mubr.bf16.mxu0 0
      %970 = vmatmul.mubr.bf16.gmra.mrb[0].mxu0 %v935
      %v971 = vpop.f32.mrb[0].mxu0
      %v972 = vadd.f32 0.0, %v971
      %v973 = vpop.f32.mrb[0].mxu0
      %v974 = vpop.f32.mrb[0].mxu0
      %v975 = vpop.f32.mrb[0].mxu0
      %976 = vdwg.mxu0
      %v977 = vadd.f32 %v898, %v972
      %s978 = scalar_lea.vmem %s6, 160
      %v979 = vld [vmem:[%s978] sm:$0xf]
      %v980 = vld [vmem:[%s978 + $0x4] sm:$0xf]
      %v981 = vld [vmem:[%s978 + $0x8] sm:$0xf]
      %v982 = vld [vmem:[%s978 + $0xc] sm:$0xf]
      %v983 = vld [vmem:[%s978 + $0x10] sm:$0xf]
      %v984 = vld [vmem:[%s978 + $0x14] sm:$0xf]
      %v985 = vld [vmem:[%s978 + $0x18] sm:$0xf]
      %v986 = vld [vmem:[%s978 + $0x1c] sm:$0xf]
      %987 = vrot.lane.b32.xlu0 %v830, 96
      %v988 = vpop.permute.xlu0 %987
      %v997 = vunpack.c.l.b16 %v979
      %v998 = vunpack.c.l.b16 %v980
      %v999 = vunpack.c.l.b16 %v981
      %v1000 = vunpack.c.l.b16 %v982
      %v1001 = vunpack.c.l.b16 %v983
      %v1002 = vunpack.c.l.b16 %v984
      %v1003 = vunpack.c.l.b16 %v985
      %v1004 = vunpack.c.l.b16 %v986
      %v1005 = vpack.c.b16 %v998, %v997
      %v1006 = vpack.c.b16 %v1000, %v999
      %v1007 = vpack.c.b16 %v1002, %v1001
      %v1008 = vpack.c.b16 %v1004, %v1003
      %v1014 = vsel %vm398, %v988, 0
      %1016 = vmatprep.subr.bf16.mxu0 0
      %1017 = vmatpush1.bf16.msra.mxu0 %v1005
      %1018 = vmatprep.subr.bf16.mxu0 0
      %1019 = vmatpush1.bf16.msra.mxu0 %v1006
      %1020 = vmatprep.subr.bf16.mxu0 0
      %1021 = vmatpush1.bf16.msra.mxu0 %v1007
      %1022 = vmatprep.subr.bf16.mxu0 0
      %1023 = vmatpush1.bf16.msra.mxu0 %v1008
      %1024 = vmatprep.subr.bf16.mxu0 0
      %1025 = vmatpush1.bf16.msra.mxu0 0
      %1026 = vmatprep.subr.bf16.mxu0 0
      %1027 = vmatpush1.bf16.msra.mxu0 0
      %1028 = vmatprep.subr.bf16.mxu0 0
      %1029 = vmatpush1.bf16.msra.mxu0 0
      %1030 = vmatprep.subr.bf16.mxu0 0
      %1031 = vmatpush1.bf16.msra.mxu0 0
      %1032 = vmatprep.subr.bf16.mxu0 0
      %1033 = vmatpush1.bf16.msra.mxu0 0
      %1034 = vmatprep.subr.bf16.mxu0 0
      %1035 = vmatpush1.bf16.msra.mxu0 0
      %1036 = vmatprep.subr.bf16.mxu0 0
      %1037 = vmatpush1.bf16.msra.mxu0 0
      %1038 = vmatprep.subr.bf16.mxu0 0
      %1039 = vmatpush1.bf16.msra.mxu0 0
      %1040 = vmatprep.subr.bf16.mxu0 0
      %1041 = vmatpush1.bf16.msra.mxu0 0
      %1042 = vmatprep.subr.bf16.mxu0 0
      %1043 = vmatpush1.bf16.msra.mxu0 0
      %1044 = vmatprep.subr.bf16.mxu0 0
      %1045 = vmatpush1.bf16.msra.mxu0 0
      %1046 = vmatprep.subr.bf16.mxu0 0
      %1047 = vmatpush1.bf16.msra.mxu0 0
      %1048 = vmatprep.mubr.bf16.mxu0 0
      %1049 = vmatmul.mubr.bf16.gmra.mrb[0].mxu0 %v1014
      %v1050 = vpop.f32.mrb[0].mxu0
      %v1051 = vadd.f32 0.0, %v1050
      %v1052 = vpop.f32.mrb[0].mxu0
      %v1053 = vpop.f32.mrb[0].mxu0
      %v1054 = vpop.f32.mrb[0].mxu0
      %1055 = vdwg.mxu0
      %v1056 = vadd.f32 %v977, %v1051
      %s1057 = scalar_lea.vmem %s6, 192
      %v1058 = vld [vmem:[%s1057] sm:$0xf]
      %v1059 = vld [vmem:[%s1057 + $0x4] sm:$0xf]
      %v1060 = vld [vmem:[%s1057 + $0x8] sm:$0xf]
      %v1061 = vld [vmem:[%s1057 + $0xc] sm:$0xf]
      %v1062 = vld [vmem:[%s1057 + $0x10] sm:$0xf]
      %v1063 = vld [vmem:[%s1057 + $0x14] sm:$0xf]
      %v1064 = vld [vmem:[%s1057 + $0x18] sm:$0xf]
      %v1065 = vld [vmem:[%s1057 + $0x1c] sm:$0xf]
      %v1066 = vrot.slane %v599, 1
      %v1075 = vunpack.c.l.b16 %v1058
      %v1076 = vunpack.c.l.b16 %v1059
      %v1077 = vunpack.c.l.b16 %v1060
      %v1078 = vunpack.c.l.b16 %v1061
      %v1079 = vunpack.c.l.b16 %v1062
      %v1080 = vunpack.c.l.b16 %v1063
      %v1081 = vunpack.c.l.b16 %v1064
      %v1082 = vunpack.c.l.b16 %v1065
      %v1083 = vpack.c.b16 %v1076, %v1075
      %v1084 = vpack.c.b16 %v1078, %v1077
      %v1085 = vpack.c.b16 %v1080, %v1079
      %v1086 = vpack.c.b16 %v1082, %v1081
      %v1092 = vsel %vm398, %v1066, 0
      %1094 = vmatprep.subr.bf16.mxu0 0
      %1095 = vmatpush1.bf16.msra.mxu0 %v1083
      %1096 = vmatprep.subr.bf16.mxu0 0
      %1097 = vmatpush1.bf16.msra.mxu0 %v1084
      %1098 = vmatprep.subr.bf16.mxu0 0
      %1099 = vmatpush1.bf16.msra.mxu0 %v1085
      %1100 = vmatprep.subr.bf16.mxu0 0
      %1101 = vmatpush1.bf16.msra.mxu0 %v1086
      %1102 = vmatprep.subr.bf16.mxu0 0
      %1103 = vmatpush1.bf16.msra.mxu0 0
      %1104 = vmatprep.subr.bf16.mxu0 0
      %1105 = vmatpush1.bf16.msra.mxu0 0
      %1106 = vmatprep.subr.bf16.mxu0 0
      %1107 = vmatpush1.bf16.msra.mxu0 0
      %1108 = vmatprep.subr.bf16.mxu0 0
      %1109 = vmatpush1.bf16.msra.mxu0 0
      %1110 = vmatprep.subr.bf16.mxu0 0
      %1111 = vmatpush1.bf16.msra.mxu0 0
      %1112 = vmatprep.subr.bf16.mxu0 0
      %1113 = vmatpush1.bf16.msra.mxu0 0
      %1114 = vmatprep.subr.bf16.mxu0 0
      %1115 = vmatpush1.bf16.msra.mxu0 0
      %1116 = vmatprep.subr.bf16.mxu0 0
      %1117 = vmatpush1.bf16.msra.mxu0 0
      %1118 = vmatprep.subr.bf16.mxu0 0
      %1119 = vmatpush1.bf16.msra.mxu0 0
      %1120 = vmatprep.subr.bf16.mxu0 0
      %1121 = vmatpush1.bf16.msra.mxu0 0
      %1122 = vmatprep.subr.bf16.mxu0 0
      %1123 = vmatpush1.bf16.msra.mxu0 0
      %1124 = vmatprep.subr.bf16.mxu0 0
      %1125 = vmatpush1.bf16.msra.mxu0 0
      %1126 = vmatprep.mubr.bf16.mxu0 0
      %1127 = vmatmul.mubr.bf16.gmra.mrb[0].mxu0 %v1092
      %v1128 = vpop.f32.mrb[0].mxu0
      %v1129 = vadd.f32 0.0, %v1128
      %v1130 = vpop.f32.mrb[0].mxu0
      %v1131 = vpop.f32.mrb[0].mxu0
      %v1132 = vpop.f32.mrb[0].mxu0
      %1133 = vdwg.mxu0
      %v1134 = vadd.f32 %v1056, %v1129
      %s1135 = scalar_lea.vmem %s6, 224
      %v1136 = vld [vmem:[%s1135] sm:$0xf]
      %v1137 = vld [vmem:[%s1135 + $0x4] sm:$0xf]
      %v1138 = vld [vmem:[%s1135 + $0x8] sm:$0xf]
      %v1139 = vld [vmem:[%s1135 + $0xc] sm:$0xf]
      %v1140 = vld [vmem:[%s1135 + $0x10] sm:$0xf]
      %v1141 = vld [vmem:[%s1135 + $0x14] sm:$0xf]
      %v1142 = vld [vmem:[%s1135 + $0x18] sm:$0xf]
      %v1143 = vld [vmem:[%s1135 + $0x1c] sm:$0xf]
      %1144 = vrot.lane.b32.xlu0 %v1066, 112
      %v1145 = vpop.permute.xlu0 %1144
      %v1154 = vunpack.c.l.b16 %v1136
      %v1155 = vunpack.c.l.b16 %v1137
      %v1156 = vunpack.c.l.b16 %v1138
      %v1157 = vunpack.c.l.b16 %v1139
      %v1158 = vunpack.c.l.b16 %v1140
      %v1159 = vunpack.c.l.b16 %v1141
      %v1160 = vunpack.c.l.b16 %v1142
      %v1161 = vunpack.c.l.b16 %v1143
      %v1162 = vpack.c.b16 %v1155, %v1154
      %v1163 = vpack.c.b16 %v1157, %v1156
      %v1164 = vpack.c.b16 %v1159, %v1158
      %v1165 = vpack.c.b16 %v1161, %v1160
      %v1171 = vsel %vm398, %v1145, 0
      %1173 = vmatprep.subr.bf16.mxu0 0
      %1174 = vmatpush1.bf16.msra.mxu0 %v1162
      %1175 = vmatprep.subr.bf16.mxu0 0
      %1176 = vmatpush1.bf16.msra.mxu0 %v1163
      %1177 = vmatprep.subr.bf16.mxu0 0
      %1178 = vmatpush1.bf16.msra.mxu0 %v1164
      %1179 = vmatprep.subr.bf16.mxu0 0
      %1180 = vmatpush1.bf16.msra.mxu0 %v1165
      %1181 = vmatprep.subr.bf16.mxu0 0
      %1182 = vmatpush1.bf16.msra.mxu0 0
      %1183 = vmatprep.subr.bf16.mxu0 0
      %1184 = vmatpush1.bf16.msra.mxu0 0
      %1185 = vmatprep.subr.bf16.mxu0 0
      %1186 = vmatpush1.bf16.msra.mxu0 0
      %1187 = vmatprep.subr.bf16.mxu0 0
      %1188 = vmatpush1.bf16.msra.mxu0 0
      %1189 = vmatprep.subr.bf16.mxu0 0
      %1190 = vmatpush1.bf16.msra.mxu0 0
      %1191 = vmatprep.subr.bf16.mxu0 0
      %1192 = vmatpush1.bf16.msra.mxu0 0
      %1193 = vmatprep.subr.bf16.mxu0 0
      %1194 = vmatpush1.bf16.msra.mxu0 0
      %1195 = vmatprep.subr.bf16.mxu0 0
      %1196 = vmatpush1.bf16.msra.mxu0 0
      %1197 = vmatprep.subr.bf16.mxu0 0
      %1198 = vmatpush1.bf16.msra.mxu0 0
      %1199 = vmatprep.subr.bf16.mxu0 0
      %1200 = vmatpush1.bf16.msra.mxu0 0
      %1201 = vmatprep.subr.bf16.mxu0 0
      %1202 = vmatpush1.bf16.msra.mxu0 0
      %1203 = vmatprep.subr.bf16.mxu0 0
      %1204 = vmatpush1.bf16.msra.mxu0 0
      %1205 = vmatprep.mubr.bf16.mxu0 0
      %1206 = vmatmul.mubr.bf16.gmra.mrb[0].mxu0 %v1171
      %v1207 = vpop.f32.mrb[0].mxu0
      %v1208 = vadd.f32 0.0, %v1207
      %v1209 = vpop.f32.mrb[0].mxu0
      %v1210 = vpop.f32.mrb[0].mxu0
      %v1211 = vpop.f32.mrb[0].mxu0
      %1212 = vdwg.mxu0
      %v1213 = vadd.f32 %v1134, %v1208
      %s1214 = scalar_lea.vmem %s6, 256
      %v1215 = vld [vmem:[%s1214] sm:$0xf]
      %v1216 = vld [vmem:[%s1214 + $0x4] sm:$0xf]
      %v1217 = vld [vmem:[%s1214 + $0x8] sm:$0xf]
      %v1218 = vld [vmem:[%s1214 + $0xc] sm:$0xf]
      %v1219 = vld [vmem:[%s1214 + $0x10] sm:$0xf]
      %v1220 = vld [vmem:[%s1214 + $0x14] sm:$0xf]
      %v1221 = vld [vmem:[%s1214 + $0x18] sm:$0xf]
      %v1222 = vld [vmem:[%s1214 + $0x1c] sm:$0xf]
      %1223 = vrot.lane.b32.xlu0 %v1066, 96
      %v1224 = vpop.permute.xlu0 %1223
      %v1233 = vunpack.c.l.b16 %v1215
      %v1234 = vunpack.c.l.b16 %v1216
      %v1235 = vunpack.c.l.b16 %v1217
      %v1236 = vunpack.c.l.b16 %v1218
      %v1237 = vunpack.c.l.b16 %v1219
      %v1238 = vunpack.c.l.b16 %v1220
      %v1239 = vunpack.c.l.b16 %v1221
      %v1240 = vunpack.c.l.b16 %v1222
      %v1241 = vpack.c.b16 %v1234, %v1233
      %v1242 = vpack.c.b16 %v1236, %v1235
      %v1243 = vpack.c.b16 %v1238, %v1237
      %v1244 = vpack.c.b16 %v1240, %v1239
      %v1250 = vsel %vm398, %v1224, 0
      %1252 = vmatprep.subr.bf16.mxu0 0
      %1253 = vmatpush1.bf16.msra.mxu0 %v1241
      %1254 = vmatprep.subr.bf16.mxu0 0
      %1255 = vmatpush1.bf16.msra.mxu0 %v1242
      %1256 = vmatprep.subr.bf16.mxu0 0
      %1257 = vmatpush1.bf16.msra.mxu0 %v1243
      %1258 = vmatprep.subr.bf16.mxu0 0
      %1259 = vmatpush1.bf16.msra.mxu0 %v1244
      %1260 = vmatprep.subr.bf16.mxu0 0
      %1261 = vmatpush1.bf16.msra.mxu0 0
      %1262 = vmatprep.subr.bf16.mxu0 0
      %1263 = vmatpush1.bf16.msra.mxu0 0
      %1264 = vmatprep.subr.bf16.mxu0 0
      %1265 = vmatpush1.bf16.msra.mxu0 0
      %1266 = vmatprep.subr.bf16.mxu0 0
      %1267 = vmatpush1.bf16.msra.mxu0 0
      %1268 = vmatprep.subr.bf16.mxu0 0
      %1269 = vmatpush1.bf16.msra.mxu0 0
      %1270 = vmatprep.subr.bf16.mxu0 0
      %1271 = vmatpush1.bf16.msra.mxu0 0
      %1272 = vmatprep.subr.bf16.mxu0 0
      %1273 = vmatpush1.bf16.msra.mxu0 0
      %1274 = vmatprep.subr.bf16.mxu0 0
      %1275 = vmatpush1.bf16.msra.mxu0 0
      %1276 = vmatprep.subr.bf16.mxu0 0
      %1277 = vmatpush1.bf16.msra.mxu0 0
      %1278 = vmatprep.subr.bf16.mxu0 0
      %1279 = vmatpush1.bf16.msra.mxu0 0
      %1280 = vmatprep.subr.bf16.mxu0 0
      %1281 = vmatpush1.bf16.msra.mxu0 0
      %1282 = vmatprep.subr.bf16.mxu0 0
      %1283 = vmatpush1.bf16.msra.mxu0 0
      %1284 = vmatprep.mubr.bf16.mxu0 0
      %1285 = vmatmul.mubr.bf16.gmra.mrb[0].mxu0 %v1250
      %v1286 = vpop.f32.mrb[0].mxu0
      %v1287 = vadd.f32 0.0, %v1286
      %v1288 = vpop.f32.mrb[0].mxu0
      %v1289 = vpop.f32.mrb[0].mxu0
      %v1290 = vpop.f32.mrb[0].mxu0
      %1291 = vdwg.mxu0
      %v1292 = vadd.f32 %v1213, %v1287
      %v1293 = vld [vmem:[%s7] sm:$0x1]
      %v1295 = vlaneseq
      %v1296 = vshrl.u32 %v1295, 7
      %v1297 = vsub.s32 0, %v1296
      %v1298 = vrot.slane %v1293, %v1297
      %v1300 = vadd.f32 %v1292, %v1298
      %1301 = vst.msk [vmem:[%s351] sm:$0xf] %vm555, %v1300
      %p1302 = scmp.lt.s32.totalorder %s21, 1
      %s1303 = scalar_select %p1302, %s21, 1
      %s1304 = smul.addr %s1303, 4
      %s1305 = scalar_lea.vmem %s8, %s1304
      %p1306 = scmp.lt.s32.totalorder %s21, 1
      %s1307 = scalar_select %p1306, %s21, 1
      %s1308 = smul.addr %s1307, 4
      %s1309 = scalar_lea.vmem %s9, %s1308
      // Predicated region
      $region53: #{backbone_with_fpn_forward.10} parent=51 // pred_check
        %p1310 = pneg %p217
      $region54: #{backbone_with_fpn_forward.10} parent=51 // pred_check_branch
        %1312 = sbr.rel (%p1310) target = $region56
      $region55: #{backbone_with_fpn_forward.10} parent=51 // pred_region
        _
      $region56: #{backbone_with_fpn_forward.10} parent=51 // pred_fallthru
        _
      // Predicated region
      $region57: #{backbone_with_fpn_forward.10} parent=51 // pred_check
        %p1313 = pneg %p243
      $region58: #{backbone_with_fpn_forward.10} parent=51 // pred_check_branch
        %1315 = sbr.rel (%p1313) target = $region60
      $region59: #{backbone_with_fpn_forward.10} parent=51 // pred_region
        _
      $region60: #{backbone_with_fpn_forward.10} parent=51 // pred_fallthru
        _
    $region52: #{backbone_with_fpn_forward.10} parent=5 // pred_fallthru
      _
    %p1316 = scmp.le.s32.totalorder 2, %s16
    // Predicated region
    $region61: #{backbone_with_fpn_forward.10} parent=5 // pred_check
      %p1317 = pneg %p1316
    $region62: #{backbone_with_fpn_forward.10} parent=5 // pred_check_branch
      %1319 = sbr.rel (%p1317) target = $region64
    $region63: #{backbone_with_fpn_forward.10} parent=5 // pred_region
      %s1320 = ssub.s32 %s16, 2
      // Predicated region
      $region65: #{backbone_with_fpn_forward.10} parent=63 // pred_check
        %p1321 = pneg %p223
      $region66: #{backbone_with_fpn_forward.10} parent=63 // pred_check_branch
        %1323 = sbr.rel (%p1321) target = $region68
      $region67: #{backbone_with_fpn_forward.10} parent=63 // pred_region
        %p1324 = scmp.lt.s32.totalorder %s22, 1
        %s1325 = scalar_select %p1324, %s22, 1
        %s1326 = smul.addr %s1325, 4
        %s1327 = scalar_lea.vmem %s8, %s1326
      $region68: #{backbone_with_fpn_forward.10} parent=63 // pred_fallthru
        _
      // Predicated region
      $region69: #{backbone_with_fpn_forward.10} parent=63 // pred_check
        %p1328 = pneg %p249
      $region70: #{backbone_with_fpn_forward.10} parent=63 // pred_check_branch
        %1330 = sbr.rel (%p1328) target = $region72
      $region71: #{backbone_with_fpn_forward.10} parent=63 // pred_region
        %p1331 = scmp.lt.s32.totalorder %s22, 1
        %s1332 = scalar_select %p1331, %s22, 1
        %s1333 = smul.addr %s1332, 4
        %s1334 = scalar_lea.vmem %s9, %s1333
      $region72: #{backbone_with_fpn_forward.10} parent=63 // pred_fallthru
        _
    $region64: #{backbone_with_fpn_forward.10} parent=5 // pred_fallthru
      _
  $region6: #{backbone_with_fpn_forward.10} parent=0 // loop_footer
    %s20 = sadd.s32 1, %s16
  $region7: #{backbone_with_fpn_forward.10} parent=0 // loop_footer_branch
    %15 = sbr.rel target = $region3
  $region8: #{backbone_with_fpn_forward.10} parent=0 // loop_exit
    _

// kernel: backbone_with_fpn_forward.11
$region0: #{backbone_with_fpn_forward.11}
  #allocation0 [shape = 'u32[]', space=smem, size = 0x4, offset = 0x4, fixed_abs, tag = 'smem constant byte address 0x4 - core index']
  #allocation1 [shape = 'u32[144,128]{1,0:T(1,128)}', space=vmem, size = 0x12000, scoped, tag = 'internal scratch']
  #allocation2 [shape = 'bf16[10,160]{1,0:T(8,128)(2,1)}', space=vmem, size = 0x2000, scoped, tag = 'scratch operand']
  %s0 = inlined_call_operand.vmem [shape: f32[2,8,64], index: 0, kind: input, shape index: {}]
  %s1 = inlined_call_operand.vmem [shape: f32[2,4,64], index: 1, kind: input, shape index: {}]
  %s2 = inlined_call_operand.vmem [shape: bf16[8,4], index: 2, kind: input, shape index: {}]
  %s3 = inlined_call_operand.vmem [shape: bf16[64,128], index: 3, kind: input, shape index: {}]
  %s4 = inlined_call_operand.vmem [shape: bf16[64,128], index: 4, kind: input, shape index: {}]
  %s5 = inlined_call_operand.vmem [shape: f32[1,128], index: 5, kind: input, shape index: {}]
  %s6 = inlined_call_operand.vmem [shape: bf16[9,128,128], index: 6, kind: input, shape index: {}]
  %s7 = inlined_call_operand.vmem [shape: f32[1,128], index: 7, kind: input, shape index: {}]
  %s8 = inlined_call_operand.vmem [shape: f32[2,8,128], index: 8, kind: output, shape index: {0}]
  %s9 = inlined_call_operand.hbm [shape: f32[2,8,128], index: 9, kind: output, shape index: {1}]
  %10 = xla_tuple %s8, %s9
  %s11 = sld [smem:[#allocation0]]
  $region73: #{backbone_with_fpn_forward.11} parent=0
    _
  %s13 = ssub.s32 1, %s11
  %s14 = scalar_select 0, %s13, %s11
  $region1: #{backbone_with_fpn_forward.11} parent=0
    #allocation3 [shape = 'u8[8192]{0}', space=vmem, size = 0x2000, scoped, tag = 'output window, operand 1']
    #allocation4 [shape = 's32[2]{0}', space=sflag, size = 0x8, scoped, tag = 'scoped memory for backbone_with_fpn_forward.11']
    %15 = vsyncpa [#allocation4], 0
    %s16 = scalar_lea.sflag [#allocation4], 1
    %17 = vsyncpa %s16, 0
    loop: start=0, step=1, limit=4
    $region2: #{backbone_with_fpn_forward.11} parent=1 // loop_pre_header
      _
    $region3: #{backbone_with_fpn_forward.11} parent=1 // loop_header
      %s19 = sphi 0, %s23
      %p20 = scmp.ge.s32.totalorder %s19, 4
      %s29 = sphi 0, %s31
      %s32 = sphi 0, %s29
      %s33 = sphi 0, %s32
      %s49 = sphi 0, %s33
      %s55 = sphi 0, %s57
      %s58 = sphi 0, %s55
      %s59 = sphi 0, %s58
      %s75 = sphi 0, %s59
      %s79 = sphi 0, %s79
      %s81 = sphi 0, %s79
      %s82 = sphi 0, %s81
      %s96 = sphi 0, %s82
      %s100 = sphi 0, %s100
      %s102 = sphi 0, %s100
      %s103 = sphi 0, %s102
      %s117 = sphi 0, %s103
      %s121 = sphi 0, %s121
      %s123 = sphi 0, %s121
      %s124 = sphi 0, %s123
      %s138 = sphi 0, %s124
      %s142 = sphi 0, %s142
      %s144 = sphi 0, %s142
      %s145 = sphi 0, %s144
      %s159 = sphi 0, %s145
      %s163 = sphi 0, %s163
      %s165 = sphi 0, %s163
      %s166 = sphi 0, %s165
      %s180 = sphi 0, %s166
      %s184 = sphi 0, %s184
      %s186 = sphi 0, %s184
      %s187 = sphi 0, %s186
      %s201 = sphi 0, %s187
      %s207 = sphi 0, %s209
      %s210 = sphi 0, %s207
      %s211 = sphi 0, %s210
      %s227 = sphi 0, %s211
      %s233 = sphi 0, %s235
      %s236 = sphi 0, %s233
      %s237 = sphi 0, %s236
      %s253 = sphi 0, %s237
    $region4: #{backbone_with_fpn_forward.11} parent=1 // loop_header_branch
      %22 = sbr.rel (%p20) target = $region8
    $region5: #{backbone_with_fpn_forward.11} parent=1 // loop_body
      %s24 = ssub.s32 %s19, 1
      %s25 = ssub.s32 %s19, 2
      %s26 = sadd.s32 %s19, 1
      %s27 = ssub.s32 %s19, %s26
      %p28 = scmp.eq.s32.totalorder %s27, 0
      %s30 = sadd.s32 %s29, 1
      %s31 = scalar_select %p28, %s29, %s30
      %p34 = pneg %p28
      %p35 = scmp.eq.s32.totalorder %s19, 1
      %p36 = por %p34, %p35
      %p37 = scmp.ne.s32.totalorder %s29, %s32
      %p38 = scmp.eq.s32.totalorder %s19, 0
      %p39 = por %p37, %p38
      %p40 = scmp.ne.s32.totalorder %s29, %s32
      %p41 = scmp.eq.s32.totalorder %s24, 1
      %p42 = por %p40, %p41
      %p43 = scmp.ne.s32.totalorder %s32, %s33
      %p44 = scmp.eq.s32.totalorder %s24, 0
      %p45 = por %p43, %p44
      %p46 = scmp.ne.s32.totalorder %s32, %s33
      %p47 = scmp.eq.s32.totalorder %s25, 1
      %p48 = por %p46, %p47
      %p50 = scmp.ne.s32.totalorder %s33, %s49
      %p51 = scmp.eq.s32.totalorder %s25, 0
      %p52 = por %p50, %p51
      %s53 = ssub.s32 %s19, %s26
      %p54 = scmp.eq.s32.totalorder %s53, 0
      %s56 = sadd.s32 %s55, 1
      %s57 = scalar_select %p54, %s55, %s56
      %p60 = pneg %p54
      %p61 = scmp.eq.s32.totalorder %s19, 1
      %p62 = por %p60, %p61
      %p63 = scmp.ne.s32.totalorder %s55, %s58
      %p64 = scmp.eq.s32.totalorder %s19, 0
      %p65 = por %p63, %p64
      %p66 = scmp.ne.s32.totalorder %s55, %s58
      %p67 = scmp.eq.s32.totalorder %s24, 1
      %p68 = por %p66, %p67
      %p69 = scmp.ne.s32.totalorder %s58, %s59
      %p70 = scmp.eq.s32.totalorder %s24, 0
      %p71 = por %p69, %p70
      %p72 = scmp.ne.s32.totalorder %s58, %s59
      %p73 = scmp.eq.s32.totalorder %s25, 1
      %p74 = por %p72, %p73
      %p76 = scmp.ne.s32.totalorder %s59, %s75
      %p77 = scmp.eq.s32.totalorder %s25, 0
      %p78 = por %p76, %p77
      %s80 = sadd.s32 %s79, 1
      %p83 = scmp.eq.s32.totalorder %s19, 1
      %p84 = scmp.ne.s32.totalorder %s79, %s81
      %p85 = scmp.eq.s32.totalorder %s19, 0
      %p86 = por %p84, %p85
      %p87 = scmp.ne.s32.totalorder %s79, %s81
      %p88 = scmp.eq.s32.totalorder %s24, 1
      %p89 = por %p87, %p88
      %p90 = scmp.ne.s32.totalorder %s81, %s82
      %p91 = scmp.eq.s32.totalorder %s24, 0
      %p92 = por %p90, %p91
      %p93 = scmp.ne.s32.totalorder %s81, %s82
      %p94 = scmp.eq.s32.totalorder %s25, 1
      %p95 = por %p93, %p94
      %p97 = scmp.ne.s32.totalorder %s82, %s96
      %p98 = scmp.eq.s32.totalorder %s25, 0
      %p99 = por %p97, %p98
      %s101 = sadd.s32 %s100, 1
      %p104 = scmp.eq.s32.totalorder %s19, 1
      %p105 = scmp.ne.s32.totalorder %s100, %s102
      %p106 = scmp.eq.s32.totalorder %s19, 0
      %p107 = por %p105, %p106
      %p108 = scmp.ne.s32.totalorder %s100, %s102
      %p109 = scmp.eq.s32.totalorder %s24, 1
      %p110 = por %p108, %p109
      %p111 = scmp.ne.s32.totalorder %s102, %s103
      %p112 = scmp.eq.s32.totalorder %s24, 0
      %p113 = por %p111, %p112
      %p114 = scmp.ne.s32.totalorder %s102, %s103
      %p115 = scmp.eq.s32.totalorder %s25, 1
      %p116 = por %p114, %p115
      %p118 = scmp.ne.s32.totalorder %s103, %s117
      %p119 = scmp.eq.s32.totalorder %s25, 0
      %p120 = por %p118, %p119
      %s122 = sadd.s32 %s121, 1
      %p125 = scmp.eq.s32.totalorder %s19, 1
      %p126 = scmp.ne.s32.totalorder %s121, %s123
      %p127 = scmp.eq.s32.totalorder %s19, 0
      %p128 = por %p126, %p127
      %p129 = scmp.ne.s32.totalorder %s121, %s123
      %p130 = scmp.eq.s32.totalorder %s24, 1
      %p131 = por %p129, %p130
      %p132 = scmp.ne.s32.totalorder %s123, %s124
      %p133 = scmp.eq.s32.totalorder %s24, 0
      %p134 = por %p132, %p133
      %p135 = scmp.ne.s32.totalorder %s123, %s124
      %p136 = scmp.eq.s32.totalorder %s25, 1
      %p137 = por %p135, %p136
      %p139 = scmp.ne.s32.totalorder %s124, %s138
      %p140 = scmp.eq.s32.totalorder %s25, 0
      %p141 = por %p139, %p140
      %s143 = sadd.s32 %s142, 1
      %p146 = scmp.eq.s32.totalorder %s19, 1
      %p147 = scmp.ne.s32.totalorder %s142, %s144
      %p148 = scmp.eq.s32.totalorder %s19, 0
      %p149 = por %p147, %p148
      %p150 = scmp.ne.s32.totalorder %s142, %s144
      %p151 = scmp.eq.s32.totalorder %s24, 1
      %p152 = por %p150, %p151
      %p153 = scmp.ne.s32.totalorder %s144, %s145
      %p154 = scmp.eq.s32.totalorder %s24, 0
      %p155 = por %p153, %p154
      %p156 = scmp.ne.s32.totalorder %s144, %s145
      %p157 = scmp.eq.s32.totalorder %s25, 1
      %p158 = por %p156, %p157
      %p160 = scmp.ne.s32.totalorder %s145, %s159
      %p161 = scmp.eq.s32.totalorder %s25, 0
      %p162 = por %p160, %p161
      %s164 = sadd.s32 %s163, 1
      %p167 = scmp.eq.s32.totalorder %s19, 1
      %p168 = scmp.ne.s32.totalorder %s163, %s165
      %p169 = scmp.eq.s32.totalorder %s19, 0
      %p170 = por %p168, %p169
      %p171 = scmp.ne.s32.totalorder %s163, %s165
      %p172 = scmp.eq.s32.totalorder %s24, 1
      %p173 = por %p171, %p172
      %p174 = scmp.ne.s32.totalorder %s165, %s166
      %p175 = scmp.eq.s32.totalorder %s24, 0
      %p176 = por %p174, %p175
      %p177 = scmp.ne.s32.totalorder %s165, %s166
      %p178 = scmp.eq.s32.totalorder %s25, 1
      %p179 = por %p177, %p178
      %p181 = scmp.ne.s32.totalorder %s166, %s180
      %p182 = scmp.eq.s32.totalorder %s25, 0
      %p183 = por %p181, %p182
      %s185 = sadd.s32 %s184, 1
      %p188 = scmp.eq.s32.totalorder %s19, 1
      %p189 = scmp.ne.s32.totalorder %s184, %s186
      %p190 = scmp.eq.s32.totalorder %s19, 0
      %p191 = por %p189, %p190
      %p192 = scmp.ne.s32.totalorder %s184, %s186
      %p193 = scmp.eq.s32.totalorder %s24, 1
      %p194 = por %p192, %p193
      %p195 = scmp.ne.s32.totalorder %s186, %s187
      %p196 = scmp.eq.s32.totalorder %s24, 0
      %p197 = por %p195, %p196
      %p198 = scmp.ne.s32.totalorder %s186, %s187
      %p199 = scmp.eq.s32.totalorder %s25, 1
      %p200 = por %p198, %p199
      %p202 = scmp.ne.s32.totalorder %s187, %s201
      %p203 = scmp.eq.s32.totalorder %s25, 0
      %p204 = por %p202, %p203
      %s205 = ssub.s32 %s19, %s26
      %p206 = scmp.eq.s32.totalorder %s205, 0
      %s208 = sadd.s32 %s207, 1
      %s209 = scalar_select %p206, %s207, %s208
      %p212 = pneg %p206
      %p213 = scmp.eq.s32.totalorder %s19, 1
      %p214 = por %p212, %p213
      %p215 = scmp.ne.s32.totalorder %s207, %s210
      %p216 = scmp.eq.s32.totalorder %s19, 0
      %p217 = por %p215, %p216
      %p218 = scmp.ne.s32.totalorder %s207, %s210
      %p219 = scmp.eq.s32.totalorder %s24, 1
      %p220 = por %p218, %p219
      %p221 = scmp.ne.s32.totalorder %s210, %s211
      %p222 = scmp.eq.s32.totalorder %s24, 0
      %p223 = por %p221, %p222
      %p224 = scmp.ne.s32.totalorder %s210, %s211
      %p225 = scmp.eq.s32.totalorder %s25, 1
      %p226 = por %p224, %p225
      %p228 = scmp.ne.s32.totalorder %s211, %s227
      %p229 = scmp.eq.s32.totalorder %s25, 0
      %p230 = por %p228, %p229
      %s231 = ssub.s32 %s19, %s26
      %p232 = scmp.eq.s32.totalorder %s231, 0
      %s234 = sadd.s32 %s233, 1
      %s235 = scalar_select %p232, %s233, %s234
      %p238 = pneg %p232
      %p239 = scmp.eq.s32.totalorder %s19, 1
      %p240 = por %p238, %p239
      %p241 = scmp.ne.s32.totalorder %s233, %s236
      %p242 = scmp.eq.s32.totalorder %s19, 0
      %p243 = por %p241, %p242
      %p244 = scmp.ne.s32.totalorder %s233, %s236
      %p245 = scmp.eq.s32.totalorder %s24, 1
      %p246 = por %p244, %p245
      %p247 = scmp.ne.s32.totalorder %s236, %s237
      %p248 = scmp.eq.s32.totalorder %s24, 0
      %p249 = por %p247, %p248
      %p250 = scmp.ne.s32.totalorder %s236, %s237
      %p251 = scmp.eq.s32.totalorder %s25, 1
      %p252 = por %p250, %p251
      %p254 = scmp.ne.s32.totalorder %s237, %s253
      %p255 = scmp.eq.s32.totalorder %s25, 0
      %p256 = por %p254, %p255
      %p257 = scmp.le.s32.totalorder 1, %s19
      %p258 = scmp.lt.s32.totalorder %s19, 3
      %p259 = pnand %p257, %p258
      %p260 = pneg %p259
      // Predicated region
      $region9: #{backbone_with_fpn_forward.11} parent=5 // pred_check
        _
      $region10: #{backbone_with_fpn_forward.11} parent=5 // pred_check_branch
        %262 = sbr.rel (%p259) target = $region12
      $region11: #{backbone_with_fpn_forward.11} parent=5 // pred_region
        %s263 = ssub.s32 %s19, 1
        // Predicated region
        $region13: #{backbone_with_fpn_forward.11} parent=11 // pred_check
          %p264 = pneg %p92
        $region14: #{backbone_with_fpn_forward.11} parent=11 // pred_check_branch
          %266 = sbr.rel (%p264) target = $region16
        $region15: #{backbone_with_fpn_forward.11} parent=11 // pred_region
          _
        $region16: #{backbone_with_fpn_forward.11} parent=11 // pred_fallthru
          _
        // Predicated region
        $region17: #{backbone_with_fpn_forward.11} parent=11 // pred_check
          %p267 = pneg %p113
        $region18: #{backbone_with_fpn_forward.11} parent=11 // pred_check_branch
          %269 = sbr.rel (%p267) target = $region20
        $region19: #{backbone_with_fpn_forward.11} parent=11 // pred_region
          _
        $region20: #{backbone_with_fpn_forward.11} parent=11 // pred_fallthru
          _
        // Predicated region
        $region21: #{backbone_with_fpn_forward.11} parent=11 // pred_check
          %p270 = pneg %p134
        $region22: #{backbone_with_fpn_forward.11} parent=11 // pred_check_branch
          %272 = sbr.rel (%p270) target = $region24
        $region23: #{backbone_with_fpn_forward.11} parent=11 // pred_region
          _
        $region24: #{backbone_with_fpn_forward.11} parent=11 // pred_fallthru
          _
        // Predicated region
        $region25: #{backbone_with_fpn_forward.11} parent=11 // pred_check
          %p273 = pneg %p155
        $region26: #{backbone_with_fpn_forward.11} parent=11 // pred_check_branch
          %275 = sbr.rel (%p273) target = $region28
        $region27: #{backbone_with_fpn_forward.11} parent=11 // pred_region
          _
        $region28: #{backbone_with_fpn_forward.11} parent=11 // pred_fallthru
          _
        // Predicated region
        $region29: #{backbone_with_fpn_forward.11} parent=11 // pred_check
          %p276 = pneg %p176
        $region30: #{backbone_with_fpn_forward.11} parent=11 // pred_check_branch
          %278 = sbr.rel (%p276) target = $region32
        $region31: #{backbone_with_fpn_forward.11} parent=11 // pred_region
          _
        $region32: #{backbone_with_fpn_forward.11} parent=11 // pred_fallthru
          _
        // Predicated region
        $region33: #{backbone_with_fpn_forward.11} parent=11 // pred_check
          %p279 = pneg %p197
        $region34: #{backbone_with_fpn_forward.11} parent=11 // pred_check_branch
          %281 = sbr.rel (%p279) target = $region36
        $region35: #{backbone_with_fpn_forward.11} parent=11 // pred_region
          _
        $region36: #{backbone_with_fpn_forward.11} parent=11 // pred_fallthru
          _
      $region12: #{backbone_with_fpn_forward.11} parent=5 // pred_fallthru
        _
      %p282 = scmp.lt.s32.totalorder %s19, 2
      // Predicated region
      $region37: #{backbone_with_fpn_forward.11} parent=5 // pred_check
        %p283 = pneg %p282
      $region38: #{backbone_with_fpn_forward.11} parent=5 // pred_check_branch
        %285 = sbr.rel (%p283) target = $region40
      $region39: #{backbone_with_fpn_forward.11} parent=5 // pred_region
        // Predicated region
        $region41: #{backbone_with_fpn_forward.11} parent=39 // pred_check
          %p286 = pneg %p39
        $region42: #{backbone_with_fpn_forward.11} parent=39 // pred_check_branch
          %288 = sbr.rel (%p286) target = $region44
        $region43: #{backbone_with_fpn_forward.11} parent=39 // pred_region
          %p289 = scmp.lt.s32.totalorder %s19, 1
          %s290 = scalar_select %p289, %s19, 1
          %s291 = smul.addr %s290, 8
          %s292 = scalar_lea.vmem %s0, %s291
        $region44: #{backbone_with_fpn_forward.11} parent=39 // pred_fallthru
          _
        // Predicated region
        $region45: #{backbone_with_fpn_forward.11} parent=39 // pred_check
          %p293 = pneg %p65
        $region46: #{backbone_with_fpn_forward.11} parent=39 // pred_check_branch
          %295 = sbr.rel (%p293) target = $region48
        $region47: #{backbone_with_fpn_forward.11} parent=39 // pred_region
          %p296 = scmp.lt.s32.totalorder %s19, 1
          %s297 = scalar_select %p296, %s19, 1
          %s298 = smul.addr %s297, 4
          %s299 = scalar_lea.vmem %s1, %s298
        $region48: #{backbone_with_fpn_forward.11} parent=39 // pred_fallthru
          _
      $region40: #{backbone_with_fpn_forward.11} parent=5 // pred_fallthru
        _
      %p300 = scmp.le.s32.totalorder 1, %s19
      %p301 = scmp.lt.s32.totalorder %s19, 3
      %p302 = pnand %p300, %p301
      %p303 = pneg %p302
      // Predicated region
      $region49: #{backbone_with_fpn_forward.11} parent=5 // pred_check
        _
      $region50: #{backbone_with_fpn_forward.11} parent=5 // pred_check_branch
        %305 = sbr.rel (%p302) target = $region52
      $region51: #{backbone_with_fpn_forward.11} parent=5 // pred_region
        %s306 = ssub.s32 %s19, 1
        %p307 = scmp.lt.s32.totalorder %s24, 1
        %s308 = scalar_select %p307, %s24, 1
        %s309 = smul.addr %s308, 8
        %s310 = scalar_lea.vmem %s0, %s309
        %p311 = pneg %p45
        %p312 = pneg %p42
        %p313 = scmp.lt.s32.totalorder %s24, 1
        %s314 = scalar_select %p313, %s24, 1
        %s315 = smul.addr %s314, 4
        %s316 = scalar_lea.vmem %s1, %s315
        %p317 = pneg %p71
        %p318 = pneg %p68
        %p319 = pneg %p92
        %p320 = pneg %p89
        %p321 = pneg %p113
        %p322 = pneg %p110
        %p323 = pneg %p134
        %p324 = pneg %p131
        %p325 = pneg %p155
        %p326 = pneg %p152
        %p327 = pneg %p176
        %p328 = pneg %p173
        %p329 = pneg %p197
        %p330 = pneg %p194
        %p331 = pneg %p223
        %p332 = pneg %p220
        %p333 = scmp.lt.s32.totalorder %s24, 1
        %s334 = scalar_select %p333, %s24, 1
        %s335 = smul.addr %s334, 8
        %s336 = scalar_lea.vmem %s8, %s335
        %p337 = pneg %p249
        %p338 = pneg %p246
        %s339 = sand.u32 %s236, 1
        %s340 = scalar_lea.sflag [#allocation4], %s339
        %s341 = sand.u32 %s236, 1
        %s342 = smul.addr %s341, 8
        %s343 = scalar_lea.vmem [#allocation3], %s342
        %p344 = scmp.lt.s32.totalorder %s24, 1
        %s345 = scalar_select %p344, %s24, 1
        %s346 = smul.addr %s345, 8
        %s347 = scalar_lea.vmem %s0, %s346
        %p348 = scmp.lt.s32.totalorder %s24, 1
        %s349 = scalar_select %p348, %s24, 1
        %s350 = smul.addr %s349, 4
        %s351 = scalar_lea.vmem %s1, %s350
        %p352 = scmp.lt.s32.totalorder %s24, 1
        %s353 = scalar_select %p352, %s24, 1
        %s354 = smul.addr %s353, 8
        %s355 = scalar_lea.vmem %s8, %s354
        %v357 = vld [vmem:[%s347] sm:$0xff]
        %v358 = vpack.c.bf16 %v357, %v357
        %v359 = vld [vmem:[%s4] sm:$0xf]
        %v360 = vld [vmem:[%s4 + $0x4] sm:$0xf]
        %v361 = vld [vmem:[%s4 + $0x8] sm:$0xf]
        %v362 = vld [vmem:[%s4 + $0xc] sm:$0xf]
        %v363 = vld [vmem:[%s4 + $0x10] sm:$0xf]
        %v364 = vld [vmem:[%s4 + $0x14] sm:$0xf]
        %v365 = vld [vmem:[%s4 + $0x18] sm:$0xf]
        %v366 = vld [vmem:[%s4 + $0x1c] sm:$0xf]
        %v367 = vld [vmem:[%s5] sm:$0x1]
        %v369 = vlaneseq
        %v370 = vshrl.u32 %v369, 7
        %v371 = vsub.s32 0, %v370
        %v372 = vrot.slane %v367, %v371
        %v382 = vunpack.c.l.b16 %v359
        %v383 = vunpack.c.l.b16 %v360
        %v384 = vunpack.c.l.b16 %v361
        %v385 = vunpack.c.l.b16 %v362
        %v386 = vunpack.c.l.b16 %v363
        %v387 = vunpack.c.l.b16 %v364
        %v388 = vunpack.c.l.b16 %v365
        %v389 = vunpack.c.l.b16 %v366
        %v390 = vpack.c.b16 %v383, %v382
        %v391 = vpack.c.b16 %v385, %v384
        %v392 = vpack.c.b16 %v387, %v386
        %v393 = vpack.c.b16 %v389, %v388
        %vm398 = vcmask 523264
        %v400 = vsel %vm398, %v358, 0
        %402 = vmatprep.subr.bf16.mxu0 0
        %403 = vmatpush1.bf16.msra.mxu0 %v390
        %404 = vmatprep.subr.bf16.mxu0 0
        %405 = vmatpush1.bf16.msra.mxu0 %v391
        %406 = vmatprep.subr.bf16.mxu0 0
        %407 = vmatpush1.bf16.msra.mxu0 %v392
        %408 = vmatprep.subr.bf16.mxu0 0
        %409 = vmatpush1.bf16.msra.mxu0 %v393
        %410 = vmatprep.subr.bf16.mxu0 0
        %411 = vmatpush1.bf16.msra.mxu0 0
        %412 = vmatprep.subr.bf16.mxu0 0
        %413 = vmatpush1.bf16.msra.mxu0 0
        %414 = vmatprep.subr.bf16.mxu0 0
        %415 = vmatpush1.bf16.msra.mxu0 0
        %416 = vmatprep.subr.bf16.mxu0 0
        %417 = vmatpush1.bf16.msra.mxu0 0
        %418 = vmatprep.subr.bf16.mxu0 0
        %419 = vmatpush1.bf16.msra.mxu0 0
        %420 = vmatprep.subr.bf16.mxu0 0
        %421 = vmatpush1.bf16.msra.mxu0 0
        %422 = vmatprep.subr.bf16.mxu0 0
        %423 = vmatpush1.bf16.msra.mxu0 0
        %424 = vmatprep.subr.bf16.mxu0 0
        %425 = vmatpush1.bf16.msra.mxu0 0
        %426 = vmatprep.subr.bf16.mxu0 0
        %427 = vmatpush1.bf16.msra.mxu0 0
        %428 = vmatprep.subr.bf16.mxu0 0
        %429 = vmatpush1.bf16.msra.mxu0 0
        %430 = vmatprep.subr.bf16.mxu0 0
        %431 = vmatpush1.bf16.msra.mxu0 0
        %432 = vmatprep.subr.bf16.mxu0 0
        %433 = vmatpush1.bf16.msra.mxu0 0
        %434 = vmatprep.mubr.bf16.mxu0 0
        %435 = vmatmul.mubr.bf16.gmra.mrb[0].mxu0 %v400
        %v436 = vpop.f32.mrb[0].mxu0
        %v437 = vadd.f32 %v372, %v436
        %v438 = vpop.f32.mrb[0].mxu0
        %v439 = vpop.f32.mrb[0].mxu0
        %v440 = vpop.f32.mrb[0].mxu0
        %441 = vdwg.mxu0
        %v442 = vld [vmem:[%s351] sm:$0xf]
        %v443 = vpack.c.bf16 %v442, %v442
        %v444 = vld [vmem:[%s2] sm:$0xf]
        %vm445 = vcmask 31744
        %v447 = vsel %vm445, %v444, 0
        %vm449 = vcmask 1041408
        %v451 = vsel %vm449, %v443, 0
        %453 = vmatprep.subr.bf16.mxu0 0
        %454 = vmatpush1.bf16.msra.mxu0 %v451
        %455 = vmatprep.subr.bf16.mxu0 0
        %456 = vmatpush1.bf16.msra.mxu0 0
        %457 = vmatprep.subr.bf16.mxu0 0
        %458 = vmatpush1.bf16.msra.mxu0 0
        %459 = vmatprep.subr.bf16.mxu0 0
        %460 = vmatpush1.bf16.msra.mxu0 0
        %461 = vmatprep.subr.bf16.mxu0 0
        %462 = vmatpush1.bf16.msra.mxu0 0
        %463 = vmatprep.subr.bf16.mxu0 0
        %464 = vmatpush1.bf16.msra.mxu0 0
        %465 = vmatprep.subr.bf16.mxu0 0
        %466 = vmatpush1.bf16.msra.mxu0 0
        %467 = vmatprep.subr.bf16.mxu0 0
        %468 = vmatpush1.bf16.msra.mxu0 0
        %469 = vmatprep.subr.bf16.mxu0 0
        %470 = vmatpush1.bf16.msra.mxu0 0
        %471 = vmatprep.subr.bf16.mxu0 0
        %472 = vmatpush1.bf16.msra.mxu0 0
        %473 = vmatprep.subr.bf16.mxu0 0
        %474 = vmatpush1.bf16.msra.mxu0 0
        %475 = vmatprep.subr.bf16.mxu0 0
        %476 = vmatpush1.bf16.msra.mxu0 0
        %477 = vmatprep.subr.bf16.mxu0 0
        %478 = vmatpush1.bf16.msra.mxu0 0
        %479 = vmatprep.subr.bf16.mxu0 0
        %480 = vmatpush1.bf16.msra.mxu0 0
        %481 = vmatprep.subr.bf16.mxu0 0
        %482 = vmatpush1.bf16.msra.mxu0 0
        %483 = vmatprep.subr.bf16.mxu0 0
        %484 = vmatpush1.bf16.msra.mxu0 0
        %485 = vmatprep.mubr.bf16.mxu0 0
        %486 = vmatmul.mubr.bf16.gmra.mrb[0].mxu0 %v447
        %v487 = vpop.f32.mrb[0].mxu0
        %v488 = vadd.f32 0.0, %v487
        %v489 = vpop.f32.mrb[0].mxu0
        %v490 = vpop.f32.mrb[0].mxu0
        %v491 = vpop.f32.mrb[0].mxu0
        %492 = vdwg.mxu0
        %v493 = vpack.c.bf16 %v488, %v488
        %v494 = vld [vmem:[%s3] sm:$0xf]
        %v495 = vld [vmem:[%s3 + $0x4] sm:$0xf]
        %v496 = vld [vmem:[%s3 + $0x8] sm:$0xf]
        %v497 = vld [vmem:[%s3 + $0xc] sm:$0xf]
        %v498 = vld [vmem:[%s3 + $0x10] sm:$0xf]
        %v499 = vld [vmem:[%s3 + $0x14] sm:$0xf]
        %v500 = vld [vmem:[%s3 + $0x18] sm:$0xf]
        %v501 = vld [vmem:[%s3 + $0x1c] sm:$0xf]
        %v510 = vunpack.c.l.b16 %v494
        %v511 = vunpack.c.l.b16 %v495
        %v512 = vunpack.c.l.b16 %v496
        %v513 = vunpack.c.l.b16 %v497
        %v514 = vunpack.c.l.b16 %v498
        %v515 = vunpack.c.l.b16 %v499
        %v516 = vunpack.c.l.b16 %v500
        %v517 = vunpack.c.l.b16 %v501
        %v518 = vpack.c.b16 %v511, %v510
        %v519 = vpack.c.b16 %v513, %v512
        %v520 = vpack.c.b16 %v515, %v514
        %v521 = vpack.c.b16 %v517, %v516
        %v527 = vsel %vm398, %v493, 0
        %529 = vmatprep.subr.bf16.mxu0 0
        %530 = vmatpush1.bf16.msra.mxu0 %v518
        %531 = vmatprep.subr.bf16.mxu0 0
        %532 = vmatpush1.bf16.msra.mxu0 %v519
        %533 = vmatprep.subr.bf16.mxu0 0
        %534 = vmatpush1.bf16.msra.mxu0 %v520
        %535 = vmatprep.subr.bf16.mxu0 0
        %536 = vmatpush1.bf16.msra.mxu0 %v521
        %537 = vmatprep.subr.bf16.mxu0 0
        %538 = vmatpush1.bf16.msra.mxu0 0
        %539 = vmatprep.subr.bf16.mxu0 0
        %540 = vmatpush1.bf16.msra.mxu0 0
        %541 = vmatprep.subr.bf16.mxu0 0
        %542 = vmatpush1.bf16.msra.mxu0 0
        %543 = vmatprep.subr.bf16.mxu0 0
        %544 = vmatpush1.bf16.msra.mxu0 0
        %545 = vmatprep.subr.bf16.mxu0 0
        %546 = vmatpush1.bf16.msra.mxu0 0
        %547 = vmatprep.subr.bf16.mxu0 0
        %548 = vmatpush1.bf16.msra.mxu0 0
        %549 = vmatprep.subr.bf16.mxu0 0
        %550 = vmatpush1.bf16.msra.mxu0 0
        %551 = vmatprep.subr.bf16.mxu0 0
        %552 = vmatpush1.bf16.msra.mxu0 0
        %553 = vmatprep.subr.bf16.mxu0 0
        %554 = vmatpush1.bf16.msra.mxu0 0
        %555 = vmatprep.subr.bf16.mxu0 0
        %556 = vmatpush1.bf16.msra.mxu0 0
        %557 = vmatprep.subr.bf16.mxu0 0
        %558 = vmatpush1.bf16.msra.mxu0 0
        %559 = vmatprep.subr.bf16.mxu0 0
        %560 = vmatpush1.bf16.msra.mxu0 0
        %561 = vmatprep.mubr.bf16.mxu0 0
        %562 = vmatmul.mubr.bf16.gmra.mrb[0].mxu0 %v527
        %v563 = vpop.f32.mrb[0].mxu0
        %v564 = vadd.f32 0.0, %v563
        %v565 = vpop.f32.mrb[0].mxu0
        %v566 = vpop.f32.mrb[0].mxu0
        %v567 = vpop.f32.mrb[0].mxu0
        %568 = vdwg.mxu0
        %v569 = vadd.f32 %v437, %v564
        %570 = vst [vmem:[%s343] sm:$0xff] %v569
        %vm571 = vcmask 1043456
        %vm572 = vcmask 261124
        %vm573 = vmor %vm572, %vm571
        %574 = vst.msk [vmem:[#allocation2] sm:$0xff] %vm573, 0
        %vm575 = vcmask 1040384
        %vm576 = vcmask 258052
        %vm577 = vmor %vm576, %vm575
        %578 = vst.msk [vmem:[#allocation2 + $0x8] sm:$0x11] %vm577, 0
        %v579 = vpack.c.bf16 %v569, %v569
        %v581 = vunpack.c.l.b16 %v579
        %v582 = vpack.c.b16 %v581, %v581
        %v584 = vshrl.u32 %v582, 16
        %v586 = vrot.slane %v584, 7
        %v587 = vshll.u32 %v582, 16
        %v589 = vor.u32 %v586, %v587
        %v590 = vrot.slane %v586, 4
        %591 = vrot.lane.b32.xlu0 %v589, 16
        %v592 = vpop.permute.xlu0 %591
        %593 = vrot.lane.b32.xlu0 %v590, 16
        %v594 = vpop.permute.xlu0 %593
        %v595 = vrot.slane %v592, 4
        %v596 = vrot.slane %v594, 4
        %vm597 = vcmask 130048
        %v598 = vsel %vm597, %v595, %v592
        %v599 = vsel %vm597, %v596, %v594
        %vm602 = vcmask 1043584
        %vm603 = vsmask.f32 7938
        %vm604 = vmand %vm602, %vm603
        %vm605 = vcmask 130052
        %vm606 = vsmask.f32 7954
        %vm607 = vmand %vm605, %vm606
        %vm608 = vmor %vm607, %vm604
        %v609 = vld [vmem:[#allocation2] sm:$0xff]
        %v610 = vsel %vm608, %v598, %v609
        %611 = vst [vmem:[#allocation2] sm:$0xff] %v610
        %vm612 = vcmask 1040512
        %vm613 = vsmask.f32 256
        %vm614 = vmand %vm612, %vm613
        %vm615 = vcmask 126980
        %vm616 = vsmask.f32 4352
        %vm617 = vmand %vm615, %vm616
        %vm618 = vmor %vm617, %vm614
        %v619 = vld [vmem:[#allocation2 + $0x8] sm:$0x11]
        %v620 = vsel %vm618, %v599, %v619
        %621 = vst [vmem:[#allocation2 + $0x8] sm:$0x11] %v620
        %v622 = vld [vmem:[#allocation2] sm:$0xff]
        %v623 = vld [vmem:[#allocation2 + $0x8] sm:$0x11]
        %v624 = vld [vmem:[%s6] sm:$0xf]
        %v625 = vld [vmem:[%s6 + $0x4] sm:$0xf]
        %v626 = vld [vmem:[%s6 + $0x8] sm:$0xf]
        %v627 = vld [vmem:[%s6 + $0xc] sm:$0xf]
        %v628 = vld [vmem:[%s6 + $0x10] sm:$0xf]
        %v629 = vld [vmem:[%s6 + $0x14] sm:$0xf]
        %v630 = vld [vmem:[%s6 + $0x18] sm:$0xf]
        %v631 = vld [vmem:[%s6 + $0x1c] sm:$0xf]
        %v632 = vld [vmem:[%s6 + $0x20] sm:$0xf]
        %v633 = vld [vmem:[%s6 + $0x24] sm:$0xf]
        %v634 = vld [vmem:[%s6 + $0x28] sm:$0xf]
        %v635 = vld [vmem:[%s6 + $0x2c] sm:$0xf]
        %v636 = vld [vmem:[%s6 + $0x30] sm:$0xf]
        %v637 = vld [vmem:[%s6 + $0x34] sm:$0xf]
        %v638 = vld [vmem:[%s6 + $0x38] sm:$0xf]
        %v639 = vld [vmem:[%s6 + $0x3c] sm:$0xf]
        %s640 = scalar_lea.vmem %s6, 64
        %v641 = vld [vmem:[%s640] sm:$0xf]
        %v642 = vld [vmem:[%s640 + $0x4] sm:$0xf]
        %v643 = vld [vmem:[%s640 + $0x8] sm:$0xf]
        %v644 = vld [vmem:[%s640 + $0xc] sm:$0xf]
        %v645 = vld [vmem:[%s640 + $0x10] sm:$0xf]
        %v646 = vld [vmem:[%s640 + $0x14] sm:$0xf]
        %v647 = vld [vmem:[%s640 + $0x18] sm:$0xf]
        %v648 = vld [vmem:[%s640 + $0x1c] sm:$0xf]
        %v649 = vld [vmem:[%s640 + $0x20] sm:$0xf]
        %v650 = vld [vmem:[%s640 + $0x24] sm:$0xf]
        %v651 = vld [vmem:[%s640 + $0x28] sm:$0xf]
        %v652 = vld [vmem:[%s640 + $0x2c] sm:$0xf]
        %v653 = vld [vmem:[%s640 + $0x30] sm:$0xf]
        %v654 = vld [vmem:[%s640 + $0x34] sm:$0xf]
        %v655 = vld [vmem:[%s640 + $0x38] sm:$0xf]
        %v656 = vld [vmem:[%s640 + $0x3c] sm:$0xf]
        %v658 = vunpack.c.l.b16 %v622
        %v659 = vunpack.c.h.b16 %v622
        %v660 = vpack.c.b16 %v658, %v658
        %v661 = vpack.c.b16 %v659, %v659
        %662 = vrot.lane.b32.xlu0 %v660, 112
        %v663 = vpop.permute.xlu0 %662
        %664 = vrot.lane.b32.xlu0 %v661, 112
        %v665 = vpop.permute.xlu0 %664
        %vm666 = vcmask 916480
        %v667 = vsel %vm666, %v663, %v665
        %v685 = vunpack.c.l.b16 %v641
        %v686 = vunpack.c.l.b16 %v642
        %v687 = vunpack.c.l.b16 %v643
        %v688 = vunpack.c.l.b16 %v644
        %v689 = vunpack.c.l.b16 %v645
        %v690 = vunpack.c.l.b16 %v646
        %v691 = vunpack.c.l.b16 %v647
        %v692 = vunpack.c.l.b16 %v648
        %v693 = vunpack.c.l.b16 %v649
        %v694 = vunpack.c.l.b16 %v650
        %v695 = vunpack.c.l.b16 %v651
        %v696 = vunpack.c.l.b16 %v652
        %v697 = vunpack.c.l.b16 %v653
        %v698 = vunpack.c.l.b16 %v654
        %v699 = vunpack.c.l.b16 %v655
        %v700 = vunpack.c.l.b16 %v656
        %v701 = vpack.c.b16 %v686, %v685
        %v702 = vpack.c.b16 %v688, %v687
        %v703 = vpack.c.b16 %v690, %v689
        %v704 = vpack.c.b16 %v692, %v691
        %v705 = vpack.c.b16 %v694, %v693
        %v706 = vpack.c.b16 %v696, %v695
        %v707 = vpack.c.b16 %v698, %v697
        %v708 = vpack.c.b16 %v700, %v699
        %717 = vmatprep.subr.bf16.mxu0 0
        %718 = vmatpush1.bf16.msra.mxu0 %v701
        %719 = vmatprep.subr.bf16.mxu0 0
        %720 = vmatpush1.bf16.msra.mxu0 %v702
        %721 = vmatprep.subr.bf16.mxu0 0
        %722 = vmatpush1.bf16.msra.mxu0 %v703
        %723 = vmatprep.subr.bf16.mxu0 0
        %724 = vmatpush1.bf16.msra.mxu0 %v704
        %725 = vmatprep.subr.bf16.mxu0 0
        %726 = vmatpush1.bf16.msra.mxu0 %v705
        %727 = vmatprep.subr.bf16.mxu0 0
        %728 = vmatpush1.bf16.msra.mxu0 %v706
        %729 = vmatprep.subr.bf16.mxu0 0
        %730 = vmatpush1.bf16.msra.mxu0 %v707
        %731 = vmatprep.subr.bf16.mxu0 0
        %732 = vmatpush1.bf16.msra.mxu0 %v708
        %733 = vmatprep.subr.bf16.mxu0 0
        %734 = vmatpush1.bf16.msra.mxu0 0
        %735 = vmatprep.subr.bf16.mxu0 0
        %736 = vmatpush1.bf16.msra.mxu0 0
        %737 = vmatprep.subr.bf16.mxu0 0
        %738 = vmatpush1.bf16.msra.mxu0 0
        %739 = vmatprep.subr.bf16.mxu0 0
        %740 = vmatpush1.bf16.msra.mxu0 0
        %741 = vmatprep.subr.bf16.mxu0 0
        %742 = vmatpush1.bf16.msra.mxu0 0
        %743 = vmatprep.subr.bf16.mxu0 0
        %744 = vmatpush1.bf16.msra.mxu0 0
        %745 = vmatprep.subr.bf16.mxu0 0
        %746 = vmatpush1.bf16.msra.mxu0 0
        %747 = vmatprep.subr.bf16.mxu0 0
        %748 = vmatpush1.bf16.msra.mxu0 0
        %749 = vmatprep.mubr.bf16.mxu0 0
        %750 = vmatmul.mubr.bf16.gmra.mrb[0].mxu0 %v667
        %v751 = vpop.f32.mrb[0].mxu0
        %v752 = vadd.f32 0.0, %v751
        %v753 = vpop.f32.mrb[0].mxu0
        %v754 = vpop.f32.mrb[0].mxu0
        %v755 = vpop.f32.mrb[0].mxu0
        %756 = vdwg.mxu0
        %v773 = vunpack.c.l.b16 %v624
        %v774 = vunpack.c.l.b16 %v625
        %v775 = vunpack.c.l.b16 %v626
        %v776 = vunpack.c.l.b16 %v627
        %v777 = vunpack.c.l.b16 %v628
        %v778 = vunpack.c.l.b16 %v629
        %v779 = vunpack.c.l.b16 %v630
        %v780 = vunpack.c.l.b16 %v631
        %v781 = vunpack.c.l.b16 %v632
        %v782 = vunpack.c.l.b16 %v633
        %v783 = vunpack.c.l.b16 %v634
        %v784 = vunpack.c.l.b16 %v635
        %v785 = vunpack.c.l.b16 %v636
        %v786 = vunpack.c.l.b16 %v637
        %v787 = vunpack.c.l.b16 %v638
        %v788 = vunpack.c.l.b16 %v639
        %v789 = vpack.c.b16 %v774, %v773
        %v790 = vpack.c.b16 %v776, %v775
        %v791 = vpack.c.b16 %v778, %v777
        %v792 = vpack.c.b16 %v780, %v779
        %v793 = vpack.c.b16 %v782, %v781
        %v794 = vpack.c.b16 %v784, %v783
        %v795 = vpack.c.b16 %v786, %v785
        %v796 = vpack.c.b16 %v788, %v787
        %805 = vmatprep.subr.bf16.mxu0 0
        %806 = vmatpush1.bf16.msra.mxu0 %v789
        %807 = vmatprep.subr.bf16.mxu0 0
        %808 = vmatpush1.bf16.msra.mxu0 %v790
        %809 = vmatprep.subr.bf16.mxu0 0
        %810 = vmatpush1.bf16.msra.mxu0 %v791
        %811 = vmatprep.subr.bf16.mxu0 0
        %812 = vmatpush1.bf16.msra.mxu0 %v792
        %813 = vmatprep.subr.bf16.mxu0 0
        %814 = vmatpush1.bf16.msra.mxu0 %v793
        %815 = vmatprep.subr.bf16.mxu0 0
        %816 = vmatpush1.bf16.msra.mxu0 %v794
        %817 = vmatprep.subr.bf16.mxu0 0
        %818 = vmatpush1.bf16.msra.mxu0 %v795
        %819 = vmatprep.subr.bf16.mxu0 0
        %820 = vmatpush1.bf16.msra.mxu0 %v796
        %821 = vmatprep.subr.bf16.mxu0 0
        %822 = vmatpush1.bf16.msra.mxu0 0
        %823 = vmatprep.subr.bf16.mxu0 0
        %824 = vmatpush1.bf16.msra.mxu0 0
        %825 = vmatprep.subr.bf16.mxu0 0
        %826 = vmatpush1.bf16.msra.mxu0 0
        %827 = vmatprep.subr.bf16.mxu0 0
        %828 = vmatpush1.bf16.msra.mxu0 0
        %829 = vmatprep.subr.bf16.mxu0 0
        %830 = vmatpush1.bf16.msra.mxu0 0
        %831 = vmatprep.subr.bf16.mxu0 0
        %832 = vmatpush1.bf16.msra.mxu0 0
        %833 = vmatprep.subr.bf16.mxu0 0
        %834 = vmatpush1.bf16.msra.mxu0 0
        %835 = vmatprep.subr.bf16.mxu0 0
        %836 = vmatpush1.bf16.msra.mxu0 0
        %837 = vmatprep.mubr.bf16.mxu0 0
        %838 = vmatmul.mubr.bf16.gmra.mrb[0].mxu0 %v622
        %v839 = vpop.f32.mrb[0].mxu0
        %v840 = vadd.f32 %v752, %v839
        %v841 = vpop.f32.mrb[0].mxu0
        %v842 = vpop.f32.mrb[0].mxu0
        %v843 = vpop.f32.mrb[0].mxu0
        %844 = vdwg.mxu0
        %s845 = scalar_lea.vmem %s6, 128
        %v846 = vld [vmem:[%s845] sm:$0xf]
        %v847 = vld [vmem:[%s845 + $0x4] sm:$0xf]
        %v848 = vld [vmem:[%s845 + $0x8] sm:$0xf]
        %v849 = vld [vmem:[%s845 + $0xc] sm:$0xf]
        %v850 = vld [vmem:[%s845 + $0x10] sm:$0xf]
        %v851 = vld [vmem:[%s845 + $0x14] sm:$0xf]
        %v852 = vld [vmem:[%s845 + $0x18] sm:$0xf]
        %v853 = vld [vmem:[%s845 + $0x1c] sm:$0xf]
        %v854 = vld [vmem:[%s845 + $0x20] sm:$0xf]
        %v855 = vld [vmem:[%s845 + $0x24] sm:$0xf]
        %v856 = vld [vmem:[%s845 + $0x28] sm:$0xf]
        %v857 = vld [vmem:[%s845 + $0x2c] sm:$0xf]
        %v858 = vld [vmem:[%s845 + $0x30] sm:$0xf]
        %v859 = vld [vmem:[%s845 + $0x34] sm:$0xf]
        %v860 = vld [vmem:[%s845 + $0x38] sm:$0xf]
        %v861 = vld [vmem:[%s845 + $0x3c] sm:$0xf]
        %862 = vrot.lane.b32.xlu0 %v660, 96
        %v863 = vpop.permute.xlu0 %862
        %864 = vrot.lane.b32.xlu0 %v661, 96
        %v865 = vpop.permute.xlu0 %864
        %vm866 = vcmask 785408
        %v867 = vsel %vm866, %v863, %v865
        %v885 = vunpack.c.l.b16 %v846
        %v886 = vunpack.c.l.b16 %v847
        %v887 = vunpack.c.l.b16 %v848
        %v888 = vunpack.c.l.b16 %v849
        %v889 = vunpack.c.l.b16 %v850
        %v890 = vunpack.c.l.b16 %v851
        %v891 = vunpack.c.l.b16 %v852
        %v892 = vunpack.c.l.b16 %v853
        %v893 = vunpack.c.l.b16 %v854
        %v894 = vunpack.c.l.b16 %v855
        %v895 = vunpack.c.l.b16 %v856
        %v896 = vunpack.c.l.b16 %v857
        %v897 = vunpack.c.l.b16 %v858
        %v898 = vunpack.c.l.b16 %v859
        %v899 = vunpack.c.l.b16 %v860
        %v900 = vunpack.c.l.b16 %v861
        %v901 = vpack.c.b16 %v886, %v885
        %v902 = vpack.c.b16 %v888, %v887
        %v903 = vpack.c.b16 %v890, %v889
        %v904 = vpack.c.b16 %v892, %v891
        %v905 = vpack.c.b16 %v894, %v893
        %v906 = vpack.c.b16 %v896, %v895
        %v907 = vpack.c.b16 %v898, %v897
        %v908 = vpack.c.b16 %v900, %v899
        %917 = vmatprep.subr.bf16.mxu0 0
        %918 = vmatpush1.bf16.msra.mxu0 %v901
        %919 = vmatprep.subr.bf16.mxu0 0
        %920 = vmatpush1.bf16.msra.mxu0 %v902
        %921 = vmatprep.subr.bf16.mxu0 0
        %922 = vmatpush1.bf16.msra.mxu0 %v903
        %923 = vmatprep.subr.bf16.mxu0 0
        %924 = vmatpush1.bf16.msra.mxu0 %v904
        %925 = vmatprep.subr.bf16.mxu0 0
        %926 = vmatpush1.bf16.msra.mxu0 %v905
        %927 = vmatprep.subr.bf16.mxu0 0
        %928 = vmatpush1.bf16.msra.mxu0 %v906
        %929 = vmatprep.subr.bf16.mxu0 0
        %930 = vmatpush1.bf16.msra.mxu0 %v907
        %931 = vmatprep.subr.bf16.mxu0 0
        %932 = vmatpush1.bf16.msra.mxu0 %v908
        %933 = vmatprep.subr.bf16.mxu0 0
        %934 = vmatpush1.bf16.msra.mxu0 0
        %935 = vmatprep.subr.bf16.mxu0 0
        %936 = vmatpush1.bf16.msra.mxu0 0
        %937 = vmatprep.subr.bf16.mxu0 0
        %938 = vmatpush1.bf16.msra.mxu0 0
        %939 = vmatprep.subr.bf16.mxu0 0
        %940 = vmatpush1.bf16.msra.mxu0 0
        %941 = vmatprep.subr.bf16.mxu0 0
        %942 = vmatpush1.bf16.msra.mxu0 0
        %943 = vmatprep.subr.bf16.mxu0 0
        %944 = vmatpush1.bf16.msra.mxu0 0
        %945 = vmatprep.subr.bf16.mxu0 0
        %946 = vmatpush1.bf16.msra.mxu0 0
        %947 = vmatprep.subr.bf16.mxu0 0
        %948 = vmatpush1.bf16.msra.mxu0 0
        %949 = vmatprep.mubr.bf16.mxu0 0
        %950 = vmatmul.mubr.bf16.gmra.mrb[0].mxu0 %v867
        %v951 = vpop.f32.mrb[0].mxu0
        %v952 = vadd.f32 0.0, %v951
        %v953 = vpop.f32.mrb[0].mxu0
        %v954 = vpop.f32.mrb[0].mxu0
        %v955 = vpop.f32.mrb[0].mxu0
        %956 = vdwg.mxu0
        %v957 = vadd.f32 %v840, %v952
        %s958 = scalar_lea.vmem %s6, 192
        %v959 = vld [vmem:[%s958] sm:$0xf]
        %v960 = vld [vmem:[%s958 + $0x4] sm:$0xf]
        %v961 = vld [vmem:[%s958 + $0x8] sm:$0xf]
        %v962 = vld [vmem:[%s958 + $0xc] sm:$0xf]
        %v963 = vld [vmem:[%s958 + $0x10] sm:$0xf]
        %v964 = vld [vmem:[%s958 + $0x14] sm:$0xf]
        %v965 = vld [vmem:[%s958 + $0x18] sm:$0xf]
        %v966 = vld [vmem:[%s958 + $0x1c] sm:$0xf]
        %v967 = vld [vmem:[%s958 + $0x20] sm:$0xf]
        %v968 = vld [vmem:[%s958 + $0x24] sm:$0xf]
        %v969 = vld [vmem:[%s958 + $0x28] sm:$0xf]
        %v970 = vld [vmem:[%s958 + $0x2c] sm:$0xf]
        %v971 = vld [vmem:[%s958 + $0x30] sm:$0xf]
        %v972 = vld [vmem:[%s958 + $0x34] sm:$0xf]
        %v973 = vld [vmem:[%s958 + $0x38] sm:$0xf]
        %v974 = vld [vmem:[%s958 + $0x3c] sm:$0xf]
        %v976 = vunpack.c.l.b16 %v623
        %v977 = vpack.c.b16 %v976, %v658
        %v979 = vshrl.u32 %v977, 16
        %v981 = vshll.u32 %v977, 16
        %v983 = vrot.slane %v981, 1
        %v984 = vor.u32 %v979, %v983
        %v1002 = vunpack.c.l.b16 %v959
        %v1003 = vunpack.c.l.b16 %v960
        %v1004 = vunpack.c.l.b16 %v961
        %v1005 = vunpack.c.l.b16 %v962
        %v1006 = vunpack.c.l.b16 %v963
        %v1007 = vunpack.c.l.b16 %v964
        %v1008 = vunpack.c.l.b16 %v965
        %v1009 = vunpack.c.l.b16 %v966
        %v1010 = vunpack.c.l.b16 %v967
        %v1011 = vunpack.c.l.b16 %v968
        %v1012 = vunpack.c.l.b16 %v969
        %v1013 = vunpack.c.l.b16 %v970
        %v1014 = vunpack.c.l.b16 %v971
        %v1015 = vunpack.c.l.b16 %v972
        %v1016 = vunpack.c.l.b16 %v973
        %v1017 = vunpack.c.l.b16 %v974
        %v1018 = vpack.c.b16 %v1003, %v1002
        %v1019 = vpack.c.b16 %v1005, %v1004
        %v1020 = vpack.c.b16 %v1007, %v1006
        %v1021 = vpack.c.b16 %v1009, %v1008
        %v1022 = vpack.c.b16 %v1011, %v1010
        %v1023 = vpack.c.b16 %v1013, %v1012
        %v1024 = vpack.c.b16 %v1015, %v1014
        %v1025 = vpack.c.b16 %v1017, %v1016
        %1034 = vmatprep.subr.bf16.mxu0 0
        %1035 = vmatpush1.bf16.msra.mxu0 %v1018
        %1036 = vmatprep.subr.bf16.mxu0 0
        %1037 = vmatpush1.bf16.msra.mxu0 %v1019
        %1038 = vmatprep.subr.bf16.mxu0 0
        %1039 = vmatpush1.bf16.msra.mxu0 %v1020
        %1040 = vmatprep.subr.bf16.mxu0 0
        %1041 = vmatpush1.bf16.msra.mxu0 %v1021
        %1042 = vmatprep.subr.bf16.mxu0 0
        %1043 = vmatpush1.bf16.msra.mxu0 %v1022
        %1044 = vmatprep.subr.bf16.mxu0 0
        %1045 = vmatpush1.bf16.msra.mxu0 %v1023
        %1046 = vmatprep.subr.bf16.mxu0 0
        %1047 = vmatpush1.bf16.msra.mxu0 %v1024
        %1048 = vmatprep.subr.bf16.mxu0 0
        %1049 = vmatpush1.bf16.msra.mxu0 %v1025
        %1050 = vmatprep.subr.bf16.mxu0 0
        %1051 = vmatpush1.bf16.msra.mxu0 0
        %1052 = vmatprep.subr.bf16.mxu0 0
        %1053 = vmatpush1.bf16.msra.mxu0 0
        %1054 = vmatprep.subr.bf16.mxu0 0
        %1055 = vmatpush1.bf16.msra.mxu0 0
        %1056 = vmatprep.subr.bf16.mxu0 0
        %1057 = vmatpush1.bf16.msra.mxu0 0
        %1058 = vmatprep.subr.bf16.mxu0 0
        %1059 = vmatpush1.bf16.msra.mxu0 0
        %1060 = vmatprep.subr.bf16.mxu0 0
        %1061 = vmatpush1.bf16.msra.mxu0 0
        %1062 = vmatprep.subr.bf16.mxu0 0
        %1063 = vmatpush1.bf16.msra.mxu0 0
        %1064 = vmatprep.subr.bf16.mxu0 0
        %1065 = vmatpush1.bf16.msra.mxu0 0
        %1066 = vmatprep.mubr.bf16.mxu0 0
        %1067 = vmatmul.mubr.bf16.gmra.mrb[0].mxu0 %v984
        %v1068 = vpop.f32.mrb[0].mxu0
        %v1069 = vadd.f32 0.0, %v1068
        %v1070 = vpop.f32.mrb[0].mxu0
        %v1071 = vpop.f32.mrb[0].mxu0
        %v1072 = vpop.f32.mrb[0].mxu0
        %1073 = vdwg.mxu0
        %v1074 = vadd.f32 %v957, %v1069
        %s1075 = scalar_lea.vmem %s6, 256
        %v1076 = vld [vmem:[%s1075] sm:$0xf]
        %v1077 = vld [vmem:[%s1075 + $0x4] sm:$0xf]
        %v1078 = vld [vmem:[%s1075 + $0x8] sm:$0xf]
        %v1079 = vld [vmem:[%s1075 + $0xc] sm:$0xf]
        %v1080 = vld [vmem:[%s1075 + $0x10] sm:$0xf]
        %v1081 = vld [vmem:[%s1075 + $0x14] sm:$0xf]
        %v1082 = vld [vmem:[%s1075 + $0x18] sm:$0xf]
        %v1083 = vld [vmem:[%s1075 + $0x1c] sm:$0xf]
        %v1084 = vld [vmem:[%s1075 + $0x20] sm:$0xf]
        %v1085 = vld [vmem:[%s1075 + $0x24] sm:$0xf]
        %v1086 = vld [vmem:[%s1075 + $0x28] sm:$0xf]
        %v1087 = vld [vmem:[%s1075 + $0x2c] sm:$0xf]
        %v1088 = vld [vmem:[%s1075 + $0x30] sm:$0xf]
        %v1089 = vld [vmem:[%s1075 + $0x34] sm:$0xf]
        %v1090 = vld [vmem:[%s1075 + $0x38] sm:$0xf]
        %v1091 = vld [vmem:[%s1075 + $0x3c] sm:$0xf]
        %v1092 = vunpack.c.h.b16 %v623
        %v1093 = vpack.c.b16 %v1092, %v659
        %v1095 = vshrl.u32 %v1093, 16
        %v1097 = vshll.u32 %v1093, 16
        %v1099 = vrot.slane %v1097, 1
        %v1100 = vor.u32 %v1095, %v1099
        %1101 = vrot.lane.b32.xlu0 %v984, 112
        %v1102 = vpop.permute.xlu0 %1101
        %1103 = vrot.lane.b32.xlu0 %v1100, 112
        %v1104 = vpop.permute.xlu0 %1103
        %v1105 = vsel %vm666, %v1102, %v1104
        %v1123 = vunpack.c.l.b16 %v1076
        %v1124 = vunpack.c.l.b16 %v1077
        %v1125 = vunpack.c.l.b16 %v1078
        %v1126 = vunpack.c.l.b16 %v1079
        %v1127 = vunpack.c.l.b16 %v1080
        %v1128 = vunpack.c.l.b16 %v1081
        %v1129 = vunpack.c.l.b16 %v1082
        %v1130 = vunpack.c.l.b16 %v1083
        %v1131 = vunpack.c.l.b16 %v1084
        %v1132 = vunpack.c.l.b16 %v1085
        %v1133 = vunpack.c.l.b16 %v1086
        %v1134 = vunpack.c.l.b16 %v1087
        %v1135 = vunpack.c.l.b16 %v1088
        %v1136 = vunpack.c.l.b16 %v1089
        %v1137 = vunpack.c.l.b16 %v1090
        %v1138 = vunpack.c.l.b16 %v1091
        %v1139 = vpack.c.b16 %v1124, %v1123
        %v1140 = vpack.c.b16 %v1126, %v1125
        %v1141 = vpack.c.b16 %v1128, %v1127
        %v1142 = vpack.c.b16 %v1130, %v1129
        %v1143 = vpack.c.b16 %v1132, %v1131
        %v1144 = vpack.c.b16 %v1134, %v1133
        %v1145 = vpack.c.b16 %v1136, %v1135
        %v1146 = vpack.c.b16 %v1138, %v1137
        %1155 = vmatprep.subr.bf16.mxu0 0
        %1156 = vmatpush1.bf16.msra.mxu0 %v1139
        %1157 = vmatprep.subr.bf16.mxu0 0
        %1158 = vmatpush1.bf16.msra.mxu0 %v1140
        %1159 = vmatprep.subr.bf16.mxu0 0
        %1160 = vmatpush1.bf16.msra.mxu0 %v1141
        %1161 = vmatprep.subr.bf16.mxu0 0
        %1162 = vmatpush1.bf16.msra.mxu0 %v1142
        %1163 = vmatprep.subr.bf16.mxu0 0
        %1164 = vmatpush1.bf16.msra.mxu0 %v1143
        %1165 = vmatprep.subr.bf16.mxu0 0
        %1166 = vmatpush1.bf16.msra.mxu0 %v1144
        %1167 = vmatprep.subr.bf16.mxu0 0
        %1168 = vmatpush1.bf16.msra.mxu0 %v1145
        %1169 = vmatprep.subr.bf16.mxu0 0
        %1170 = vmatpush1.bf16.msra.mxu0 %v1146
        %1171 = vmatprep.subr.bf16.mxu0 0
        %1172 = vmatpush1.bf16.msra.mxu0 0
        %1173 = vmatprep.subr.bf16.mxu0 0
        %1174 = vmatpush1.bf16.msra.mxu0 0
        %1175 = vmatprep.subr.bf16.mxu0 0
        %1176 = vmatpush1.bf16.msra.mxu0 0
        %1177 = vmatprep.subr.bf16.mxu0 0
        %1178 = vmatpush1.bf16.msra.mxu0 0
        %1179 = vmatprep.subr.bf16.mxu0 0
        %1180 = vmatpush1.bf16.msra.mxu0 0
        %1181 = vmatprep.subr.bf16.mxu0 0
        %1182 = vmatpush1.bf16.msra.mxu0 0
        %1183 = vmatprep.subr.bf16.mxu0 0
        %1184 = vmatpush1.bf16.msra.mxu0 0
        %1185 = vmatprep.subr.bf16.mxu0 0
        %1186 = vmatpush1.bf16.msra.mxu0 0
        %1187 = vmatprep.mubr.bf16.mxu0 0
        %1188 = vmatmul.mubr.bf16.gmra.mrb[0].mxu0 %v1105
        %v1189 = vpop.f32.mrb[0].mxu0
        %v1190 = vadd.f32 0.0, %v1189
        %v1191 = vpop.f32.mrb[0].mxu0
        %v1192 = vpop.f32.mrb[0].mxu0
        %v1193 = vpop.f32.mrb[0].mxu0
        %1194 = vdwg.mxu0
        %v1195 = vadd.f32 %v1074, %v1190
        %s1196 = scalar_lea.vmem %s6, 320
        %v1197 = vld [vmem:[%s1196] sm:$0xf]
        %v1198 = vld [vmem:[%s1196 + $0x4] sm:$0xf]
        %v1199 = vld [vmem:[%s1196 + $0x8] sm:$0xf]
        %v1200 = vld [vmem:[%s1196 + $0xc] sm:$0xf]
        %v1201 = vld [vmem:[%s1196 + $0x10] sm:$0xf]
        %v1202 = vld [vmem:[%s1196 + $0x14] sm:$0xf]
        %v1203 = vld [vmem:[%s1196 + $0x18] sm:$0xf]
        %v1204 = vld [vmem:[%s1196 + $0x1c] sm:$0xf]
        %v1205 = vld [vmem:[%s1196 + $0x20] sm:$0xf]
        %v1206 = vld [vmem:[%s1196 + $0x24] sm:$0xf]
        %v1207 = vld [vmem:[%s1196 + $0x28] sm:$0xf]
        %v1208 = vld [vmem:[%s1196 + $0x2c] sm:$0xf]
        %v1209 = vld [vmem:[%s1196 + $0x30] sm:$0xf]
        %v1210 = vld [vmem:[%s1196 + $0x34] sm:$0xf]
        %v1211 = vld [vmem:[%s1196 + $0x38] sm:$0xf]
        %v1212 = vld [vmem:[%s1196 + $0x3c] sm:$0xf]
        %1213 = vrot.lane.b32.xlu0 %v984, 96
        %v1214 = vpop.permute.xlu0 %1213
        %1215 = vrot.lane.b32.xlu0 %v1100, 96
        %v1216 = vpop.permute.xlu0 %1215
        %v1217 = vsel %vm866, %v1214, %v1216
        %v1235 = vunpack.c.l.b16 %v1197
        %v1236 = vunpack.c.l.b16 %v1198
        %v1237 = vunpack.c.l.b16 %v1199
        %v1238 = vunpack.c.l.b16 %v1200
        %v1239 = vunpack.c.l.b16 %v1201
        %v1240 = vunpack.c.l.b16 %v1202
        %v1241 = vunpack.c.l.b16 %v1203
        %v1242 = vunpack.c.l.b16 %v1204
        %v1243 = vunpack.c.l.b16 %v1205
        %v1244 = vunpack.c.l.b16 %v1206
        %v1245 = vunpack.c.l.b16 %v1207
        %v1246 = vunpack.c.l.b16 %v1208
        %v1247 = vunpack.c.l.b16 %v1209
        %v1248 = vunpack.c.l.b16 %v1210
        %v1249 = vunpack.c.l.b16 %v1211
        %v1250 = vunpack.c.l.b16 %v1212
        %v1251 = vpack.c.b16 %v1236, %v1235
        %v1252 = vpack.c.b16 %v1238, %v1237
        %v1253 = vpack.c.b16 %v1240, %v1239
        %v1254 = vpack.c.b16 %v1242, %v1241
        %v1255 = vpack.c.b16 %v1244, %v1243
        %v1256 = vpack.c.b16 %v1246, %v1245
        %v1257 = vpack.c.b16 %v1248, %v1247
        %v1258 = vpack.c.b16 %v1250, %v1249
        %1267 = vmatprep.subr.bf16.mxu0 0
        %1268 = vmatpush1.bf16.msra.mxu0 %v1251
        %1269 = vmatprep.subr.bf16.mxu0 0
        %1270 = vmatpush1.bf16.msra.mxu0 %v1252
        %1271 = vmatprep.subr.bf16.mxu0 0
        %1272 = vmatpush1.bf16.msra.mxu0 %v1253
        %1273 = vmatprep.subr.bf16.mxu0 0
        %1274 = vmatpush1.bf16.msra.mxu0 %v1254
        %1275 = vmatprep.subr.bf16.mxu0 0
        %1276 = vmatpush1.bf16.msra.mxu0 %v1255
        %1277 = vmatprep.subr.bf16.mxu0 0
        %1278 = vmatpush1.bf16.msra.mxu0 %v1256
        %1279 = vmatprep.subr.bf16.mxu0 0
        %1280 = vmatpush1.bf16.msra.mxu0 %v1257
        %1281 = vmatprep.subr.bf16.mxu0 0
        %1282 = vmatpush1.bf16.msra.mxu0 %v1258
        %1283 = vmatprep.subr.bf16.mxu0 0
        %1284 = vmatpush1.bf16.msra.mxu0 0
        %1285 = vmatprep.subr.bf16.mxu0 0
        %1286 = vmatpush1.bf16.msra.mxu0 0
        %1287 = vmatprep.subr.bf16.mxu0 0
        %1288 = vmatpush1.bf16.msra.mxu0 0
        %1289 = vmatprep.subr.bf16.mxu0 0
        %1290 = vmatpush1.bf16.msra.mxu0 0
        %1291 = vmatprep.subr.bf16.mxu0 0
        %1292 = vmatpush1.bf16.msra.mxu0 0
        %1293 = vmatprep.subr.bf16.mxu0 0
        %1294 = vmatpush1.bf16.msra.mxu0 0
        %1295 = vmatprep.subr.bf16.mxu0 0
        %1296 = vmatpush1.bf16.msra.mxu0 0
        %1297 = vmatprep.subr.bf16.mxu0 0
        %1298 = vmatpush1.bf16.msra.mxu0 0
        %1299 = vmatprep.mubr.bf16.mxu0 0
        %1300 = vmatmul.mubr.bf16.gmra.mrb[0].mxu0 %v1217
        %v1301 = vpop.f32.mrb[0].mxu0
        %v1302 = vadd.f32 0.0, %v1301
        %v1303 = vpop.f32.mrb[0].mxu0
        %v1304 = vpop.f32.mrb[0].mxu0
        %v1305 = vpop.f32.mrb[0].mxu0
        %1306 = vdwg.mxu0
        %v1307 = vadd.f32 %v1195, %v1302
        %s1308 = scalar_lea.vmem %s6, 384
        %v1309 = vld [vmem:[%s1308] sm:$0xf]
        %v1310 = vld [vmem:[%s1308 + $0x4] sm:$0xf]
        %v1311 = vld [vmem:[%s1308 + $0x8] sm:$0xf]
        %v1312 = vld [vmem:[%s1308 + $0xc] sm:$0xf]
        %v1313 = vld [vmem:[%s1308 + $0x10] sm:$0xf]
        %v1314 = vld [vmem:[%s1308 + $0x14] sm:$0xf]
        %v1315 = vld [vmem:[%s1308 + $0x18] sm:$0xf]
        %v1316 = vld [vmem:[%s1308 + $0x1c] sm:$0xf]
        %v1317 = vld [vmem:[%s1308 + $0x20] sm:$0xf]
        %v1318 = vld [vmem:[%s1308 + $0x24] sm:$0xf]
        %v1319 = vld [vmem:[%s1308 + $0x28] sm:$0xf]
        %v1320 = vld [vmem:[%s1308 + $0x2c] sm:$0xf]
        %v1321 = vld [vmem:[%s1308 + $0x30] sm:$0xf]
        %v1322 = vld [vmem:[%s1308 + $0x34] sm:$0xf]
        %v1323 = vld [vmem:[%s1308 + $0x38] sm:$0xf]
        %v1324 = vld [vmem:[%s1308 + $0x3c] sm:$0xf]
        %v1325 = vrot.slane %v977, 1
        %v1343 = vunpack.c.l.b16 %v1309
        %v1344 = vunpack.c.l.b16 %v1310
        %v1345 = vunpack.c.l.b16 %v1311
        %v1346 = vunpack.c.l.b16 %v1312
        %v1347 = vunpack.c.l.b16 %v1313
        %v1348 = vunpack.c.l.b16 %v1314
        %v1349 = vunpack.c.l.b16 %v1315
        %v1350 = vunpack.c.l.b16 %v1316
        %v1351 = vunpack.c.l.b16 %v1317
        %v1352 = vunpack.c.l.b16 %v1318
        %v1353 = vunpack.c.l.b16 %v1319
        %v1354 = vunpack.c.l.b16 %v1320
        %v1355 = vunpack.c.l.b16 %v1321
        %v1356 = vunpack.c.l.b16 %v1322
        %v1357 = vunpack.c.l.b16 %v1323
        %v1358 = vunpack.c.l.b16 %v1324
        %v1359 = vpack.c.b16 %v1344, %v1343
        %v1360 = vpack.c.b16 %v1346, %v1345
        %v1361 = vpack.c.b16 %v1348, %v1347
        %v1362 = vpack.c.b16 %v1350, %v1349
        %v1363 = vpack.c.b16 %v1352, %v1351
        %v1364 = vpack.c.b16 %v1354, %v1353
        %v1365 = vpack.c.b16 %v1356, %v1355
        %v1366 = vpack.c.b16 %v1358, %v1357
        %1375 = vmatprep.subr.bf16.mxu0 0
        %1376 = vmatpush1.bf16.msra.mxu0 %v1359
        %1377 = vmatprep.subr.bf16.mxu0 0
        %1378 = vmatpush1.bf16.msra.mxu0 %v1360
        %1379 = vmatprep.subr.bf16.mxu0 0
        %1380 = vmatpush1.bf16.msra.mxu0 %v1361
        %1381 = vmatprep.subr.bf16.mxu0 0
        %1382 = vmatpush1.bf16.msra.mxu0 %v1362
        %1383 = vmatprep.subr.bf16.mxu0 0
        %1384 = vmatpush1.bf16.msra.mxu0 %v1363
        %1385 = vmatprep.subr.bf16.mxu0 0
        %1386 = vmatpush1.bf16.msra.mxu0 %v1364
        %1387 = vmatprep.subr.bf16.mxu0 0
        %1388 = vmatpush1.bf16.msra.mxu0 %v1365
        %1389 = vmatprep.subr.bf16.mxu0 0
        %1390 = vmatpush1.bf16.msra.mxu0 %v1366
        %1391 = vmatprep.subr.bf16.mxu0 0
        %1392 = vmatpush1.bf16.msra.mxu0 0
        %1393 = vmatprep.subr.bf16.mxu0 0
        %1394 = vmatpush1.bf16.msra.mxu0 0
        %1395 = vmatprep.subr.bf16.mxu0 0
        %1396 = vmatpush1.bf16.msra.mxu0 0
        %1397 = vmatprep.subr.bf16.mxu0 0
        %1398 = vmatpush1.bf16.msra.mxu0 0
        %1399 = vmatprep.subr.bf16.mxu0 0
        %1400 = vmatpush1.bf16.msra.mxu0 0
        %1401 = vmatprep.subr.bf16.mxu0 0
        %1402 = vmatpush1.bf16.msra.mxu0 0
        %1403 = vmatprep.subr.bf16.mxu0 0
        %1404 = vmatpush1.bf16.msra.mxu0 0
        %1405 = vmatprep.subr.bf16.mxu0 0
        %1406 = vmatpush1.bf16.msra.mxu0 0
        %1407 = vmatprep.mubr.bf16.mxu0 0
        %1408 = vmatmul.mubr.bf16.gmra.mrb[0].mxu0 %v1325
        %v1409 = vpop.f32.mrb[0].mxu0
        %v1410 = vadd.f32 0.0, %v1409
        %v1411 = vpop.f32.mrb[0].mxu0
        %v1412 = vpop.f32.mrb[0].mxu0
        %v1413 = vpop.f32.mrb[0].mxu0
        %1414 = vdwg.mxu0
        %v1415 = vadd.f32 %v1307, %v1410
        %s1416 = scalar_lea.vmem %s6, 448
        %v1417 = vld [vmem:[%s1416] sm:$0xf]
        %v1418 = vld [vmem:[%s1416 + $0x4] sm:$0xf]
        %v1419 = vld [vmem:[%s1416 + $0x8] sm:$0xf]
        %v1420 = vld [vmem:[%s1416 + $0xc] sm:$0xf]
        %v1421 = vld [vmem:[%s1416 + $0x10] sm:$0xf]
        %v1422 = vld [vmem:[%s1416 + $0x14] sm:$0xf]
        %v1423 = vld [vmem:[%s1416 + $0x18] sm:$0xf]
        %v1424 = vld [vmem:[%s1416 + $0x1c] sm:$0xf]
        %v1425 = vld [vmem:[%s1416 + $0x20] sm:$0xf]
        %v1426 = vld [vmem:[%s1416 + $0x24] sm:$0xf]
        %v1427 = vld [vmem:[%s1416 + $0x28] sm:$0xf]
        %v1428 = vld [vmem:[%s1416 + $0x2c] sm:$0xf]
        %v1429 = vld [vmem:[%s1416 + $0x30] sm:$0xf]
        %v1430 = vld [vmem:[%s1416 + $0x34] sm:$0xf]
        %v1431 = vld [vmem:[%s1416 + $0x38] sm:$0xf]
        %v1432 = vld [vmem:[%s1416 + $0x3c] sm:$0xf]
        %v1433 = vrot.slane %v1093, 1
        %1434 = vrot.lane.b32.xlu0 %v1325, 112
        %v1435 = vpop.permute.xlu0 %1434
        %1436 = vrot.lane.b32.xlu0 %v1433, 112
        %v1437 = vpop.permute.xlu0 %1436
        %v1438 = vsel %vm666, %v1435, %v1437
        %v1456 = vunpack.c.l.b16 %v1417
        %v1457 = vunpack.c.l.b16 %v1418
        %v1458 = vunpack.c.l.b16 %v1419
        %v1459 = vunpack.c.l.b16 %v1420
        %v1460 = vunpack.c.l.b16 %v1421
        %v1461 = vunpack.c.l.b16 %v1422
        %v1462 = vunpack.c.l.b16 %v1423
        %v1463 = vunpack.c.l.b16 %v1424
        %v1464 = vunpack.c.l.b16 %v1425
        %v1465 = vunpack.c.l.b16 %v1426
        %v1466 = vunpack.c.l.b16 %v1427
        %v1467 = vunpack.c.l.b16 %v1428
        %v1468 = vunpack.c.l.b16 %v1429
        %v1469 = vunpack.c.l.b16 %v1430
        %v1470 = vunpack.c.l.b16 %v1431
        %v1471 = vunpack.c.l.b16 %v1432
        %v1472 = vpack.c.b16 %v1457, %v1456
        %v1473 = vpack.c.b16 %v1459, %v1458
        %v1474 = vpack.c.b16 %v1461, %v1460
        %v1475 = vpack.c.b16 %v1463, %v1462
        %v1476 = vpack.c.b16 %v1465, %v1464
        %v1477 = vpack.c.b16 %v1467, %v1466
        %v1478 = vpack.c.b16 %v1469, %v1468
        %v1479 = vpack.c.b16 %v1471, %v1470
        %1488 = vmatprep.subr.bf16.mxu0 0
        %1489 = vmatpush1.bf16.msra.mxu0 %v1472
        %1490 = vmatprep.subr.bf16.mxu0 0
        %1491 = vmatpush1.bf16.msra.mxu0 %v1473
        %1492 = vmatprep.subr.bf16.mxu0 0
        %1493 = vmatpush1.bf16.msra.mxu0 %v1474
        %1494 = vmatprep.subr.bf16.mxu0 0
        %1495 = vmatpush1.bf16.msra.mxu0 %v1475
        %1496 = vmatprep.subr.bf16.mxu0 0
        %1497 = vmatpush1.bf16.msra.mxu0 %v1476
        %1498 = vmatprep.subr.bf16.mxu0 0
        %1499 = vmatpush1.bf16.msra.mxu0 %v1477
        %1500 = vmatprep.subr.bf16.mxu0 0
        %1501 = vmatpush1.bf16.msra.mxu0 %v1478
        %1502 = vmatprep.subr.bf16.mxu0 0
        %1503 = vmatpush1.bf16.msra.mxu0 %v1479
        %1504 = vmatprep.subr.bf16.mxu0 0
        %1505 = vmatpush1.bf16.msra.mxu0 0
        %1506 = vmatprep.subr.bf16.mxu0 0
        %1507 = vmatpush1.bf16.msra.mxu0 0
        %1508 = vmatprep.subr.bf16.mxu0 0
        %1509 = vmatpush1.bf16.msra.mxu0 0
        %1510 = vmatprep.subr.bf16.mxu0 0
        %1511 = vmatpush1.bf16.msra.mxu0 0
        %1512 = vmatprep.subr.bf16.mxu0 0
        %1513 = vmatpush1.bf16.msra.mxu0 0
        %1514 = vmatprep.subr.bf16.mxu0 0
        %1515 = vmatpush1.bf16.msra.mxu0 0
        %1516 = vmatprep.subr.bf16.mxu0 0
        %1517 = vmatpush1.bf16.msra.mxu0 0
        %1518 = vmatprep.subr.bf16.mxu0 0
        %1519 = vmatpush1.bf16.msra.mxu0 0
        %1520 = vmatprep.mubr.bf16.mxu0 0
        %1521 = vmatmul.mubr.bf16.gmra.mrb[0].mxu0 %v1438
        %v1522 = vpop.f32.mrb[0].mxu0
        %v1523 = vadd.f32 0.0, %v1522
        %v1524 = vpop.f32.mrb[0].mxu0
        %v1525 = vpop.f32.mrb[0].mxu0
        %v1526 = vpop.f32.mrb[0].mxu0
        %1527 = vdwg.mxu0
        %v1528 = vadd.f32 %v1415, %v1523
        %s1529 = scalar_lea.vmem %s6, 512
        %v1530 = vld [vmem:[%s1529] sm:$0xf]
        %v1531 = vld [vmem:[%s1529 + $0x4] sm:$0xf]
        %v1532 = vld [vmem:[%s1529 + $0x8] sm:$0xf]
        %v1533 = vld [vmem:[%s1529 + $0xc] sm:$0xf]
        %v1534 = vld [vmem:[%s1529 + $0x10] sm:$0xf]
        %v1535 = vld [vmem:[%s1529 + $0x14] sm:$0xf]
        %v1536 = vld [vmem:[%s1529 + $0x18] sm:$0xf]
        %v1537 = vld [vmem:[%s1529 + $0x1c] sm:$0xf]
        %v1538 = vld [vmem:[%s1529 + $0x20] sm:$0xf]
        %v1539 = vld [vmem:[%s1529 + $0x24] sm:$0xf]
        %v1540 = vld [vmem:[%s1529 + $0x28] sm:$0xf]
        %v1541 = vld [vmem:[%s1529 + $0x2c] sm:$0xf]
        %v1542 = vld [vmem:[%s1529 + $0x30] sm:$0xf]
        %v1543 = vld [vmem:[%s1529 + $0x34] sm:$0xf]
        %v1544 = vld [vmem:[%s1529 + $0x38] sm:$0xf]
        %v1545 = vld [vmem:[%s1529 + $0x3c] sm:$0xf]
        %1546 = vrot.lane.b32.xlu0 %v1325, 96
        %v1547 = vpop.permute.xlu0 %1546
        %1548 = vrot.lane.b32.xlu0 %v1433, 96
        %v1549 = vpop.permute.xlu0 %1548
        %v1550 = vsel %vm866, %v1547, %v1549
        %v1568 = vunpack.c.l.b16 %v1530
        %v1569 = vunpack.c.l.b16 %v1531
        %v1570 = vunpack.c.l.b16 %v1532
        %v1571 = vunpack.c.l.b16 %v1533
        %v1572 = vunpack.c.l.b16 %v1534
        %v1573 = vunpack.c.l.b16 %v1535
        %v1574 = vunpack.c.l.b16 %v1536
        %v1575 = vunpack.c.l.b16 %v1537
        %v1576 = vunpack.c.l.b16 %v1538
        %v1577 = vunpack.c.l.b16 %v1539
        %v1578 = vunpack.c.l.b16 %v1540
        %v1579 = vunpack.c.l.b16 %v1541
        %v1580 = vunpack.c.l.b16 %v1542
        %v1581 = vunpack.c.l.b16 %v1543
        %v1582 = vunpack.c.l.b16 %v1544
        %v1583 = vunpack.c.l.b16 %v1545
        %v1584 = vpack.c.b16 %v1569, %v1568
        %v1585 = vpack.c.b16 %v1571, %v1570
        %v1586 = vpack.c.b16 %v1573, %v1572
        %v1587 = vpack.c.b16 %v1575, %v1574
        %v1588 = vpack.c.b16 %v1577, %v1576
        %v1589 = vpack.c.b16 %v1579, %v1578
        %v1590 = vpack.c.b16 %v1581, %v1580
        %v1591 = vpack.c.b16 %v1583, %v1582
        %1600 = vmatprep.subr.bf16.mxu0 0
        %1601 = vmatpush1.bf16.msra.mxu0 %v1584
        %1602 = vmatprep.subr.bf16.mxu0 0
        %1603 = vmatpush1.bf16.msra.mxu0 %v1585
        %1604 = vmatprep.subr.bf16.mxu0 0
        %1605 = vmatpush1.bf16.msra.mxu0 %v1586
        %1606 = vmatprep.subr.bf16.mxu0 0
        %1607 = vmatpush1.bf16.msra.mxu0 %v1587
        %1608 = vmatprep.subr.bf16.mxu0 0
        %1609 = vmatpush1.bf16.msra.mxu0 %v1588
        %1610 = vmatprep.subr.bf16.mxu0 0
        %1611 = vmatpush1.bf16.msra.mxu0 %v1589
        %1612 = vmatprep.subr.bf16.mxu0 0
        %1613 = vmatpush1.bf16.msra.mxu0 %v1590
        %1614 = vmatprep.subr.bf16.mxu0 0
        %1615 = vmatpush1.bf16.msra.mxu0 %v1591
        %1616 = vmatprep.subr.bf16.mxu0 0
        %1617 = vmatpush1.bf16.msra.mxu0 0
        %1618 = vmatprep.subr.bf16.mxu0 0
        %1619 = vmatpush1.bf16.msra.mxu0 0
        %1620 = vmatprep.subr.bf16.mxu0 0
        %1621 = vmatpush1.bf16.msra.mxu0 0
        %1622 = vmatprep.subr.bf16.mxu0 0
        %1623 = vmatpush1.bf16.msra.mxu0 0
        %1624 = vmatprep.subr.bf16.mxu0 0
        %1625 = vmatpush1.bf16.msra.mxu0 0
        %1626 = vmatprep.subr.bf16.mxu0 0
        %1627 = vmatpush1.bf16.msra.mxu0 0
        %1628 = vmatprep.subr.bf16.mxu0 0
        %1629 = vmatpush1.bf16.msra.mxu0 0
        %1630 = vmatprep.subr.bf16.mxu0 0
        %1631 = vmatpush1.bf16.msra.mxu0 0
        %1632 = vmatprep.mubr.bf16.mxu0 0
        %1633 = vmatmul.mubr.bf16.gmra.mrb[0].mxu0 %v1550
        %v1634 = vpop.f32.mrb[0].mxu0
        %v1635 = vadd.f32 0.0, %v1634
        %v1636 = vpop.f32.mrb[0].mxu0
        %v1637 = vpop.f32.mrb[0].mxu0
        %v1638 = vpop.f32.mrb[0].mxu0
        %1639 = vdwg.mxu0
        %v1640 = vadd.f32 %v1528, %v1635
        %v1641 = vld [vmem:[%s7] sm:$0x1]
        %v1643 = vlaneseq
        %v1644 = vshrl.u32 %v1643, 7
        %v1645 = vsub.s32 0, %v1644
        %v1646 = vrot.slane %v1641, %v1645
        %v1648 = vadd.f32 %v1640, %v1646
        %1649 = vst [vmem:[%s355] sm:$0xff] %v1648
        %p1650 = scmp.lt.s32.totalorder %s24, 1
        %s1651 = scalar_select %p1650, %s24, 1
        %s1652 = smul.addr %s1651, 8
        %s1653 = scalar_lea.vmem %s8, %s1652
        %s1654 = sand.u32 %s236, 1
        %s1655 = scalar_lea.sflag [#allocation4], %s1654
        %s1656 = sand.u32 %s236, 1
        %s1657 = smul.addr %s1656, 8
        %s1658 = scalar_lea.vmem [#allocation3], %s1657
        // Predicated region
        $region53: #{backbone_with_fpn_forward.11} parent=51 // pred_check
          %p1659 = pneg %p220
        $region54: #{backbone_with_fpn_forward.11} parent=51 // pred_check_branch
          %1661 = sbr.rel (%p1659) target = $region56
        $region55: #{backbone_with_fpn_forward.11} parent=51 // pred_region
          _
        $region56: #{backbone_with_fpn_forward.11} parent=51 // pred_fallthru
          _
        // Predicated region
        $region57: #{backbone_with_fpn_forward.11} parent=51 // pred_check
          %p1662 = pneg %p246
        $region58: #{backbone_with_fpn_forward.11} parent=51 // pred_check_branch
          %1664 = sbr.rel (%p1662) target = $region60
        $region59: #{backbone_with_fpn_forward.11} parent=51 // pred_region
          %s1666 = ssub.s32 128, 128
          %1667 = vsyncadd %s1655, %s1666
          %s1668 = smul.addr %s24, 128
          %s1669 = scalar_lea.hbm %s9, %s1668
          %s1671 = sshll.u32 %s1658, 4
          %s1672 = int_to_ptr.vmem [resolvable:$true] %s1671
          %1674 = dma.vmem_to_hbm [thread:$0]  %s1672, 128, %s1669, %s1655
        $region60: #{backbone_with_fpn_forward.11} parent=51 // pred_fallthru
          _
      $region52: #{backbone_with_fpn_forward.11} parent=5 // pred_fallthru
        _
      %p1675 = scmp.le.s32.totalorder 2, %s19
      // Predicated region
      $region61: #{backbone_with_fpn_forward.11} parent=5 // pred_check
        %p1676 = pneg %p1675
      $region62: #{backbone_with_fpn_forward.11} parent=5 // pred_check_branch
        %1678 = sbr.rel (%p1676) target = $region64
      $region63: #{backbone_with_fpn_forward.11} parent=5 // pred_region
        %s1679 = ssub.s32 %s19, 2
        // Predicated region
        $region65: #{backbone_with_fpn_forward.11} parent=63 // pred_check
          %p1680 = pneg %p226
        $region66: #{backbone_with_fpn_forward.11} parent=63 // pred_check_branch
          %1682 = sbr.rel (%p1680) target = $region68
        $region67: #{backbone_with_fpn_forward.11} parent=63 // pred_region
          %p1683 = scmp.lt.s32.totalorder %s25, 1
          %s1684 = scalar_select %p1683, %s25, 1
          %s1685 = smul.addr %s1684, 8
          %s1686 = scalar_lea.vmem %s8, %s1685
        $region68: #{backbone_with_fpn_forward.11} parent=63 // pred_fallthru
          _
        // Predicated region
        $region69: #{backbone_with_fpn_forward.11} parent=63 // pred_check
          %p1687 = pneg %p252
        $region70: #{backbone_with_fpn_forward.11} parent=63 // pred_check_branch
          %1689 = sbr.rel (%p1687) target = $region72
        $region71: #{backbone_with_fpn_forward.11} parent=63 // pred_region
          %s1690 = sand.u32 %s237, 1
          %s1691 = scalar_lea.sflag [#allocation4], %s1690
          %s1692 = sand.u32 %s237, 1
          %s1693 = smul.addr %s1692, 8
          %s1694 = scalar_lea.vmem [#allocation3], %s1693
          %1695 = dma.done %s1691, 128
        $region72: #{backbone_with_fpn_forward.11} parent=63 // pred_fallthru
          _
      $region64: #{backbone_with_fpn_forward.11} parent=5 // pred_fallthru
        _
    $region6: #{backbone_with_fpn_forward.11} parent=1 // loop_footer
      %s23 = sadd.s32 1, %s19
    $region7: #{backbone_with_fpn_forward.11} parent=1 // loop_footer_branch
      %18 = sbr.rel target = $region3
    $region8: #{backbone_with_fpn_forward.11} parent=1 // loop_exit
      _
    %1696 = vsyncpa [#allocation4], 1
    %s1697 = scalar_lea.sflag [#allocation4], 1
    %1698 = vsyncpa %s1697, 1

</llo_original>
